<compile_context>
chip_gen: v6e
topology: v6e:2x2x1
jax: 0.10.0
libtpu: 0.0.40
codegen_flags: <defaults>
</compile_context>

<pallas_src>
import functools

import jax
import jax.numpy as jnp
from jax import lax
from jax.experimental import pallas as pl
from jax.experimental.pallas import tpu as pltpu

F32 = jnp.float32
BF16 = jnp.bfloat16
_VMEM_LIMIT = 32 * 1024 * 1024


def _cparams(sem):
    return pltpu.CompilerParams(dimension_semantics=sem,
                                vmem_limit_bytes=_VMEM_LIMIT)


def _round_up(n, m):
    return ((n + m - 1) // m) * m


def fold_bn(w, b, gamma, beta, rmean, rvar, eps=1e-5):
    """Fold eval-mode BatchNorm1d (affine, running stats) into a Linear."""
    s = gamma / jnp.sqrt(rvar + eps)
    return w * s[None, :], (b - rmean) * s + beta


# ----------------------------------------------------------------------------
# Generic row-tiled linear kernels (bf16 MXU inputs, f32 accumulation)
# ----------------------------------------------------------------------------

def _linear_kernel(x_ref, w_ref, b_ref, o_ref, *, act):
    y = jnp.dot(x_ref[...], w_ref[...], preferred_element_type=jnp.float32)
    y = y + b_ref[...]
    if act == "relu":
        y = jnp.maximum(y, 0.0)
    elif act == "tanh":
        y = jnp.tanh(y)
    o_ref[...] = y.astype(o_ref.dtype)


def linear(x, w, b, act=None, tm=512, out_dtype=BF16):
    Np, Din = x.shape
    Dout = w.shape[1]
    return pl.pallas_call(
        functools.partial(_linear_kernel, act=act),
        out_shape=jax.ShapeDtypeStruct((Np, Dout), out_dtype),
        grid=(Np // tm,),
        in_specs=[
            pl.BlockSpec((tm, Din), lambda i: (i, 0)),
            pl.BlockSpec((Din, Dout), lambda i: (0, 0)),
            pl.BlockSpec((1, Dout), lambda i: (0, 0)),
        ],
        out_specs=pl.BlockSpec((tm, Dout), lambda i: (i, 0)),
        compiler_params=_cparams(("parallel",)),
    )(x, w, b.reshape(1, Dout).astype(F32))


def _linear_ln_kernel(x_ref, w_ref, b_ref, g_ref, beta_ref, o_ref, *, relu, eps):
    # Linear + LayerNorm (+ReLU) fused epilogue (all epilogue math in f32).
    y = jnp.dot(x_ref[...], w_ref[...], preferred_element_type=jnp.float32)
    y = y + b_ref[...]
    mu = jnp.mean(y, axis=-1, keepdims=True)
    yc = y - mu
    var = jnp.mean(yc * yc, axis=-1, keepdims=True)
    y = yc * lax.rsqrt(var + eps) * g_ref[...] + beta_ref[...]
    if relu:
        y = jnp.maximum(y, 0.0)
    o_ref[...] = y.astype(o_ref.dtype)


def linear_ln(x, w, b, gamma, beta, relu=True, eps=1e-5, tm=512):
    Np, Din = x.shape
    Dout = w.shape[1]
    return pl.pallas_call(
        functools.partial(_linear_ln_kernel, relu=relu, eps=eps),
        out_shape=jax.ShapeDtypeStruct((Np, Dout), BF16),
        grid=(Np // tm,),
        in_specs=[
            pl.BlockSpec((tm, Din), lambda i: (i, 0)),
            pl.BlockSpec((Din, Dout), lambda i: (0, 0)),
            pl.BlockSpec((1, Dout), lambda i: (0, 0)),
            pl.BlockSpec((1, Dout), lambda i: (0, 0)),
            pl.BlockSpec((1, Dout), lambda i: (0, 0)),
        ],
        out_specs=pl.BlockSpec((tm, Dout), lambda i: (i, 0)),
        compiler_params=_cparams(("parallel",)),
    )(x, w, b.reshape(1, Dout).astype(F32),
      gamma.reshape(1, Dout).astype(F32), beta.reshape(1, Dout).astype(F32))


# ----------------------------------------------------------------------------
# Fused q/v/k projection: one matmul, two outputs (qv packed, k separate)
# so the attention phase-2 kernel never has to stream K.
# ----------------------------------------------------------------------------

def _qvk_kernel(x_ref, w_ref, b_ref, qv_ref, k_ref, *, HC):
    y = jnp.dot(x_ref[...], w_ref[...], preferred_element_type=jnp.float32)
    y = y + b_ref[...]
    qv_ref[...] = y[:, :2 * HC].astype(qv_ref.dtype)
    k_ref[...] = y[:, 2 * HC:].astype(k_ref.dtype)


def qvk_project(x, w_qvk, b_qvk, *, HC, tm):
    Np, Din = x.shape
    return pl.pallas_call(
        functools.partial(_qvk_kernel, HC=HC),
        out_shape=(jax.ShapeDtypeStruct((Np, 2 * HC), BF16),
                   jax.ShapeDtypeStruct((Np, HC), BF16)),
        grid=(Np // tm,),
        in_specs=[
            pl.BlockSpec((tm, Din), lambda i: (i, 0)),
            pl.BlockSpec((Din, 3 * HC), lambda i: (0, 0)),
            pl.BlockSpec((1, 3 * HC), lambda i: (0, 0)),
        ],
        out_specs=(pl.BlockSpec((tm, 2 * HC), lambda i: (i, 0)),
                   pl.BlockSpec((tm, HC), lambda i: (i, 0))),
        compiler_params=_cparams(("parallel",)),
    )(x, w_qvk, b_qvk.reshape(1, 3 * HC).astype(F32))


# ----------------------------------------------------------------------------
# Linear attention (full_attention_conv), two phases
# ----------------------------------------------------------------------------

def _attn_stats_kernel(qv_ref, k_ref, kv_ref, aux_ref, *,
                       num_heads, C, tm, n_true, tiles_per_core):
    # Phase 1: accumulate K^T V per head, per-column sum(K), sum(q^2), sum(k^2).
    # Rows >= n_true (padding) are masked out so the end-to-end padding never
    # contaminates the global reductions.
    c = pl.program_id(0)
    j = pl.program_id(1)

    @pl.when(j == 0)
    def _():
        kv_ref[...] = jnp.zeros_like(kv_ref)
        aux_ref[...] = jnp.zeros_like(aux_ref)

    HC = num_heads * C
    base = (c * tiles_per_core + j) * tm
    rows = base + lax.broadcasted_iota(jnp.int32, (tm, 1), 0)
    valid = rows < n_true
    mask_f = valid.astype(jnp.float32)

    qv = qv_ref[...]
    k_raw = k_ref[...]
    q_f = qv[:, :HC].astype(jnp.float32) * mask_f
    k_f = k_raw.astype(jnp.float32) * mask_f
    k_b = k_raw * valid.astype(k_raw.dtype)            # bf16 mask for the MXU path
    v_b = qv[:, HC:]                                   # bf16 (pairs with masked k)

    # packed aux: row 0 = sum(K), row 1 = per-col sum(q^2), row 2 = per-col sum(k^2)
    aux_ref[0:1, :] += jnp.sum(k_f, axis=0, keepdims=True)
    aux_ref[1:2, :] += jnp.sum(q_f * q_f, axis=0, keepdims=True)
    aux_ref[2:3, :] += jnp.sum(k_f * k_f, axis=0, keepdims=True)

    updates = []
    for h in range(num_heads):                         # static unroll over heads
        kh = k_b[:, h * C:(h + 1) * C]
        vh = v_b[:, h * C:(h + 1) * C]
        # contract over rows without an explicit transpose (MXU-friendly)
        updates.append(lax.dot_general(kh, vh, (((0,), (0,)), ((), ())),
                                       preferred_element_type=jnp.float32))
    kv_ref[...] += updates[0] if num_heads == 1 else jnp.concatenate(updates, axis=0)


def attention_stats(qv, k, *, num_heads, C, n_true, tm, split):
    Np = qv.shape[0]
    HC = num_heads * C
    nt = Np // tm
    tpc = nt // split
    return pl.pallas_call(
        functools.partial(_attn_stats_kernel, num_heads=num_heads, C=C,
                          tm=tm, n_true=n_true, tiles_per_core=tpc),
        out_shape=(jax.ShapeDtypeStruct((split * HC, C), F32),
                   jax.ShapeDtypeStruct((split * 8, HC), F32)),
        grid=(split, tpc),
        in_specs=[
            pl.BlockSpec((tm, 2 * HC), lambda c, j: (c * tpc + j, 0)),
            pl.BlockSpec((tm, HC), lambda c, j: (c * tpc + j, 0)),
        ],
        out_specs=(pl.BlockSpec((HC, C), lambda c, j: (c, 0)),
                   pl.BlockSpec((8, HC), lambda c, j: (c, 0))),
        compiler_params=_cparams(("parallel", "arbitrary")),
    )(qv, k)


def _attn_out_kernel(qv_ref, res_ref, kv_ref, aux_ref, g_ref, b_ref, o_ref, *,
                     num_heads, C, n_true, alpha, eps):
    # Phase 2: per row-tile attention output + head mean + residual mix + LN + ReLU.
    HC = num_heads * C
    qv = qv_ref[...]
    q = qv[:, :HC].astype(jnp.float32)

    # global (Frobenius) L2 normalization factors (torch.norm(qs, p=2))
    inv_nq = lax.rsqrt(jnp.maximum(jnp.sum(aux_ref[1:2, :]), 1e-24))
    inv_nk = lax.rsqrt(jnp.maximum(jnp.sum(aux_ref[2:3, :]), 1e-24))
    n_f = float(n_true)

    acc = jnp.zeros((q.shape[0], C), jnp.float32)
    for h in range(num_heads):                         # static unroll over heads
        qh = q[:, h * C:(h + 1) * C] * inv_nq
        vh = qv[:, HC + h * C:HC + (h + 1) * C].astype(jnp.float32)
        kvh = kv_ref[h * C:(h + 1) * C, :] * inv_nk                 # [C, C]
        num = jnp.dot(qh.astype(jnp.bfloat16), kvh.astype(jnp.bfloat16),
                      preferred_element_type=jnp.float32) + n_f * vh
        ksum_h = aux_ref[0:1, h * C:(h + 1) * C] * inv_nk           # [1, C]
        denom = jnp.sum(qh * ksum_h, axis=-1, keepdims=True) + n_f
        acc = acc + num * pl.reciprocal(denom, approx=True)
    attn = acc * (1.0 / num_heads)

    # residual mix + LayerNorm + ReLU (f32 epilogue)
    x = alpha * attn + (1.0 - alpha) * res_ref[...].astype(jnp.float32)
    mu = jnp.mean(x, axis=-1, keepdims=True)
    xc = x - mu
    var = jnp.mean(xc * xc, axis=-1, keepdims=True)
    y = xc * lax.rsqrt(var + eps) * g_ref[...] + b_ref[...]
    o_ref[...] = jnp.maximum(y, 0.0).astype(o_ref.dtype)


def attention_mix_ln(qv, res, kv, aux, gamma, beta, *,
                     num_heads, C, n_true, alpha=0.5, eps=1e-5, tm=512):
    Np = qv.shape[0]
    hid = res.shape[1]
    HC = num_heads * C
    return pl.pallas_call(
        functools.partial(_attn_out_kernel, num_heads=num_heads, C=C,
                          n_true=n_true, alpha=alpha, eps=eps),
        out_shape=jax.ShapeDtypeStruct((Np, hid), BF16),
        grid=(Np // tm,),
        in_specs=[
            pl.BlockSpec((tm, 2 * HC), lambda i: (i, 0)),
            pl.BlockSpec((tm, hid), lambda i: (i, 0)),
            pl.BlockSpec((HC, C), lambda i: (0, 0)),
            pl.BlockSpec((8, HC), lambda i: (0, 0)),
            pl.BlockSpec((1, hid), lambda i: (0, 0)),
            pl.BlockSpec((1, hid), lambda i: (0, 0)),
        ],
        out_specs=pl.BlockSpec((tm, hid), lambda i: (i, 0)),
        compiler_params=_cparams(("parallel",)),
    )(qv, res, kv, aux, gamma.reshape(1, hid).astype(F32),
      beta.reshape(1, hid).astype(F32))


# ----------------------------------------------------------------------------
# Hetero GCN: XW in stacked (2, Np, hid) layout + tiled propagation
# ----------------------------------------------------------------------------

def _xw_kernel(x_ref, w_ref, o_ref, *, hid):
    y = jnp.dot(x_ref[...], w_ref[...], preferred_element_type=jnp.float32)
    o_ref[0] = y[:, :hid].astype(o_ref.dtype)
    o_ref[1] = y[:, hid:].astype(o_ref.dtype)


def gcn_xw(x, w_cat, *, hid, tm):
    """X @ [W0 | W1] written directly as a stacked (2, Np, hid) bf16 array."""
    Np, Din = x.shape
    return pl.pallas_call(
        functools.partial(_xw_kernel, hid=hid),
        out_shape=jax.ShapeDtypeStruct((2, Np, hid), BF16),
        grid=(Np // tm,),
        in_specs=[
            pl.BlockSpec((tm, Din), lambda i: (i, 0)),
            pl.BlockSpec((Din, 2 * hid), lambda i: (0, 0)),
        ],
        out_specs=pl.BlockSpec((2, tm, hid), lambda i: (0, i, 0)),
        compiler_params=_cparams(("parallel",)),
    )(x, w_cat)


def _gcn_prop_kernel(a_ref, xw_ref, g_ref, bc_ref, w_ref, b_ref, o_ref, acc_ref):
    # acc += A_hat[e] @ XW[e] over (edge type, K tile); epilogue adds biases and the
    # residual g, then applies the trailing Linear (BN folded) + ReLU.
    e = pl.program_id(1)
    k = pl.program_id(2)

    @pl.when(jnp.logical_and(e == 0, k == 0))
    def _():
        acc_ref[...] = jnp.zeros_like(acc_ref)

    acc_ref[...] += jnp.dot(a_ref[0], xw_ref[0], preferred_element_type=jnp.float32)

    @pl.when(jnp.logical_and(e == pl.num_programs(1) - 1,
                             k == pl.num_programs(2) - 1))
    def _():
        h = acc_ref[...] + bc_ref[...] + g_ref[...].astype(jnp.float32)
        y = jnp.dot(h.astype(jnp.bfloat16), w_ref[...],
                    preferred_element_type=jnp.float32) + b_ref[...]
        o_ref[...] = jnp.maximum(y, 0.0).astype(o_ref.dtype)


def gcn_propagate(a_st, xw_st, g_res, b_comb, w_out, b_out, *, tm, tk):
    _, Np, _ = a_st.shape
    hid = g_res.shape[1]
    Dout = w_out.shape[1]
    return pl.pallas_call(
        _gcn_prop_kernel,
        out_shape=jax.ShapeDtypeStruct((Np, Dout), BF16),
        grid=(Np // tm, 2, Np // tk),
        in_specs=[
            pl.BlockSpec((1, tm, tk), lambda i, e, k: (e, i, k)),   # A tiles streamed (bf16)
            pl.BlockSpec((1, tk, hid), lambda i, e, k: (e, k, 0)),
            pl.BlockSpec((tm, hid), lambda i, e, k: (i, 0)),
            pl.BlockSpec((1, hid), lambda i, e, k: (0, 0)),
            pl.BlockSpec((hid, Dout), lambda i, e, k: (0, 0)),
            pl.BlockSpec((1, Dout), lambda i, e, k: (0, 0)),
        ],
        out_specs=pl.BlockSpec((tm, Dout), lambda i, e, k: (i, 0)),
        scratch_shapes=[pltpu.VMEM((tm, hid), jnp.float32)],
        compiler_params=_cparams(("parallel", "arbitrary", "arbitrary")),
    )(a_st, xw_st, g_res, b_comb.reshape(1, hid).astype(F32),
      w_out, b_out.reshape(1, Dout).astype(F32))


# ----------------------------------------------------------------------------
# Fused head: concat (K=2*hid MXU push) + tanh + L2norm + proj MLP + L2norm
# ----------------------------------------------------------------------------

def _head_kernel(xt_ref, xg_ref, wf_ref, bf_ref, w1_ref, b1_ref,
                 w2_ref, b2_ref, o_ref):
    xc = jnp.concatenate([xt_ref[...], xg_ref[...]], axis=-1)       # (tm, 2*hid) bf16
    out = jnp.tanh(jnp.dot(xc, wf_ref[...], preferred_element_type=jnp.float32)
                   + bf_ref[...])
    out = out * lax.rsqrt(jnp.sum(out * out, axis=-1, keepdims=True) + 1e-24)
    h = jnp.dot(out.astype(jnp.bfloat16), w1_ref[...],
                preferred_element_type=jnp.float32) + b1_ref[...]
    h = jnp.maximum(h, 0.0)
    h = jnp.dot(h.astype(jnp.bfloat16), w2_ref[...],
                preferred_element_type=jnp.float32) + b2_ref[...]
    o_ref[...] = (h * lax.rsqrt(jnp.sum(h * h, axis=-1, keepdims=True) + 1e-24)
                  ).astype(o_ref.dtype)


def head_projection(x_trans, x_graph, w_fc, b_fc, w1, b1, w2, b2, *, tm):
    Np, hid = x_trans.shape
    out_ch = w_fc.shape[1]
    mid = w1.shape[1]
    proj_dim = w2.shape[1]
    return pl.pallas_call(
        _head_kernel,
        out_shape=jax.ShapeDtypeStruct((Np, proj_dim), F32),
        grid=(Np // tm,),
        in_specs=[
            pl.BlockSpec((tm, hid), lambda i: (i, 0)),
            pl.BlockSpec((tm, hid), lambda i: (i, 0)),
            pl.BlockSpec((2 * hid, out_ch), lambda i: (0, 0)),
            pl.BlockSpec((1, out_ch), lambda i: (0, 0)),
            pl.BlockSpec((out_ch, mid), lambda i: (0, 0)),
            pl.BlockSpec((1, mid), lambda i: (0, 0)),
            pl.BlockSpec((mid, proj_dim), lambda i: (0, 0)),
            pl.BlockSpec((1, proj_dim), lambda i: (0, 0)),
        ],
        out_specs=pl.BlockSpec((tm, proj_dim), lambda i: (i, 0)),
        compiler_params=_cparams(("parallel",)),
    )(x_trans, x_graph, w_fc, b_fc.reshape(1, out_ch).astype(F32),
      w1, b1.reshape(1, mid).astype(F32), w2, b2.reshape(1, proj_dim).astype(F32))


# ----------------------------------------------------------------------------
# Plain-JAX glue: dense normalized adjacency for both GCNConv edge types,
# built directly at padded size and stacked (2, Np, Np) -- no extra O(N^2) copies.
# ----------------------------------------------------------------------------

def build_gcn_adj_stacked(edge_index, edge_type, edge_weight, n_true, n_pad):
    src, dst = edge_index[0], edge_index[1]
    A = jnp.zeros((2, n_pad, n_pad), F32)
    # A[e, i, j] = weight of edge j -> i of type e (aggregation at target)
    A = A.at[edge_type, dst, src].add(edge_weight.astype(F32))
    diag = jnp.arange(n_true)
    A = A.at[:, diag, diag].add(1.0)                   # self loops (fill value 1.0), real nodes only
    deg = jnp.sum(A, axis=2)                           # in-degree incl. self loop; 0 on padded rows
    dinv = jnp.where(deg > 0, lax.rsqrt(deg), 0.0)
    A = (dinv[:, :, None] * A) * dinv[:, None, :]      # D^-1/2 (A + I) D^-1/2
    return A.astype(BF16)                              # stream to the kernel in bf16


# ----------------------------------------------------------------------------
# Parameter init (deterministic, shapes follow the PyTorch module __init__)
# ----------------------------------------------------------------------------

def init_params(key, in_ch, hid, out_ch, proj_dim, heads):
    mid = (out_ch + proj_dim) // 2
    keys = iter(jax.random.split(key, 64))

    def lin(din, dout):
        bound = 1.0 / (din ** 0.5)
        w = jax.random.uniform(next(keys), (din, dout), F32, -bound, bound)
        b = jax.random.uniform(next(keys), (dout,), F32, -bound, bound)
        return w, b

    def norm_params(d):
        g = 1.0 + 0.1 * jax.random.normal(next(keys), (d,), F32)
        b = 0.1 * jax.random.normal(next(keys), (d,), F32)
        return g, b

    p = {}
    # Transformer branch (TransConv: fcs[0], LN, 1 x TransConvLayer, LN)
    p["t_fc0"] = lin(in_ch, hid)
    p["t_ln0"] = norm_params(hid)
    p["t_Wq"] = lin(hid, hid * heads)
    p["t_Wk"] = lin(hid, hid * heads)
    p["t_Wv"] = lin(hid, hid * heads)
    p["t_ln1"] = norm_params(hid)
    # GNN branch (lins[0], BN, HeteroConv{2x GCNConv}, lins[1], BN)
    p["g_lin0"] = lin(in_ch, hid)
    g0, b0 = norm_params(hid)
    p["g_bn0"] = (g0, b0, 0.1 * jax.random.normal(next(keys), (hid,), F32),
                  1.0 + 0.1 * jax.random.uniform(next(keys), (hid,), F32))
    p["gcn0_w"] = jax.random.normal(next(keys), (hid, hid), F32) * (1.0 / hid ** 0.5)
    p["gcn0_b"] = jnp.zeros((hid,), F32)
    p["gcn1_w"] = jax.random.normal(next(keys), (hid, hid), F32) * (1.0 / hid ** 0.5)
    p["gcn1_b"] = jnp.zeros((hid,), F32)
    p["g_lin1"] = lin(hid, hid)
    g1, b1 = norm_params(hid)
    p["g_bn1"] = (g1, b1, 0.1 * jax.random.normal(next(keys), (hid,), F32),
                  1.0 + 0.1 * jax.random.uniform(next(keys), (hid,), F32))
    # Head: fc = Linear(2*hid, out) + Tanh ; projection = Linear->ReLU->Linear
    p["fc"] = lin(2 * hid, out_ch)
    p["proj1"] = lin(out_ch, mid)
    p["proj2"] = lin(mid, proj_dim)
    return p


# ----------------------------------------------------------------------------
# SGFormer forward (eval mode, return_projection=True)
# ----------------------------------------------------------------------------

def sgformer_forward(p, x, edge_index, edge_type, edge_weight, *,
                     alpha=0.5, heads=1, tm=512, tk=512, eps_ln=1e-5):
    N, in_ch = x.shape
    hid = p["t_fc0"][0].shape[1]
    C = hid                                    # per-head channels == hidden
    HC = heads * C

    Np = _round_up(N, tm)
    Kin = _round_up(in_ch, 128)                # fill the MXU contraction dim
    nt = Np // tm

    # largest multiple of tm that divides Np and does not exceed the requested tk
    tk_mult = 1
    for cand in range(min(nt, max(1, tk // tm)), 0, -1):
        if nt % cand == 0:
            tk_mult = cand
            break
    tk_eff = tk_mult * tm

    # one-shot pad (rows -> Np, features -> Kin) + bf16 cast; everything downstream
    # stays at Np rows, only the final projection is sliced back to N.
    xp = jnp.pad(x, ((0, Np - N), (0, Kin - in_ch))).astype(BF16)

    def pad_in_w(w):
        return jnp.pad(w, ((0, Kin - in_ch), (0, 0))).astype(BF16)

    # ---- Transformer branch (TransConv, trans_num_layers=1) ----
    # fcs[0] + LayerNorm + ReLU (dropout = identity in eval), fused in one kernel
    layer0 = linear_ln(xp, pad_in_w(p["t_fc0"][0]), p["t_fc0"][1],
                       *p["t_ln0"], relu=True, eps=eps_ln, tm=tm)
    # packed [Wq | Wv | Wk] so phase-2 only ever streams (q, v)
    w_qvk = jnp.concatenate([p["t_Wq"][0], p["t_Wv"][0], p["t_Wk"][0]],
                            axis=1).astype(BF16)
    b_qvk = jnp.concatenate([p["t_Wq"][1], p["t_Wv"][1], p["t_Wk"][1]], axis=0)
    qv, kk = qvk_project(layer0, w_qvk, b_qvk, HC=HC, tm=tm)

    # phase 1 (global reductions, split across TensorCores when possible)
    split = 2 if (nt >= 2 and nt % 2 == 0) else 1
    kv_parts, aux_parts = attention_stats(qv, kk, num_heads=heads, C=C,
                                          n_true=N, tm=tm, split=split)
    kv = kv_parts.reshape(split, HC, C).sum(axis=0)
    aux = aux_parts.reshape(split, 8, HC).sum(axis=0)
    # phase 2 (rows, fused residual-mix + LN + ReLU)
    x_trans = attention_mix_ln(qv, layer0, kv, aux, *p["t_ln1"],
                               num_heads=heads, C=C, n_true=N,
                               alpha=alpha, eps=eps_ln, tm=tm)

    # ---- Hetero GCN branch (gnn_num_layers=1) ----
    # lins[0] + eval-BatchNorm folded + ReLU -> one kernel
    w0f, b0f = fold_bn(*p["g_lin0"], *p["g_bn0"])
    g = linear(xp, pad_in_w(w0f), b0f, act="relu", tm=tm)
    # XW for both edge types with one matmul, emitted directly in stacked layout
    w_cat = jnp.concatenate([p["gcn0_w"], p["gcn1_w"]], axis=1).astype(BF16)
    xw = gcn_xw(g, w_cat, hid=hid, tm=tm)                       # (2, Np, hid) bf16

    a_st = build_gcn_adj_stacked(edge_index, edge_type, edge_weight, N, Np)
    b_comb = p["gcn0_b"] + p["gcn1_b"]
    w1f, b1f = fold_bn(*p["g_lin1"], *p["g_bn1"])
    # HeteroConv(sum) + biases + residual + lins[1] (BN folded) + ReLU: one kernel
    x_graph = gcn_propagate(a_st, xw, g, b_comb, w1f.astype(BF16), b1f,
                            tm=tm, tk=tk_eff)

    # ---- Head (fc + Tanh + L2norm + projection MLP + L2norm, fully fused) ----
    proj = head_projection(x_trans, x_graph,
                           p["fc"][0].astype(BF16), p["fc"][1],
                           p["proj1"][0].astype(BF16), p["proj1"][1],
                           p["proj2"][0].astype(BF16), p["proj2"][1], tm=tm)
    return proj[:N]


# ----------------------------------------------------------------------------
# Example run
# ----------------------------------------------------------------------------

if __name__ == "__main__":
    # lane-dense small example: hid = C = out_ch = proj_dim = 128; N not a
    # multiple of the row tile to exercise the padded-row masking path.
    N, E = 200, 512
    in_ch, hid, out_ch, proj_dim, heads = 64, 128, 128, 128, 1
    tm = 128          # small graph: keeps >=2 parallel row tiles (v7x dual-TC)

    key = jax.random.PRNGKey(0)
    kx, ks, ko, kt, kw, kp = jax.random.split(key, 6)

    x = jax.random.normal(kx, (N, in_ch), F32)
    src = jax.random.randint(ks, (E,), 0, N)
    off = jax.random.randint(ko, (E,), 1, N)        # ensure no self loops in the data
    dst = (src + off) % N
    edge_index = jnp.stack([src, dst]).astype(jnp.int32)
    edge_type = jax.random.randint(kt, (E,), 0, 2).astype(jnp.int32)
    edge_weight = jax.random.uniform(kw, (E,), F32, 0.5, 1.5)

    params = init_params(kp, in_ch, hid, out_ch, proj_dim, heads)

    fwd = jax.jit(functools.partial(sgformer_forward, alpha=0.5, heads=heads,
                                    tm=tm, tk=256))
    proj = fwd(params, x, edge_index, edge_type, edge_weight)
    jax.block_until_ready(proj)
    assert proj.shape == (N, proj_dim)
    assert bool(jnp.all(jnp.isfinite(proj)))
    print("KERNEL_OK")
</pallas_src>

<mosaic_0001>
module attributes {stable_mosaic.version = 11 : i64} {
  func.func private @main(%arg0: i32) attributes {dimension_semantics = [#tpu.dimension_semantics<core_parallel>], iteration_bounds = array<i64: 2>, tpu.core_type = #tpu.core_type<sc_scalar_subcore>, window_params = []} {
    return
  }
}

module attributes {stable_mosaic.version = 11 : i64} {
  func.func private @main(%arg0: i32) attributes {dimension_semantics = [#tpu.dimension_semantics<core_parallel>], iteration_bounds = array<i64: 2>, tpu.core_type = #tpu.core_type<sc_scalar_subcore>, window_params = []} {
    return
  }
}

module attributes {stable_mosaic.version = 11 : i64} {
  func.func @_linear_ln_kernel(%arg0: i32, %arg1: memref<128x128xbf16, #tpu.memory_space<vmem>>, %arg2: memref<128x128xbf16, #tpu.memory_space<vmem>>, %arg3: memref<1x128xf32, #tpu.memory_space<vmem>>, %arg4: memref<1x128xf32, #tpu.memory_space<vmem>>, %arg5: memref<1x128xf32, #tpu.memory_space<vmem>>, %arg6: memref<128x128xbf16, #tpu.memory_space<vmem>>) attributes {dimension_semantics = [#tpu.dimension_semantics<parallel>], iteration_bounds = array<i64: 2>, scalar_prefetch = 0 : i64, scratch_operands = 0 : i64, tpu.core_type = #tpu.core_type<tc>, window_params = [{transform_indices = @transform_0, window_bounds = array<i64: 128, 128>}, {pipeline_mode = #tpu.pipeline_mode<synchronous>, transform_indices = @transform_1, window_bounds = array<i64: 128, 128>}, {pipeline_mode = #tpu.pipeline_mode<synchronous>, transform_indices = @transform_2, window_bounds = array<i64: 1, 128>}, {pipeline_mode = #tpu.pipeline_mode<synchronous>, transform_indices = @transform_3, window_bounds = array<i64: 1, 128>}, {pipeline_mode = #tpu.pipeline_mode<synchronous>, transform_indices = @transform_4, window_bounds = array<i64: 1, 128>}, {transform_indices = @transform_5, window_bounds = array<i64: 128, 128>}]} {
    %c0 = arith.constant 0 : index
    %c0_0 = arith.constant 0 : index
    %0 = vector.load %arg1[%c0, %c0_0] : memref<128x128xbf16, #tpu.memory_space<vmem>>, vector<128x128xbf16>
    %c0_1 = arith.constant 0 : index
    %c0_2 = arith.constant 0 : index
    %1 = vector.load %arg2[%c0_1, %c0_2] : memref<128x128xbf16, #tpu.memory_space<vmem>>, vector<128x128xbf16>
    %cst = arith.constant dense<0.000000e+00> : vector<128x128xf32>
    %2 = tpu.matmul %0, %1, %cst {dimension_numbers = #tpu.dot_dimension_numbers<[1], [0], [0], [1], [0, 0, 1, 1], [], []>} : vector<128x128xbf16>, vector<128x128xbf16>, vector<128x128xf32> -> vector<128x128xf32>
    %c0_3 = arith.constant 0 : index
    %c0_4 = arith.constant 0 : index
    %3 = vector.load %arg3[%c0_3, %c0_4] : memref<1x128xf32, #tpu.memory_space<vmem>>, vector<1x128xf32>
    %4 = vector.broadcast %3 : vector<1x128xf32> to vector<128x128xf32>
    %5 = arith.addf %2, %4 : vector<128x128xf32>
    %cst_5 = arith.constant dense<0.000000e+00> : vector<128xf32>
    %6 = vector.multi_reduction <add>, %5, %cst_5 [1] : vector<128x128xf32> to vector<128xf32>
    %7 = vector.shape_cast %6 : vector<128xf32> to vector<128x1xf32>
    %cst_6 = arith.constant 1.280000e+02 : f32
    %8 = vector.broadcast %cst_6 : f32 to vector<128x1xf32>
    %9 = arith.divf %7, %8 : vector<128x1xf32>
    %10 = vector.broadcast %9 : vector<128x1xf32> to vector<128x128xf32>
    %11 = arith.subf %5, %10 : vector<128x128xf32>
    %12 = arith.mulf %11, %11 : vector<128x128xf32>
    %cst_7 = arith.constant dense<0.000000e+00> : vector<128xf32>
    %13 = vector.multi_reduction <add>, %12, %cst_7 [1] : vector<128x128xf32> to vector<128xf32>
    %14 = vector.shape_cast %13 : vector<128xf32> to vector<128x1xf32>
    %cst_8 = arith.constant 1.280000e+02 : f32
    %15 = vector.broadcast %cst_8 : f32 to vector<128x1xf32>
    %16 = arith.divf %14, %15 : vector<128x1xf32>
    %cst_9 = arith.constant 9.99999974E-6 : f32
    %17 = vector.broadcast %cst_9 : f32 to vector<128x1xf32>
    %18 = arith.addf %16, %17 : vector<128x1xf32>
    %19 = math.rsqrt %18 : vector<128x1xf32>
    %20 = vector.broadcast %19 : vector<128x1xf32> to vector<128x128xf32>
    %21 = arith.mulf %11, %20 : vector<128x128xf32>
    %c0_10 = arith.constant 0 : index
    %c0_11 = arith.constant 0 : index
    %22 = vector.load %arg4[%c0_10, %c0_11] : memref<1x128xf32, #tpu.memory_space<vmem>>, vector<1x128xf32>
    %23 = vector.broadcast %22 : vector<1x128xf32> to vector<128x128xf32>
    %24 = arith.mulf %21, %23 : vector<128x128xf32>
    %c0_12 = arith.constant 0 : index
    %c0_13 = arith.constant 0 : index
    %25 = vector.load %arg5[%c0_12, %c0_13] : memref<1x128xf32, #tpu.memory_space<vmem>>, vector<1x128xf32>
    %26 = vector.broadcast %25 : vector<1x128xf32> to vector<128x128xf32>
    %27 = arith.addf %24, %26 : vector<128x128xf32>
    %cst_14 = arith.constant 0.000000e+00 : f32
    %28 = vector.broadcast %cst_14 : f32 to vector<128x128xf32>
    %29 = arith.maximumf %27, %28 : vector<128x128xf32>
    %30 = arith.truncf %29 : vector<128x128xf32> to vector<128x128xbf16>
    %c0_15 = arith.constant 0 : index
    %c0_16 = arith.constant 0 : index
    %31 = vector.load %arg6[%c0_15, %c0_16] : memref<128x128xbf16, #tpu.memory_space<vmem>>, vector<128x128xbf16>
    tpu.vector_store %arg6[%c0_15, %c0_16], %30 {strides = array<i32>} : memref<128x128xbf16, #tpu.memory_space<vmem>>, vector<128x128xbf16>,
    return
  }
  func.func @transform_0(%arg0: i32) -> (i32, i32) {
    %c0_i32 = arith.constant 0 : i32
    %c0_i32_0 = arith.constant 0 : i32
    return %arg0, %c0_i32 : i32, i32
  }
  func.func @transform_1(%arg0: i32) -> (i32, i32) {
    %c0_i32 = arith.constant 0 : i32
    %c0_i32_0 = arith.constant 0 : i32
    %c0_i32_1 = arith.constant 0 : i32
    return %c0_i32, %c0_i32_0 : i32, i32
  }
  func.func @transform_2(%arg0: i32) -> (i32, i32) {
    %c0_i32 = arith.constant 0 : i32
    %c0_i32_0 = arith.constant 0 : i32
    %c0_i32_1 = arith.constant 0 : i32
    return %c0_i32, %c0_i32_0 : i32, i32
  }
  func.func @transform_3(%arg0: i32) -> (i32, i32) {
    %c0_i32 = arith.constant 0 : i32
    %c0_i32_0 = arith.constant 0 : i32
    %c0_i32_1 = arith.constant 0 : i32
    return %c0_i32, %c0_i32_0 : i32, i32
  }
  func.func @transform_4(%arg0: i32) -> (i32, i32) {
    %c0_i32 = arith.constant 0 : i32
    %c0_i32_0 = arith.constant 0 : i32
    %c0_i32_1 = arith.constant 0 : i32
    return %c0_i32, %c0_i32_0 : i32, i32
  }
  func.func @transform_5(%arg0: i32) -> (i32, i32) {
    %c0_i32 = arith.constant 0 : i32
    %c0_i32_0 = arith.constant 0 : i32
    return %arg0, %c0_i32 : i32, i32
  }
}

module attributes {stable_mosaic.version = 11 : i64} {
  func.func @_qvk_kernel(%arg0: i32, %arg1: memref<128x128xbf16, #tpu.memory_space<vmem>>, %arg2: memref<128x384xbf16, #tpu.memory_space<vmem>>, %arg3: memref<1x384xf32, #tpu.memory_space<vmem>>, %arg4: memref<128x256xbf16, #tpu.memory_space<vmem>>, %arg5: memref<128x128xbf16, #tpu.memory_space<vmem>>) attributes {dimension_semantics = [#tpu.dimension_semantics<parallel>], iteration_bounds = array<i64: 2>, scalar_prefetch = 0 : i64, scratch_operands = 0 : i64, tpu.core_type = #tpu.core_type<tc>, window_params = [{transform_indices = @transform_0, window_bounds = array<i64: 128, 128>}, {pipeline_mode = #tpu.pipeline_mode<synchronous>, transform_indices = @transform_1, window_bounds = array<i64: 128, 384>}, {pipeline_mode = #tpu.pipeline_mode<synchronous>, transform_indices = @transform_2, window_bounds = array<i64: 1, 384>}, {transform_indices = @transform_3, window_bounds = array<i64: 128, 256>}, {transform_indices = @transform_4, window_bounds = array<i64: 128, 128>}]} {
    %c0 = arith.constant 0 : index
    %c0_0 = arith.constant 0 : index
    %0 = vector.load %arg1[%c0, %c0_0] : memref<128x128xbf16, #tpu.memory_space<vmem>>, vector<128x128xbf16>
    %c0_1 = arith.constant 0 : index
    %c0_2 = arith.constant 0 : index
    %1 = vector.load %arg2[%c0_1, %c0_2] : memref<128x384xbf16, #tpu.memory_space<vmem>>, vector<128x384xbf16>
    %cst = arith.constant dense<0.000000e+00> : vector<128x384xf32>
    %2 = tpu.matmul %0, %1, %cst {dimension_numbers = #tpu.dot_dimension_numbers<[1], [0], [0], [1], [0, 0, 1, 1], [], []>} : vector<128x128xbf16>, vector<128x384xbf16>, vector<128x384xf32> -> vector<128x384xf32>
    %c0_3 = arith.constant 0 : index
    %c0_4 = arith.constant 0 : index
    %3 = vector.load %arg3[%c0_3, %c0_4] : memref<1x384xf32, #tpu.memory_space<vmem>>, vector<1x384xf32>
    %4 = vector.broadcast %3 : vector<1x384xf32> to vector<128x384xf32>
    %5 = arith.addf %2, %4 : vector<128x384xf32>
    %6 = vector.extract_strided_slice %5 {offsets = [0, 0], sizes = [128, 256], strides = [1, 1]} : vector<128x384xf32> to vector<128x256xf32>
    %7 = arith.truncf %6 : vector<128x256xf32> to vector<128x256xbf16>
    %c0_5 = arith.constant 0 : index
    %c0_6 = arith.constant 0 : index
    %8 = vector.load %arg4[%c0_5, %c0_6] : memref<128x256xbf16, #tpu.memory_space<vmem>>, vector<128x256xbf16>
    tpu.vector_store %arg4[%c0_5, %c0_6], %7 {strides = array<i32>} : memref<128x256xbf16, #tpu.memory_space<vmem>>, vector<128x256xbf16>,
    %9 = vector.extract_strided_slice %5 {offsets = [0, 256], sizes = [128, 128], strides = [1, 1]} : vector<128x384xf32> to vector<128x128xf32>
    %10 = arith.truncf %9 : vector<128x128xf32> to vector<128x128xbf16>
    %c0_7 = arith.constant 0 : index
    %c0_8 = arith.constant 0 : index
    %11 = vector.load %arg5[%c0_7, %c0_8] : memref<128x128xbf16, #tpu.memory_space<vmem>>, vector<128x128xbf16>
    tpu.vector_store %arg5[%c0_7, %c0_8], %10 {strides = array<i32>} : memref<128x128xbf16, #tpu.memory_space<vmem>>, vector<128x128xbf16>,
    return
  }
  func.func @transform_0(%arg0: i32) -> (i32, i32) {
    %c0_i32 = arith.constant 0 : i32
    %c0_i32_0 = arith.constant 0 : i32
    return %arg0, %c0_i32 : i32, i32
  }
  func.func @transform_1(%arg0: i32) -> (i32, i32) {
    %c0_i32 = arith.constant 0 : i32
    %c0_i32_0 = arith.constant 0 : i32
    %c0_i32_1 = arith.constant 0 : i32
    return %c0_i32, %c0_i32_0 : i32, i32
  }
  func.func @transform_2(%arg0: i32) -> (i32, i32) {
    %c0_i32 = arith.constant 0 : i32
    %c0_i32_0 = arith.constant 0 : i32
    %c0_i32_1 = arith.constant 0 : i32
    return %c0_i32, %c0_i32_0 : i32, i32
  }
  func.func @transform_3(%arg0: i32) -> (i32, i32) {
    %c0_i32 = arith.constant 0 : i32
    %c0_i32_0 = arith.constant 0 : i32
    return %arg0, %c0_i32 : i32, i32
  }
  func.func @transform_4(%arg0: i32) -> (i32, i32) {
    %c0_i32 = arith.constant 0 : i32
    %c0_i32_0 = arith.constant 0 : i32
    return %arg0, %c0_i32 : i32, i32
  }
}

module attributes {stable_mosaic.version = 11 : i64} {
  func.func @_attn_stats_kernel(%arg0: i32, %arg1: i32, %arg2: memref<128x256xbf16, #tpu.memory_space<vmem>>, %arg3: memref<128x128xbf16, #tpu.memory_space<vmem>>, %arg4: memref<128x128xf32, #tpu.memory_space<vmem>>, %arg5: memref<8x128xf32, #tpu.memory_space<vmem>>) attributes {dimension_semantics = [#tpu.dimension_semantics<parallel>, #tpu.dimension_semantics<arbitrary>], iteration_bounds = array<i64: 2, 1>, scalar_prefetch = 0 : i64, scratch_operands = 0 : i64, tpu.core_type = #tpu.core_type<tc>, window_params = [{transform_indices = @transform_0, window_bounds = array<i64: 128, 256>}, {transform_indices = @transform_1, window_bounds = array<i64: 128, 128>}, {transform_indices = @transform_2, window_bounds = array<i64: 128, 128>}, {transform_indices = @transform_3, window_bounds = array<i64: 8, 128>}]} {
    %c0_i32 = arith.constant 0 : i32
    %0 = arith.cmpi eq, %arg1, %c0_i32 : i32
    %1 = arith.extui %0 : i1 to i32
    %c0_i32_0 = arith.constant 0 : i32
    %2 = arith.cmpi ne, %1, %c0_i32_0 : i32
    scf.if %2 {
      %cst_21 = arith.constant 0.000000e+00 : f32
      %49 = vector.broadcast %cst_21 : f32 to vector<128x128xf32>
      %c0_22 = arith.constant 0 : index
      %c0_23 = arith.constant 0 : index
      %50 = vector.load %arg4[%c0_22, %c0_23] : memref<128x128xf32, #tpu.memory_space<vmem>>, vector<128x128xf32>
      tpu.vector_store %arg4[%c0_22, %c0_23], %49 {strides = array<i32>} : memref<128x128xf32, #tpu.memory_space<vmem>>, vector<128x128xf32>,
      %cst_24 = arith.constant 0.000000e+00 : f32
      %51 = vector.broadcast %cst_24 : f32 to vector<8x128xf32>
      %c0_25 = arith.constant 0 : index
      %c0_26 = arith.constant 0 : index
      %52 = vector.load %arg5[%c0_25, %c0_26] : memref<8x128xf32, #tpu.memory_space<vmem>>, vector<8x128xf32>
      tpu.vector_store %arg5[%c0_25, %c0_26], %51 {strides = array<i32>} : memref<8x128xf32, #tpu.memory_space<vmem>>, vector<8x128xf32>,
    } else {
    }
    %c1_i32 = arith.constant 1 : i32
    %3 = arith.muli %arg0, %c1_i32 : i32
    %4 = arith.addi %3, %arg1 : i32
    %c128_i32 = arith.constant 128 : i32
    %5 = arith.muli %4, %c128_i32 : i32
    %6 = tpu.iota {dimensions = array<i32: 0>} : vector<128x1xi32>
    %7 = vector.broadcast %5 : i32 to vector<128x1xi32>
    %8 = arith.addi %7, %6 : vector<128x1xi32>
    %c200_i32 = arith.constant 200 : i32
    %9 = vector.broadcast %c200_i32 : i32 to vector<128x1xi32>
    %10 = arith.cmpi slt, %8, %9 : vector<128x1xi32>
    %11 = arith.extui %10 : vector<128x1xi1> to vector<128x1xi32>
    %12 = arith.sitofp %11 : vector<128x1xi32> to vector<128x1xf32>
    %c0 = arith.constant 0 : index
    %c0_1 = arith.constant 0 : index
    %13 = vector.load %arg2[%c0, %c0_1] : memref<128x256xbf16, #tpu.memory_space<vmem>>, vector<128x256xbf16>
    %c0_2 = arith.constant 0 : index
    %c0_3 = arith.constant 0 : index
    %14 = vector.load %arg3[%c0_2, %c0_3] : memref<128x128xbf16, #tpu.memory_space<vmem>>, vector<128x128xbf16>
    %15 = vector.extract_strided_slice %13 {offsets = [0, 0], sizes = [128, 128], strides = [1, 1]} : vector<128x256xbf16> to vector<128x128xbf16>
    %16 = arith.extf %15 : vector<128x128xbf16> to vector<128x128xf32>
    %17 = vector.broadcast %12 : vector<128x1xf32> to vector<128x128xf32>
    %18 = arith.mulf %16, %17 : vector<128x128xf32>
    %19 = arith.extf %14 : vector<128x128xbf16> to vector<128x128xf32>
    %20 = vector.broadcast %12 : vector<128x1xf32> to vector<128x128xf32>
    %21 = arith.mulf %19, %20 : vector<128x128xf32>
    %22 = arith.extui %10 : vector<128x1xi1> to vector<128x1xi32>
    %23 = arith.sitofp %22 : vector<128x1xi32> to vector<128x1xf32>
    %24 = arith.truncf %23 : vector<128x1xf32> to vector<128x1xbf16>
    %25 = vector.broadcast %24 : vector<128x1xbf16> to vector<128x128xbf16>
    %26 = arith.mulf %14, %25 : vector<128x128xbf16>
    %27 = vector.extract_strided_slice %13 {offsets = [0, 128], sizes = [128, 128], strides = [1, 1]} : vector<128x256xbf16> to vector<128x128xbf16>
    %c0_4 = arith.constant 0 : index
    %c0_5 = arith.constant 0 : index
    %28 = vector.load %arg5[%c0_4, %c0_5] : memref<8x128xf32, #tpu.memory_space<vmem>>, vector<1x128xf32>
    %cst = arith.constant dense<0.000000e+00> : vector<128xf32>
    %29 = vector.multi_reduction <add>, %21, %cst [0] : vector<128x128xf32> to vector<128xf32>
    %30 = vector.shape_cast %29 : vector<128xf32> to vector<1x128xf32>
    %31 = arith.addf %28, %30 : vector<1x128xf32>
    %c0_6 = arith.constant 0 : index
    %c0_7 = arith.constant 0 : index
    %32 = vector.load %arg5[%c0_6, %c0_7] : memref<8x128xf32, #tpu.memory_space<vmem>>, vector<1x128xf32>
    tpu.vector_store %arg5[%c0_6, %c0_7], %31 {strides = array<i32>} : memref<8x128xf32, #tpu.memory_space<vmem>>, vector<1x128xf32>,
    %c1 = arith.constant 1 : index
    %c0_8 = arith.constant 0 : index
    %33 = vector.load %arg5[%c1, %c0_8] : memref<8x128xf32, #tpu.memory_space<vmem>>, vector<1x128xf32>
    %34 = arith.mulf %18, %18 : vector<128x128xf32>
    %cst_9 = arith.constant dense<0.000000e+00> : vector<128xf32>
    %35 = vector.multi_reduction <add>, %34, %cst_9 [0] : vector<128x128xf32> to vector<128xf32>
    %36 = vector.shape_cast %35 : vector<128xf32> to vector<1x128xf32>
    %37 = arith.addf %33, %36 : vector<1x128xf32>
    %c1_10 = arith.constant 1 : index
    %c0_11 = arith.constant 0 : index
    %38 = vector.load %arg5[%c1_10, %c0_11] : memref<8x128xf32, #tpu.memory_space<vmem>>, vector<1x128xf32>
    tpu.vector_store %arg5[%c1_10, %c0_11], %37 {strides = array<i32>} : memref<8x128xf32, #tpu.memory_space<vmem>>, vector<1x128xf32>,
    %c2 = arith.constant 2 : index
    %c0_12 = arith.constant 0 : index
    %39 = vector.load %arg5[%c2, %c0_12] : memref<8x128xf32, #tpu.memory_space<vmem>>, vector<1x128xf32>
    %40 = arith.mulf %21, %21 : vector<128x128xf32>
    %cst_13 = arith.constant dense<0.000000e+00> : vector<128xf32>
    %41 = vector.multi_reduction <add>, %40, %cst_13 [0] : vector<128x128xf32> to vector<128xf32>
    %42 = vector.shape_cast %41 : vector<128xf32> to vector<1x128xf32>
    %43 = arith.addf %39, %42 : vector<1x128xf32>
    %c2_14 = arith.constant 2 : index
    %c0_15 = arith.constant 0 : index
    %44 = vector.load %arg5[%c2_14, %c0_15] : memref<8x128xf32, #tpu.memory_space<vmem>>, vector<1x128xf32>
    tpu.vector_store %arg5[%c2_14, %c0_15], %43 {strides = array<i32>} : memref<8x128xf32, #tpu.memory_space<vmem>>, vector<1x128xf32>,
    %cst_16 = arith.constant dense<0.000000e+00> : vector<128x128xf32>
    %45 = tpu.matmul %26, %27, %cst_16 {dimension_numbers = #tpu.dot_dimension_numbers<[0], [0], [1], [1], [0, 1, 1, 1], [], []>} : vector<128x128xbf16>, vector<128x128xbf16>, vector<128x128xf32> -> vector<128x128xf32>
    %c0_17 = arith.constant 0 : index
    %c0_18 = arith.constant 0 : index
    %46 = vector.load %arg4[%c0_17, %c0_18] : memref<128x128xf32, #tpu.memory_space<vmem>>, vector<128x128xf32>
    %47 = arith.addf %46, %45 : vector<128x128xf32>
    %c0_19 = arith.constant 0 : index
    %c0_20 = arith.constant 0 : index
    %48 = vector.load %arg4[%c0_19, %c0_20] : memref<128x128xf32, #tpu.memory_space<vmem>>, vector<128x128xf32>
    tpu.vector_store %arg4[%c0_19, %c0_20], %47 {strides = array<i32>} : memref<128x128xf32, #tpu.memory_space<vmem>>, vector<128x128xf32>,
    return
  }
  func.func @transform_0(%arg0: i32, %arg1: i32) -> (i32, i32) {
    %c1_i32 = arith.constant 1 : i32
    %0 = arith.muli %arg0, %c1_i32 : i32
    %1 = arith.addi %0, %arg1 : i32
    %c0_i32 = arith.constant 0 : i32
    %c0_i32_0 = arith.constant 0 : i32
    return %1, %c0_i32 : i32, i32
  }
  func.func @transform_1(%arg0: i32, %arg1: i32) -> (i32, i32) {
    %c1_i32 = arith.constant 1 : i32
    %0 = arith.muli %arg0, %c1_i32 : i32
    %1 = arith.addi %0, %arg1 : i32
    %c0_i32 = arith.constant 0 : i32
    %c0_i32_0 = arith.constant 0 : i32
    return %1, %c0_i32 : i32, i32
  }
  func.func @transform_2(%arg0: i32, %arg1: i32) -> (i32, i32) {
    %c0_i32 = arith.constant 0 : i32
    %c0_i32_0 = arith.constant 0 : i32
    return %arg0, %c0_i32 : i32, i32
  }
  func.func @transform_3(%arg0: i32, %arg1: i32) -> (i32, i32) {
    %c0_i32 = arith.constant 0 : i32
    %c0_i32_0 = arith.constant 0 : i32
    return %arg0, %c0_i32 : i32, i32
  }
}

module attributes {stable_mosaic.version = 11 : i64} {
  func.func @_linear_kernel(%arg0: i32, %arg1: memref<128x128xbf16, #tpu.memory_space<vmem>>, %arg2: memref<128x128xbf16, #tpu.memory_space<vmem>>, %arg3: memref<1x128xf32, #tpu.memory_space<vmem>>, %arg4: memref<128x128xbf16, #tpu.memory_space<vmem>>) attributes {dimension_semantics = [#tpu.dimension_semantics<parallel>], iteration_bounds = array<i64: 2>, scalar_prefetch = 0 : i64, scratch_operands = 0 : i64, tpu.core_type = #tpu.core_type<tc>, window_params = [{transform_indices = @transform_0, window_bounds = array<i64: 128, 128>}, {pipeline_mode = #tpu.pipeline_mode<synchronous>, transform_indices = @transform_1, window_bounds = array<i64: 128, 128>}, {pipeline_mode = #tpu.pipeline_mode<synchronous>, transform_indices = @transform_2, window_bounds = array<i64: 1, 128>}, {transform_indices = @transform_3, window_bounds = array<i64: 128, 128>}]} {
    %c0 = arith.constant 0 : index
    %c0_0 = arith.constant 0 : index
    %0 = vector.load %arg1[%c0, %c0_0] : memref<128x128xbf16, #tpu.memory_space<vmem>>, vector<128x128xbf16>
    %c0_1 = arith.constant 0 : index
    %c0_2 = arith.constant 0 : index
    %1 = vector.load %arg2[%c0_1, %c0_2] : memref<128x128xbf16, #tpu.memory_space<vmem>>, vector<128x128xbf16>
    %cst = arith.constant dense<0.000000e+00> : vector<128x128xf32>
    %2 = tpu.matmul %0, %1, %cst {dimension_numbers = #tpu.dot_dimension_numbers<[1], [0], [0], [1], [0, 0, 1, 1], [], []>} : vector<128x128xbf16>, vector<128x128xbf16>, vector<128x128xf32> -> vector<128x128xf32>
    %c0_3 = arith.constant 0 : index
    %c0_4 = arith.constant 0 : index
    %3 = vector.load %arg3[%c0_3, %c0_4] : memref<1x128xf32, #tpu.memory_space<vmem>>, vector<1x128xf32>
    %4 = vector.broadcast %3 : vector<1x128xf32> to vector<128x128xf32>
    %5 = arith.addf %2, %4 : vector<128x128xf32>
    %cst_5 = arith.constant 0.000000e+00 : f32
    %6 = vector.broadcast %cst_5 : f32 to vector<128x128xf32>
    %7 = arith.maximumf %5, %6 : vector<128x128xf32>
    %8 = arith.truncf %7 : vector<128x128xf32> to vector<128x128xbf16>
    %c0_6 = arith.constant 0 : index
    %c0_7 = arith.constant 0 : index
    %9 = vector.load %arg4[%c0_6, %c0_7] : memref<128x128xbf16, #tpu.memory_space<vmem>>, vector<128x128xbf16>
    tpu.vector_store %arg4[%c0_6, %c0_7], %8 {strides = array<i32>} : memref<128x128xbf16, #tpu.memory_space<vmem>>, vector<128x128xbf16>,
    return
  }
  func.func @transform_0(%arg0: i32) -> (i32, i32) {
    %c0_i32 = arith.constant 0 : i32
    %c0_i32_0 = arith.constant 0 : i32
    return %arg0, %c0_i32 : i32, i32
  }
  func.func @transform_1(%arg0: i32) -> (i32, i32) {
    %c0_i32 = arith.constant 0 : i32
    %c0_i32_0 = arith.constant 0 : i32
    %c0_i32_1 = arith.constant 0 : i32
    return %c0_i32, %c0_i32_0 : i32, i32
  }
  func.func @transform_2(%arg0: i32) -> (i32, i32) {
    %c0_i32 = arith.constant 0 : i32
    %c0_i32_0 = arith.constant 0 : i32
    %c0_i32_1 = arith.constant 0 : i32
    return %c0_i32, %c0_i32_0 : i32, i32
  }
  func.func @transform_3(%arg0: i32) -> (i32, i32) {
    %c0_i32 = arith.constant 0 : i32
    %c0_i32_0 = arith.constant 0 : i32
    return %arg0, %c0_i32 : i32, i32
  }
}

module attributes {stable_mosaic.version = 11 : i64} {
  func.func @_xw_kernel(%arg0: i32, %arg1: memref<128x128xbf16, #tpu.memory_space<vmem>>, %arg2: memref<128x256xbf16, #tpu.memory_space<vmem>>, %arg3: memref<2x128x128xbf16, #tpu.memory_space<vmem>>) attributes {dimension_semantics = [#tpu.dimension_semantics<parallel>], iteration_bounds = array<i64: 2>, scalar_prefetch = 0 : i64, scratch_operands = 0 : i64, tpu.core_type = #tpu.core_type<tc>, window_params = [{transform_indices = @transform_0, window_bounds = array<i64: 128, 128>}, {pipeline_mode = #tpu.pipeline_mode<synchronous>, transform_indices = @transform_1, window_bounds = array<i64: 128, 256>}, {transform_indices = @transform_2, window_bounds = array<i64: 2, 128, 128>}]} {
    %c0 = arith.constant 0 : index
    %c0_0 = arith.constant 0 : index
    %0 = vector.load %arg1[%c0, %c0_0] : memref<128x128xbf16, #tpu.memory_space<vmem>>, vector<128x128xbf16>
    %c0_1 = arith.constant 0 : index
    %c0_2 = arith.constant 0 : index
    %1 = vector.load %arg2[%c0_1, %c0_2] : memref<128x256xbf16, #tpu.memory_space<vmem>>, vector<128x256xbf16>
    %cst = arith.constant dense<0.000000e+00> : vector<128x256xf32>
    %2 = tpu.matmul %0, %1, %cst {dimension_numbers = #tpu.dot_dimension_numbers<[1], [0], [0], [1], [0, 0, 1, 1], [], []>} : vector<128x128xbf16>, vector<128x256xbf16>, vector<128x256xf32> -> vector<128x256xf32>
    %3 = vector.extract_strided_slice %2 {offsets = [0, 0], sizes = [128, 128], strides = [1, 1]} : vector<128x256xf32> to vector<128x128xf32>
    %4 = arith.truncf %3 : vector<128x128xf32> to vector<128x128xbf16>
    %c0_3 = arith.constant 0 : index
    %c0_4 = arith.constant 0 : index
    %c0_5 = arith.constant 0 : index
    %5 = vector.load %arg3[%c0_3, %c0_4, %c0_5] : memref<2x128x128xbf16, #tpu.memory_space<vmem>>, vector<1x128x128xbf16>
    %6 = vector.shape_cast %5 : vector<1x128x128xbf16> to vector<128x128xbf16>
    %7 = vector.shape_cast %4 : vector<128x128xbf16> to vector<1x128x128xbf16>
    tpu.vector_store %arg3[%c0_3, %c0_4, %c0_5], %7 {strides = array<i32>} : memref<2x128x128xbf16, #tpu.memory_space<vmem>>, vector<1x128x128xbf16>,
    %8 = vector.extract_strided_slice %2 {offsets = [0, 128], sizes = [128, 128], strides = [1, 1]} : vector<128x256xf32> to vector<128x128xf32>
    %9 = arith.truncf %8 : vector<128x128xf32> to vector<128x128xbf16>
    %c1 = arith.constant 1 : index
    %c0_6 = arith.constant 0 : index
    %c0_7 = arith.constant 0 : index
    %10 = vector.load %arg3[%c1, %c0_6, %c0_7] : memref<2x128x128xbf16, #tpu.memory_space<vmem>>, vector<1x128x128xbf16>
    %11 = vector.shape_cast %10 : vector<1x128x128xbf16> to vector<128x128xbf16>
    %12 = vector.shape_cast %9 : vector<128x128xbf16> to vector<1x128x128xbf16>
    tpu.vector_store %arg3[%c1, %c0_6, %c0_7], %12 {strides = array<i32>} : memref<2x128x128xbf16, #tpu.memory_space<vmem>>, vector<1x128x128xbf16>,
    return
  }
  func.func @transform_0(%arg0: i32) -> (i32, i32) {
    %c0_i32 = arith.constant 0 : i32
    %c0_i32_0 = arith.constant 0 : i32
    return %arg0, %c0_i32 : i32, i32
  }
  func.func @transform_1(%arg0: i32) -> (i32, i32) {
    %c0_i32 = arith.constant 0 : i32
    %c0_i32_0 = arith.constant 0 : i32
    %c0_i32_1 = arith.constant 0 : i32
    return %c0_i32, %c0_i32_0 : i32, i32
  }
  func.func @transform_2(%arg0: i32) -> (i32, i32, i32) {
    %c0_i32 = arith.constant 0 : i32
    %c0_i32_0 = arith.constant 0 : i32
    %c0_i32_1 = arith.constant 0 : i32
    return %c0_i32, %arg0, %c0_i32_0 : i32, i32, i32
  }
}

module attributes {stable_mosaic.version = 11 : i64} {
  func.func @_attn_out_kernel(%arg0: i32, %arg1: memref<128x256xbf16, #tpu.memory_space<vmem>>, %arg2: memref<128x128xbf16, #tpu.memory_space<vmem>>, %arg3: memref<128x128xf32, #tpu.memory_space<vmem>>, %arg4: memref<8x128xf32, #tpu.memory_space<vmem>>, %arg5: memref<1x128xf32, #tpu.memory_space<vmem>>, %arg6: memref<1x128xf32, #tpu.memory_space<vmem>>, %arg7: memref<128x128xbf16, #tpu.memory_space<vmem>>) attributes {dimension_semantics = [#tpu.dimension_semantics<parallel>], iteration_bounds = array<i64: 2>, scalar_prefetch = 0 : i64, scratch_operands = 0 : i64, tpu.core_type = #tpu.core_type<tc>, window_params = [{transform_indices = @transform_0, window_bounds = array<i64: 128, 256>}, {transform_indices = @transform_1, window_bounds = array<i64: 128, 128>}, {pipeline_mode = #tpu.pipeline_mode<synchronous>, transform_indices = @transform_2, window_bounds = array<i64: 128, 128>}, {pipeline_mode = #tpu.pipeline_mode<synchronous>, transform_indices = @transform_3, window_bounds = array<i64: 8, 128>}, {pipeline_mode = #tpu.pipeline_mode<synchronous>, transform_indices = @transform_4, window_bounds = array<i64: 1, 128>}, {pipeline_mode = #tpu.pipeline_mode<synchronous>, transform_indices = @transform_5, window_bounds = array<i64: 1, 128>}, {transform_indices = @transform_6, window_bounds = array<i64: 128, 128>}]} {
    %c0 = arith.constant 0 : index
    %c0_0 = arith.constant 0 : index
    %0 = vector.load %arg1[%c0, %c0_0] : memref<128x256xbf16, #tpu.memory_space<vmem>>, vector<128x256xbf16>
    %1 = vector.extract_strided_slice %0 {offsets = [0, 0], sizes = [128, 128], strides = [1, 1]} : vector<128x256xbf16> to vector<128x128xbf16>
    %2 = arith.extf %1 : vector<128x128xbf16> to vector<128x128xf32>
    %c1 = arith.constant 1 : index
    %c0_1 = arith.constant 0 : index
    %3 = vector.load %arg4[%c1, %c0_1] : memref<8x128xf32, #tpu.memory_space<vmem>>, vector<1x128xf32>
    %4 = vector.shape_cast %3 : vector<1x128xf32> to vector<1x1x128xf32>
    %cst = arith.constant dense<0.000000e+00> : vector<1xf32>
    %5 = vector.multi_reduction <add>, %4, %cst [1, 2] : vector<1x1x128xf32> to vector<1xf32>
    %6 = vector.shape_cast %5 : vector<1xf32> to vector<1x1x1xf32>
    %7 = vector.extract %6[0, 0, 0] : f32 from vector<1x1x1xf32>
    %cst_2 = arith.constant 1.000000e-24 : f32
    %8 = arith.maximumf %7, %cst_2 : f32
    %9 = math.rsqrt %8 : f32
    %c2 = arith.constant 2 : index
    %c0_3 = arith.constant 0 : index
    %10 = vector.load %arg4[%c2, %c0_3] : memref<8x128xf32, #tpu.memory_space<vmem>>, vector<1x128xf32>
    %11 = vector.shape_cast %10 : vector<1x128xf32> to vector<1x1x128xf32>
    %cst_4 = arith.constant dense<0.000000e+00> : vector<1xf32>
    %12 = vector.multi_reduction <add>, %11, %cst_4 [1, 2] : vector<1x1x128xf32> to vector<1xf32>
    %13 = vector.shape_cast %12 : vector<1xf32> to vector<1x1x1xf32>
    %14 = vector.extract %13[0, 0, 0] : f32 from vector<1x1x1xf32>
    %cst_5 = arith.constant 1.000000e-24 : f32
    %15 = arith.maximumf %14, %cst_5 : f32
    %16 = math.rsqrt %15 : f32
    %cst_6 = arith.constant 0.000000e+00 : f32
    %17 = vector.broadcast %cst_6 : f32 to vector<128x128xf32>
    %18 = vector.broadcast %9 : f32 to vector<128x128xf32>
    %19 = arith.mulf %2, %18 : vector<128x128xf32>
    %20 = vector.extract_strided_slice %0 {offsets = [0, 128], sizes = [128, 128], strides = [1, 1]} : vector<128x256xbf16> to vector<128x128xbf16>
    %21 = arith.extf %20 : vector<128x128xbf16> to vector<128x128xf32>
    %c0_7 = arith.constant 0 : index
    %c0_8 = arith.constant 0 : index
    %22 = vector.load %arg3[%c0_7, %c0_8] : memref<128x128xf32, #tpu.memory_space<vmem>>, vector<128x128xf32>
    %23 = vector.broadcast %16 : f32 to vector<128x128xf32>
    %24 = arith.mulf %22, %23 : vector<128x128xf32>
    %25 = arith.truncf %19 : vector<128x128xf32> to vector<128x128xbf16>
    %26 = arith.truncf %24 : vector<128x128xf32> to vector<128x128xbf16>
    %cst_9 = arith.constant dense<0.000000e+00> : vector<128x128xf32>
    %27 = tpu.matmul %25, %26, %cst_9 {dimension_numbers = #tpu.dot_dimension_numbers<[1], [0], [0], [1], [0, 0, 1, 1], [], []>} : vector<128x128xbf16>, vector<128x128xbf16>, vector<128x128xf32> -> vector<128x128xf32>
    %cst_10 = arith.constant 2.000000e+02 : f32
    %28 = vector.broadcast %cst_10 : f32 to vector<128x128xf32>
    %29 = arith.mulf %28, %21 : vector<128x128xf32>
    %30 = arith.addf %27, %29 : vector<128x128xf32>
    %c0_11 = arith.constant 0 : index
    %c0_12 = arith.constant 0 : index
    %31 = vector.load %arg4[%c0_11, %c0_12] : memref<8x128xf32, #tpu.memory_space<vmem>>, vector<1x128xf32>
    %32 = vector.broadcast %16 : f32 to vector<1x128xf32>
    %33 = arith.mulf %31, %32 : vector<1x128xf32>
    %34 = vector.broadcast %33 : vector<1x128xf32> to vector<128x128xf32>
    %35 = arith.mulf %19, %34 : vector<128x128xf32>
    %cst_13 = arith.constant dense<0.000000e+00> : vector<128xf32>
    %36 = vector.multi_reduction <add>, %35, %cst_13 [1] : vector<128x128xf32> to vector<128xf32>
    %37 = vector.shape_cast %36 : vector<128xf32> to vector<128x1xf32>
    %cst_14 = arith.constant 2.000000e+02 : f32
    %38 = vector.broadcast %cst_14 : f32 to vector<128x1xf32>
    %39 = arith.addf %37, %38 : vector<128x1xf32>
    %40 = tpu.reciprocal %39 {approx = true} : vector<128x1xf32> -> vector<128x1xf32>
    %41 = vector.broadcast %40 : vector<128x1xf32> to vector<128x128xf32>
    %42 = arith.mulf %30, %41 : vector<128x128xf32>
    %43 = arith.addf %17, %42 : vector<128x128xf32>
    %cst_15 = arith.constant 1.000000e+00 : f32
    %44 = vector.broadcast %cst_15 : f32 to vector<128x128xf32>
    %45 = arith.mulf %43, %44 : vector<128x128xf32>
    %cst_16 = arith.constant 5.000000e-01 : f32
    %46 = vector.broadcast %cst_16 : f32 to vector<128x128xf32>
    %47 = arith.mulf %46, %45 : vector<128x128xf32>
    %c0_17 = arith.constant 0 : index
    %c0_18 = arith.constant 0 : index
    %48 = vector.load %arg2[%c0_17, %c0_18] : memref<128x128xbf16, #tpu.memory_space<vmem>>, vector<128x128xbf16>
    %49 = arith.extf %48 : vector<128x128xbf16> to vector<128x128xf32>
    %cst_19 = arith.constant 5.000000e-01 : f32
    %50 = vector.broadcast %cst_19 : f32 to vector<128x128xf32>
    %51 = arith.mulf %50, %49 : vector<128x128xf32>
    %52 = arith.addf %47, %51 : vector<128x128xf32>
    %cst_20 = arith.constant dense<0.000000e+00> : vector<128xf32>
    %53 = vector.multi_reduction <add>, %52, %cst_20 [1] : vector<128x128xf32> to vector<128xf32>
    %54 = vector.shape_cast %53 : vector<128xf32> to vector<128x1xf32>
    %cst_21 = arith.constant 1.280000e+02 : f32
    %55 = vector.broadcast %cst_21 : f32 to vector<128x1xf32>
    %56 = arith.divf %54, %55 : vector<128x1xf32>
    %57 = vector.broadcast %56 : vector<128x1xf32> to vector<128x128xf32>
    %58 = arith.subf %52, %57 : vector<128x128xf32>
    %59 = arith.mulf %58, %58 : vector<128x128xf32>
    %cst_22 = arith.constant dense<0.000000e+00> : vector<128xf32>
    %60 = vector.multi_reduction <add>, %59, %cst_22 [1] : vector<128x128xf32> to vector<128xf32>
    %61 = vector.shape_cast %60 : vector<128xf32> to vector<128x1xf32>
    %cst_23 = arith.constant 1.280000e+02 : f32
    %62 = vector.broadcast %cst_23 : f32 to vector<128x1xf32>
    %63 = arith.divf %61, %62 : vector<128x1xf32>
    %cst_24 = arith.constant 9.99999974E-6 : f32
    %64 = vector.broadcast %cst_24 : f32 to vector<128x1xf32>
    %65 = arith.addf %63, %64 : vector<128x1xf32>
    %66 = math.rsqrt %65 : vector<128x1xf32>
    %67 = vector.broadcast %66 : vector<128x1xf32> to vector<128x128xf32>
    %68 = arith.mulf %58, %67 : vector<128x128xf32>
    %c0_25 = arith.constant 0 : index
    %c0_26 = arith.constant 0 : index
    %69 = vector.load %arg5[%c0_25, %c0_26] : memref<1x128xf32, #tpu.memory_space<vmem>>, vector<1x128xf32>
    %70 = vector.broadcast %69 : vector<1x128xf32> to vector<128x128xf32>
    %71 = arith.mulf %68, %70 : vector<128x128xf32>
    %c0_27 = arith.constant 0 : index
    %c0_28 = arith.constant 0 : index
    %72 = vector.load %arg6[%c0_27, %c0_28] : memref<1x128xf32, #tpu.memory_space<vmem>>, vector<1x128xf32>
    %73 = vector.broadcast %72 : vector<1x128xf32> to vector<128x128xf32>
    %74 = arith.addf %71, %73 : vector<128x128xf32>
    %cst_29 = arith.constant 0.000000e+00 : f32
    %75 = vector.broadcast %cst_29 : f32 to vector<128x128xf32>
    %76 = arith.maximumf %74, %75 : vector<128x128xf32>
    %77 = arith.truncf %76 : vector<128x128xf32> to vector<128x128xbf16>
    %c0_30 = arith.constant 0 : index
    %c0_31 = arith.constant 0 : index
    %78 = vector.load %arg7[%c0_30, %c0_31] : memref<128x128xbf16, #tpu.memory_space<vmem>>, vector<128x128xbf16>
    tpu.vector_store %arg7[%c0_30, %c0_31], %77 {strides = array<i32>} : memref<128x128xbf16, #tpu.memory_space<vmem>>, vector<128x128xbf16>,
    return
  }
  func.func @transform_0(%arg0: i32) -> (i32, i32) {
    %c0_i32 = arith.constant 0 : i32
    %c0_i32_0 = arith.constant 0 : i32
    return %arg0, %c0_i32 : i32, i32
  }
  func.func @transform_1(%arg0: i32) -> (i32, i32) {
    %c0_i32 = arith.constant 0 : i32
    %c0_i32_0 = arith.constant 0 : i32
    return %arg0, %c0_i32 : i32, i32
  }
  func.func @transform_2(%arg0: i32) -> (i32, i32) {
    %c0_i32 = arith.constant 0 : i32
    %c0_i32_0 = arith.constant 0 : i32
    %c0_i32_1 = arith.constant 0 : i32
    return %c0_i32, %c0_i32_0 : i32, i32
  }
  func.func @transform_3(%arg0: i32) -> (i32, i32) {
    %c0_i32 = arith.constant 0 : i32
    %c0_i32_0 = arith.constant 0 : i32
    %c0_i32_1 = arith.constant 0 : i32
    return %c0_i32, %c0_i32_0 : i32, i32
  }
  func.func @transform_4(%arg0: i32) -> (i32, i32) {
    %c0_i32 = arith.constant 0 : i32
    %c0_i32_0 = arith.constant 0 : i32
    %c0_i32_1 = arith.constant 0 : i32
    return %c0_i32, %c0_i32_0 : i32, i32
  }
  func.func @transform_5(%arg0: i32) -> (i32, i32) {
    %c0_i32 = arith.constant 0 : i32
    %c0_i32_0 = arith.constant 0 : i32
    %c0_i32_1 = arith.constant 0 : i32
    return %c0_i32, %c0_i32_0 : i32, i32
  }
  func.func @transform_6(%arg0: i32) -> (i32, i32) {
    %c0_i32 = arith.constant 0 : i32
    %c0_i32_0 = arith.constant 0 : i32
    return %arg0, %c0_i32 : i32, i32
  }
}

module attributes {stable_mosaic.version = 11 : i64} {
  func.func @_gcn_prop_kernel(%arg0: i32, %arg1: i32, %arg2: i32, %arg3: memref<1x128x256xbf16, #tpu.memory_space<vmem>>, %arg4: memref<1x256x128xbf16, #tpu.memory_space<vmem>>, %arg5: memref<128x128xbf16, #tpu.memory_space<vmem>>, %arg6: memref<1x128xf32, #tpu.memory_space<vmem>>, %arg7: memref<128x128xbf16, #tpu.memory_space<vmem>>, %arg8: memref<1x128xf32, #tpu.memory_space<vmem>>, %arg9: memref<128x128xbf16, #tpu.memory_space<vmem>>, %arg10: memref<128x128xf32, #tpu.memory_space<vmem>>) attributes {dimension_semantics = [#tpu.dimension_semantics<parallel>, #tpu.dimension_semantics<arbitrary>, #tpu.dimension_semantics<arbitrary>], iteration_bounds = array<i64: 2, 2, 1>, scalar_prefetch = 0 : i64, scratch_operands = 1 : i64, tpu.core_type = #tpu.core_type<tc>, window_params = [{transform_indices = @transform_0, window_bounds = array<i64: 1, 128, 256>}, {transform_indices = @transform_1, window_bounds = array<i64: 1, 256, 128>}, {transform_indices = @transform_2, window_bounds = array<i64: 128, 128>}, {pipeline_mode = #tpu.pipeline_mode<synchronous>, transform_indices = @transform_3, window_bounds = array<i64: 1, 128>}, {pipeline_mode = #tpu.pipeline_mode<synchronous>, transform_indices = @transform_4, window_bounds = array<i64: 128, 128>}, {pipeline_mode = #tpu.pipeline_mode<synchronous>, transform_indices = @transform_5, window_bounds = array<i64: 1, 128>}, {transform_indices = @transform_6, window_bounds = array<i64: 128, 128>}]} {
    %c0_i32 = arith.constant 0 : i32
    %0 = arith.cmpi eq, %arg1, %c0_i32 : i32
    %c0_i32_0 = arith.constant 0 : i32
    %1 = arith.cmpi eq, %arg2, %c0_i32_0 : i32
    %2 = arith.andi %0, %1 : i1
    %3 = arith.extui %2 : i1 to i32
    %c0_i32_1 = arith.constant 0 : i32
    %4 = arith.cmpi ne, %3, %c0_i32_1 : i32
    scf.if %4 {
      %cst_13 = arith.constant 0.000000e+00 : f32
      %18 = vector.broadcast %cst_13 : f32 to vector<128x128xf32>
      %c0_14 = arith.constant 0 : index
      %c0_15 = arith.constant 0 : index
      %19 = vector.load %arg10[%c0_14, %c0_15] : memref<128x128xf32, #tpu.memory_space<vmem>>, vector<128x128xf32>
      tpu.vector_store %arg10[%c0_14, %c0_15], %18 {strides = array<i32>} : memref<128x128xf32, #tpu.memory_space<vmem>>, vector<128x128xf32>,
    } else {
    }
    %c0 = arith.constant 0 : index
    %c0_2 = arith.constant 0 : index
    %5 = vector.load %arg10[%c0, %c0_2] : memref<128x128xf32, #tpu.memory_space<vmem>>, vector<128x128xf32>
    %c0_3 = arith.constant 0 : index
    %c0_4 = arith.constant 0 : index
    %c0_5 = arith.constant 0 : index
    %6 = vector.load %arg3[%c0_3, %c0_4, %c0_5] : memref<1x128x256xbf16, #tpu.memory_space<vmem>>, vector<1x128x256xbf16>
    %7 = vector.shape_cast %6 : vector<1x128x256xbf16> to vector<128x256xbf16>
    %c0_6 = arith.constant 0 : index
    %c0_7 = arith.constant 0 : index
    %c0_8 = arith.constant 0 : index
    %8 = vector.load %arg4[%c0_6, %c0_7, %c0_8] : memref<1x256x128xbf16, #tpu.memory_space<vmem>>, vector<1x256x128xbf16>
    %9 = vector.shape_cast %8 : vector<1x256x128xbf16> to vector<256x128xbf16>
    %cst = arith.constant dense<0.000000e+00> : vector<128x128xf32>
    %10 = tpu.matmul %7, %9, %cst {dimension_numbers = #tpu.dot_dimension_numbers<[1], [0], [0], [1], [0, 0, 1, 1], [], []>} : vector<128x256xbf16>, vector<256x128xbf16>, vector<128x128xf32> -> vector<128x128xf32>
    %11 = arith.addf %5, %10 : vector<128x128xf32>
    %c0_9 = arith.constant 0 : index
    %c0_10 = arith.constant 0 : index
    %12 = vector.load %arg10[%c0_9, %c0_10] : memref<128x128xf32, #tpu.memory_space<vmem>>, vector<128x128xf32>
    tpu.vector_store %arg10[%c0_9, %c0_10], %11 {strides = array<i32>} : memref<128x128xf32, #tpu.memory_space<vmem>>, vector<128x128xf32>,
    %c1_i32 = arith.constant 1 : i32
    %13 = arith.cmpi eq, %arg1, %c1_i32 : i32
    %c0_i32_11 = arith.constant 0 : i32
    %14 = arith.cmpi eq, %arg2, %c0_i32_11 : i32
    %15 = arith.andi %13, %14 : i1
    %16 = arith.extui %15 : i1 to i32
    %c0_i32_12 = arith.constant 0 : i32
    %17 = arith.cmpi ne, %16, %c0_i32_12 : i32
    scf.if %17 {
      %c0_13 = arith.constant 0 : index
      %c0_14 = arith.constant 0 : index
      %18 = vector.load %arg10[%c0_13, %c0_14] : memref<128x128xf32, #tpu.memory_space<vmem>>, vector<128x128xf32>
      %c0_15 = arith.constant 0 : index
      %c0_16 = arith.constant 0 : index
      %19 = vector.load %arg6[%c0_15, %c0_16] : memref<1x128xf32, #tpu.memory_space<vmem>>, vector<1x128xf32>
      %20 = vector.broadcast %19 : vector<1x128xf32> to vector<128x128xf32>
      %21 = arith.addf %18, %20 : vector<128x128xf32>
      %c0_17 = arith.constant 0 : index
      %c0_18 = arith.constant 0 : index
      %22 = vector.load %arg5[%c0_17, %c0_18] : memref<128x128xbf16, #tpu.memory_space<vmem>>, vector<128x128xbf16>
      %23 = arith.extf %22 : vector<128x128xbf16> to vector<128x128xf32>
      %24 = arith.addf %21, %23 : vector<128x128xf32>
      %25 = arith.truncf %24 : vector<128x128xf32> to vector<128x128xbf16>
      %c0_19 = arith.constant 0 : index
      %c0_20 = arith.constant 0 : index
      %26 = vector.load %arg7[%c0_19, %c0_20] : memref<128x128xbf16, #tpu.memory_space<vmem>>, vector<128x128xbf16>
      %cst_21 = arith.constant dense<0.000000e+00> : vector<128x128xf32>
      %27 = tpu.matmul %25, %26, %cst_21 {dimension_numbers = #tpu.dot_dimension_numbers<[1], [0], [0], [1], [0, 0, 1, 1], [], []>} : vector<128x128xbf16>, vector<128x128xbf16>, vector<128x128xf32> -> vector<128x128xf32>
      %c0_22 = arith.constant 0 : index
      %c0_23 = arith.constant 0 : index
      %28 = vector.load %arg8[%c0_22, %c0_23] : memref<1x128xf32, #tpu.memory_space<vmem>>, vector<1x128xf32>
      %29 = vector.broadcast %28 : vector<1x128xf32> to vector<128x128xf32>
      %30 = arith.addf %27, %29 : vector<128x128xf32>
      %cst_24 = arith.constant 0.000000e+00 : f32
      %31 = vector.broadcast %cst_24 : f32 to vector<128x128xf32>
      %32 = arith.maximumf %30, %31 : vector<128x128xf32>
      %33 = arith.truncf %32 : vector<128x128xf32> to vector<128x128xbf16>
      %c0_25 = arith.constant 0 : index
      %c0_26 = arith.constant 0 : index
      %34 = vector.load %arg9[%c0_25, %c0_26] : memref<128x128xbf16, #tpu.memory_space<vmem>>, vector<128x128xbf16>
      tpu.vector_store %arg9[%c0_25, %c0_26], %33 {strides = array<i32>} : memref<128x128xbf16, #tpu.memory_space<vmem>>, vector<128x128xbf16>,
    } else {
    }
    return
  }
  func.func @transform_0(%arg0: i32, %arg1: i32, %arg2: i32) -> (i32, i32, i32) {
    %c0_i32 = arith.constant 0 : i32
    return %arg1, %arg0, %arg2 : i32, i32, i32
  }
  func.func @transform_1(%arg0: i32, %arg1: i32, %arg2: i32) -> (i32, i32, i32) {
    %c0_i32 = arith.constant 0 : i32
    %c0_i32_0 = arith.constant 0 : i32
    return %arg1, %arg2, %c0_i32 : i32, i32, i32
  }
  func.func @transform_2(%arg0: i32, %arg1: i32, %arg2: i32) -> (i32, i32) {
    %c0_i32 = arith.constant 0 : i32
    %c0_i32_0 = arith.constant 0 : i32
    return %arg0, %c0_i32 : i32, i32
  }
  func.func @transform_3(%arg0: i32, %arg1: i32, %arg2: i32) -> (i32, i32) {
    %c0_i32 = arith.constant 0 : i32
    %c0_i32_0 = arith.constant 0 : i32
    %c0_i32_1 = arith.constant 0 : i32
    return %c0_i32, %c0_i32_0 : i32, i32
  }
  func.func @transform_4(%arg0: i32, %arg1: i32, %arg2: i32) -> (i32, i32) {
    %c0_i32 = arith.constant 0 : i32
    %c0_i32_0 = arith.constant 0 : i32
    %c0_i32_1 = arith.constant 0 : i32
    return %c0_i32, %c0_i32_0 : i32, i32
  }
  func.func @transform_5(%arg0: i32, %arg1: i32, %arg2: i32) -> (i32, i32) {
    %c0_i32 = arith.constant 0 : i32
    %c0_i32_0 = arith.constant 0 : i32
    %c0_i32_1 = arith.constant 0 : i32
    return %c0_i32, %c0_i32_0 : i32, i32
  }
  func.func @transform_6(%arg0: i32, %arg1: i32, %arg2: i32) -> (i32, i32) {
    %c0_i32 = arith.constant 0 : i32
    %c0_i32_0 = arith.constant 0 : i32
    return %arg0, %c0_i32 : i32, i32
  }
}

module attributes {stable_mosaic.version = 11 : i64} {
  func.func @_head_kernel(%arg0: i32, %arg1: memref<128x128xbf16, #tpu.memory_space<vmem>>, %arg2: memref<128x128xbf16, #tpu.memory_space<vmem>>, %arg3: memref<256x128xbf16, #tpu.memory_space<vmem>>, %arg4: memref<1x128xf32, #tpu.memory_space<vmem>>, %arg5: memref<128x128xbf16, #tpu.memory_space<vmem>>, %arg6: memref<1x128xf32, #tpu.memory_space<vmem>>, %arg7: memref<128x128xbf16, #tpu.memory_space<vmem>>, %arg8: memref<1x128xf32, #tpu.memory_space<vmem>>, %arg9: memref<128x128xf32, #tpu.memory_space<vmem>>) attributes {dimension_semantics = [#tpu.dimension_semantics<parallel>], iteration_bounds = array<i64: 2>, scalar_prefetch = 0 : i64, scratch_operands = 0 : i64, tpu.core_type = #tpu.core_type<tc>, window_params = [{transform_indices = @transform_0, window_bounds = array<i64: 128, 128>}, {transform_indices = @transform_1, window_bounds = array<i64: 128, 128>}, {pipeline_mode = #tpu.pipeline_mode<synchronous>, transform_indices = @transform_2, window_bounds = array<i64: 256, 128>}, {pipeline_mode = #tpu.pipeline_mode<synchronous>, transform_indices = @transform_3, window_bounds = array<i64: 1, 128>}, {pipeline_mode = #tpu.pipeline_mode<synchronous>, transform_indices = @transform_4, window_bounds = array<i64: 128, 128>}, {pipeline_mode = #tpu.pipeline_mode<synchronous>, transform_indices = @transform_5, window_bounds = array<i64: 1, 128>}, {pipeline_mode = #tpu.pipeline_mode<synchronous>, transform_indices = @transform_6, window_bounds = array<i64: 128, 128>}, {pipeline_mode = #tpu.pipeline_mode<synchronous>, transform_indices = @transform_7, window_bounds = array<i64: 1, 128>}, {transform_indices = @transform_8, window_bounds = array<i64: 128, 128>}]} {
    %c0 = arith.constant 0 : index
    %c0_0 = arith.constant 0 : index
    %0 = vector.load %arg1[%c0, %c0_0] : memref<128x128xbf16, #tpu.memory_space<vmem>>, vector<128x128xbf16>
    %c0_1 = arith.constant 0 : index
    %c0_2 = arith.constant 0 : index
    %1 = vector.load %arg2[%c0_1, %c0_2] : memref<128x128xbf16, #tpu.memory_space<vmem>>, vector<128x128xbf16>
    %2 = tpu.concatenate %0, %1 in 1 : vector<128x128xbf16>, vector<128x128xbf16> -> vector<128x256xbf16>
    %c0_3 = arith.constant 0 : index
    %c0_4 = arith.constant 0 : index
    %3 = vector.load %arg3[%c0_3, %c0_4] : memref<256x128xbf16, #tpu.memory_space<vmem>>, vector<256x128xbf16>
    %cst = arith.constant dense<0.000000e+00> : vector<128x128xf32>
    %4 = tpu.matmul %2, %3, %cst {dimension_numbers = #tpu.dot_dimension_numbers<[1], [0], [0], [1], [0, 0, 1, 1], [], []>} : vector<128x256xbf16>, vector<256x128xbf16>, vector<128x128xf32> -> vector<128x128xf32>
    %c0_5 = arith.constant 0 : index
    %c0_6 = arith.constant 0 : index
    %5 = vector.load %arg4[%c0_5, %c0_6] : memref<1x128xf32, #tpu.memory_space<vmem>>, vector<1x128xf32>
    %6 = vector.broadcast %5 : vector<1x128xf32> to vector<128x128xf32>
    %7 = arith.addf %4, %6 : vector<128x128xf32>
    %8 = math.tanh %7 : vector<128x128xf32>
    %9 = arith.mulf %8, %8 : vector<128x128xf32>
    %cst_7 = arith.constant dense<0.000000e+00> : vector<128xf32>
    %10 = vector.multi_reduction <add>, %9, %cst_7 [1] : vector<128x128xf32> to vector<128xf32>
    %11 = vector.shape_cast %10 : vector<128xf32> to vector<128x1xf32>
    %cst_8 = arith.constant 1.000000e-24 : f32
    %12 = vector.broadcast %cst_8 : f32 to vector<128x1xf32>
    %13 = arith.addf %11, %12 : vector<128x1xf32>
    %14 = math.rsqrt %13 : vector<128x1xf32>
    %15 = vector.broadcast %14 : vector<128x1xf32> to vector<128x128xf32>
    %16 = arith.mulf %8, %15 : vector<128x128xf32>
    %17 = arith.truncf %16 : vector<128x128xf32> to vector<128x128xbf16>
    %c0_9 = arith.constant 0 : index
    %c0_10 = arith.constant 0 : index
    %18 = vector.load %arg5[%c0_9, %c0_10] : memref<128x128xbf16, #tpu.memory_space<vmem>>, vector<128x128xbf16>
    %cst_11 = arith.constant dense<0.000000e+00> : vector<128x128xf32>
    %19 = tpu.matmul %17, %18, %cst_11 {dimension_numbers = #tpu.dot_dimension_numbers<[1], [0], [0], [1], [0, 0, 1, 1], [], []>} : vector<128x128xbf16>, vector<128x128xbf16>, vector<128x128xf32> -> vector<128x128xf32>
    %c0_12 = arith.constant 0 : index
    %c0_13 = arith.constant 0 : index
    %20 = vector.load %arg6[%c0_12, %c0_13] : memref<1x128xf32, #tpu.memory_space<vmem>>, vector<1x128xf32>
    %21 = vector.broadcast %20 : vector<1x128xf32> to vector<128x128xf32>
    %22 = arith.addf %19, %21 : vector<128x128xf32>
    %cst_14 = arith.constant 0.000000e+00 : f32
    %23 = vector.broadcast %cst_14 : f32 to vector<128x128xf32>
    %24 = arith.maximumf %22, %23 : vector<128x128xf32>
    %25 = arith.truncf %24 : vector<128x128xf32> to vector<128x128xbf16>
    %c0_15 = arith.constant 0 : index
    %c0_16 = arith.constant 0 : index
    %26 = vector.load %arg7[%c0_15, %c0_16] : memref<128x128xbf16, #tpu.memory_space<vmem>>, vector<128x128xbf16>
    %cst_17 = arith.constant dense<0.000000e+00> : vector<128x128xf32>
    %27 = tpu.matmul %25, %26, %cst_17 {dimension_numbers = #tpu.dot_dimension_numbers<[1], [0], [0], [1], [0, 0, 1, 1], [], []>} : vector<128x128xbf16>, vector<128x128xbf16>, vector<128x128xf32> -> vector<128x128xf32>
    %c0_18 = arith.constant 0 : index
    %c0_19 = arith.constant 0 : index
    %28 = vector.load %arg8[%c0_18, %c0_19] : memref<1x128xf32, #tpu.memory_space<vmem>>, vector<1x128xf32>
    %29 = vector.broadcast %28 : vector<1x128xf32> to vector<128x128xf32>
    %30 = arith.addf %27, %29 : vector<128x128xf32>
    %31 = arith.mulf %30, %30 : vector<128x128xf32>
    %cst_20 = arith.constant dense<0.000000e+00> : vector<128xf32>
    %32 = vector.multi_reduction <add>, %31, %cst_20 [1] : vector<128x128xf32> to vector<128xf32>
    %33 = vector.shape_cast %32 : vector<128xf32> to vector<128x1xf32>
    %cst_21 = arith.constant 1.000000e-24 : f32
    %34 = vector.broadcast %cst_21 : f32 to vector<128x1xf32>
    %35 = arith.addf %33, %34 : vector<128x1xf32>
    %36 = math.rsqrt %35 : vector<128x1xf32>
    %37 = vector.broadcast %36 : vector<128x1xf32> to vector<128x128xf32>
    %38 = arith.mulf %30, %37 : vector<128x128xf32>
    %c0_22 = arith.constant 0 : index
    %c0_23 = arith.constant 0 : index
    %39 = vector.load %arg9[%c0_22, %c0_23] : memref<128x128xf32, #tpu.memory_space<vmem>>, vector<128x128xf32>
    tpu.vector_store %arg9[%c0_22, %c0_23], %38 {strides = array<i32>} : memref<128x128xf32, #tpu.memory_space<vmem>>, vector<128x128xf32>,
    return
  }
  func.func @transform_0(%arg0: i32) -> (i32, i32) {
    %c0_i32 = arith.constant 0 : i32
    %c0_i32_0 = arith.constant 0 : i32
    return %arg0, %c0_i32 : i32, i32
  }
  func.func @transform_1(%arg0: i32) -> (i32, i32) {
    %c0_i32 = arith.constant 0 : i32
    %c0_i32_0 = arith.constant 0 : i32
    return %arg0, %c0_i32 : i32, i32
  }
  func.func @transform_2(%arg0: i32) -> (i32, i32) {
    %c0_i32 = arith.constant 0 : i32
    %c0_i32_0 = arith.constant 0 : i32
    %c0_i32_1 = arith.constant 0 : i32
    return %c0_i32, %c0_i32_0 : i32, i32
  }
  func.func @transform_3(%arg0: i32) -> (i32, i32) {
    %c0_i32 = arith.constant 0 : i32
    %c0_i32_0 = arith.constant 0 : i32
    %c0_i32_1 = arith.constant 0 : i32
    return %c0_i32, %c0_i32_0 : i32, i32
  }
  func.func @transform_4(%arg0: i32) -> (i32, i32) {
    %c0_i32 = arith.constant 0 : i32
    %c0_i32_0 = arith.constant 0 : i32
    %c0_i32_1 = arith.constant 0 : i32
    return %c0_i32, %c0_i32_0 : i32, i32
  }
  func.func @transform_5(%arg0: i32) -> (i32, i32) {
    %c0_i32 = arith.constant 0 : i32
    %c0_i32_0 = arith.constant 0 : i32
    %c0_i32_1 = arith.constant 0 : i32
    return %c0_i32, %c0_i32_0 : i32, i32
  }
  func.func @transform_6(%arg0: i32) -> (i32, i32) {
    %c0_i32 = arith.constant 0 : i32
    %c0_i32_0 = arith.constant 0 : i32
    %c0_i32_1 = arith.constant 0 : i32
    return %c0_i32, %c0_i32_0 : i32, i32
  }
  func.func @transform_7(%arg0: i32) -> (i32, i32) {
    %c0_i32 = arith.constant 0 : i32
    %c0_i32_0 = arith.constant 0 : i32
    %c0_i32_1 = arith.constant 0 : i32
    return %c0_i32, %c0_i32_0 : i32, i32
  }
  func.func @transform_8(%arg0: i32) -> (i32, i32) {
    %c0_i32 = arith.constant 0 : i32
    %c0_i32_0 = arith.constant 0 : i32
    return %arg0, %c0_i32 : i32, i32
  }
}

</mosaic_0001>

<llo_original>
// kernel: sgformer_forward.8
$region0: #{sgformer_forward.8}
  #allocation0 [shape = 'u32[]', space=smem, size = 0x4, offset = 0x4, fixed_abs, tag = 'smem constant byte address 0x4 - core index']
  #allocation1 [shape = 'u32[144,128]{1,0:T(1,128)}', space=vmem, size = 0x12000, scoped, tag = 'internal scratch']
  %s0 = inlined_call_operand.vmem [shape: bf16[256,128], index: 0, kind: input, shape index: {}]
  %s1 = inlined_call_operand.vmem [shape: bf16[128,128], index: 1, kind: input, shape index: {}]
  %s2 = inlined_call_operand.hbm [shape: f32[1,128], index: 2, kind: input, shape index: {}]
  %s3 = inlined_call_operand.hbm [shape: f32[1,128], index: 3, kind: input, shape index: {}]
  %s4 = inlined_call_operand.hbm [shape: f32[1,128], index: 4, kind: input, shape index: {}]
  %s5 = inlined_call_operand.vmem [shape: bf16[256,128], index: 5, kind: output, shape index: {}]
  %s6 = sld [smem:[#allocation0]]
  $region65: #{sgformer_forward.8} parent=0
    _
  %s8 = ssub.s32 1, %s6
  %s9 = scalar_select 0, %s8, %s6
  $region1: #{sgformer_forward.8} parent=0
    #allocation2 [shape = 'u8[512]{0}', space=vmem, size = 0x400, scoped, tag = 'input window, operand 2, single buffered']
    #allocation3 [shape = 's32[2]{0}', space=sflag, size = 0x8, scoped, tag = 'scoped memory for sgformer_forward.8']
    #allocation4 [shape = 'u8[512]{0}', space=vmem, size = 0x400, scoped, tag = 'input window, operand 3, single buffered']
    #allocation5 [shape = 's32[1]{0}', space=sflag, size = 0x4, scoped, tag = 'scoped memory for sgformer_forward.8']
    #allocation6 [shape = 'u8[512]{0}', space=vmem, size = 0x400, scoped, tag = 'input window, operand 4, single buffered']
    %10 = vsyncpa [#allocation3], 0
    %11 = vsyncpa [#allocation5], 0
    loop: start=0, step=1, limit=4
    $region2: #{sgformer_forward.8} parent=1 // loop_pre_header
      _
    $region3: #{sgformer_forward.8} parent=1 // loop_header
      %s13 = sphi 0, %s17
      %p14 = scmp.ge.s32.totalorder %s13, 4
      %s23 = sphi 0, %s25
      %s26 = sphi 0, %s23
      %s27 = sphi 0, %s26
      %s43 = sphi 0, %s27
      %s47 = sphi 0, %s47
      %s49 = sphi 0, %s47
      %s50 = sphi 0, %s49
      %s64 = sphi 0, %s50
      %s68 = sphi 0, %s68
      %s70 = sphi 0, %s68
      %s71 = sphi 0, %s70
      %s85 = sphi 0, %s71
      %s89 = sphi 0, %s89
      %s91 = sphi 0, %s89
      %s92 = sphi 0, %s91
      %s106 = sphi 0, %s92
      %s110 = sphi 0, %s110
      %s112 = sphi 0, %s110
      %s113 = sphi 0, %s112
      %s127 = sphi 0, %s113
      %s133 = sphi 0, %s135
      %s136 = sphi 0, %s133
      %s137 = sphi 0, %s136
      %s153 = sphi 0, %s137
    $region4: #{sgformer_forward.8} parent=1 // loop_header_branch
      %16 = sbr.rel (%p14) target = $region8
    $region5: #{sgformer_forward.8} parent=1 // loop_body
      %s18 = ssub.s32 %s13, 1
      %s19 = ssub.s32 %s13, 2
      %s20 = sadd.s32 %s13, 1
      %s21 = ssub.s32 %s13, %s20
      %p22 = scmp.eq.s32.totalorder %s21, 0
      %s24 = sadd.s32 %s23, 1
      %s25 = scalar_select %p22, %s23, %s24
      %p28 = pneg %p22
      %p29 = scmp.eq.s32.totalorder %s13, 1
      %p30 = por %p28, %p29
      %p31 = scmp.ne.s32.totalorder %s23, %s26
      %p32 = scmp.eq.s32.totalorder %s13, 0
      %p33 = por %p31, %p32
      %p34 = scmp.ne.s32.totalorder %s23, %s26
      %p35 = scmp.eq.s32.totalorder %s18, 1
      %p36 = por %p34, %p35
      %p37 = scmp.ne.s32.totalorder %s26, %s27
      %p38 = scmp.eq.s32.totalorder %s18, 0
      %p39 = por %p37, %p38
      %p40 = scmp.ne.s32.totalorder %s26, %s27
      %p41 = scmp.eq.s32.totalorder %s19, 1
      %p42 = por %p40, %p41
      %p44 = scmp.ne.s32.totalorder %s27, %s43
      %p45 = scmp.eq.s32.totalorder %s19, 0
      %p46 = por %p44, %p45
      %s48 = sadd.s32 %s47, 1
      %p51 = scmp.eq.s32.totalorder %s13, 1
      %p52 = scmp.ne.s32.totalorder %s47, %s49
      %p53 = scmp.eq.s32.totalorder %s13, 0
      %p54 = por %p52, %p53
      %p55 = scmp.ne.s32.totalorder %s47, %s49
      %p56 = scmp.eq.s32.totalorder %s18, 1
      %p57 = por %p55, %p56
      %p58 = scmp.ne.s32.totalorder %s49, %s50
      %p59 = scmp.eq.s32.totalorder %s18, 0
      %p60 = por %p58, %p59
      %p61 = scmp.ne.s32.totalorder %s49, %s50
      %p62 = scmp.eq.s32.totalorder %s19, 1
      %p63 = por %p61, %p62
      %p65 = scmp.ne.s32.totalorder %s50, %s64
      %p66 = scmp.eq.s32.totalorder %s19, 0
      %p67 = por %p65, %p66
      %s69 = sadd.s32 %s68, 1
      %p72 = scmp.eq.s32.totalorder %s13, 1
      %p73 = scmp.ne.s32.totalorder %s68, %s70
      %p74 = scmp.eq.s32.totalorder %s13, 0
      %p75 = por %p73, %p74
      %p76 = scmp.ne.s32.totalorder %s68, %s70
      %p77 = scmp.eq.s32.totalorder %s18, 1
      %p78 = por %p76, %p77
      %p79 = scmp.ne.s32.totalorder %s70, %s71
      %p80 = scmp.eq.s32.totalorder %s18, 0
      %p81 = por %p79, %p80
      %p82 = scmp.ne.s32.totalorder %s70, %s71
      %p83 = scmp.eq.s32.totalorder %s19, 1
      %p84 = por %p82, %p83
      %p86 = scmp.ne.s32.totalorder %s71, %s85
      %p87 = scmp.eq.s32.totalorder %s19, 0
      %p88 = por %p86, %p87
      %s90 = sadd.s32 %s89, 1
      %p93 = scmp.eq.s32.totalorder %s13, 1
      %p94 = scmp.ne.s32.totalorder %s89, %s91
      %p95 = scmp.eq.s32.totalorder %s13, 0
      %p96 = por %p94, %p95
      %p97 = scmp.ne.s32.totalorder %s89, %s91
      %p98 = scmp.eq.s32.totalorder %s18, 1
      %p99 = por %p97, %p98
      %p100 = scmp.ne.s32.totalorder %s91, %s92
      %p101 = scmp.eq.s32.totalorder %s18, 0
      %p102 = por %p100, %p101
      %p103 = scmp.ne.s32.totalorder %s91, %s92
      %p104 = scmp.eq.s32.totalorder %s19, 1
      %p105 = por %p103, %p104
      %p107 = scmp.ne.s32.totalorder %s92, %s106
      %p108 = scmp.eq.s32.totalorder %s19, 0
      %p109 = por %p107, %p108
      %s111 = sadd.s32 %s110, 1
      %p114 = scmp.eq.s32.totalorder %s13, 1
      %p115 = scmp.ne.s32.totalorder %s110, %s112
      %p116 = scmp.eq.s32.totalorder %s13, 0
      %p117 = por %p115, %p116
      %p118 = scmp.ne.s32.totalorder %s110, %s112
      %p119 = scmp.eq.s32.totalorder %s18, 1
      %p120 = por %p118, %p119
      %p121 = scmp.ne.s32.totalorder %s112, %s113
      %p122 = scmp.eq.s32.totalorder %s18, 0
      %p123 = por %p121, %p122
      %p124 = scmp.ne.s32.totalorder %s112, %s113
      %p125 = scmp.eq.s32.totalorder %s19, 1
      %p126 = por %p124, %p125
      %p128 = scmp.ne.s32.totalorder %s113, %s127
      %p129 = scmp.eq.s32.totalorder %s19, 0
      %p130 = por %p128, %p129
      %s131 = ssub.s32 %s13, %s20
      %p132 = scmp.eq.s32.totalorder %s131, 0
      %s134 = sadd.s32 %s133, 1
      %s135 = scalar_select %p132, %s133, %s134
      %p138 = pneg %p132
      %p139 = scmp.eq.s32.totalorder %s13, 1
      %p140 = por %p138, %p139
      %p141 = scmp.ne.s32.totalorder %s133, %s136
      %p142 = scmp.eq.s32.totalorder %s13, 0
      %p143 = por %p141, %p142
      %p144 = scmp.ne.s32.totalorder %s133, %s136
      %p145 = scmp.eq.s32.totalorder %s18, 1
      %p146 = por %p144, %p145
      %p147 = scmp.ne.s32.totalorder %s136, %s137
      %p148 = scmp.eq.s32.totalorder %s18, 0
      %p149 = por %p147, %p148
      %p150 = scmp.ne.s32.totalorder %s136, %s137
      %p151 = scmp.eq.s32.totalorder %s19, 1
      %p152 = por %p150, %p151
      %p154 = scmp.ne.s32.totalorder %s137, %s153
      %p155 = scmp.eq.s32.totalorder %s19, 0
      %p156 = por %p154, %p155
      %p157 = scmp.le.s32.totalorder 1, %s13
      %p158 = scmp.lt.s32.totalorder %s13, 3
      %p159 = pnand %p157, %p158
      %p160 = pneg %p159
      // Predicated region
      $region9: #{sgformer_forward.8} parent=5 // pred_check
        _
      $region10: #{sgformer_forward.8} parent=5 // pred_check_branch
        %162 = sbr.rel (%p159) target = $region12
      $region11: #{sgformer_forward.8} parent=5 // pred_region
        %s163 = ssub.s32 %s13, 1
        // Predicated region
        $region13: #{sgformer_forward.8} parent=11 // pred_check
          %p164 = pneg %p60
        $region14: #{sgformer_forward.8} parent=11 // pred_check_branch
          %166 = sbr.rel (%p164) target = $region16
        $region15: #{sgformer_forward.8} parent=11 // pred_region
          _
        $region16: #{sgformer_forward.8} parent=11 // pred_fallthru
          _
        // Predicated region
        $region17: #{sgformer_forward.8} parent=11 // pred_check
          %p167 = pneg %p81
        $region18: #{sgformer_forward.8} parent=11 // pred_check_branch
          %169 = sbr.rel (%p167) target = $region20
        $region19: #{sgformer_forward.8} parent=11 // pred_region
          %s171 = ssub.s32 16, 16
          %172 = vsyncadd [#allocation3], %s171
          %s174 = sshll.u32 [#allocation2], 4
          %s175 = int_to_ptr.vmem [resolvable:$true] %s174
          %177 = dma.hbm_to_vmem [thread:$0]  %s2, 16, %s175, [#allocation3]
        $region20: #{sgformer_forward.8} parent=11 // pred_fallthru
          _
        // Predicated region
        $region21: #{sgformer_forward.8} parent=11 // pred_check
          %p178 = pneg %p102
        $region22: #{sgformer_forward.8} parent=11 // pred_check_branch
          %180 = sbr.rel (%p178) target = $region24
        $region23: #{sgformer_forward.8} parent=11 // pred_region
          %s182 = ssub.s32 16, 16
          %183 = vsyncadd [#allocation5], %s182
          %s185 = sshll.u32 [#allocation4], 4
          %s186 = int_to_ptr.vmem [resolvable:$true] %s185
          %188 = dma.hbm_to_vmem [thread:$0]  %s3, 16, %s186, [#allocation5]
        $region24: #{sgformer_forward.8} parent=11 // pred_fallthru
          _
        // Predicated region
        $region25: #{sgformer_forward.8} parent=11 // pred_check
          %p189 = pneg %p123
        $region26: #{sgformer_forward.8} parent=11 // pred_check_branch
          %191 = sbr.rel (%p189) target = $region28
        $region27: #{sgformer_forward.8} parent=11 // pred_region
          %s193 = ssub.s32 16, 16
          %194 = vsyncadd [#allocation5], %s193
          %s196 = sshll.u32 [#allocation6], 4
          %s197 = int_to_ptr.vmem [resolvable:$true] %s196
          %199 = dma.hbm_to_vmem [thread:$0]  %s4, 16, %s197, [#allocation5]
        $region28: #{sgformer_forward.8} parent=11 // pred_fallthru
          _
      $region12: #{sgformer_forward.8} parent=5 // pred_fallthru
        _
      %p200 = scmp.lt.s32.totalorder %s13, 2
      // Predicated region
      $region29: #{sgformer_forward.8} parent=5 // pred_check
        %p201 = pneg %p200
      $region30: #{sgformer_forward.8} parent=5 // pred_check_branch
        %203 = sbr.rel (%p201) target = $region32
      $region31: #{sgformer_forward.8} parent=5 // pred_region
        // Predicated region
        $region33: #{sgformer_forward.8} parent=31 // pred_check
          %p204 = pneg %p33
        $region34: #{sgformer_forward.8} parent=31 // pred_check_branch
          %206 = sbr.rel (%p204) target = $region36
        $region35: #{sgformer_forward.8} parent=31 // pred_region
          %s207 = smul.u32 16, %s13
          %p208 = scmp.lt.s32.totalorder %s207, 31
          %s209 = scalar_select %p208, %s207, 31
          %s210 = smul.addr %s209, 4
          %s211 = scalar_lea.vmem %s0, %s210
          %s212 = smul.u32 16, %s13
        $region36: #{sgformer_forward.8} parent=31 // pred_fallthru
          _
      $region32: #{sgformer_forward.8} parent=5 // pred_fallthru
        _
      %p213 = scmp.le.s32.totalorder 1, %s13
      %p214 = scmp.lt.s32.totalorder %s13, 3
      %p215 = pnand %p213, %p214
      %p216 = pneg %p215
      // Predicated region
      $region37: #{sgformer_forward.8} parent=5 // pred_check
        _
      $region38: #{sgformer_forward.8} parent=5 // pred_check_branch
        %218 = sbr.rel (%p215) target = $region40
      $region39: #{sgformer_forward.8} parent=5 // pred_region
        %s219 = ssub.s32 %s13, 1
        // Predicated region
        $region41: #{sgformer_forward.8} parent=39 // pred_check
          %p220 = pneg %p81
        $region42: #{sgformer_forward.8} parent=39 // pred_check_branch
          %222 = sbr.rel (%p220) target = $region44
        $region43: #{sgformer_forward.8} parent=39 // pred_region
          %223 = dma.done [#allocation3], 16
        $region44: #{sgformer_forward.8} parent=39 // pred_fallthru
          _
        // Predicated region
        $region45: #{sgformer_forward.8} parent=39 // pred_check
          %p224 = pneg %p102
        $region46: #{sgformer_forward.8} parent=39 // pred_check_branch
          %226 = sbr.rel (%p224) target = $region48
        $region47: #{sgformer_forward.8} parent=39 // pred_region
          %227 = dma.done [#allocation5], 16
        $region48: #{sgformer_forward.8} parent=39 // pred_fallthru
          _
        // Predicated region
        $region49: #{sgformer_forward.8} parent=39 // pred_check
          %p228 = pneg %p123
        $region50: #{sgformer_forward.8} parent=39 // pred_check_branch
          %230 = sbr.rel (%p228) target = $region52
        $region51: #{sgformer_forward.8} parent=39 // pred_region
          %231 = dma.done [#allocation5], 16
        $region52: #{sgformer_forward.8} parent=39 // pred_fallthru
          _
        %s232 = smul.u32 16, %s18
        %p233 = scmp.lt.s32.totalorder %s232, 31
        %s234 = scalar_select %p233, %s232, 31
        %s235 = smul.addr %s234, 4
        %s236 = scalar_lea.vmem %s0, %s235
        %p237 = pneg %p39
        %p238 = pneg %p36
        %p239 = pneg %p60
        %p240 = pneg %p57
        %p241 = pneg %p81
        %p242 = pneg %p78
        %p243 = pneg %p102
        %p244 = pneg %p99
        %p245 = pneg %p123
        %p246 = pneg %p120
        %p247 = pneg %p149
        %p248 = pneg %p146
        %s249 = smul.u32 16, %s18
        %p250 = scmp.lt.s32.totalorder %s249, 31
        %s251 = scalar_select %p250, %s249, 31
        %s252 = smul.addr %s251, 4
        %s253 = scalar_lea.vmem %s5, %s252
        %s254 = smul.u32 16, %s18
        %p255 = scmp.lt.s32.totalorder %s254, 31
        %s256 = scalar_select %p255, %s254, 31
        %s257 = smul.addr %s256, 4
        %s258 = scalar_lea.vmem %s0, %s257
        %s259 = smul.u32 16, %s18
        %s260 = smul.u32 16, %s18
        %p261 = scmp.lt.s32.totalorder %s260, 31
        %s262 = scalar_select %p261, %s260, 31
        %s263 = smul.addr %s262, 4
        %s264 = scalar_lea.vmem %s5, %s263
        %s265 = smul.u32 16, %s18
        %v267 = vld [vmem:[%s258] sm:$0xf]
        %v268 = vld [vmem:[%s258 + $0x4] sm:$0xf]
        %v269 = vld [vmem:[%s258 + $0x8] sm:$0xf]
        %v270 = vld [vmem:[%s258 + $0xc] sm:$0xf]
        %v271 = vld [vmem:[%s258 + $0x10] sm:$0xf]
        %v272 = vld [vmem:[%s258 + $0x14] sm:$0xf]
        %v273 = vld [vmem:[%s258 + $0x18] sm:$0xf]
        %v274 = vld [vmem:[%s258 + $0x1c] sm:$0xf]
        %v275 = vld [vmem:[%s258 + $0x20] sm:$0xf]
        %v276 = vld [vmem:[%s258 + $0x24] sm:$0xf]
        %v277 = vld [vmem:[%s258 + $0x28] sm:$0xf]
        %v278 = vld [vmem:[%s258 + $0x2c] sm:$0xf]
        %v279 = vld [vmem:[%s258 + $0x30] sm:$0xf]
        %v280 = vld [vmem:[%s258 + $0x34] sm:$0xf]
        %v281 = vld [vmem:[%s258 + $0x38] sm:$0xf]
        %v282 = vld [vmem:[%s258 + $0x3c] sm:$0xf]
        %v283 = vld [vmem:[%s1] sm:$0xf]
        %v284 = vld [vmem:[%s1 + $0x4] sm:$0xf]
        %v285 = vld [vmem:[%s1 + $0x8] sm:$0xf]
        %v286 = vld [vmem:[%s1 + $0xc] sm:$0xf]
        %v287 = vld [vmem:[%s1 + $0x10] sm:$0xf]
        %v288 = vld [vmem:[%s1 + $0x14] sm:$0xf]
        %v289 = vld [vmem:[%s1 + $0x18] sm:$0xf]
        %v290 = vld [vmem:[%s1 + $0x1c] sm:$0xf]
        %v291 = vld [vmem:[%s1 + $0x20] sm:$0xf]
        %v292 = vld [vmem:[%s1 + $0x24] sm:$0xf]
        %v293 = vld [vmem:[%s1 + $0x28] sm:$0xf]
        %v294 = vld [vmem:[%s1 + $0x2c] sm:$0xf]
        %v295 = vld [vmem:[%s1 + $0x30] sm:$0xf]
        %v296 = vld [vmem:[%s1 + $0x34] sm:$0xf]
        %v297 = vld [vmem:[%s1 + $0x38] sm:$0xf]
        %v298 = vld [vmem:[%s1 + $0x3c] sm:$0xf]
        %v299 = vld [vmem:[#allocation2] sm:$0x1]
        %v301 = vlaneseq
        %v302 = vshrl.u32 %v301, 7
        %v303 = vsub.s32 0, %v302
        %v304 = vrot.slane %v299, %v303
        %v322 = vunpack.c.l.b16 %v267
        %v323 = vunpack.c.l.b16 %v268
        %v324 = vunpack.c.l.b16 %v269
        %v325 = vunpack.c.l.b16 %v270
        %v326 = vunpack.c.l.b16 %v271
        %v327 = vunpack.c.l.b16 %v272
        %v328 = vunpack.c.l.b16 %v273
        %v329 = vunpack.c.l.b16 %v274
        %v330 = vunpack.c.l.b16 %v275
        %v331 = vunpack.c.l.b16 %v276
        %v332 = vunpack.c.l.b16 %v277
        %v333 = vunpack.c.l.b16 %v278
        %v334 = vunpack.c.l.b16 %v279
        %v335 = vunpack.c.l.b16 %v280
        %v336 = vunpack.c.l.b16 %v281
        %v337 = vunpack.c.l.b16 %v282
        %v338 = vpack.c.b16 %v323, %v322
        %v339 = vpack.c.b16 %v325, %v324
        %v340 = vpack.c.b16 %v327, %v326
        %v341 = vpack.c.b16 %v329, %v328
        %v342 = vpack.c.b16 %v331, %v330
        %v343 = vpack.c.b16 %v333, %v332
        %v344 = vpack.c.b16 %v335, %v334
        %v345 = vpack.c.b16 %v337, %v336
        %v370 = vunpack.c.l.b16 %v283
        %v371 = vunpack.c.l.b16 %v284
        %v372 = vunpack.c.l.b16 %v285
        %v373 = vunpack.c.l.b16 %v286
        %v374 = vunpack.c.l.b16 %v287
        %v375 = vunpack.c.l.b16 %v288
        %v376 = vunpack.c.l.b16 %v289
        %v377 = vunpack.c.l.b16 %v290
        %v378 = vunpack.c.l.b16 %v291
        %v379 = vunpack.c.l.b16 %v292
        %v380 = vunpack.c.l.b16 %v293
        %v381 = vunpack.c.l.b16 %v294
        %v382 = vunpack.c.l.b16 %v295
        %v383 = vunpack.c.l.b16 %v296
        %v384 = vunpack.c.l.b16 %v297
        %v385 = vunpack.c.l.b16 %v298
        %v386 = vpack.c.b16 %v371, %v370
        %v387 = vpack.c.b16 %v373, %v372
        %v388 = vpack.c.b16 %v375, %v374
        %v389 = vpack.c.b16 %v377, %v376
        %v390 = vpack.c.b16 %v379, %v378
        %v391 = vpack.c.b16 %v381, %v380
        %v392 = vpack.c.b16 %v383, %v382
        %v393 = vpack.c.b16 %v385, %v384
        %402 = vmatprep.subr.bf16.mxu0 0
        %403 = vmatpush1.bf16.msra.mxu0 %v393
        %404 = vmatprep.subr.bf16.mxu0 0
        %405 = vmatpush1.bf16.msra.mxu0 %v392
        %406 = vmatprep.subr.bf16.mxu0 0
        %407 = vmatpush1.bf16.msra.mxu0 %v391
        %408 = vmatprep.subr.bf16.mxu0 0
        %409 = vmatpush1.bf16.msra.mxu0 %v390
        %410 = vmatprep.subr.bf16.mxu0 0
        %411 = vmatpush1.bf16.msra.mxu0 %v389
        %412 = vmatprep.subr.bf16.mxu0 0
        %413 = vmatpush1.bf16.msra.mxu0 %v388
        %414 = vmatprep.subr.bf16.mxu0 0
        %415 = vmatpush1.bf16.msra.mxu0 %v387
        %416 = vmatprep.subr.bf16.mxu0 0
        %417 = vmatpush1.bf16.msra.mxu0 %v386
        %418 = vmatprep.subr.bf16.mxu0 0
        %419 = vmatpush2.bf16.msra.mxu0 0
        %420 = vmatprep.subr.bf16.mxu0 0
        %421 = vmatpush2.bf16.msra.mxu0 0
        %422 = vmatprep.subr.bf16.mxu0 0
        %423 = vmatpush2.bf16.msra.mxu0 0
        %424 = vmatprep.subr.bf16.mxu0 0
        %425 = vmatpush2.bf16.msra.mxu0 0
        %426 = vmatprep.subr.bf16.mxu0 0
        %427 = vmatpush2.bf16.msra.mxu0 0
        %428 = vmatprep.subr.bf16.mxu0 0
        %429 = vmatpush2.bf16.msra.mxu0 0
        %430 = vmatprep.subr.bf16.mxu0 0
        %431 = vmatpush2.bf16.msra.mxu0 0
        %432 = vmatprep.subr.bf16.mxu0 0
        %433 = vmatpush2.bf16.msra.mxu0 0
        %434 = vmatprep.mubr.bf16.mxu0 0
        %435 = vmatmul.mubr.bf16.gmra.mxu0 %v338
        %v436 = vpop.f32.mrf.mxu0
        %v437 = vadd.f32 %v304, %v436
        %v438 = vpop.f32.mrf.mxu0
        %v439 = vpop.f32.mrf.mxu0
        %v440 = vadd.f32 %v304, %v439
        %v441 = vpop.f32.mrf.mxu0
        %442 = vmatprep.mubr.bf16.mxu0 0
        %443 = vmatmul.mubr.bf16.gmra.mxu0 %v339
        %v444 = vpop.f32.mrf.mxu0
        %v445 = vadd.f32 %v304, %v444
        %v446 = vpop.f32.mrf.mxu0
        %v447 = vpop.f32.mrf.mxu0
        %v448 = vadd.f32 %v304, %v447
        %v449 = vpop.f32.mrf.mxu0
        %450 = vmatprep.mubr.bf16.mxu0 0
        %451 = vmatmul.mubr.bf16.gmra.mxu0 %v340
        %v452 = vpop.f32.mrf.mxu0
        %v453 = vadd.f32 %v304, %v452
        %v454 = vpop.f32.mrf.mxu0
        %v455 = vpop.f32.mrf.mxu0
        %v456 = vadd.f32 %v304, %v455
        %v457 = vpop.f32.mrf.mxu0
        %458 = vmatprep.mubr.bf16.mxu0 0
        %459 = vmatmul.mubr.bf16.gmra.mxu0 %v341
        %v460 = vpop.f32.mrf.mxu0
        %v461 = vadd.f32 %v304, %v460
        %v462 = vpop.f32.mrf.mxu0
        %v463 = vpop.f32.mrf.mxu0
        %v464 = vadd.f32 %v304, %v463
        %v465 = vpop.f32.mrf.mxu0
        %466 = vmatprep.mubr.bf16.mxu0 0
        %467 = vmatmul.mubr.bf16.gmra.mxu0 %v342
        %v468 = vpop.f32.mrf.mxu0
        %v469 = vadd.f32 %v304, %v468
        %v470 = vpop.f32.mrf.mxu0
        %v471 = vpop.f32.mrf.mxu0
        %v472 = vadd.f32 %v304, %v471
        %v473 = vpop.f32.mrf.mxu0
        %474 = vmatprep.mubr.bf16.mxu0 0
        %475 = vmatmul.mubr.bf16.gmra.mxu0 %v343
        %v476 = vpop.f32.mrf.mxu0
        %v477 = vadd.f32 %v304, %v476
        %v478 = vpop.f32.mrf.mxu0
        %v479 = vpop.f32.mrf.mxu0
        %v480 = vadd.f32 %v304, %v479
        %v481 = vpop.f32.mrf.mxu0
        %482 = vmatprep.mubr.bf16.mxu0 0
        %483 = vmatmul.mubr.bf16.gmra.mxu0 %v344
        %v484 = vpop.f32.mrf.mxu0
        %v485 = vadd.f32 %v304, %v484
        %v486 = vpop.f32.mrf.mxu0
        %v487 = vpop.f32.mrf.mxu0
        %v488 = vadd.f32 %v304, %v487
        %v489 = vpop.f32.mrf.mxu0
        %490 = vmatprep.mubr.bf16.mxu0 0
        %491 = vmatmul.mubr.bf16.gmra.mxu0 %v345
        %v492 = vpop.f32.mrf.mxu0
        %v493 = vadd.f32 %v304, %v492
        %v494 = vpop.f32.mrf.mxu0
        %v495 = vpop.f32.mrf.mxu0
        %v496 = vadd.f32 %v304, %v495
        %v497 = vpop.f32.mrf.mxu0
        %498 = vdwg.mxu0
        %499 = vadd.xlane.f32.xlu0 %v437
        %v500 = vpop.xlane.xlu0 %499
        %501 = vadd.xlane.f32.xlu0 %v440
        %v502 = vpop.xlane.xlu0 %501
        %503 = vadd.xlane.f32.xlu0 %v445
        %v504 = vpop.xlane.xlu0 %503
        %505 = vadd.xlane.f32.xlu0 %v448
        %v506 = vpop.xlane.xlu0 %505
        %507 = vadd.xlane.f32.xlu0 %v453
        %v508 = vpop.xlane.xlu0 %507
        %509 = vadd.xlane.f32.xlu0 %v456
        %v510 = vpop.xlane.xlu0 %509
        %511 = vadd.xlane.f32.xlu0 %v461
        %v512 = vpop.xlane.xlu0 %511
        %513 = vadd.xlane.f32.xlu0 %v464
        %v514 = vpop.xlane.xlu0 %513
        %515 = vadd.xlane.f32.xlu0 %v469
        %v516 = vpop.xlane.xlu0 %515
        %517 = vadd.xlane.f32.xlu0 %v472
        %v518 = vpop.xlane.xlu0 %517
        %519 = vadd.xlane.f32.xlu0 %v477
        %v520 = vpop.xlane.xlu0 %519
        %521 = vadd.xlane.f32.xlu0 %v480
        %v522 = vpop.xlane.xlu0 %521
        %523 = vadd.xlane.f32.xlu0 %v485
        %v524 = vpop.xlane.xlu0 %523
        %525 = vadd.xlane.f32.xlu0 %v488
        %v526 = vpop.xlane.xlu0 %525
        %527 = vadd.xlane.f32.xlu0 %v493
        %v528 = vpop.xlane.xlu0 %527
        %529 = vadd.xlane.f32.xlu0 %v496
        %v530 = vpop.xlane.xlu0 %529
        %v531 = vrcp.pop 128.0
        %v532 = vmul.f32 %v500, %v531
        %v533 = vmul.f32 %v502, %v531
        %v534 = vmul.f32 %v504, %v531
        %v535 = vmul.f32 %v506, %v531
        %v536 = vmul.f32 %v508, %v531
        %v537 = vmul.f32 %v510, %v531
        %v538 = vmul.f32 %v512, %v531
        %v539 = vmul.f32 %v514, %v531
        %v540 = vmul.f32 %v516, %v531
        %v541 = vmul.f32 %v518, %v531
        %v542 = vmul.f32 %v520, %v531
        %v543 = vmul.f32 %v522, %v531
        %v544 = vmul.f32 %v524, %v531
        %v545 = vmul.f32 %v526, %v531
        %v546 = vmul.f32 %v528, %v531
        %v547 = vmul.f32 %v530, %v531
        %v548 = vsub.f32 %v437, %v532
        %v549 = vsub.f32 %v440, %v533
        %v550 = vsub.f32 %v445, %v534
        %v551 = vsub.f32 %v448, %v535
        %v552 = vsub.f32 %v453, %v536
        %v553 = vsub.f32 %v456, %v537
        %v554 = vsub.f32 %v461, %v538
        %v555 = vsub.f32 %v464, %v539
        %v556 = vsub.f32 %v469, %v540
        %v557 = vsub.f32 %v472, %v541
        %v558 = vsub.f32 %v477, %v542
        %v559 = vsub.f32 %v480, %v543
        %v560 = vsub.f32 %v485, %v544
        %v561 = vsub.f32 %v488, %v545
        %v562 = vsub.f32 %v493, %v546
        %v563 = vsub.f32 %v496, %v547
        %v564 = vmul.f32 %v548, %v548
        %v565 = vmul.f32 %v549, %v549
        %v566 = vmul.f32 %v550, %v550
        %v567 = vmul.f32 %v551, %v551
        %v568 = vmul.f32 %v552, %v552
        %v569 = vmul.f32 %v553, %v553
        %v570 = vmul.f32 %v554, %v554
        %v571 = vmul.f32 %v555, %v555
        %v572 = vmul.f32 %v556, %v556
        %v573 = vmul.f32 %v557, %v557
        %v574 = vmul.f32 %v558, %v558
        %v575 = vmul.f32 %v559, %v559
        %v576 = vmul.f32 %v560, %v560
        %v577 = vmul.f32 %v561, %v561
        %v578 = vmul.f32 %v562, %v562
        %v579 = vmul.f32 %v563, %v563
        %580 = vadd.xlane.f32.xlu0 %v564
        %v581 = vpop.xlane.xlu0 %580
        %582 = vadd.xlane.f32.xlu0 %v565
        %v583 = vpop.xlane.xlu0 %582
        %584 = vadd.xlane.f32.xlu0 %v566
        %v585 = vpop.xlane.xlu0 %584
        %586 = vadd.xlane.f32.xlu0 %v567
        %v587 = vpop.xlane.xlu0 %586
        %588 = vadd.xlane.f32.xlu0 %v568
        %v589 = vpop.xlane.xlu0 %588
        %590 = vadd.xlane.f32.xlu0 %v569
        %v591 = vpop.xlane.xlu0 %590
        %592 = vadd.xlane.f32.xlu0 %v570
        %v593 = vpop.xlane.xlu0 %592
        %594 = vadd.xlane.f32.xlu0 %v571
        %v595 = vpop.xlane.xlu0 %594
        %596 = vadd.xlane.f32.xlu0 %v572
        %v597 = vpop.xlane.xlu0 %596
        %598 = vadd.xlane.f32.xlu0 %v573
        %v599 = vpop.xlane.xlu0 %598
        %600 = vadd.xlane.f32.xlu0 %v574
        %v601 = vpop.xlane.xlu0 %600
        %602 = vadd.xlane.f32.xlu0 %v575
        %v603 = vpop.xlane.xlu0 %602
        %604 = vadd.xlane.f32.xlu0 %v576
        %v605 = vpop.xlane.xlu0 %604
        %606 = vadd.xlane.f32.xlu0 %v577
        %v607 = vpop.xlane.xlu0 %606
        %608 = vadd.xlane.f32.xlu0 %v578
        %v609 = vpop.xlane.xlu0 %608
        %610 = vadd.xlane.f32.xlu0 %v579
        %v611 = vpop.xlane.xlu0 %610
        %v612 = vmul.f32 %v581, %v531
        %v613 = vmul.f32 %v583, %v531
        %v614 = vmul.f32 %v585, %v531
        %v615 = vmul.f32 %v587, %v531
        %v616 = vmul.f32 %v589, %v531
        %v617 = vmul.f32 %v591, %v531
        %v618 = vmul.f32 %v593, %v531
        %v619 = vmul.f32 %v595, %v531
        %v620 = vmul.f32 %v597, %v531
        %v621 = vmul.f32 %v599, %v531
        %v622 = vmul.f32 %v601, %v531
        %v623 = vmul.f32 %v603, %v531
        %v624 = vmul.f32 %v605, %v531
        %v625 = vmul.f32 %v607, %v531
        %v626 = vmul.f32 %v609, %v531
        %v627 = vmul.f32 %v611, %v531
        %v628 = vadd.f32 %v612, 1e-05
        %v629 = vadd.f32 %v613, 1e-05
        %v630 = vadd.f32 %v614, 1e-05
        %v631 = vadd.f32 %v615, 1e-05
        %v632 = vadd.f32 %v616, 1e-05
        %v633 = vadd.f32 %v617, 1e-05
        %v634 = vadd.f32 %v618, 1e-05
        %v635 = vadd.f32 %v619, 1e-05
        %v636 = vadd.f32 %v620, 1e-05
        %v637 = vadd.f32 %v621, 1e-05
        %v638 = vadd.f32 %v622, 1e-05
        %v639 = vadd.f32 %v623, 1e-05
        %v640 = vadd.f32 %v624, 1e-05
        %v641 = vadd.f32 %v625, 1e-05
        %v642 = vadd.f32 %v626, 1e-05
        %v643 = vadd.f32 %v627, 1e-05
        %v644 = vrsqrt.pop %v628
        %v645 = vrsqrt.pop %v629
        %v646 = vrsqrt.pop %v630
        %v647 = vrsqrt.pop %v631
        %v648 = vrsqrt.pop %v632
        %v649 = vrsqrt.pop %v633
        %v650 = vrsqrt.pop %v634
        %v651 = vrsqrt.pop %v635
        %v652 = vrsqrt.pop %v636
        %v653 = vrsqrt.pop %v637
        %v654 = vrsqrt.pop %v638
        %v655 = vrsqrt.pop %v639
        %v656 = vrsqrt.pop %v640
        %v657 = vrsqrt.pop %v641
        %v658 = vrsqrt.pop %v642
        %v659 = vrsqrt.pop %v643
        %v660 = vmul.f32 %v548, %v644
        %v661 = vmul.f32 %v549, %v645
        %v662 = vmul.f32 %v550, %v646
        %v663 = vmul.f32 %v551, %v647
        %v664 = vmul.f32 %v552, %v648
        %v665 = vmul.f32 %v553, %v649
        %v666 = vmul.f32 %v554, %v650
        %v667 = vmul.f32 %v555, %v651
        %v668 = vmul.f32 %v556, %v652
        %v669 = vmul.f32 %v557, %v653
        %v670 = vmul.f32 %v558, %v654
        %v671 = vmul.f32 %v559, %v655
        %v672 = vmul.f32 %v560, %v656
        %v673 = vmul.f32 %v561, %v657
        %v674 = vmul.f32 %v562, %v658
        %v675 = vmul.f32 %v563, %v659
        %v676 = vld [vmem:[#allocation4] sm:$0x1]
        %v678 = vlaneseq
        %v679 = vshrl.u32 %v678, 7
        %v680 = vsub.s32 0, %v679
        %v681 = vrot.slane %v676, %v680
        %v683 = vmul.f32 %v660, %v681
        %v684 = vmul.f32 %v661, %v681
        %v685 = vmul.f32 %v662, %v681
        %v686 = vmul.f32 %v663, %v681
        %v687 = vmul.f32 %v664, %v681
        %v688 = vmul.f32 %v665, %v681
        %v689 = vmul.f32 %v666, %v681
        %v690 = vmul.f32 %v667, %v681
        %v691 = vmul.f32 %v668, %v681
        %v692 = vmul.f32 %v669, %v681
        %v693 = vmul.f32 %v670, %v681
        %v694 = vmul.f32 %v671, %v681
        %v695 = vmul.f32 %v672, %v681
        %v696 = vmul.f32 %v673, %v681
        %v697 = vmul.f32 %v674, %v681
        %v698 = vmul.f32 %v675, %v681
        %v699 = vld [vmem:[#allocation6] sm:$0x1]
        %v701 = vlaneseq
        %v702 = vshrl.u32 %v701, 7
        %v703 = vsub.s32 0, %v702
        %v704 = vrot.slane %v699, %v703
        %v706 = vadd.f32 %v683, %v704
        %v707 = vadd.f32 %v684, %v704
        %v708 = vadd.f32 %v685, %v704
        %v709 = vadd.f32 %v686, %v704
        %v710 = vadd.f32 %v687, %v704
        %v711 = vadd.f32 %v688, %v704
        %v712 = vadd.f32 %v689, %v704
        %v713 = vadd.f32 %v690, %v704
        %v714 = vadd.f32 %v691, %v704
        %v715 = vadd.f32 %v692, %v704
        %v716 = vadd.f32 %v693, %v704
        %v717 = vadd.f32 %v694, %v704
        %v718 = vadd.f32 %v695, %v704
        %v719 = vadd.f32 %v696, %v704
        %v720 = vadd.f32 %v697, %v704
        %v721 = vadd.f32 %v698, %v704
        %v722 = vmax.f32 %v706, 0.0
        %v723 = vmax.f32 %v707, 0.0
        %v724 = vmax.f32 %v708, 0.0
        %v725 = vmax.f32 %v709, 0.0
        %v726 = vmax.f32 %v710, 0.0
        %v727 = vmax.f32 %v711, 0.0
        %v728 = vmax.f32 %v712, 0.0
        %v729 = vmax.f32 %v713, 0.0
        %v730 = vmax.f32 %v714, 0.0
        %v731 = vmax.f32 %v715, 0.0
        %v732 = vmax.f32 %v716, 0.0
        %v733 = vmax.f32 %v717, 0.0
        %v734 = vmax.f32 %v718, 0.0
        %v735 = vmax.f32 %v719, 0.0
        %v736 = vmax.f32 %v720, 0.0
        %v737 = vmax.f32 %v721, 0.0
        %v738 = vpack.c.bf16 %v723, %v722
        %v739 = vpack.c.bf16 %v725, %v724
        %v740 = vpack.c.bf16 %v727, %v726
        %v741 = vpack.c.bf16 %v729, %v728
        %v742 = vpack.c.bf16 %v731, %v730
        %v743 = vpack.c.bf16 %v733, %v732
        %v744 = vpack.c.bf16 %v735, %v734
        %v745 = vpack.c.bf16 %v737, %v736
        %v754 = vunpack.c.l.b16 %v738
        %v755 = vunpack.c.h.b16 %v738
        %v756 = vunpack.c.l.b16 %v739
        %v757 = vunpack.c.h.b16 %v739
        %v758 = vunpack.c.l.b16 %v740
        %v759 = vunpack.c.h.b16 %v740
        %v760 = vunpack.c.l.b16 %v741
        %v761 = vunpack.c.h.b16 %v741
        %v762 = vunpack.c.l.b16 %v742
        %v763 = vunpack.c.h.b16 %v742
        %v764 = vunpack.c.l.b16 %v743
        %v765 = vunpack.c.h.b16 %v743
        %v766 = vunpack.c.l.b16 %v744
        %v767 = vunpack.c.h.b16 %v744
        %v768 = vunpack.c.l.b16 %v745
        %v769 = vunpack.c.h.b16 %v745
        %v770 = vpack.c.b16 %v754, %v754
        %v771 = vpack.c.b16 %v755, %v755
        %v772 = vpack.c.b16 %v756, %v756
        %v773 = vpack.c.b16 %v757, %v757
        %v774 = vpack.c.b16 %v758, %v758
        %v775 = vpack.c.b16 %v759, %v759
        %v776 = vpack.c.b16 %v760, %v760
        %v777 = vpack.c.b16 %v761, %v761
        %v778 = vpack.c.b16 %v762, %v762
        %v779 = vpack.c.b16 %v763, %v763
        %v780 = vpack.c.b16 %v764, %v764
        %v781 = vpack.c.b16 %v765, %v765
        %v782 = vpack.c.b16 %v766, %v766
        %v783 = vpack.c.b16 %v767, %v767
        %v784 = vpack.c.b16 %v768, %v768
        %v785 = vpack.c.b16 %v769, %v769
        %802 = vst [vmem:[%s264] sm:$0xf] %v770
        %803 = vst [vmem:[%s264 + $0x4] sm:$0xf] %v771
        %804 = vst [vmem:[%s264 + $0x8] sm:$0xf] %v772
        %805 = vst [vmem:[%s264 + $0xc] sm:$0xf] %v773
        %806 = vst [vmem:[%s264 + $0x10] sm:$0xf] %v774
        %807 = vst [vmem:[%s264 + $0x14] sm:$0xf] %v775
        %808 = vst [vmem:[%s264 + $0x18] sm:$0xf] %v776
        %809 = vst [vmem:[%s264 + $0x1c] sm:$0xf] %v777
        %810 = vst [vmem:[%s264 + $0x20] sm:$0xf] %v778
        %811 = vst [vmem:[%s264 + $0x24] sm:$0xf] %v779
        %812 = vst [vmem:[%s264 + $0x28] sm:$0xf] %v780
        %813 = vst [vmem:[%s264 + $0x2c] sm:$0xf] %v781
        %814 = vst [vmem:[%s264 + $0x30] sm:$0xf] %v782
        %815 = vst [vmem:[%s264 + $0x34] sm:$0xf] %v783
        %816 = vst [vmem:[%s264 + $0x38] sm:$0xf] %v784
        %817 = vst [vmem:[%s264 + $0x3c] sm:$0xf] %v785
        %s818 = smul.u32 16, %s18
        %p819 = scmp.lt.s32.totalorder %s818, 31
        %s820 = scalar_select %p819, %s818, 31
        %s821 = smul.addr %s820, 4
        %s822 = scalar_lea.vmem %s5, %s821
        // Predicated region
        $region53: #{sgformer_forward.8} parent=39 // pred_check
          %p823 = pneg %p146
        $region54: #{sgformer_forward.8} parent=39 // pred_check_branch
          %825 = sbr.rel (%p823) target = $region56
        $region55: #{sgformer_forward.8} parent=39 // pred_region
          %s826 = smul.u32 16, %s18
        $region56: #{sgformer_forward.8} parent=39 // pred_fallthru
          _
      $region40: #{sgformer_forward.8} parent=5 // pred_fallthru
        _
      %p827 = scmp.le.s32.totalorder 2, %s13
      // Predicated region
      $region57: #{sgformer_forward.8} parent=5 // pred_check
        %p828 = pneg %p827
      $region58: #{sgformer_forward.8} parent=5 // pred_check_branch
        %830 = sbr.rel (%p828) target = $region60
      $region59: #{sgformer_forward.8} parent=5 // pred_region
        %s831 = ssub.s32 %s13, 2
        // Predicated region
        $region61: #{sgformer_forward.8} parent=59 // pred_check
          %p832 = pneg %p152
        $region62: #{sgformer_forward.8} parent=59 // pred_check_branch
          %834 = sbr.rel (%p832) target = $region64
        $region63: #{sgformer_forward.8} parent=59 // pred_region
          %s835 = smul.u32 16, %s19
          %p836 = scmp.lt.s32.totalorder %s835, 31
          %s837 = scalar_select %p836, %s835, 31
          %s838 = smul.addr %s837, 4
          %s839 = scalar_lea.vmem %s5, %s838
        $region64: #{sgformer_forward.8} parent=59 // pred_fallthru
          _
      $region60: #{sgformer_forward.8} parent=5 // pred_fallthru
        _
    $region6: #{sgformer_forward.8} parent=1 // loop_footer
      %s17 = sadd.s32 1, %s13
    $region7: #{sgformer_forward.8} parent=1 // loop_footer_branch
      %12 = sbr.rel target = $region3
    $region8: #{sgformer_forward.8} parent=1 // loop_exit
      _
    %840 = vsyncpa [#allocation3], 1
    %s841 = scalar_lea.sflag [#allocation3], 1
    %842 = vsyncpa %s841, 1
    %843 = vsyncpa [#allocation5], 1

// kernel: sgformer_forward.9
$region0: #{sgformer_forward.9}
  #allocation0 [shape = 'u32[]', space=smem, size = 0x4, offset = 0x4, fixed_abs, tag = 'smem constant byte address 0x4 - core index']
  #allocation1 [shape = 'u32[144,128]{1,0:T(1,128)}', space=vmem, size = 0x12000, scoped, tag = 'internal scratch']
  %s0 = inlined_call_operand.vmem [shape: bf16[256,128], index: 0, kind: input, shape index: {}]
  %s1 = inlined_call_operand.vmem [shape: bf16[128,384], index: 1, kind: input, shape index: {}]
  %s2 = inlined_call_operand.vmem [shape: f32[1,384], index: 2, kind: input, shape index: {}]
  %s3 = inlined_call_operand.vmem [shape: bf16[256,256], index: 3, kind: output, shape index: {0}]
  %s4 = inlined_call_operand.vmem [shape: bf16[256,128], index: 4, kind: output, shape index: {1}]
  %5 = xla_tuple %s3, %s4
  %s6 = sld [smem:[#allocation0]]
  $region53: #{sgformer_forward.9} parent=0
    _
  %s8 = ssub.s32 1, %s6
  %s9 = scalar_select 0, %s8, %s6
  loop: start=0, step=1, limit=4
  $region2: #{sgformer_forward.9} parent=0 // loop_pre_header
    _
  $region3: #{sgformer_forward.9} parent=0 // loop_header
    %s11 = sphi 0, %s15
    %p12 = scmp.ge.s32.totalorder %s11, 4
    %s21 = sphi 0, %s23
    %s24 = sphi 0, %s21
    %s25 = sphi 0, %s24
    %s41 = sphi 0, %s25
    %s45 = sphi 0, %s45
    %s47 = sphi 0, %s45
    %s48 = sphi 0, %s47
    %s62 = sphi 0, %s48
    %s66 = sphi 0, %s66
    %s68 = sphi 0, %s66
    %s69 = sphi 0, %s68
    %s83 = sphi 0, %s69
    %s89 = sphi 0, %s91
    %s92 = sphi 0, %s89
    %s93 = sphi 0, %s92
    %s109 = sphi 0, %s93
    %s115 = sphi 0, %s117
    %s118 = sphi 0, %s115
    %s119 = sphi 0, %s118
    %s135 = sphi 0, %s119
  $region4: #{sgformer_forward.9} parent=0 // loop_header_branch
    %14 = sbr.rel (%p12) target = $region8
  $region5: #{sgformer_forward.9} parent=0 // loop_body
    %s16 = ssub.s32 %s11, 1
    %s17 = ssub.s32 %s11, 2
    %s18 = sadd.s32 %s11, 1
    %s19 = ssub.s32 %s11, %s18
    %p20 = scmp.eq.s32.totalorder %s19, 0
    %s22 = sadd.s32 %s21, 1
    %s23 = scalar_select %p20, %s21, %s22
    %p26 = pneg %p20
    %p27 = scmp.eq.s32.totalorder %s11, 1
    %p28 = por %p26, %p27
    %p29 = scmp.ne.s32.totalorder %s21, %s24
    %p30 = scmp.eq.s32.totalorder %s11, 0
    %p31 = por %p29, %p30
    %p32 = scmp.ne.s32.totalorder %s21, %s24
    %p33 = scmp.eq.s32.totalorder %s16, 1
    %p34 = por %p32, %p33
    %p35 = scmp.ne.s32.totalorder %s24, %s25
    %p36 = scmp.eq.s32.totalorder %s16, 0
    %p37 = por %p35, %p36
    %p38 = scmp.ne.s32.totalorder %s24, %s25
    %p39 = scmp.eq.s32.totalorder %s17, 1
    %p40 = por %p38, %p39
    %p42 = scmp.ne.s32.totalorder %s25, %s41
    %p43 = scmp.eq.s32.totalorder %s17, 0
    %p44 = por %p42, %p43
    %s46 = sadd.s32 %s45, 1
    %p49 = scmp.eq.s32.totalorder %s11, 1
    %p50 = scmp.ne.s32.totalorder %s45, %s47
    %p51 = scmp.eq.s32.totalorder %s11, 0
    %p52 = por %p50, %p51
    %p53 = scmp.ne.s32.totalorder %s45, %s47
    %p54 = scmp.eq.s32.totalorder %s16, 1
    %p55 = por %p53, %p54
    %p56 = scmp.ne.s32.totalorder %s47, %s48
    %p57 = scmp.eq.s32.totalorder %s16, 0
    %p58 = por %p56, %p57
    %p59 = scmp.ne.s32.totalorder %s47, %s48
    %p60 = scmp.eq.s32.totalorder %s17, 1
    %p61 = por %p59, %p60
    %p63 = scmp.ne.s32.totalorder %s48, %s62
    %p64 = scmp.eq.s32.totalorder %s17, 0
    %p65 = por %p63, %p64
    %s67 = sadd.s32 %s66, 1
    %p70 = scmp.eq.s32.totalorder %s11, 1
    %p71 = scmp.ne.s32.totalorder %s66, %s68
    %p72 = scmp.eq.s32.totalorder %s11, 0
    %p73 = por %p71, %p72
    %p74 = scmp.ne.s32.totalorder %s66, %s68
    %p75 = scmp.eq.s32.totalorder %s16, 1
    %p76 = por %p74, %p75
    %p77 = scmp.ne.s32.totalorder %s68, %s69
    %p78 = scmp.eq.s32.totalorder %s16, 0
    %p79 = por %p77, %p78
    %p80 = scmp.ne.s32.totalorder %s68, %s69
    %p81 = scmp.eq.s32.totalorder %s17, 1
    %p82 = por %p80, %p81
    %p84 = scmp.ne.s32.totalorder %s69, %s83
    %p85 = scmp.eq.s32.totalorder %s17, 0
    %p86 = por %p84, %p85
    %s87 = ssub.s32 %s11, %s18
    %p88 = scmp.eq.s32.totalorder %s87, 0
    %s90 = sadd.s32 %s89, 1
    %s91 = scalar_select %p88, %s89, %s90
    %p94 = pneg %p88
    %p95 = scmp.eq.s32.totalorder %s11, 1
    %p96 = por %p94, %p95
    %p97 = scmp.ne.s32.totalorder %s89, %s92
    %p98 = scmp.eq.s32.totalorder %s11, 0
    %p99 = por %p97, %p98
    %p100 = scmp.ne.s32.totalorder %s89, %s92
    %p101 = scmp.eq.s32.totalorder %s16, 1
    %p102 = por %p100, %p101
    %p103 = scmp.ne.s32.totalorder %s92, %s93
    %p104 = scmp.eq.s32.totalorder %s16, 0
    %p105 = por %p103, %p104
    %p106 = scmp.ne.s32.totalorder %s92, %s93
    %p107 = scmp.eq.s32.totalorder %s17, 1
    %p108 = por %p106, %p107
    %p110 = scmp.ne.s32.totalorder %s93, %s109
    %p111 = scmp.eq.s32.totalorder %s17, 0
    %p112 = por %p110, %p111
    %s113 = ssub.s32 %s11, %s18
    %p114 = scmp.eq.s32.totalorder %s113, 0
    %s116 = sadd.s32 %s115, 1
    %s117 = scalar_select %p114, %s115, %s116
    %p120 = pneg %p114
    %p121 = scmp.eq.s32.totalorder %s11, 1
    %p122 = por %p120, %p121
    %p123 = scmp.ne.s32.totalorder %s115, %s118
    %p124 = scmp.eq.s32.totalorder %s11, 0
    %p125 = por %p123, %p124
    %p126 = scmp.ne.s32.totalorder %s115, %s118
    %p127 = scmp.eq.s32.totalorder %s16, 1
    %p128 = por %p126, %p127
    %p129 = scmp.ne.s32.totalorder %s118, %s119
    %p130 = scmp.eq.s32.totalorder %s16, 0
    %p131 = por %p129, %p130
    %p132 = scmp.ne.s32.totalorder %s118, %s119
    %p133 = scmp.eq.s32.totalorder %s17, 1
    %p134 = por %p132, %p133
    %p136 = scmp.ne.s32.totalorder %s119, %s135
    %p137 = scmp.eq.s32.totalorder %s17, 0
    %p138 = por %p136, %p137
    %p139 = scmp.le.s32.totalorder 1, %s11
    %p140 = scmp.lt.s32.totalorder %s11, 3
    %p141 = pnand %p139, %p140
    %p142 = pneg %p141
    // Predicated region
    $region9: #{sgformer_forward.9} parent=5 // pred_check
      _
    $region10: #{sgformer_forward.9} parent=5 // pred_check_branch
      %144 = sbr.rel (%p141) target = $region12
    $region11: #{sgformer_forward.9} parent=5 // pred_region
      %s145 = ssub.s32 %s11, 1
      // Predicated region
      $region13: #{sgformer_forward.9} parent=11 // pred_check
        %p146 = pneg %p58
      $region14: #{sgformer_forward.9} parent=11 // pred_check_branch
        %148 = sbr.rel (%p146) target = $region16
      $region15: #{sgformer_forward.9} parent=11 // pred_region
        _
      $region16: #{sgformer_forward.9} parent=11 // pred_fallthru
        _
      // Predicated region
      $region17: #{sgformer_forward.9} parent=11 // pred_check
        %p149 = pneg %p79
      $region18: #{sgformer_forward.9} parent=11 // pred_check_branch
        %151 = sbr.rel (%p149) target = $region20
      $region19: #{sgformer_forward.9} parent=11 // pred_region
        _
      $region20: #{sgformer_forward.9} parent=11 // pred_fallthru
        _
    $region12: #{sgformer_forward.9} parent=5 // pred_fallthru
      _
    %p152 = scmp.lt.s32.totalorder %s11, 2
    // Predicated region
    $region21: #{sgformer_forward.9} parent=5 // pred_check
      %p153 = pneg %p152
    $region22: #{sgformer_forward.9} parent=5 // pred_check_branch
      %155 = sbr.rel (%p153) target = $region24
    $region23: #{sgformer_forward.9} parent=5 // pred_region
      // Predicated region
      $region25: #{sgformer_forward.9} parent=23 // pred_check
        %p156 = pneg %p31
      $region26: #{sgformer_forward.9} parent=23 // pred_check_branch
        %158 = sbr.rel (%p156) target = $region28
      $region27: #{sgformer_forward.9} parent=23 // pred_region
        %s159 = smul.u32 16, %s11
        %p160 = scmp.lt.s32.totalorder %s159, 31
        %s161 = scalar_select %p160, %s159, 31
        %s162 = smul.addr %s161, 4
        %s163 = scalar_lea.vmem %s0, %s162
        %s164 = smul.u32 16, %s11
      $region28: #{sgformer_forward.9} parent=23 // pred_fallthru
        _
    $region24: #{sgformer_forward.9} parent=5 // pred_fallthru
      _
    %p165 = scmp.le.s32.totalorder 1, %s11
    %p166 = scmp.lt.s32.totalorder %s11, 3
    %p167 = pnand %p165, %p166
    %p168 = pneg %p167
    // Predicated region
    $region29: #{sgformer_forward.9} parent=5 // pred_check
      _
    $region30: #{sgformer_forward.9} parent=5 // pred_check_branch
      %170 = sbr.rel (%p167) target = $region32
    $region31: #{sgformer_forward.9} parent=5 // pred_region
      %s171 = ssub.s32 %s11, 1
      %s172 = smul.u32 16, %s16
      %p173 = scmp.lt.s32.totalorder %s172, 31
      %s174 = scalar_select %p173, %s172, 31
      %s175 = smul.addr %s174, 4
      %s176 = scalar_lea.vmem %s0, %s175
      %p177 = pneg %p37
      %p178 = pneg %p34
      %p179 = pneg %p58
      %p180 = pneg %p55
      %p181 = pneg %p79
      %p182 = pneg %p76
      %p183 = pneg %p105
      %p184 = pneg %p102
      %s185 = smul.u32 16, %s16
      %p186 = scmp.lt.s32.totalorder %s185, 31
      %s187 = scalar_select %p186, %s185, 31
      %s188 = smul.addr %s187, 2
      %s189 = smul.addr %s188, 4
      %s190 = scalar_lea.vmem %s3, %s189
      %p191 = pneg %p131
      %p192 = pneg %p128
      %s193 = smul.u32 16, %s16
      %p194 = scmp.lt.s32.totalorder %s193, 31
      %s195 = scalar_select %p194, %s193, 31
      %s196 = smul.addr %s195, 4
      %s197 = scalar_lea.vmem %s4, %s196
      %s198 = smul.u32 16, %s16
      %p199 = scmp.lt.s32.totalorder %s198, 31
      %s200 = scalar_select %p199, %s198, 31
      %s201 = smul.addr %s200, 4
      %s202 = scalar_lea.vmem %s0, %s201
      %s203 = smul.u32 16, %s16
      %s204 = smul.u32 16, %s16
      %p205 = scmp.lt.s32.totalorder %s204, 31
      %s206 = scalar_select %p205, %s204, 31
      %s207 = smul.addr %s206, 2
      %s208 = smul.addr %s207, 4
      %s209 = scalar_lea.vmem %s3, %s208
      %s210 = smul.u32 16, %s16
      %s211 = smul.u32 16, %s16
      %p212 = scmp.lt.s32.totalorder %s211, 31
      %s213 = scalar_select %p212, %s211, 31
      %s214 = smul.addr %s213, 4
      %s215 = scalar_lea.vmem %s4, %s214
      %s216 = smul.u32 16, %s16
      %v218 = vld [vmem:[%s202] sm:$0xf]
      %v219 = vld [vmem:[%s202 + $0x4] sm:$0xf]
      %v220 = vld [vmem:[%s202 + $0x8] sm:$0xf]
      %v221 = vld [vmem:[%s202 + $0xc] sm:$0xf]
      %v222 = vld [vmem:[%s202 + $0x10] sm:$0xf]
      %v223 = vld [vmem:[%s202 + $0x14] sm:$0xf]
      %v224 = vld [vmem:[%s202 + $0x18] sm:$0xf]
      %v225 = vld [vmem:[%s202 + $0x1c] sm:$0xf]
      %v226 = vld [vmem:[%s202 + $0x20] sm:$0xf]
      %v227 = vld [vmem:[%s202 + $0x24] sm:$0xf]
      %v228 = vld [vmem:[%s202 + $0x28] sm:$0xf]
      %v229 = vld [vmem:[%s202 + $0x2c] sm:$0xf]
      %v230 = vld [vmem:[%s202 + $0x30] sm:$0xf]
      %v231 = vld [vmem:[%s202 + $0x34] sm:$0xf]
      %v232 = vld [vmem:[%s202 + $0x38] sm:$0xf]
      %v233 = vld [vmem:[%s202 + $0x3c] sm:$0xf]
      %v234 = vld [vmem:[%s1] sm:$0xff]
      %v235 = vld [vmem:[%s1 + $0x8] sm:$0xf]
      %v236 = vld [vmem:[%s1 + $0xc] sm:$0xff]
      %v237 = vld [vmem:[%s1 + $0x14] sm:$0xf]
      %v238 = vld [vmem:[%s1 + $0x18] sm:$0xff]
      %v239 = vld [vmem:[%s1 + $0x20] sm:$0xf]
      %v240 = vld [vmem:[%s1 + $0x24] sm:$0xff]
      %v241 = vld [vmem:[%s1 + $0x2c] sm:$0xf]
      %v242 = vld [vmem:[%s1 + $0x30] sm:$0xff]
      %v243 = vld [vmem:[%s1 + $0x38] sm:$0xf]
      %v244 = vld [vmem:[%s1 + $0x3c] sm:$0xff]
      %v245 = vld [vmem:[%s1 + $0x44] sm:$0xf]
      %v246 = vld [vmem:[%s1 + $0x48] sm:$0xff]
      %v247 = vld [vmem:[%s1 + $0x50] sm:$0xf]
      %v248 = vld [vmem:[%s1 + $0x54] sm:$0xff]
      %v249 = vld [vmem:[%s1 + $0x5c] sm:$0xf]
      %v250 = vld [vmem:[%s1 + $0x60] sm:$0xff]
      %v251 = vld [vmem:[%s1 + $0x68] sm:$0xf]
      %v252 = vld [vmem:[%s1 + $0x6c] sm:$0xff]
      %v253 = vld [vmem:[%s1 + $0x74] sm:$0xf]
      %v254 = vld [vmem:[%s1 + $0x78] sm:$0xff]
      %v255 = vld [vmem:[%s1 + $0x80] sm:$0xf]
      %v256 = vld [vmem:[%s1 + $0x84] sm:$0xff]
      %v257 = vld [vmem:[%s1 + $0x8c] sm:$0xf]
      %v258 = vld [vmem:[%s1 + $0x90] sm:$0xff]
      %v259 = vld [vmem:[%s1 + $0x98] sm:$0xf]
      %v260 = vld [vmem:[%s1 + $0x9c] sm:$0xff]
      %v261 = vld [vmem:[%s1 + $0xa4] sm:$0xf]
      %v262 = vld [vmem:[%s1 + $0xa8] sm:$0xff]
      %v263 = vld [vmem:[%s1 + $0xb0] sm:$0xf]
      %v264 = vld [vmem:[%s1 + $0xb4] sm:$0xff]
      %v265 = vld [vmem:[%s1 + $0xbc] sm:$0xf]
      %v266 = vld [vmem:[%s2] sm:$0x7]
      %v268 = vlaneseq
      %v269 = vshrl.u32 %v268, 7
      %v270 = vsub.s32 0, %v269
      %v271 = vrot.slane %v266, %v270
      %v272 = vlaneseq
      %v273 = vshrl.u32 %v272, 7
      %v274 = vsub.s32 1, %v273
      %v275 = vrot.slane %v266, %v274
      %v276 = vlaneseq
      %v277 = vshrl.u32 %v276, 7
      %v278 = vsub.s32 2, %v277
      %v279 = vrot.slane %v266, %v278
      %v299 = vunpack.c.l.b16 %v218
      %v300 = vunpack.c.l.b16 %v219
      %v301 = vunpack.c.l.b16 %v220
      %v302 = vunpack.c.l.b16 %v221
      %v303 = vunpack.c.l.b16 %v222
      %v304 = vunpack.c.l.b16 %v223
      %v305 = vunpack.c.l.b16 %v224
      %v306 = vunpack.c.l.b16 %v225
      %v307 = vunpack.c.l.b16 %v226
      %v308 = vunpack.c.l.b16 %v227
      %v309 = vunpack.c.l.b16 %v228
      %v310 = vunpack.c.l.b16 %v229
      %v311 = vunpack.c.l.b16 %v230
      %v312 = vunpack.c.l.b16 %v231
      %v313 = vunpack.c.l.b16 %v232
      %v314 = vunpack.c.l.b16 %v233
      %v315 = vpack.c.b16 %v300, %v299
      %v316 = vpack.c.b16 %v302, %v301
      %v317 = vpack.c.b16 %v304, %v303
      %v318 = vpack.c.b16 %v306, %v305
      %v319 = vpack.c.b16 %v308, %v307
      %v320 = vpack.c.b16 %v310, %v309
      %v321 = vpack.c.b16 %v312, %v311
      %v322 = vpack.c.b16 %v314, %v313
      %v363 = vunpack.c.l.b16 %v234
      %v364 = vunpack.c.h.b16 %v234
      %v365 = vunpack.c.l.b16 %v235
      %v366 = vunpack.c.l.b16 %v236
      %v367 = vunpack.c.h.b16 %v236
      %v368 = vunpack.c.l.b16 %v237
      %v369 = vunpack.c.l.b16 %v238
      %v370 = vunpack.c.h.b16 %v238
      %v371 = vunpack.c.l.b16 %v239
      %v372 = vunpack.c.l.b16 %v240
      %v373 = vunpack.c.h.b16 %v240
      %v374 = vunpack.c.l.b16 %v241
      %v375 = vunpack.c.l.b16 %v242
      %v376 = vunpack.c.h.b16 %v242
      %v377 = vunpack.c.l.b16 %v243
      %v378 = vunpack.c.l.b16 %v244
      %v379 = vunpack.c.h.b16 %v244
      %v380 = vunpack.c.l.b16 %v245
      %v381 = vunpack.c.l.b16 %v246
      %v382 = vunpack.c.h.b16 %v246
      %v383 = vunpack.c.l.b16 %v247
      %v384 = vunpack.c.l.b16 %v248
      %v385 = vunpack.c.h.b16 %v248
      %v386 = vunpack.c.l.b16 %v249
      %v387 = vunpack.c.l.b16 %v250
      %v388 = vunpack.c.h.b16 %v250
      %v389 = vunpack.c.l.b16 %v251
      %v390 = vunpack.c.l.b16 %v252
      %v391 = vunpack.c.h.b16 %v252
      %v392 = vunpack.c.l.b16 %v253
      %v393 = vunpack.c.l.b16 %v254
      %v394 = vunpack.c.h.b16 %v254
      %v395 = vunpack.c.l.b16 %v255
      %v396 = vunpack.c.l.b16 %v256
      %v397 = vunpack.c.h.b16 %v256
      %v398 = vunpack.c.l.b16 %v257
      %v399 = vunpack.c.l.b16 %v258
      %v400 = vunpack.c.h.b16 %v258
      %v401 = vunpack.c.l.b16 %v259
      %v402 = vunpack.c.l.b16 %v260
      %v403 = vunpack.c.h.b16 %v260
      %v404 = vunpack.c.l.b16 %v261
      %v405 = vunpack.c.l.b16 %v262
      %v406 = vunpack.c.h.b16 %v262
      %v407 = vunpack.c.l.b16 %v263
      %v408 = vunpack.c.l.b16 %v264
      %v409 = vunpack.c.h.b16 %v264
      %v410 = vunpack.c.l.b16 %v265
      %v411 = vpack.c.b16 %v366, %v363
      %v412 = vpack.c.b16 %v367, %v364
      %v413 = vpack.c.b16 %v368, %v365
      %v414 = vpack.c.b16 %v372, %v369
      %v415 = vpack.c.b16 %v373, %v370
      %v416 = vpack.c.b16 %v374, %v371
      %v417 = vpack.c.b16 %v378, %v375
      %v418 = vpack.c.b16 %v379, %v376
      %v419 = vpack.c.b16 %v380, %v377
      %v420 = vpack.c.b16 %v384, %v381
      %v421 = vpack.c.b16 %v385, %v382
      %v422 = vpack.c.b16 %v386, %v383
      %v423 = vpack.c.b16 %v390, %v387
      %v424 = vpack.c.b16 %v391, %v388
      %v425 = vpack.c.b16 %v392, %v389
      %v426 = vpack.c.b16 %v396, %v393
      %v427 = vpack.c.b16 %v397, %v394
      %v428 = vpack.c.b16 %v398, %v395
      %v429 = vpack.c.b16 %v402, %v399
      %v430 = vpack.c.b16 %v403, %v400
      %v431 = vpack.c.b16 %v404, %v401
      %v432 = vpack.c.b16 %v408, %v405
      %v433 = vpack.c.b16 %v409, %v406
      %v434 = vpack.c.b16 %v410, %v407
      %459 = vmatprep.subr.bf16.mxu0 %v433
      %460 = vmatpush1.bf16.msra.mxu0 %v432
      %461 = vmatprep.subr.bf16.mxu0 %v430
      %462 = vmatpush1.bf16.msra.mxu0 %v429
      %463 = vmatprep.subr.bf16.mxu0 %v427
      %464 = vmatpush1.bf16.msra.mxu0 %v426
      %465 = vmatprep.subr.bf16.mxu0 %v424
      %466 = vmatpush1.bf16.msra.mxu0 %v423
      %467 = vmatprep.subr.bf16.mxu0 %v421
      %468 = vmatpush1.bf16.msra.mxu0 %v420
      %469 = vmatprep.subr.bf16.mxu0 %v418
      %470 = vmatpush1.bf16.msra.mxu0 %v417
      %471 = vmatprep.subr.bf16.mxu0 %v415
      %472 = vmatpush1.bf16.msra.mxu0 %v414
      %473 = vmatprep.subr.bf16.mxu0 %v412
      %474 = vmatpush1.bf16.msra.mxu0 %v411
      %475 = vmatprep.subr.bf16.mxu0 0
      %476 = vmatpush2.bf16.msra.mxu0 0
      %477 = vmatprep.subr.bf16.mxu0 0
      %478 = vmatpush2.bf16.msra.mxu0 0
      %479 = vmatprep.subr.bf16.mxu0 0
      %480 = vmatpush2.bf16.msra.mxu0 0
      %481 = vmatprep.subr.bf16.mxu0 0
      %482 = vmatpush2.bf16.msra.mxu0 0
      %483 = vmatprep.subr.bf16.mxu0 0
      %484 = vmatpush2.bf16.msra.mxu0 0
      %485 = vmatprep.subr.bf16.mxu0 0
      %486 = vmatpush2.bf16.msra.mxu0 0
      %487 = vmatprep.subr.bf16.mxu0 0
      %488 = vmatpush2.bf16.msra.mxu0 0
      %489 = vmatprep.subr.bf16.mxu0 0
      %490 = vmatpush2.bf16.msra.mxu0 0
      %491 = vmatprep.mubr.bf16.mxu0 0
      %492 = vmatmul.mubr.bf16.gmra.mxu0 %v315
      %v493 = vpop.f32.mrf.mxu0
      %v494 = vadd.f32 %v271, %v493
      %v495 = vpop.f32.mrf.mxu0
      %v496 = vadd.f32 %v275, %v495
      %v497 = vpop.f32.mrf.mxu0
      %v498 = vadd.f32 %v271, %v497
      %v499 = vpop.f32.mrf.mxu0
      %v500 = vadd.f32 %v275, %v499
      %501 = vmatprep.mubr.bf16.mxu0 0
      %502 = vmatmul.mubr.bf16.gmra.mxu0 %v316
      %v503 = vpop.f32.mrf.mxu0
      %v504 = vadd.f32 %v271, %v503
      %v505 = vpop.f32.mrf.mxu0
      %v506 = vadd.f32 %v275, %v505
      %v507 = vpop.f32.mrf.mxu0
      %v508 = vadd.f32 %v271, %v507
      %v509 = vpop.f32.mrf.mxu0
      %v510 = vadd.f32 %v275, %v509
      %511 = vmatprep.mubr.bf16.mxu0 0
      %512 = vmatmul.mubr.bf16.gmra.mxu0 %v317
      %v513 = vpop.f32.mrf.mxu0
      %v514 = vadd.f32 %v271, %v513
      %v515 = vpop.f32.mrf.mxu0
      %v516 = vadd.f32 %v275, %v515
      %v517 = vpop.f32.mrf.mxu0
      %v518 = vadd.f32 %v271, %v517
      %v519 = vpop.f32.mrf.mxu0
      %v520 = vadd.f32 %v275, %v519
      %521 = vmatprep.mubr.bf16.mxu0 0
      %522 = vmatmul.mubr.bf16.gmra.mxu0 %v318
      %v523 = vpop.f32.mrf.mxu0
      %v524 = vadd.f32 %v271, %v523
      %v525 = vpop.f32.mrf.mxu0
      %v526 = vadd.f32 %v275, %v525
      %v527 = vpop.f32.mrf.mxu0
      %v528 = vadd.f32 %v271, %v527
      %v529 = vpop.f32.mrf.mxu0
      %v530 = vadd.f32 %v275, %v529
      %531 = vmatprep.mubr.bf16.mxu0 0
      %532 = vmatmul.mubr.bf16.gmra.mxu0 %v319
      %v533 = vpop.f32.mrf.mxu0
      %v534 = vadd.f32 %v271, %v533
      %v535 = vpop.f32.mrf.mxu0
      %v536 = vadd.f32 %v275, %v535
      %v537 = vpop.f32.mrf.mxu0
      %v538 = vadd.f32 %v271, %v537
      %v539 = vpop.f32.mrf.mxu0
      %v540 = vadd.f32 %v275, %v539
      %541 = vmatprep.mubr.bf16.mxu0 0
      %542 = vmatmul.mubr.bf16.gmra.mxu0 %v320
      %v543 = vpop.f32.mrf.mxu0
      %v544 = vadd.f32 %v271, %v543
      %v545 = vpop.f32.mrf.mxu0
      %v546 = vadd.f32 %v275, %v545
      %v547 = vpop.f32.mrf.mxu0
      %v548 = vadd.f32 %v271, %v547
      %v549 = vpop.f32.mrf.mxu0
      %v550 = vadd.f32 %v275, %v549
      %551 = vmatprep.mubr.bf16.mxu0 0
      %552 = vmatmul.mubr.bf16.gmra.mxu0 %v321
      %v553 = vpop.f32.mrf.mxu0
      %v554 = vadd.f32 %v271, %v553
      %v555 = vpop.f32.mrf.mxu0
      %v556 = vadd.f32 %v275, %v555
      %v557 = vpop.f32.mrf.mxu0
      %v558 = vadd.f32 %v271, %v557
      %v559 = vpop.f32.mrf.mxu0
      %v560 = vadd.f32 %v275, %v559
      %561 = vmatprep.mubr.bf16.mxu0 0
      %562 = vmatmul.mubr.bf16.gmra.mxu0 %v322
      %v563 = vpop.f32.mrf.mxu0
      %v564 = vadd.f32 %v271, %v563
      %v565 = vpop.f32.mrf.mxu0
      %v566 = vadd.f32 %v275, %v565
      %v567 = vpop.f32.mrf.mxu0
      %v568 = vadd.f32 %v271, %v567
      %v569 = vpop.f32.mrf.mxu0
      %v570 = vadd.f32 %v275, %v569
      %571 = vdwg.mxu0
      %572 = vmatprep.subr.bf16.mxu0 0
      %573 = vmatpush1.bf16.msra.mxu0 %v434
      %574 = vmatprep.subr.bf16.mxu0 0
      %575 = vmatpush1.bf16.msra.mxu0 %v431
      %576 = vmatprep.subr.bf16.mxu0 0
      %577 = vmatpush1.bf16.msra.mxu0 %v428
      %578 = vmatprep.subr.bf16.mxu0 0
      %579 = vmatpush1.bf16.msra.mxu0 %v425
      %580 = vmatprep.subr.bf16.mxu0 0
      %581 = vmatpush1.bf16.msra.mxu0 %v422
      %582 = vmatprep.subr.bf16.mxu0 0
      %583 = vmatpush1.bf16.msra.mxu0 %v419
      %584 = vmatprep.subr.bf16.mxu0 0
      %585 = vmatpush1.bf16.msra.mxu0 %v416
      %586 = vmatprep.subr.bf16.mxu0 0
      %587 = vmatpush1.bf16.msra.mxu0 %v413
      %588 = vmatprep.subr.bf16.mxu0 0
      %589 = vmatpush2.bf16.msra.mxu0 0
      %590 = vmatprep.subr.bf16.mxu0 0
      %591 = vmatpush2.bf16.msra.mxu0 0
      %592 = vmatprep.subr.bf16.mxu0 0
      %593 = vmatpush2.bf16.msra.mxu0 0
      %594 = vmatprep.subr.bf16.mxu0 0
      %595 = vmatpush2.bf16.msra.mxu0 0
      %596 = vmatprep.subr.bf16.mxu0 0
      %597 = vmatpush2.bf16.msra.mxu0 0
      %598 = vmatprep.subr.bf16.mxu0 0
      %599 = vmatpush2.bf16.msra.mxu0 0
      %600 = vmatprep.subr.bf16.mxu0 0
      %601 = vmatpush2.bf16.msra.mxu0 0
      %602 = vmatprep.subr.bf16.mxu0 0
      %603 = vmatpush2.bf16.msra.mxu0 0
      %604 = vmatprep.mubr.bf16.mxu0 0
      %605 = vmatmul.mubr.bf16.gmra.mxu0 %v315
      %v606 = vpop.f32.mrf.mxu0
      %v607 = vadd.f32 %v279, %v606
      %v608 = vpop.f32.mrf.mxu0
      %v609 = vpop.f32.mrf.mxu0
      %v610 = vadd.f32 %v279, %v609
      %v611 = vpop.f32.mrf.mxu0
      %612 = vmatprep.mubr.bf16.mxu0 0
      %613 = vmatmul.mubr.bf16.gmra.mxu0 %v316
      %v614 = vpop.f32.mrf.mxu0
      %v615 = vadd.f32 %v279, %v614
      %v616 = vpop.f32.mrf.mxu0
      %v617 = vpop.f32.mrf.mxu0
      %v618 = vadd.f32 %v279, %v617
      %v619 = vpop.f32.mrf.mxu0
      %620 = vmatprep.mubr.bf16.mxu0 0
      %621 = vmatmul.mubr.bf16.gmra.mxu0 %v317
      %v622 = vpop.f32.mrf.mxu0
      %v623 = vadd.f32 %v279, %v622
      %v624 = vpop.f32.mrf.mxu0
      %v625 = vpop.f32.mrf.mxu0
      %v626 = vadd.f32 %v279, %v625
      %v627 = vpop.f32.mrf.mxu0
      %628 = vmatprep.mubr.bf16.mxu0 0
      %629 = vmatmul.mubr.bf16.gmra.mxu0 %v318
      %v630 = vpop.f32.mrf.mxu0
      %v631 = vadd.f32 %v279, %v630
      %v632 = vpop.f32.mrf.mxu0
      %v633 = vpop.f32.mrf.mxu0
      %v634 = vadd.f32 %v279, %v633
      %v635 = vpop.f32.mrf.mxu0
      %636 = vmatprep.mubr.bf16.mxu0 0
      %637 = vmatmul.mubr.bf16.gmra.mxu0 %v319
      %v638 = vpop.f32.mrf.mxu0
      %v639 = vadd.f32 %v279, %v638
      %v640 = vpop.f32.mrf.mxu0
      %v641 = vpop.f32.mrf.mxu0
      %v642 = vadd.f32 %v279, %v641
      %v643 = vpop.f32.mrf.mxu0
      %644 = vmatprep.mubr.bf16.mxu0 0
      %645 = vmatmul.mubr.bf16.gmra.mxu0 %v320
      %v646 = vpop.f32.mrf.mxu0
      %v647 = vadd.f32 %v279, %v646
      %v648 = vpop.f32.mrf.mxu0
      %v649 = vpop.f32.mrf.mxu0
      %v650 = vadd.f32 %v279, %v649
      %v651 = vpop.f32.mrf.mxu0
      %652 = vmatprep.mubr.bf16.mxu0 0
      %653 = vmatmul.mubr.bf16.gmra.mxu0 %v321
      %v654 = vpop.f32.mrf.mxu0
      %v655 = vadd.f32 %v279, %v654
      %v656 = vpop.f32.mrf.mxu0
      %v657 = vpop.f32.mrf.mxu0
      %v658 = vadd.f32 %v279, %v657
      %v659 = vpop.f32.mrf.mxu0
      %660 = vmatprep.mubr.bf16.mxu0 0
      %661 = vmatmul.mubr.bf16.gmra.mxu0 %v322
      %v662 = vpop.f32.mrf.mxu0
      %v663 = vadd.f32 %v279, %v662
      %v664 = vpop.f32.mrf.mxu0
      %v665 = vpop.f32.mrf.mxu0
      %v666 = vadd.f32 %v279, %v665
      %v667 = vpop.f32.mrf.mxu0
      %668 = vdwg.mxu0
      %v669 = vpack.c.bf16 %v498, %v494
      %v670 = vpack.c.bf16 %v500, %v496
      %v671 = vpack.c.bf16 %v508, %v504
      %v672 = vpack.c.bf16 %v510, %v506
      %v673 = vpack.c.bf16 %v518, %v514
      %v674 = vpack.c.bf16 %v520, %v516
      %v675 = vpack.c.bf16 %v528, %v524
      %v676 = vpack.c.bf16 %v530, %v526
      %v677 = vpack.c.bf16 %v538, %v534
      %v678 = vpack.c.bf16 %v540, %v536
      %v679 = vpack.c.bf16 %v548, %v544
      %v680 = vpack.c.bf16 %v550, %v546
      %v681 = vpack.c.bf16 %v558, %v554
      %v682 = vpack.c.bf16 %v560, %v556
      %v683 = vpack.c.bf16 %v568, %v564
      %v684 = vpack.c.bf16 %v570, %v566
      %v701 = vunpack.c.l.b16 %v669
      %v702 = vunpack.c.l.b16 %v670
      %v703 = vunpack.c.h.b16 %v669
      %v704 = vunpack.c.h.b16 %v670
      %v705 = vunpack.c.l.b16 %v671
      %v706 = vunpack.c.l.b16 %v672
      %v707 = vunpack.c.h.b16 %v671
      %v708 = vunpack.c.h.b16 %v672
      %v709 = vunpack.c.l.b16 %v673
      %v710 = vunpack.c.l.b16 %v674
      %v711 = vunpack.c.h.b16 %v673
      %v712 = vunpack.c.h.b16 %v674
      %v713 = vunpack.c.l.b16 %v675
      %v714 = vunpack.c.l.b16 %v676
      %v715 = vunpack.c.h.b16 %v675
      %v716 = vunpack.c.h.b16 %v676
      %v717 = vunpack.c.l.b16 %v677
      %v718 = vunpack.c.l.b16 %v678
      %v719 = vunpack.c.h.b16 %v677
      %v720 = vunpack.c.h.b16 %v678
      %v721 = vunpack.c.l.b16 %v679
      %v722 = vunpack.c.l.b16 %v680
      %v723 = vunpack.c.h.b16 %v679
      %v724 = vunpack.c.h.b16 %v680
      %v725 = vunpack.c.l.b16 %v681
      %v726 = vunpack.c.l.b16 %v682
      %v727 = vunpack.c.h.b16 %v681
      %v728 = vunpack.c.h.b16 %v682
      %v729 = vunpack.c.l.b16 %v683
      %v730 = vunpack.c.l.b16 %v684
      %v731 = vunpack.c.h.b16 %v683
      %v732 = vunpack.c.h.b16 %v684
      %v733 = vpack.c.b16 %v702, %v701
      %v734 = vpack.c.b16 %v704, %v703
      %v735 = vpack.c.b16 %v706, %v705
      %v736 = vpack.c.b16 %v708, %v707
      %v737 = vpack.c.b16 %v710, %v709
      %v738 = vpack.c.b16 %v712, %v711
      %v739 = vpack.c.b16 %v714, %v713
      %v740 = vpack.c.b16 %v716, %v715
      %v741 = vpack.c.b16 %v718, %v717
      %v742 = vpack.c.b16 %v720, %v719
      %v743 = vpack.c.b16 %v722, %v721
      %v744 = vpack.c.b16 %v724, %v723
      %v745 = vpack.c.b16 %v726, %v725
      %v746 = vpack.c.b16 %v728, %v727
      %v747 = vpack.c.b16 %v730, %v729
      %v748 = vpack.c.b16 %v732, %v731
      %765 = vst [vmem:[%s209] sm:$0xff] %v733
      %766 = vst [vmem:[%s209 + $0x8] sm:$0xff] %v734
      %767 = vst [vmem:[%s209 + $0x10] sm:$0xff] %v735
      %768 = vst [vmem:[%s209 + $0x18] sm:$0xff] %v736
      %769 = vst [vmem:[%s209 + $0x20] sm:$0xff] %v737
      %770 = vst [vmem:[%s209 + $0x28] sm:$0xff] %v738
      %771 = vst [vmem:[%s209 + $0x30] sm:$0xff] %v739
      %772 = vst [vmem:[%s209 + $0x38] sm:$0xff] %v740
      %773 = vst [vmem:[%s209 + $0x40] sm:$0xff] %v741
      %774 = vst [vmem:[%s209 + $0x48] sm:$0xff] %v742
      %775 = vst [vmem:[%s209 + $0x50] sm:$0xff] %v743
      %776 = vst [vmem:[%s209 + $0x58] sm:$0xff] %v744
      %777 = vst [vmem:[%s209 + $0x60] sm:$0xff] %v745
      %778 = vst [vmem:[%s209 + $0x68] sm:$0xff] %v746
      %779 = vst [vmem:[%s209 + $0x70] sm:$0xff] %v747
      %780 = vst [vmem:[%s209 + $0x78] sm:$0xff] %v748
      %v781 = vpack.c.bf16 %v610, %v607
      %v782 = vpack.c.bf16 %v618, %v615
      %v783 = vpack.c.bf16 %v626, %v623
      %v784 = vpack.c.bf16 %v634, %v631
      %v785 = vpack.c.bf16 %v642, %v639
      %v786 = vpack.c.bf16 %v650, %v647
      %v787 = vpack.c.bf16 %v658, %v655
      %v788 = vpack.c.bf16 %v666, %v663
      %v797 = vunpack.c.l.b16 %v781
      %v798 = vunpack.c.h.b16 %v781
      %v799 = vunpack.c.l.b16 %v782
      %v800 = vunpack.c.h.b16 %v782
      %v801 = vunpack.c.l.b16 %v783
      %v802 = vunpack.c.h.b16 %v783
      %v803 = vunpack.c.l.b16 %v784
      %v804 = vunpack.c.h.b16 %v784
      %v805 = vunpack.c.l.b16 %v785
      %v806 = vunpack.c.h.b16 %v785
      %v807 = vunpack.c.l.b16 %v786
      %v808 = vunpack.c.h.b16 %v786
      %v809 = vunpack.c.l.b16 %v787
      %v810 = vunpack.c.h.b16 %v787
      %v811 = vunpack.c.l.b16 %v788
      %v812 = vunpack.c.h.b16 %v788
      %v813 = vpack.c.b16 %v797, %v797
      %v814 = vpack.c.b16 %v798, %v798
      %v815 = vpack.c.b16 %v799, %v799
      %v816 = vpack.c.b16 %v800, %v800
      %v817 = vpack.c.b16 %v801, %v801
      %v818 = vpack.c.b16 %v802, %v802
      %v819 = vpack.c.b16 %v803, %v803
      %v820 = vpack.c.b16 %v804, %v804
      %v821 = vpack.c.b16 %v805, %v805
      %v822 = vpack.c.b16 %v806, %v806
      %v823 = vpack.c.b16 %v807, %v807
      %v824 = vpack.c.b16 %v808, %v808
      %v825 = vpack.c.b16 %v809, %v809
      %v826 = vpack.c.b16 %v810, %v810
      %v827 = vpack.c.b16 %v811, %v811
      %v828 = vpack.c.b16 %v812, %v812
      %845 = vst [vmem:[%s215] sm:$0xf] %v813
      %846 = vst [vmem:[%s215 + $0x4] sm:$0xf] %v814
      %847 = vst [vmem:[%s215 + $0x8] sm:$0xf] %v815
      %848 = vst [vmem:[%s215 + $0xc] sm:$0xf] %v816
      %849 = vst [vmem:[%s215 + $0x10] sm:$0xf] %v817
      %850 = vst [vmem:[%s215 + $0x14] sm:$0xf] %v818
      %851 = vst [vmem:[%s215 + $0x18] sm:$0xf] %v819
      %852 = vst [vmem:[%s215 + $0x1c] sm:$0xf] %v820
      %853 = vst [vmem:[%s215 + $0x20] sm:$0xf] %v821
      %854 = vst [vmem:[%s215 + $0x24] sm:$0xf] %v822
      %855 = vst [vmem:[%s215 + $0x28] sm:$0xf] %v823
      %856 = vst [vmem:[%s215 + $0x2c] sm:$0xf] %v824
      %857 = vst [vmem:[%s215 + $0x30] sm:$0xf] %v825
      %858 = vst [vmem:[%s215 + $0x34] sm:$0xf] %v826
      %859 = vst [vmem:[%s215 + $0x38] sm:$0xf] %v827
      %860 = vst [vmem:[%s215 + $0x3c] sm:$0xf] %v828
      %s861 = smul.u32 16, %s16
      %p862 = scmp.lt.s32.totalorder %s861, 31
      %s863 = scalar_select %p862, %s861, 31
      %s864 = smul.addr %s863, 2
      %s865 = smul.addr %s864, 4
      %s866 = scalar_lea.vmem %s3, %s865
      %s867 = smul.u32 16, %s16
      %p868 = scmp.lt.s32.totalorder %s867, 31
      %s869 = scalar_select %p868, %s867, 31
      %s870 = smul.addr %s869, 4
      %s871 = scalar_lea.vmem %s4, %s870
      // Predicated region
      $region33: #{sgformer_forward.9} parent=31 // pred_check
        %p872 = pneg %p102
      $region34: #{sgformer_forward.9} parent=31 // pred_check_branch
        %874 = sbr.rel (%p872) target = $region36
      $region35: #{sgformer_forward.9} parent=31 // pred_region
        %s875 = smul.u32 16, %s16
      $region36: #{sgformer_forward.9} parent=31 // pred_fallthru
        _
      // Predicated region
      $region37: #{sgformer_forward.9} parent=31 // pred_check
        %p876 = pneg %p128
      $region38: #{sgformer_forward.9} parent=31 // pred_check_branch
        %878 = sbr.rel (%p876) target = $region40
      $region39: #{sgformer_forward.9} parent=31 // pred_region
        %s879 = smul.u32 16, %s16
      $region40: #{sgformer_forward.9} parent=31 // pred_fallthru
        _
    $region32: #{sgformer_forward.9} parent=5 // pred_fallthru
      _
    %p880 = scmp.le.s32.totalorder 2, %s11
    // Predicated region
    $region41: #{sgformer_forward.9} parent=5 // pred_check
      %p881 = pneg %p880
    $region42: #{sgformer_forward.9} parent=5 // pred_check_branch
      %883 = sbr.rel (%p881) target = $region44
    $region43: #{sgformer_forward.9} parent=5 // pred_region
      %s884 = ssub.s32 %s11, 2
      // Predicated region
      $region45: #{sgformer_forward.9} parent=43 // pred_check
        %p885 = pneg %p108
      $region46: #{sgformer_forward.9} parent=43 // pred_check_branch
        %887 = sbr.rel (%p885) target = $region48
      $region47: #{sgformer_forward.9} parent=43 // pred_region
        %s888 = smul.u32 16, %s17
        %p889 = scmp.lt.s32.totalorder %s888, 31
        %s890 = scalar_select %p889, %s888, 31
        %s891 = smul.addr %s890, 2
        %s892 = smul.addr %s891, 4
        %s893 = scalar_lea.vmem %s3, %s892
      $region48: #{sgformer_forward.9} parent=43 // pred_fallthru
        _
      // Predicated region
      $region49: #{sgformer_forward.9} parent=43 // pred_check
        %p894 = pneg %p134
      $region50: #{sgformer_forward.9} parent=43 // pred_check_branch
        %896 = sbr.rel (%p894) target = $region52
      $region51: #{sgformer_forward.9} parent=43 // pred_region
        %s897 = smul.u32 16, %s17
        %p898 = scmp.lt.s32.totalorder %s897, 31
        %s899 = scalar_select %p898, %s897, 31
        %s900 = smul.addr %s899, 4
        %s901 = scalar_lea.vmem %s4, %s900
      $region52: #{sgformer_forward.9} parent=43 // pred_fallthru
        _
    $region44: #{sgformer_forward.9} parent=5 // pred_fallthru
      _
  $region6: #{sgformer_forward.9} parent=0 // loop_footer
    %s15 = sadd.s32 1, %s11
  $region7: #{sgformer_forward.9} parent=0 // loop_footer_branch
    %10 = sbr.rel target = $region3
  $region8: #{sgformer_forward.9} parent=0 // loop_exit
    _

// kernel: sgformer_forward.10
$region0: #{sgformer_forward.10}
  #allocation0 [shape = 'u32[]', space=smem, size = 0x4, offset = 0x4, fixed_abs, tag = 'smem constant byte address 0x4 - core index']
  #allocation1 [shape = 'u32[144,128]{1,0:T(1,128)}', space=vmem, size = 0x12000, scoped, tag = 'internal scratch']
  %s0 = inlined_call_operand.vmem [shape: bf16[256,256], index: 0, kind: input, shape index: {}]
  %s1 = inlined_call_operand.vmem [shape: bf16[256,128], index: 1, kind: input, shape index: {}]
  %s2 = inlined_call_operand.vmem [shape: f32[256,128], index: 2, kind: output, shape index: {0}]
  %s3 = inlined_call_operand.vmem [shape: f32[16,128], index: 3, kind: output, shape index: {1}]
  %4 = xla_tuple %s2, %s3
  %s5 = sld [smem:[#allocation0]]
  $region53: #{sgformer_forward.10} parent=0
    _
  %s7 = ssub.s32 1, %s5
  %s8 = scalar_select 0, %s7, %s5
  loop: start=0, step=1, limit=4
  $region2: #{sgformer_forward.10} parent=0 // loop_pre_header
    _
  $region3: #{sgformer_forward.10} parent=0 // loop_header
    %s10 = sphi 0, %s14
    %p11 = scmp.ge.s32.totalorder %s10, 4
    %s17 = sphi 0, %s29
    %s18 = sphi 0, %s25
    %s19 = sphi 0, %s17
    %s20 = sphi 0, %s18
    %s21 = sphi 0, %s19
    %s22 = sphi 0, %s20
    %s34 = sphi 0, %s36
    %s37 = sphi 0, %s34
    %s38 = sphi 0, %s37
    %s54 = sphi 0, %s38
    %s62 = sphi 0, %s64
    %s65 = sphi 0, %s62
    %s66 = sphi 0, %s65
    %s82 = sphi 0, %s66
    %s88 = sphi 0, %s90
    %s91 = sphi 0, %s88
    %s92 = sphi 0, %s91
    %s108 = sphi 0, %s92
    %s114 = sphi 0, %s116
    %s117 = sphi 0, %s114
    %s118 = sphi 0, %s117
    %s134 = sphi 0, %s118
  $region4: #{sgformer_forward.10} parent=0 // loop_header_branch
    %13 = sbr.rel (%p11) target = $region8
  $region5: #{sgformer_forward.10} parent=0 // loop_body
    %s15 = ssub.s32 %s10, 1
    %s16 = ssub.s32 %s10, 2
    %s23 = sadd.s32 1, %s18
    %p24 = scmp.ge.s32.totalorder %s23, 1
    %s25 = scalar_select %p24, 0, %s23
    %s26 = sadd.s32 1, %s17
    %s27 = scalar_select %p24, %s26, %s17
    %p28 = scmp.ge.s32.totalorder %s27, 2
    %s29 = scalar_select %p28, 0, %s27
    %s30 = sadd.s32 %s17, %s18
    %s31 = sadd.s32 %s29, %s25
    %s32 = ssub.s32 %s30, %s31
    %p33 = scmp.eq.s32.totalorder %s32, 0
    %s35 = sadd.s32 %s34, 1
    %s36 = scalar_select %p33, %s34, %s35
    %p39 = pneg %p33
    %p40 = scmp.eq.s32.totalorder %s10, 1
    %p41 = por %p39, %p40
    %p42 = scmp.ne.s32.totalorder %s34, %s37
    %p43 = scmp.eq.s32.totalorder %s10, 0
    %p44 = por %p42, %p43
    %p45 = scmp.ne.s32.totalorder %s34, %s37
    %p46 = scmp.eq.s32.totalorder %s15, 1
    %p47 = por %p45, %p46
    %p48 = scmp.ne.s32.totalorder %s37, %s38
    %p49 = scmp.eq.s32.totalorder %s15, 0
    %p50 = por %p48, %p49
    %p51 = scmp.ne.s32.totalorder %s37, %s38
    %p52 = scmp.eq.s32.totalorder %s16, 1
    %p53 = por %p51, %p52
    %p55 = scmp.ne.s32.totalorder %s38, %s54
    %p56 = scmp.eq.s32.totalorder %s16, 0
    %p57 = por %p55, %p56
    %s58 = sadd.s32 %s17, %s18
    %s59 = sadd.s32 %s29, %s25
    %s60 = ssub.s32 %s58, %s59
    %p61 = scmp.eq.s32.totalorder %s60, 0
    %s63 = sadd.s32 %s62, 1
    %s64 = scalar_select %p61, %s62, %s63
    %p67 = pneg %p61
    %p68 = scmp.eq.s32.totalorder %s10, 1
    %p69 = por %p67, %p68
    %p70 = scmp.ne.s32.totalorder %s62, %s65
    %p71 = scmp.eq.s32.totalorder %s10, 0
    %p72 = por %p70, %p71
    %p73 = scmp.ne.s32.totalorder %s62, %s65
    %p74 = scmp.eq.s32.totalorder %s15, 1
    %p75 = por %p73, %p74
    %p76 = scmp.ne.s32.totalorder %s65, %s66
    %p77 = scmp.eq.s32.totalorder %s15, 0
    %p78 = por %p76, %p77
    %p79 = scmp.ne.s32.totalorder %s65, %s66
    %p80 = scmp.eq.s32.totalorder %s16, 1
    %p81 = por %p79, %p80
    %p83 = scmp.ne.s32.totalorder %s66, %s82
    %p84 = scmp.eq.s32.totalorder %s16, 0
    %p85 = por %p83, %p84
    %s86 = ssub.s32 %s17, %s29
    %p87 = scmp.eq.s32.totalorder %s86, 0
    %s89 = sadd.s32 %s88, 1
    %s90 = scalar_select %p87, %s88, %s89
    %p93 = pneg %p87
    %p94 = scmp.eq.s32.totalorder %s10, 1
    %p95 = por %p93, %p94
    %p96 = scmp.ne.s32.totalorder %s88, %s91
    %p97 = scmp.eq.s32.totalorder %s10, 0
    %p98 = por %p96, %p97
    %p99 = scmp.ne.s32.totalorder %s88, %s91
    %p100 = scmp.eq.s32.totalorder %s15, 1
    %p101 = por %p99, %p100
    %p102 = scmp.ne.s32.totalorder %s91, %s92
    %p103 = scmp.eq.s32.totalorder %s15, 0
    %p104 = por %p102, %p103
    %p105 = scmp.ne.s32.totalorder %s91, %s92
    %p106 = scmp.eq.s32.totalorder %s16, 1
    %p107 = por %p105, %p106
    %p109 = scmp.ne.s32.totalorder %s92, %s108
    %p110 = scmp.eq.s32.totalorder %s16, 0
    %p111 = por %p109, %p110
    %s112 = ssub.s32 %s17, %s29
    %p113 = scmp.eq.s32.totalorder %s112, 0
    %s115 = sadd.s32 %s114, 1
    %s116 = scalar_select %p113, %s114, %s115
    %p119 = pneg %p113
    %p120 = scmp.eq.s32.totalorder %s10, 1
    %p121 = por %p119, %p120
    %p122 = scmp.ne.s32.totalorder %s114, %s117
    %p123 = scmp.eq.s32.totalorder %s10, 0
    %p124 = por %p122, %p123
    %p125 = scmp.ne.s32.totalorder %s114, %s117
    %p126 = scmp.eq.s32.totalorder %s15, 1
    %p127 = por %p125, %p126
    %p128 = scmp.ne.s32.totalorder %s117, %s118
    %p129 = scmp.eq.s32.totalorder %s15, 0
    %p130 = por %p128, %p129
    %p131 = scmp.ne.s32.totalorder %s117, %s118
    %p132 = scmp.eq.s32.totalorder %s16, 1
    %p133 = por %p131, %p132
    %p135 = scmp.ne.s32.totalorder %s118, %s134
    %p136 = scmp.eq.s32.totalorder %s16, 0
    %p137 = por %p135, %p136
    %p138 = scmp.le.s32.totalorder 1, %s10
    %p139 = scmp.lt.s32.totalorder %s10, 3
    %p140 = pnand %p138, %p139
    %p141 = pneg %p140
    // Predicated region
    $region9: #{sgformer_forward.10} parent=5 // pred_check
      _
    $region10: #{sgformer_forward.10} parent=5 // pred_check_branch
      %143 = sbr.rel (%p140) target = $region12
    $region11: #{sgformer_forward.10} parent=5 // pred_region
      %s144 = ssub.s32 %s10, 1
    $region12: #{sgformer_forward.10} parent=5 // pred_fallthru
      _
    %p145 = scmp.lt.s32.totalorder %s10, 2
    // Predicated region
    $region13: #{sgformer_forward.10} parent=5 // pred_check
      %p146 = pneg %p145
    $region14: #{sgformer_forward.10} parent=5 // pred_check_branch
      %148 = sbr.rel (%p146) target = $region16
    $region15: #{sgformer_forward.10} parent=5 // pred_region
      // Predicated region
      $region17: #{sgformer_forward.10} parent=15 // pred_check
        %p149 = pneg %p44
      $region18: #{sgformer_forward.10} parent=15 // pred_check_branch
        %151 = sbr.rel (%p149) target = $region20
      $region19: #{sgformer_forward.10} parent=15 // pred_region
        %s152 = sadd.s32 %s17, %s18
        %s153 = smul.u32 16, %s152
        %p154 = scmp.lt.s32.totalorder %s153, 31
        %s155 = scalar_select %p154, %s153, 31
        %s156 = smul.addr %s155, 2
        %s157 = smul.addr %s156, 4
        %s158 = scalar_lea.vmem %s0, %s157
        %s159 = sadd.s32 %s17, %s18
        %s160 = smul.u32 16, %s159
      $region20: #{sgformer_forward.10} parent=15 // pred_fallthru
        _
      // Predicated region
      $region21: #{sgformer_forward.10} parent=15 // pred_check
        %p161 = pneg %p72
      $region22: #{sgformer_forward.10} parent=15 // pred_check_branch
        %163 = sbr.rel (%p161) target = $region24
      $region23: #{sgformer_forward.10} parent=15 // pred_region
        %s164 = sadd.s32 %s17, %s18
        %s165 = smul.u32 16, %s164
        %p166 = scmp.lt.s32.totalorder %s165, 31
        %s167 = scalar_select %p166, %s165, 31
        %s168 = smul.addr %s167, 4
        %s169 = scalar_lea.vmem %s1, %s168
        %s170 = sadd.s32 %s17, %s18
        %s171 = smul.u32 16, %s170
      $region24: #{sgformer_forward.10} parent=15 // pred_fallthru
        _
    $region16: #{sgformer_forward.10} parent=5 // pred_fallthru
      _
    %p172 = scmp.le.s32.totalorder 1, %s10
    %p173 = scmp.lt.s32.totalorder %s10, 3
    %p174 = pnand %p172, %p173
    %p175 = pneg %p174
    // Predicated region
    $region25: #{sgformer_forward.10} parent=5 // pred_check
      _
    $region26: #{sgformer_forward.10} parent=5 // pred_check_branch
      %177 = sbr.rel (%p174) target = $region28
    $region27: #{sgformer_forward.10} parent=5 // pred_region
      %s178 = ssub.s32 %s10, 1
      %s179 = sadd.s32 %s19, %s20
      %s180 = smul.u32 16, %s179
      %p181 = scmp.lt.s32.totalorder %s180, 31
      %s182 = scalar_select %p181, %s180, 31
      %s183 = smul.addr %s182, 2
      %s184 = smul.addr %s183, 4
      %s185 = scalar_lea.vmem %s0, %s184
      %p186 = pneg %p50
      %p187 = pneg %p47
      %s188 = sadd.s32 %s19, %s20
      %s189 = smul.u32 16, %s188
      %p190 = scmp.lt.s32.totalorder %s189, 31
      %s191 = scalar_select %p190, %s189, 31
      %s192 = smul.addr %s191, 4
      %s193 = scalar_lea.vmem %s1, %s192
      %p194 = pneg %p78
      %p195 = pneg %p75
      %p196 = pneg %p104
      %p197 = pneg %p101
      %s198 = smul.u32 16, %s19
      %p199 = scmp.lt.s32.totalorder %s198, 31
      %s200 = scalar_select %p199, %s198, 31
      %s201 = smul.addr %s200, 8
      %s202 = scalar_lea.vmem %s2, %s201
      %p203 = pneg %p130
      %p204 = pneg %p127
      %p205 = scmp.lt.s32.totalorder %s19, 1
      %s206 = scalar_select %p205, %s19, 1
      %s207 = smul.addr %s206, 8
      %s208 = scalar_lea.vmem %s3, %s207
      %s209 = sadd.s32 %s19, %s20
      %s210 = smul.u32 16, %s209
      %p211 = scmp.lt.s32.totalorder %s210, 31
      %s212 = scalar_select %p211, %s210, 31
      %s213 = smul.addr %s212, 2
      %s214 = smul.addr %s213, 4
      %s215 = scalar_lea.vmem %s0, %s214
      %s216 = sadd.s32 %s19, %s20
      %s217 = smul.u32 16, %s216
      %s218 = sadd.s32 %s19, %s20
      %s219 = smul.u32 16, %s218
      %p220 = scmp.lt.s32.totalorder %s219, 31
      %s221 = scalar_select %p220, %s219, 31
      %s222 = smul.addr %s221, 4
      %s223 = scalar_lea.vmem %s1, %s222
      %s224 = sadd.s32 %s19, %s20
      %s225 = smul.u32 16, %s224
      %s226 = smul.u32 16, %s19
      %p227 = scmp.lt.s32.totalorder %s226, 31
      %s228 = scalar_select %p227, %s226, 31
      %s229 = smul.addr %s228, 8
      %s230 = scalar_lea.vmem %s2, %s229
      %s231 = smul.u32 16, %s19
      %p232 = scmp.lt.s32.totalorder %s19, 1
      %s233 = scalar_select %p232, %s19, 1
      %s234 = smul.addr %s233, 8
      %s235 = scalar_lea.vmem %s3, %s234
      %p237 = scmp.eq.s32.totalorder %s20, 0
      // Predicated region
      $region29: #{sgformer_forward.10} parent=27 // pred_check
        %p238 = pneg %p237
      $region30: #{sgformer_forward.10} parent=27 // pred_check_branch
        %240 = sbr.rel (%p238) target = $region32
      $region31: #{sgformer_forward.10} parent=27 // pred_region
        %241 = vst [vmem:[%s230] sm:$0xff] 0.0
        %242 = vst [vmem:[%s230 + $0x8] sm:$0xff] 0.0
        %243 = vst [vmem:[%s230 + $0x10] sm:$0xff] 0.0
        %244 = vst [vmem:[%s230 + $0x18] sm:$0xff] 0.0
        %245 = vst [vmem:[%s230 + $0x20] sm:$0xff] 0.0
        %246 = vst [vmem:[%s230 + $0x28] sm:$0xff] 0.0
        %247 = vst [vmem:[%s230 + $0x30] sm:$0xff] 0.0
        %248 = vst [vmem:[%s230 + $0x38] sm:$0xff] 0.0
        %249 = vst [vmem:[%s230 + $0x40] sm:$0xff] 0.0
        %250 = vst [vmem:[%s230 + $0x48] sm:$0xff] 0.0
        %251 = vst [vmem:[%s230 + $0x50] sm:$0xff] 0.0
        %252 = vst [vmem:[%s230 + $0x58] sm:$0xff] 0.0
        %253 = vst [vmem:[%s230 + $0x60] sm:$0xff] 0.0
        %254 = vst [vmem:[%s230 + $0x68] sm:$0xff] 0.0
        %255 = vst [vmem:[%s230 + $0x70] sm:$0xff] 0.0
        %256 = vst [vmem:[%s230 + $0x78] sm:$0xff] 0.0
        %257 = vst [vmem:[%s235] sm:$0xff] 0.0
      $region32: #{sgformer_forward.10} parent=27 // pred_fallthru
        _
      %s258 = sadd.s32 %s19, %s20
      %s259 = smul.u32 %s258, 128
      %v260 = vlaneseq
      %v261 = vshrl.u32 %v260, 7
      %v262 = vadd.s32 %v261, 8
      %v263 = vadd.s32 %v261, 16
      %v264 = vadd.s32 %v261, 24
      %v265 = vadd.s32 %v261, 32
      %v266 = vadd.s32 %v261, 40
      %v267 = vadd.s32 %v261, 48
      %v268 = vadd.s32 %v261, 56
      %v269 = vadd.s32 %v261, 64
      %v270 = vadd.s32 %v261, 72
      %v271 = vadd.s32 %v261, 80
      %v272 = vadd.s32 %v261, 88
      %v273 = vadd.s32 %v261, 96
      %v274 = vadd.s32 %v261, 104
      %v275 = vadd.s32 %v261, 112
      %v276 = vadd.s32 %v261, 120
      %v277 = vstv %s259
      %v278 = vadd.s32 %v277, %v261
      %v279 = vadd.s32 %v277, %v262
      %v280 = vadd.s32 %v277, %v263
      %v281 = vadd.s32 %v277, %v264
      %v282 = vadd.s32 %v277, %v265
      %v283 = vadd.s32 %v277, %v266
      %v284 = vadd.s32 %v277, %v267
      %v285 = vadd.s32 %v277, %v268
      %v286 = vadd.s32 %v277, %v269
      %v287 = vadd.s32 %v277, %v270
      %v288 = vadd.s32 %v277, %v271
      %v289 = vadd.s32 %v277, %v272
      %v290 = vadd.s32 %v277, %v273
      %v291 = vadd.s32 %v277, %v274
      %v292 = vadd.s32 %v277, %v275
      %v293 = vadd.s32 %v277, %v276
      %vm294 = vcmp.lt.s32.totalorder %v278, 200
      %vm295 = vcmp.lt.s32.totalorder %v279, 200
      %vm296 = vcmp.lt.s32.totalorder %v280, 200
      %vm297 = vcmp.lt.s32.totalorder %v281, 200
      %vm298 = vcmp.lt.s32.totalorder %v282, 200
      %vm299 = vcmp.lt.s32.totalorder %v283, 200
      %vm300 = vcmp.lt.s32.totalorder %v284, 200
      %vm301 = vcmp.lt.s32.totalorder %v285, 200
      %vm302 = vcmp.lt.s32.totalorder %v286, 200
      %vm303 = vcmp.lt.s32.totalorder %v287, 200
      %vm304 = vcmp.lt.s32.totalorder %v288, 200
      %vm305 = vcmp.lt.s32.totalorder %v289, 200
      %vm306 = vcmp.lt.s32.totalorder %v290, 200
      %vm307 = vcmp.lt.s32.totalorder %v291, 200
      %vm308 = vcmp.lt.s32.totalorder %v292, 200
      %vm309 = vcmp.lt.s32.totalorder %v293, 200
      %v310 = vsel %vm294, 1, 0
      %v311 = vsel %vm295, 1, 0
      %v312 = vsel %vm296, 1, 0
      %v313 = vsel %vm297, 1, 0
      %v314 = vsel %vm298, 1, 0
      %v315 = vsel %vm299, 1, 0
      %v316 = vsel %vm300, 1, 0
      %v317 = vsel %vm301, 1, 0
      %v318 = vsel %vm302, 1, 0
      %v319 = vsel %vm303, 1, 0
      %v320 = vsel %vm304, 1, 0
      %v321 = vsel %vm305, 1, 0
      %v322 = vsel %vm306, 1, 0
      %v323 = vsel %vm307, 1, 0
      %v324 = vsel %vm308, 1, 0
      %v325 = vsel %vm309, 1, 0
      %v326 = vcvt.s32.f32 %v310
      %v327 = vcvt.s32.f32 %v311
      %v328 = vcvt.s32.f32 %v312
      %v329 = vcvt.s32.f32 %v313
      %v330 = vcvt.s32.f32 %v314
      %v331 = vcvt.s32.f32 %v315
      %v332 = vcvt.s32.f32 %v316
      %v333 = vcvt.s32.f32 %v317
      %v334 = vcvt.s32.f32 %v318
      %v335 = vcvt.s32.f32 %v319
      %v336 = vcvt.s32.f32 %v320
      %v337 = vcvt.s32.f32 %v321
      %v338 = vcvt.s32.f32 %v322
      %v339 = vcvt.s32.f32 %v323
      %v340 = vcvt.s32.f32 %v324
      %v341 = vcvt.s32.f32 %v325
      %v342 = vld [vmem:[%s215] sm:$0xff]
      %v343 = vld [vmem:[%s215 + $0x8] sm:$0xff]
      %v344 = vld [vmem:[%s215 + $0x10] sm:$0xff]
      %v345 = vld [vmem:[%s215 + $0x18] sm:$0xff]
      %v346 = vld [vmem:[%s215 + $0x20] sm:$0xff]
      %v347 = vld [vmem:[%s215 + $0x28] sm:$0xff]
      %v348 = vld [vmem:[%s215 + $0x30] sm:$0xff]
      %v349 = vld [vmem:[%s215 + $0x38] sm:$0xff]
      %v350 = vld [vmem:[%s215 + $0x40] sm:$0xff]
      %v351 = vld [vmem:[%s215 + $0x48] sm:$0xff]
      %v352 = vld [vmem:[%s215 + $0x50] sm:$0xff]
      %v353 = vld [vmem:[%s215 + $0x58] sm:$0xff]
      %v354 = vld [vmem:[%s215 + $0x60] sm:$0xff]
      %v355 = vld [vmem:[%s215 + $0x68] sm:$0xff]
      %v356 = vld [vmem:[%s215 + $0x70] sm:$0xff]
      %v357 = vld [vmem:[%s215 + $0x78] sm:$0xff]
      %v358 = vld [vmem:[%s223] sm:$0xf]
      %v359 = vld [vmem:[%s223 + $0x4] sm:$0xf]
      %v360 = vld [vmem:[%s223 + $0x8] sm:$0xf]
      %v361 = vld [vmem:[%s223 + $0xc] sm:$0xf]
      %v362 = vld [vmem:[%s223 + $0x10] sm:$0xf]
      %v363 = vld [vmem:[%s223 + $0x14] sm:$0xf]
      %v364 = vld [vmem:[%s223 + $0x18] sm:$0xf]
      %v365 = vld [vmem:[%s223 + $0x1c] sm:$0xf]
      %v366 = vld [vmem:[%s223 + $0x20] sm:$0xf]
      %v367 = vld [vmem:[%s223 + $0x24] sm:$0xf]
      %v368 = vld [vmem:[%s223 + $0x28] sm:$0xf]
      %v369 = vld [vmem:[%s223 + $0x2c] sm:$0xf]
      %v370 = vld [vmem:[%s223 + $0x30] sm:$0xf]
      %v371 = vld [vmem:[%s223 + $0x34] sm:$0xf]
      %v372 = vld [vmem:[%s223 + $0x38] sm:$0xf]
      %v373 = vld [vmem:[%s223 + $0x3c] sm:$0xf]
      %v374 = vunpack.c.l.bf16 %v342
      %v375 = vunpack.c.l.bf16 %v343
      %v376 = vunpack.c.l.bf16 %v344
      %v377 = vunpack.c.l.bf16 %v345
      %v378 = vunpack.c.l.bf16 %v346
      %v379 = vunpack.c.l.bf16 %v347
      %v380 = vunpack.c.l.bf16 %v348
      %v381 = vunpack.c.l.bf16 %v349
      %v382 = vunpack.c.l.bf16 %v350
      %v383 = vunpack.c.l.bf16 %v351
      %v384 = vunpack.c.l.bf16 %v352
      %v385 = vunpack.c.l.bf16 %v353
      %v386 = vunpack.c.l.bf16 %v354
      %v387 = vunpack.c.l.bf16 %v355
      %v388 = vunpack.c.l.bf16 %v356
      %v389 = vunpack.c.l.bf16 %v357
      %v390 = vmul.f32 %v374, %v326
      %v391 = vmul.f32 %v375, %v327
      %v392 = vmul.f32 %v376, %v328
      %v393 = vmul.f32 %v377, %v329
      %v394 = vmul.f32 %v378, %v330
      %v395 = vmul.f32 %v379, %v331
      %v396 = vmul.f32 %v380, %v332
      %v397 = vmul.f32 %v381, %v333
      %v398 = vmul.f32 %v382, %v334
      %v399 = vmul.f32 %v383, %v335
      %v400 = vmul.f32 %v384, %v336
      %v401 = vmul.f32 %v385, %v337
      %v402 = vmul.f32 %v386, %v338
      %v403 = vmul.f32 %v387, %v339
      %v404 = vmul.f32 %v388, %v340
      %v405 = vmul.f32 %v389, %v341
      %v406 = vunpack.c.l.bf16 %v358
      %v407 = vunpack.c.l.bf16 %v359
      %v408 = vunpack.c.l.bf16 %v360
      %v409 = vunpack.c.l.bf16 %v361
      %v410 = vunpack.c.l.bf16 %v362
      %v411 = vunpack.c.l.bf16 %v363
      %v412 = vunpack.c.l.bf16 %v364
      %v413 = vunpack.c.l.bf16 %v365
      %v414 = vunpack.c.l.bf16 %v366
      %v415 = vunpack.c.l.bf16 %v367
      %v416 = vunpack.c.l.bf16 %v368
      %v417 = vunpack.c.l.bf16 %v369
      %v418 = vunpack.c.l.bf16 %v370
      %v419 = vunpack.c.l.bf16 %v371
      %v420 = vunpack.c.l.bf16 %v372
      %v421 = vunpack.c.l.bf16 %v373
      %v422 = vmul.f32 %v406, %v326
      %v423 = vmul.f32 %v407, %v327
      %v424 = vmul.f32 %v408, %v328
      %v425 = vmul.f32 %v409, %v329
      %v426 = vmul.f32 %v410, %v330
      %v427 = vmul.f32 %v411, %v331
      %v428 = vmul.f32 %v412, %v332
      %v429 = vmul.f32 %v413, %v333
      %v430 = vmul.f32 %v414, %v334
      %v431 = vmul.f32 %v415, %v335
      %v432 = vmul.f32 %v416, %v336
      %v433 = vmul.f32 %v417, %v337
      %v434 = vmul.f32 %v418, %v338
      %v435 = vmul.f32 %v419, %v339
      %v436 = vmul.f32 %v420, %v340
      %v437 = vmul.f32 %v421, %v341
      %v438 = vpack.c.bf16 %v327, %v326
      %v439 = vpack.c.bf16 %v329, %v328
      %v440 = vpack.c.bf16 %v331, %v330
      %v441 = vpack.c.bf16 %v333, %v332
      %v442 = vpack.c.bf16 %v335, %v334
      %v443 = vpack.c.bf16 %v337, %v336
      %v444 = vpack.c.bf16 %v339, %v338
      %v445 = vpack.c.bf16 %v341, %v340
      %v455 = vunpack.c.l.s4 839922192
      %v456 = vunpack.c.0.s8 %v455
      %v457 = vlaneseq
      %v458 = vshrl.u32 %v457, 7
      %v459 = vsub.s32 %v456, %v458
      %v460 = vrot.slane %v438, %v459
      %v462 = vunpack.c.l.s4 1985246804
      %v463 = vunpack.c.0.s8 %v462
      %v464 = vlaneseq
      %v465 = vshrl.u32 %v464, 7
      %v466 = vsub.s32 %v463, %v465
      %v467 = vrot.slane %v438, %v466
      %v469 = vunpack.c.l.s4 839922192
      %v470 = vunpack.c.0.s8 %v469
      %v471 = vlaneseq
      %v472 = vshrl.u32 %v471, 7
      %v473 = vsub.s32 %v470, %v472
      %v474 = vrot.slane %v439, %v473
      %v476 = vunpack.c.l.s4 1985246804
      %v477 = vunpack.c.0.s8 %v476
      %v478 = vlaneseq
      %v479 = vshrl.u32 %v478, 7
      %v480 = vsub.s32 %v477, %v479
      %v481 = vrot.slane %v439, %v480
      %v483 = vunpack.c.l.s4 839922192
      %v484 = vunpack.c.0.s8 %v483
      %v485 = vlaneseq
      %v486 = vshrl.u32 %v485, 7
      %v487 = vsub.s32 %v484, %v486
      %v488 = vrot.slane %v440, %v487
      %v490 = vunpack.c.l.s4 1985246804
      %v491 = vunpack.c.0.s8 %v490
      %v492 = vlaneseq
      %v493 = vshrl.u32 %v492, 7
      %v494 = vsub.s32 %v491, %v493
      %v495 = vrot.slane %v440, %v494
      %v497 = vunpack.c.l.s4 839922192
      %v498 = vunpack.c.0.s8 %v497
      %v499 = vlaneseq
      %v500 = vshrl.u32 %v499, 7
      %v501 = vsub.s32 %v498, %v500
      %v502 = vrot.slane %v441, %v501
      %v504 = vunpack.c.l.s4 1985246804
      %v505 = vunpack.c.0.s8 %v504
      %v506 = vlaneseq
      %v507 = vshrl.u32 %v506, 7
      %v508 = vsub.s32 %v505, %v507
      %v509 = vrot.slane %v441, %v508
      %v511 = vunpack.c.l.s4 839922192
      %v512 = vunpack.c.0.s8 %v511
      %v513 = vlaneseq
      %v514 = vshrl.u32 %v513, 7
      %v515 = vsub.s32 %v512, %v514
      %v516 = vrot.slane %v442, %v515
      %v518 = vunpack.c.l.s4 1985246804
      %v519 = vunpack.c.0.s8 %v518
      %v520 = vlaneseq
      %v521 = vshrl.u32 %v520, 7
      %v522 = vsub.s32 %v519, %v521
      %v523 = vrot.slane %v442, %v522
      %v525 = vunpack.c.l.s4 839922192
      %v526 = vunpack.c.0.s8 %v525
      %v527 = vlaneseq
      %v528 = vshrl.u32 %v527, 7
      %v529 = vsub.s32 %v526, %v528
      %v530 = vrot.slane %v443, %v529
      %v532 = vunpack.c.l.s4 1985246804
      %v533 = vunpack.c.0.s8 %v532
      %v534 = vlaneseq
      %v535 = vshrl.u32 %v534, 7
      %v536 = vsub.s32 %v533, %v535
      %v537 = vrot.slane %v443, %v536
      %v539 = vunpack.c.l.s4 839922192
      %v540 = vunpack.c.0.s8 %v539
      %v541 = vlaneseq
      %v542 = vshrl.u32 %v541, 7
      %v543 = vsub.s32 %v540, %v542
      %v544 = vrot.slane %v444, %v543
      %v546 = vunpack.c.l.s4 1985246804
      %v547 = vunpack.c.0.s8 %v546
      %v548 = vlaneseq
      %v549 = vshrl.u32 %v548, 7
      %v550 = vsub.s32 %v547, %v549
      %v551 = vrot.slane %v444, %v550
      %v553 = vunpack.c.l.s4 839922192
      %v554 = vunpack.c.0.s8 %v553
      %v555 = vlaneseq
      %v556 = vshrl.u32 %v555, 7
      %v557 = vsub.s32 %v554, %v556
      %v558 = vrot.slane %v445, %v557
      %v560 = vunpack.c.l.s4 1985246804
      %v561 = vunpack.c.0.s8 %v560
      %v562 = vlaneseq
      %v563 = vshrl.u32 %v562, 7
      %v564 = vsub.s32 %v561, %v563
      %v565 = vrot.slane %v445, %v564
      %v582 = vmul.bf16 %v358, %v460
      %v583 = vmul.bf16 %v359, %v467
      %v584 = vmul.bf16 %v360, %v474
      %v585 = vmul.bf16 %v361, %v481
      %v586 = vmul.bf16 %v362, %v488
      %v587 = vmul.bf16 %v363, %v495
      %v588 = vmul.bf16 %v364, %v502
      %v589 = vmul.bf16 %v365, %v509
      %v590 = vmul.bf16 %v366, %v516
      %v591 = vmul.bf16 %v367, %v523
      %v592 = vmul.bf16 %v368, %v530
      %v593 = vmul.bf16 %v369, %v537
      %v594 = vmul.bf16 %v370, %v544
      %v595 = vmul.bf16 %v371, %v551
      %v596 = vmul.bf16 %v372, %v558
      %v597 = vmul.bf16 %v373, %v565
      %v598 = vld [vmem:[%s235] sm:$0x1]
      %v599 = vadd.f32 %v422, %v423
      %v600 = vadd.f32 %v599, %v424
      %v601 = vadd.f32 %v600, %v425
      %v602 = vadd.f32 %v601, %v426
      %v603 = vadd.f32 %v602, %v427
      %v604 = vadd.f32 %v603, %v428
      %v605 = vadd.f32 %v604, %v429
      %v606 = vadd.f32 %v605, %v430
      %v607 = vadd.f32 %v606, %v431
      %v608 = vadd.f32 %v607, %v432
      %v609 = vadd.f32 %v608, %v433
      %v610 = vadd.f32 %v609, %v434
      %v611 = vadd.f32 %v610, %v435
      %v612 = vadd.f32 %v611, %v436
      %v613 = vadd.f32 %v612, %v437
      %v614 = vrot.slane %v613, 4
      %v615 = vadd.f32 %v613, %v614
      %v616 = vrot.slane %v615, 2
      %v617 = vadd.f32 %v615, %v616
      %v618 = vrot.slane %v617, 1
      %v619 = vadd.f32 %v617, %v618
      %v620 = vadd.f32 %v598, %v619
      %621 = vst [vmem:[%s235] sm:$0x1] %v620
      %v622 = vld [vmem:[%s235 + $0x1] sm:$0x1]
      %v623 = vmul.f32 %v390, %v390
      %v624 = vmul.f32 %v391, %v391
      %v625 = vmul.f32 %v392, %v392
      %v626 = vmul.f32 %v393, %v393
      %v627 = vmul.f32 %v394, %v394
      %v628 = vmul.f32 %v395, %v395
      %v629 = vmul.f32 %v396, %v396
      %v630 = vmul.f32 %v397, %v397
      %v631 = vmul.f32 %v398, %v398
      %v632 = vmul.f32 %v399, %v399
      %v633 = vmul.f32 %v400, %v400
      %v634 = vmul.f32 %v401, %v401
      %v635 = vmul.f32 %v402, %v402
      %v636 = vmul.f32 %v403, %v403
      %v637 = vmul.f32 %v404, %v404
      %v638 = vmul.f32 %v405, %v405
      %v639 = vadd.f32 %v623, %v624
      %v640 = vadd.f32 %v639, %v625
      %v641 = vadd.f32 %v640, %v626
      %v642 = vadd.f32 %v641, %v627
      %v643 = vadd.f32 %v642, %v628
      %v644 = vadd.f32 %v643, %v629
      %v645 = vadd.f32 %v644, %v630
      %v646 = vadd.f32 %v645, %v631
      %v647 = vadd.f32 %v646, %v632
      %v648 = vadd.f32 %v647, %v633
      %v649 = vadd.f32 %v648, %v634
      %v650 = vadd.f32 %v649, %v635
      %v651 = vadd.f32 %v650, %v636
      %v652 = vadd.f32 %v651, %v637
      %v653 = vadd.f32 %v652, %v638
      %v654 = vrot.slane %v653, 4
      %v655 = vadd.f32 %v653, %v654
      %v656 = vrot.slane %v655, 2
      %v657 = vadd.f32 %v655, %v656
      %v658 = vrot.slane %v657, 1
      %v659 = vadd.f32 %v657, %v658
      %v660 = vadd.f32 %v622, %v659
      %661 = vst [vmem:[%s235 + $0x1] sm:$0x1] %v660
      %v662 = vld [vmem:[%s235 + $0x2] sm:$0x1]
      %v663 = vmul.f32 %v422, %v422
      %v664 = vmul.f32 %v423, %v423
      %v665 = vmul.f32 %v424, %v424
      %v666 = vmul.f32 %v425, %v425
      %v667 = vmul.f32 %v426, %v426
      %v668 = vmul.f32 %v427, %v427
      %v669 = vmul.f32 %v428, %v428
      %v670 = vmul.f32 %v429, %v429
      %v671 = vmul.f32 %v430, %v430
      %v672 = vmul.f32 %v431, %v431
      %v673 = vmul.f32 %v432, %v432
      %v674 = vmul.f32 %v433, %v433
      %v675 = vmul.f32 %v434, %v434
      %v676 = vmul.f32 %v435, %v435
      %v677 = vmul.f32 %v436, %v436
      %v678 = vmul.f32 %v437, %v437
      %v679 = vadd.f32 %v663, %v664
      %v680 = vadd.f32 %v679, %v665
      %v681 = vadd.f32 %v680, %v666
      %v682 = vadd.f32 %v681, %v667
      %v683 = vadd.f32 %v682, %v668
      %v684 = vadd.f32 %v683, %v669
      %v685 = vadd.f32 %v684, %v670
      %v686 = vadd.f32 %v685, %v671
      %v687 = vadd.f32 %v686, %v672
      %v688 = vadd.f32 %v687, %v673
      %v689 = vadd.f32 %v688, %v674
      %v690 = vadd.f32 %v689, %v675
      %v691 = vadd.f32 %v690, %v676
      %v692 = vadd.f32 %v691, %v677
      %v693 = vadd.f32 %v692, %v678
      %v694 = vrot.slane %v693, 4
      %v695 = vadd.f32 %v693, %v694
      %v696 = vrot.slane %v695, 2
      %v697 = vadd.f32 %v695, %v696
      %v698 = vrot.slane %v697, 1
      %v699 = vadd.f32 %v697, %v698
      %v700 = vadd.f32 %v662, %v699
      %701 = vst [vmem:[%s235 + $0x2] sm:$0x1] %v700
      %v718 = vunpack.c.l.b16 %v582
      %v719 = vunpack.c.l.b16 %v583
      %v720 = vunpack.c.l.b16 %v584
      %v721 = vunpack.c.l.b16 %v585
      %v722 = vunpack.c.l.b16 %v586
      %v723 = vunpack.c.l.b16 %v587
      %v724 = vunpack.c.l.b16 %v588
      %v725 = vunpack.c.l.b16 %v589
      %v726 = vunpack.c.l.b16 %v590
      %v727 = vunpack.c.l.b16 %v591
      %v728 = vunpack.c.l.b16 %v592
      %v729 = vunpack.c.l.b16 %v593
      %v730 = vunpack.c.l.b16 %v594
      %v731 = vunpack.c.l.b16 %v595
      %v732 = vunpack.c.l.b16 %v596
      %v733 = vunpack.c.l.b16 %v597
      %v734 = vpack.c.b16 %v719, %v718
      %v735 = vpack.c.b16 %v721, %v720
      %v736 = vpack.c.b16 %v723, %v722
      %v737 = vpack.c.b16 %v725, %v724
      %v738 = vpack.c.b16 %v727, %v726
      %v739 = vpack.c.b16 %v729, %v728
      %v740 = vpack.c.b16 %v731, %v730
      %v741 = vpack.c.b16 %v733, %v732
      %750 = vxpose.xlu0.c.b16.start [1/8] %v734, 128
      %751 = vxpose.xlu0.c.b16.cont [2/8] %v735, 128
      %752 = vxpose.xlu0.c.b16.cont [3/8] %v736, 128
      %753 = vxpose.xlu0.c.b16.cont [4/8] %v737, 128
      %754 = vxpose.xlu0.c.b16.cont [5/8] %v738, 128
      %755 = vxpose.xlu0.c.b16.cont [6/8] %v739, 128
      %756 = vxpose.xlu0.c.b16.cont [7/8] %v740, 128
      %757 = vxpose.xlu0.c.b16.end [8/8] %v741, 128
      %v758 = vpop.trf.xlu0
      %v759 = vpop.trf.xlu0
      %v760 = vpop.trf.xlu0
      %v761 = vpop.trf.xlu0
      %v762 = vpop.trf.xlu0
      %v763 = vpop.trf.xlu0
      %v764 = vpop.trf.xlu0
      %v765 = vpop.trf.xlu0
      %v782 = vunpack.c.h.b16 %v342
      %v783 = vunpack.c.h.b16 %v343
      %v784 = vunpack.c.h.b16 %v344
      %v785 = vunpack.c.h.b16 %v345
      %v786 = vunpack.c.h.b16 %v346
      %v787 = vunpack.c.h.b16 %v347
      %v788 = vunpack.c.h.b16 %v348
      %v789 = vunpack.c.h.b16 %v349
      %v790 = vunpack.c.h.b16 %v350
      %v791 = vunpack.c.h.b16 %v351
      %v792 = vunpack.c.h.b16 %v352
      %v793 = vunpack.c.h.b16 %v353
      %v794 = vunpack.c.h.b16 %v354
      %v795 = vunpack.c.h.b16 %v355
      %v796 = vunpack.c.h.b16 %v356
      %v797 = vunpack.c.h.b16 %v357
      %v798 = vpack.c.b16 %v783, %v782
      %v799 = vpack.c.b16 %v785, %v784
      %v800 = vpack.c.b16 %v787, %v786
      %v801 = vpack.c.b16 %v789, %v788
      %v802 = vpack.c.b16 %v791, %v790
      %v803 = vpack.c.b16 %v793, %v792
      %v804 = vpack.c.b16 %v795, %v794
      %v805 = vpack.c.b16 %v797, %v796
      %814 = vmatprep.subr.bf16.mxu0 0
      %815 = vmatpush1.bf16.msra.mxu0 %v805
      %816 = vmatprep.subr.bf16.mxu0 0
      %817 = vmatpush1.bf16.msra.mxu0 %v804
      %818 = vmatprep.subr.bf16.mxu0 0
      %819 = vmatpush1.bf16.msra.mxu0 %v803
      %820 = vmatprep.subr.bf16.mxu0 0
      %821 = vmatpush1.bf16.msra.mxu0 %v802
      %822 = vmatprep.subr.bf16.mxu0 0
      %823 = vmatpush1.bf16.msra.mxu0 %v801
      %824 = vmatprep.subr.bf16.mxu0 0
      %825 = vmatpush1.bf16.msra.mxu0 %v800
      %826 = vmatprep.subr.bf16.mxu0 0
      %827 = vmatpush1.bf16.msra.mxu0 %v799
      %828 = vmatprep.subr.bf16.mxu0 0
      %829 = vmatpush1.bf16.msra.mxu0 %v798
      %830 = vmatprep.subr.bf16.mxu0 0
      %831 = vmatpush2.bf16.msra.mxu0 0
      %832 = vmatprep.subr.bf16.mxu0 0
      %833 = vmatpush2.bf16.msra.mxu0 0
      %834 = vmatprep.subr.bf16.mxu0 0
      %835 = vmatpush2.bf16.msra.mxu0 0
      %836 = vmatprep.subr.bf16.mxu0 0
      %837 = vmatpush2.bf16.msra.mxu0 0
      %838 = vmatprep.subr.bf16.mxu0 0
      %839 = vmatpush2.bf16.msra.mxu0 0
      %840 = vmatprep.subr.bf16.mxu0 0
      %841 = vmatpush2.bf16.msra.mxu0 0
      %842 = vmatprep.subr.bf16.mxu0 0
      %843 = vmatpush2.bf16.msra.mxu0 0
      %844 = vmatprep.subr.bf16.mxu0 0
      %845 = vmatpush2.bf16.msra.mxu0 0
      %846 = vmatprep.mubr.bf16.mxu0 0
      %847 = vmatmul.mubr.bf16.gmra.mxu0 %v758
      %v848 = vpop.f32.mrf.mxu0
      %v849 = vadd.f32 0.0, %v848
      %v850 = vpop.f32.mrf.mxu0
      %v851 = vpop.f32.mrf.mxu0
      %v852 = vadd.f32 0.0, %v851
      %v853 = vpop.f32.mrf.mxu0
      %854 = vmatprep.mubr.bf16.mxu0 0
      %855 = vmatmul.mubr.bf16.gmra.mxu0 %v759
      %v856 = vpop.f32.mrf.mxu0
      %v857 = vadd.f32 0.0, %v856
      %v858 = vpop.f32.mrf.mxu0
      %v859 = vpop.f32.mrf.mxu0
      %v860 = vadd.f32 0.0, %v859
      %v861 = vpop.f32.mrf.mxu0
      %862 = vmatprep.mubr.bf16.mxu0 0
      %863 = vmatmul.mubr.bf16.gmra.mxu0 %v760
      %v864 = vpop.f32.mrf.mxu0
      %v865 = vadd.f32 0.0, %v864
      %v866 = vpop.f32.mrf.mxu0
      %v867 = vpop.f32.mrf.mxu0
      %v868 = vadd.f32 0.0, %v867
      %v869 = vpop.f32.mrf.mxu0
      %870 = vmatprep.mubr.bf16.mxu0 0
      %871 = vmatmul.mubr.bf16.gmra.mxu0 %v761
      %v872 = vpop.f32.mrf.mxu0
      %v873 = vadd.f32 0.0, %v872
      %v874 = vpop.f32.mrf.mxu0
      %v875 = vpop.f32.mrf.mxu0
      %v876 = vadd.f32 0.0, %v875
      %v877 = vpop.f32.mrf.mxu0
      %878 = vmatprep.mubr.bf16.mxu0 0
      %879 = vmatmul.mubr.bf16.gmra.mxu0 %v762
      %v880 = vpop.f32.mrf.mxu0
      %v881 = vadd.f32 0.0, %v880
      %v882 = vpop.f32.mrf.mxu0
      %v883 = vpop.f32.mrf.mxu0
      %v884 = vadd.f32 0.0, %v883
      %v885 = vpop.f32.mrf.mxu0
      %886 = vmatprep.mubr.bf16.mxu0 0
      %887 = vmatmul.mubr.bf16.gmra.mxu0 %v763
      %v888 = vpop.f32.mrf.mxu0
      %v889 = vadd.f32 0.0, %v888
      %v890 = vpop.f32.mrf.mxu0
      %v891 = vpop.f32.mrf.mxu0
      %v892 = vadd.f32 0.0, %v891
      %v893 = vpop.f32.mrf.mxu0
      %894 = vmatprep.mubr.bf16.mxu0 0
      %895 = vmatmul.mubr.bf16.gmra.mxu0 %v764
      %v896 = vpop.f32.mrf.mxu0
      %v897 = vadd.f32 0.0, %v896
      %v898 = vpop.f32.mrf.mxu0
      %v899 = vpop.f32.mrf.mxu0
      %v900 = vadd.f32 0.0, %v899
      %v901 = vpop.f32.mrf.mxu0
      %902 = vmatprep.mubr.bf16.mxu0 0
      %903 = vmatmul.mubr.bf16.gmra.mxu0 %v765
      %v904 = vpop.f32.mrf.mxu0
      %v905 = vadd.f32 0.0, %v904
      %v906 = vpop.f32.mrf.mxu0
      %v907 = vpop.f32.mrf.mxu0
      %v908 = vadd.f32 0.0, %v907
      %v909 = vpop.f32.mrf.mxu0
      %910 = vdwg.mxu0
      %v911 = vld [vmem:[%s230] sm:$0xff]
      %v912 = vld [vmem:[%s230 + $0x8] sm:$0xff]
      %v913 = vld [vmem:[%s230 + $0x10] sm:$0xff]
      %v914 = vld [vmem:[%s230 + $0x18] sm:$0xff]
      %v915 = vld [vmem:[%s230 + $0x20] sm:$0xff]
      %v916 = vld [vmem:[%s230 + $0x28] sm:$0xff]
      %v917 = vld [vmem:[%s230 + $0x30] sm:$0xff]
      %v918 = vld [vmem:[%s230 + $0x38] sm:$0xff]
      %v919 = vld [vmem:[%s230 + $0x40] sm:$0xff]
      %v920 = vld [vmem:[%s230 + $0x48] sm:$0xff]
      %v921 = vld [vmem:[%s230 + $0x50] sm:$0xff]
      %v922 = vld [vmem:[%s230 + $0x58] sm:$0xff]
      %v923 = vld [vmem:[%s230 + $0x60] sm:$0xff]
      %v924 = vld [vmem:[%s230 + $0x68] sm:$0xff]
      %v925 = vld [vmem:[%s230 + $0x70] sm:$0xff]
      %v926 = vld [vmem:[%s230 + $0x78] sm:$0xff]
      %v927 = vadd.f32 %v911, %v849
      %v928 = vadd.f32 %v912, %v852
      %v929 = vadd.f32 %v913, %v857
      %v930 = vadd.f32 %v914, %v860
      %v931 = vadd.f32 %v915, %v865
      %v932 = vadd.f32 %v916, %v868
      %v933 = vadd.f32 %v917, %v873
      %v934 = vadd.f32 %v918, %v876
      %v935 = vadd.f32 %v919, %v881
      %v936 = vadd.f32 %v920, %v884
      %v937 = vadd.f32 %v921, %v889
      %v938 = vadd.f32 %v922, %v892
      %v939 = vadd.f32 %v923, %v897
      %v940 = vadd.f32 %v924, %v900
      %v941 = vadd.f32 %v925, %v905
      %v942 = vadd.f32 %v926, %v908
      %943 = vst [vmem:[%s230] sm:$0xff] %v927
      %944 = vst [vmem:[%s230 + $0x8] sm:$0xff] %v928
      %945 = vst [vmem:[%s230 + $0x10] sm:$0xff] %v929
      %946 = vst [vmem:[%s230 + $0x18] sm:$0xff] %v930
      %947 = vst [vmem:[%s230 + $0x20] sm:$0xff] %v931
      %948 = vst [vmem:[%s230 + $0x28] sm:$0xff] %v932
      %949 = vst [vmem:[%s230 + $0x30] sm:$0xff] %v933
      %950 = vst [vmem:[%s230 + $0x38] sm:$0xff] %v934
      %951 = vst [vmem:[%s230 + $0x40] sm:$0xff] %v935
      %952 = vst [vmem:[%s230 + $0x48] sm:$0xff] %v936
      %953 = vst [vmem:[%s230 + $0x50] sm:$0xff] %v937
      %954 = vst [vmem:[%s230 + $0x58] sm:$0xff] %v938
      %955 = vst [vmem:[%s230 + $0x60] sm:$0xff] %v939
      %956 = vst [vmem:[%s230 + $0x68] sm:$0xff] %v940
      %957 = vst [vmem:[%s230 + $0x70] sm:$0xff] %v941
      %958 = vst [vmem:[%s230 + $0x78] sm:$0xff] %v942
      %s959 = smul.u32 16, %s19
      %p960 = scmp.lt.s32.totalorder %s959, 31
      %s961 = scalar_select %p960, %s959, 31
      %s962 = smul.addr %s961, 8
      %s963 = scalar_lea.vmem %s2, %s962
      %p964 = scmp.lt.s32.totalorder %s19, 1
      %s965 = scalar_select %p964, %s19, 1
      %s966 = smul.addr %s965, 8
      %s967 = scalar_lea.vmem %s3, %s966
      // Predicated region
      $region33: #{sgformer_forward.10} parent=27 // pred_check
        %p968 = pneg %p101
      $region34: #{sgformer_forward.10} parent=27 // pred_check_branch
        %970 = sbr.rel (%p968) target = $region36
      $region35: #{sgformer_forward.10} parent=27 // pred_region
        %s971 = smul.u32 16, %s19
      $region36: #{sgformer_forward.10} parent=27 // pred_fallthru
        _
      // Predicated region
      $region37: #{sgformer_forward.10} parent=27 // pred_check
        %p972 = pneg %p127
      $region38: #{sgformer_forward.10} parent=27 // pred_check_branch
        %974 = sbr.rel (%p972) target = $region40
      $region39: #{sgformer_forward.10} parent=27 // pred_region
        _
      $region40: #{sgformer_forward.10} parent=27 // pred_fallthru
        _
    $region28: #{sgformer_forward.10} parent=5 // pred_fallthru
      _
    %p975 = scmp.le.s32.totalorder 2, %s10
    // Predicated region
    $region41: #{sgformer_forward.10} parent=5 // pred_check
      %p976 = pneg %p975
    $region42: #{sgformer_forward.10} parent=5 // pred_check_branch
      %978 = sbr.rel (%p976) target = $region44
    $region43: #{sgformer_forward.10} parent=5 // pred_region
      %s979 = ssub.s32 %s10, 2
      // Predicated region
      $region45: #{sgformer_forward.10} parent=43 // pred_check
        %p980 = pneg %p107
      $region46: #{sgformer_forward.10} parent=43 // pred_check_branch
        %982 = sbr.rel (%p980) target = $region48
      $region47: #{sgformer_forward.10} parent=43 // pred_region
        %s983 = smul.u32 16, %s21
        %p984 = scmp.lt.s32.totalorder %s983, 31
        %s985 = scalar_select %p984, %s983, 31
        %s986 = smul.addr %s985, 8
        %s987 = scalar_lea.vmem %s2, %s986
      $region48: #{sgformer_forward.10} parent=43 // pred_fallthru
        _
      // Predicated region
      $region49: #{sgformer_forward.10} parent=43 // pred_check
        %p988 = pneg %p133
      $region50: #{sgformer_forward.10} parent=43 // pred_check_branch
        %990 = sbr.rel (%p988) target = $region52
      $region51: #{sgformer_forward.10} parent=43 // pred_region
        %p991 = scmp.lt.s32.totalorder %s21, 1
        %s992 = scalar_select %p991, %s21, 1
        %s993 = smul.addr %s992, 8
        %s994 = scalar_lea.vmem %s3, %s993
      $region52: #{sgformer_forward.10} parent=43 // pred_fallthru
        _
    $region44: #{sgformer_forward.10} parent=5 // pred_fallthru
      _
  $region6: #{sgformer_forward.10} parent=0 // loop_footer
    %s14 = sadd.s32 1, %s10
  $region7: #{sgformer_forward.10} parent=0 // loop_footer_branch
    %9 = sbr.rel target = $region3
  $region8: #{sgformer_forward.10} parent=0 // loop_exit
    _

// kernel: sgformer_forward.12
$region0: #{sgformer_forward.12}
  #allocation0 [shape = 'u32[]', space=smem, size = 0x4, offset = 0x4, fixed_abs, tag = 'smem constant byte address 0x4 - core index']
  #allocation1 [shape = 'u32[144,128]{1,0:T(1,128)}', space=vmem, size = 0x12000, scoped, tag = 'internal scratch']
  %s0 = inlined_call_operand.vmem [shape: bf16[256,128], index: 0, kind: input, shape index: {}]
  %s1 = inlined_call_operand.vmem [shape: bf16[128,128], index: 1, kind: input, shape index: {}]
  %s2 = inlined_call_operand.vmem [shape: f32[1,128], index: 2, kind: input, shape index: {}]
  %s3 = inlined_call_operand.vmem [shape: bf16[256,128], index: 3, kind: output, shape index: {}]
  %s4 = sld [smem:[#allocation0]]
  $region45: #{sgformer_forward.12} parent=0
    _
  %s6 = ssub.s32 1, %s4
  %s7 = scalar_select 0, %s6, %s4
  loop: start=0, step=1, limit=4
  $region2: #{sgformer_forward.12} parent=0 // loop_pre_header
    _
  $region3: #{sgformer_forward.12} parent=0 // loop_header
    %s9 = sphi 0, %s13
    %p10 = scmp.ge.s32.totalorder %s9, 4
    %s19 = sphi 0, %s21
    %s22 = sphi 0, %s19
    %s23 = sphi 0, %s22
    %s39 = sphi 0, %s23
    %s43 = sphi 0, %s43
    %s45 = sphi 0, %s43
    %s46 = sphi 0, %s45
    %s60 = sphi 0, %s46
    %s64 = sphi 0, %s64
    %s66 = sphi 0, %s64
    %s67 = sphi 0, %s66
    %s81 = sphi 0, %s67
    %s87 = sphi 0, %s89
    %s90 = sphi 0, %s87
    %s91 = sphi 0, %s90
    %s107 = sphi 0, %s91
  $region4: #{sgformer_forward.12} parent=0 // loop_header_branch
    %12 = sbr.rel (%p10) target = $region8
  $region5: #{sgformer_forward.12} parent=0 // loop_body
    %s14 = ssub.s32 %s9, 1
    %s15 = ssub.s32 %s9, 2
    %s16 = sadd.s32 %s9, 1
    %s17 = ssub.s32 %s9, %s16
    %p18 = scmp.eq.s32.totalorder %s17, 0
    %s20 = sadd.s32 %s19, 1
    %s21 = scalar_select %p18, %s19, %s20
    %p24 = pneg %p18
    %p25 = scmp.eq.s32.totalorder %s9, 1
    %p26 = por %p24, %p25
    %p27 = scmp.ne.s32.totalorder %s19, %s22
    %p28 = scmp.eq.s32.totalorder %s9, 0
    %p29 = por %p27, %p28
    %p30 = scmp.ne.s32.totalorder %s19, %s22
    %p31 = scmp.eq.s32.totalorder %s14, 1
    %p32 = por %p30, %p31
    %p33 = scmp.ne.s32.totalorder %s22, %s23
    %p34 = scmp.eq.s32.totalorder %s14, 0
    %p35 = por %p33, %p34
    %p36 = scmp.ne.s32.totalorder %s22, %s23
    %p37 = scmp.eq.s32.totalorder %s15, 1
    %p38 = por %p36, %p37
    %p40 = scmp.ne.s32.totalorder %s23, %s39
    %p41 = scmp.eq.s32.totalorder %s15, 0
    %p42 = por %p40, %p41
    %s44 = sadd.s32 %s43, 1
    %p47 = scmp.eq.s32.totalorder %s9, 1
    %p48 = scmp.ne.s32.totalorder %s43, %s45
    %p49 = scmp.eq.s32.totalorder %s9, 0
    %p50 = por %p48, %p49
    %p51 = scmp.ne.s32.totalorder %s43, %s45
    %p52 = scmp.eq.s32.totalorder %s14, 1
    %p53 = por %p51, %p52
    %p54 = scmp.ne.s32.totalorder %s45, %s46
    %p55 = scmp.eq.s32.totalorder %s14, 0
    %p56 = por %p54, %p55
    %p57 = scmp.ne.s32.totalorder %s45, %s46
    %p58 = scmp.eq.s32.totalorder %s15, 1
    %p59 = por %p57, %p58
    %p61 = scmp.ne.s32.totalorder %s46, %s60
    %p62 = scmp.eq.s32.totalorder %s15, 0
    %p63 = por %p61, %p62
    %s65 = sadd.s32 %s64, 1
    %p68 = scmp.eq.s32.totalorder %s9, 1
    %p69 = scmp.ne.s32.totalorder %s64, %s66
    %p70 = scmp.eq.s32.totalorder %s9, 0
    %p71 = por %p69, %p70
    %p72 = scmp.ne.s32.totalorder %s64, %s66
    %p73 = scmp.eq.s32.totalorder %s14, 1
    %p74 = por %p72, %p73
    %p75 = scmp.ne.s32.totalorder %s66, %s67
    %p76 = scmp.eq.s32.totalorder %s14, 0
    %p77 = por %p75, %p76
    %p78 = scmp.ne.s32.totalorder %s66, %s67
    %p79 = scmp.eq.s32.totalorder %s15, 1
    %p80 = por %p78, %p79
    %p82 = scmp.ne.s32.totalorder %s67, %s81
    %p83 = scmp.eq.s32.totalorder %s15, 0
    %p84 = por %p82, %p83
    %s85 = ssub.s32 %s9, %s16
    %p86 = scmp.eq.s32.totalorder %s85, 0
    %s88 = sadd.s32 %s87, 1
    %s89 = scalar_select %p86, %s87, %s88
    %p92 = pneg %p86
    %p93 = scmp.eq.s32.totalorder %s9, 1
    %p94 = por %p92, %p93
    %p95 = scmp.ne.s32.totalorder %s87, %s90
    %p96 = scmp.eq.s32.totalorder %s9, 0
    %p97 = por %p95, %p96
    %p98 = scmp.ne.s32.totalorder %s87, %s90
    %p99 = scmp.eq.s32.totalorder %s14, 1
    %p100 = por %p98, %p99
    %p101 = scmp.ne.s32.totalorder %s90, %s91
    %p102 = scmp.eq.s32.totalorder %s14, 0
    %p103 = por %p101, %p102
    %p104 = scmp.ne.s32.totalorder %s90, %s91
    %p105 = scmp.eq.s32.totalorder %s15, 1
    %p106 = por %p104, %p105
    %p108 = scmp.ne.s32.totalorder %s91, %s107
    %p109 = scmp.eq.s32.totalorder %s15, 0
    %p110 = por %p108, %p109
    %p111 = scmp.le.s32.totalorder 1, %s9
    %p112 = scmp.lt.s32.totalorder %s9, 3
    %p113 = pnand %p111, %p112
    %p114 = pneg %p113
    // Predicated region
    $region9: #{sgformer_forward.12} parent=5 // pred_check
      _
    $region10: #{sgformer_forward.12} parent=5 // pred_check_branch
      %116 = sbr.rel (%p113) target = $region12
    $region11: #{sgformer_forward.12} parent=5 // pred_region
      %s117 = ssub.s32 %s9, 1
      // Predicated region
      $region13: #{sgformer_forward.12} parent=11 // pred_check
        %p118 = pneg %p56
      $region14: #{sgformer_forward.12} parent=11 // pred_check_branch
        %120 = sbr.rel (%p118) target = $region16
      $region15: #{sgformer_forward.12} parent=11 // pred_region
        _
      $region16: #{sgformer_forward.12} parent=11 // pred_fallthru
        _
      // Predicated region
      $region17: #{sgformer_forward.12} parent=11 // pred_check
        %p121 = pneg %p77
      $region18: #{sgformer_forward.12} parent=11 // pred_check_branch
        %123 = sbr.rel (%p121) target = $region20
      $region19: #{sgformer_forward.12} parent=11 // pred_region
        _
      $region20: #{sgformer_forward.12} parent=11 // pred_fallthru
        _
    $region12: #{sgformer_forward.12} parent=5 // pred_fallthru
      _
    %p124 = scmp.lt.s32.totalorder %s9, 2
    // Predicated region
    $region21: #{sgformer_forward.12} parent=5 // pred_check
      %p125 = pneg %p124
    $region22: #{sgformer_forward.12} parent=5 // pred_check_branch
      %127 = sbr.rel (%p125) target = $region24
    $region23: #{sgformer_forward.12} parent=5 // pred_region
      // Predicated region
      $region25: #{sgformer_forward.12} parent=23 // pred_check
        %p128 = pneg %p29
      $region26: #{sgformer_forward.12} parent=23 // pred_check_branch
        %130 = sbr.rel (%p128) target = $region28
      $region27: #{sgformer_forward.12} parent=23 // pred_region
        %s131 = smul.u32 16, %s9
        %p132 = scmp.lt.s32.totalorder %s131, 31
        %s133 = scalar_select %p132, %s131, 31
        %s134 = smul.addr %s133, 4
        %s135 = scalar_lea.vmem %s0, %s134
        %s136 = smul.u32 16, %s9
      $region28: #{sgformer_forward.12} parent=23 // pred_fallthru
        _
    $region24: #{sgformer_forward.12} parent=5 // pred_fallthru
      _
    %p137 = scmp.le.s32.totalorder 1, %s9
    %p138 = scmp.lt.s32.totalorder %s9, 3
    %p139 = pnand %p137, %p138
    %p140 = pneg %p139
    // Predicated region
    $region29: #{sgformer_forward.12} parent=5 // pred_check
      _
    $region30: #{sgformer_forward.12} parent=5 // pred_check_branch
      %142 = sbr.rel (%p139) target = $region32
    $region31: #{sgformer_forward.12} parent=5 // pred_region
      %s143 = ssub.s32 %s9, 1
      %s144 = smul.u32 16, %s14
      %p145 = scmp.lt.s32.totalorder %s144, 31
      %s146 = scalar_select %p145, %s144, 31
      %s147 = smul.addr %s146, 4
      %s148 = scalar_lea.vmem %s0, %s147
      %p149 = pneg %p35
      %p150 = pneg %p32
      %p151 = pneg %p56
      %p152 = pneg %p53
      %p153 = pneg %p77
      %p154 = pneg %p74
      %p155 = pneg %p103
      %p156 = pneg %p100
      %s157 = smul.u32 16, %s14
      %p158 = scmp.lt.s32.totalorder %s157, 31
      %s159 = scalar_select %p158, %s157, 31
      %s160 = smul.addr %s159, 4
      %s161 = scalar_lea.vmem %s3, %s160
      %s162 = smul.u32 16, %s14
      %p163 = scmp.lt.s32.totalorder %s162, 31
      %s164 = scalar_select %p163, %s162, 31
      %s165 = smul.addr %s164, 4
      %s166 = scalar_lea.vmem %s0, %s165
      %s167 = smul.u32 16, %s14
      %s168 = smul.u32 16, %s14
      %p169 = scmp.lt.s32.totalorder %s168, 31
      %s170 = scalar_select %p169, %s168, 31
      %s171 = smul.addr %s170, 4
      %s172 = scalar_lea.vmem %s3, %s171
      %s173 = smul.u32 16, %s14
      %v175 = vld [vmem:[%s166] sm:$0xf]
      %v176 = vld [vmem:[%s166 + $0x4] sm:$0xf]
      %v177 = vld [vmem:[%s166 + $0x8] sm:$0xf]
      %v178 = vld [vmem:[%s166 + $0xc] sm:$0xf]
      %v179 = vld [vmem:[%s166 + $0x10] sm:$0xf]
      %v180 = vld [vmem:[%s166 + $0x14] sm:$0xf]
      %v181 = vld [vmem:[%s166 + $0x18] sm:$0xf]
      %v182 = vld [vmem:[%s166 + $0x1c] sm:$0xf]
      %v183 = vld [vmem:[%s166 + $0x20] sm:$0xf]
      %v184 = vld [vmem:[%s166 + $0x24] sm:$0xf]
      %v185 = vld [vmem:[%s166 + $0x28] sm:$0xf]
      %v186 = vld [vmem:[%s166 + $0x2c] sm:$0xf]
      %v187 = vld [vmem:[%s166 + $0x30] sm:$0xf]
      %v188 = vld [vmem:[%s166 + $0x34] sm:$0xf]
      %v189 = vld [vmem:[%s166 + $0x38] sm:$0xf]
      %v190 = vld [vmem:[%s166 + $0x3c] sm:$0xf]
      %v191 = vld [vmem:[%s1] sm:$0xf]
      %v192 = vld [vmem:[%s1 + $0x4] sm:$0xf]
      %v193 = vld [vmem:[%s1 + $0x8] sm:$0xf]
      %v194 = vld [vmem:[%s1 + $0xc] sm:$0xf]
      %v195 = vld [vmem:[%s1 + $0x10] sm:$0xf]
      %v196 = vld [vmem:[%s1 + $0x14] sm:$0xf]
      %v197 = vld [vmem:[%s1 + $0x18] sm:$0xf]
      %v198 = vld [vmem:[%s1 + $0x1c] sm:$0xf]
      %v199 = vld [vmem:[%s1 + $0x20] sm:$0xf]
      %v200 = vld [vmem:[%s1 + $0x24] sm:$0xf]
      %v201 = vld [vmem:[%s1 + $0x28] sm:$0xf]
      %v202 = vld [vmem:[%s1 + $0x2c] sm:$0xf]
      %v203 = vld [vmem:[%s1 + $0x30] sm:$0xf]
      %v204 = vld [vmem:[%s1 + $0x34] sm:$0xf]
      %v205 = vld [vmem:[%s1 + $0x38] sm:$0xf]
      %v206 = vld [vmem:[%s1 + $0x3c] sm:$0xf]
      %v207 = vld [vmem:[%s2] sm:$0x1]
      %v209 = vlaneseq
      %v210 = vshrl.u32 %v209, 7
      %v211 = vsub.s32 0, %v210
      %v212 = vrot.slane %v207, %v211
      %v230 = vunpack.c.l.b16 %v175
      %v231 = vunpack.c.l.b16 %v176
      %v232 = vunpack.c.l.b16 %v177
      %v233 = vunpack.c.l.b16 %v178
      %v234 = vunpack.c.l.b16 %v179
      %v235 = vunpack.c.l.b16 %v180
      %v236 = vunpack.c.l.b16 %v181
      %v237 = vunpack.c.l.b16 %v182
      %v238 = vunpack.c.l.b16 %v183
      %v239 = vunpack.c.l.b16 %v184
      %v240 = vunpack.c.l.b16 %v185
      %v241 = vunpack.c.l.b16 %v186
      %v242 = vunpack.c.l.b16 %v187
      %v243 = vunpack.c.l.b16 %v188
      %v244 = vunpack.c.l.b16 %v189
      %v245 = vunpack.c.l.b16 %v190
      %v246 = vpack.c.b16 %v231, %v230
      %v247 = vpack.c.b16 %v233, %v232
      %v248 = vpack.c.b16 %v235, %v234
      %v249 = vpack.c.b16 %v237, %v236
      %v250 = vpack.c.b16 %v239, %v238
      %v251 = vpack.c.b16 %v241, %v240
      %v252 = vpack.c.b16 %v243, %v242
      %v253 = vpack.c.b16 %v245, %v244
      %v278 = vunpack.c.l.b16 %v191
      %v279 = vunpack.c.l.b16 %v192
      %v280 = vunpack.c.l.b16 %v193
      %v281 = vunpack.c.l.b16 %v194
      %v282 = vunpack.c.l.b16 %v195
      %v283 = vunpack.c.l.b16 %v196
      %v284 = vunpack.c.l.b16 %v197
      %v285 = vunpack.c.l.b16 %v198
      %v286 = vunpack.c.l.b16 %v199
      %v287 = vunpack.c.l.b16 %v200
      %v288 = vunpack.c.l.b16 %v201
      %v289 = vunpack.c.l.b16 %v202
      %v290 = vunpack.c.l.b16 %v203
      %v291 = vunpack.c.l.b16 %v204
      %v292 = vunpack.c.l.b16 %v205
      %v293 = vunpack.c.l.b16 %v206
      %v294 = vpack.c.b16 %v279, %v278
      %v295 = vpack.c.b16 %v281, %v280
      %v296 = vpack.c.b16 %v283, %v282
      %v297 = vpack.c.b16 %v285, %v284
      %v298 = vpack.c.b16 %v287, %v286
      %v299 = vpack.c.b16 %v289, %v288
      %v300 = vpack.c.b16 %v291, %v290
      %v301 = vpack.c.b16 %v293, %v292
      %310 = vmatprep.subr.bf16.mxu0 0
      %311 = vmatpush1.bf16.msra.mxu0 %v301
      %312 = vmatprep.subr.bf16.mxu0 0
      %313 = vmatpush1.bf16.msra.mxu0 %v300
      %314 = vmatprep.subr.bf16.mxu0 0
      %315 = vmatpush1.bf16.msra.mxu0 %v299
      %316 = vmatprep.subr.bf16.mxu0 0
      %317 = vmatpush1.bf16.msra.mxu0 %v298
      %318 = vmatprep.subr.bf16.mxu0 0
      %319 = vmatpush1.bf16.msra.mxu0 %v297
      %320 = vmatprep.subr.bf16.mxu0 0
      %321 = vmatpush1.bf16.msra.mxu0 %v296
      %322 = vmatprep.subr.bf16.mxu0 0
      %323 = vmatpush1.bf16.msra.mxu0 %v295
      %324 = vmatprep.subr.bf16.mxu0 0
      %325 = vmatpush1.bf16.msra.mxu0 %v294
      %326 = vmatprep.subr.bf16.mxu0 0
      %327 = vmatpush2.bf16.msra.mxu0 0
      %328 = vmatprep.subr.bf16.mxu0 0
      %329 = vmatpush2.bf16.msra.mxu0 0
      %330 = vmatprep.subr.bf16.mxu0 0
      %331 = vmatpush2.bf16.msra.mxu0 0
      %332 = vmatprep.subr.bf16.mxu0 0
      %333 = vmatpush2.bf16.msra.mxu0 0
      %334 = vmatprep.subr.bf16.mxu0 0
      %335 = vmatpush2.bf16.msra.mxu0 0
      %336 = vmatprep.subr.bf16.mxu0 0
      %337 = vmatpush2.bf16.msra.mxu0 0
      %338 = vmatprep.subr.bf16.mxu0 0
      %339 = vmatpush2.bf16.msra.mxu0 0
      %340 = vmatprep.subr.bf16.mxu0 0
      %341 = vmatpush2.bf16.msra.mxu0 0
      %342 = vmatprep.mubr.bf16.mxu0 0
      %343 = vmatmul.mubr.bf16.gmra.mxu0 %v246
      %v344 = vpop.f32.mrf.mxu0
      %v345 = vadd.f32 %v212, %v344
      %v346 = vpop.f32.mrf.mxu0
      %v347 = vpop.f32.mrf.mxu0
      %v348 = vadd.f32 %v212, %v347
      %v349 = vpop.f32.mrf.mxu0
      %350 = vmatprep.mubr.bf16.mxu0 0
      %351 = vmatmul.mubr.bf16.gmra.mxu0 %v247
      %v352 = vpop.f32.mrf.mxu0
      %v353 = vadd.f32 %v212, %v352
      %v354 = vpop.f32.mrf.mxu0
      %v355 = vpop.f32.mrf.mxu0
      %v356 = vadd.f32 %v212, %v355
      %v357 = vpop.f32.mrf.mxu0
      %358 = vmatprep.mubr.bf16.mxu0 0
      %359 = vmatmul.mubr.bf16.gmra.mxu0 %v248
      %v360 = vpop.f32.mrf.mxu0
      %v361 = vadd.f32 %v212, %v360
      %v362 = vpop.f32.mrf.mxu0
      %v363 = vpop.f32.mrf.mxu0
      %v364 = vadd.f32 %v212, %v363
      %v365 = vpop.f32.mrf.mxu0
      %366 = vmatprep.mubr.bf16.mxu0 0
      %367 = vmatmul.mubr.bf16.gmra.mxu0 %v249
      %v368 = vpop.f32.mrf.mxu0
      %v369 = vadd.f32 %v212, %v368
      %v370 = vpop.f32.mrf.mxu0
      %v371 = vpop.f32.mrf.mxu0
      %v372 = vadd.f32 %v212, %v371
      %v373 = vpop.f32.mrf.mxu0
      %374 = vmatprep.mubr.bf16.mxu0 0
      %375 = vmatmul.mubr.bf16.gmra.mxu0 %v250
      %v376 = vpop.f32.mrf.mxu0
      %v377 = vadd.f32 %v212, %v376
      %v378 = vpop.f32.mrf.mxu0
      %v379 = vpop.f32.mrf.mxu0
      %v380 = vadd.f32 %v212, %v379
      %v381 = vpop.f32.mrf.mxu0
      %382 = vmatprep.mubr.bf16.mxu0 0
      %383 = vmatmul.mubr.bf16.gmra.mxu0 %v251
      %v384 = vpop.f32.mrf.mxu0
      %v385 = vadd.f32 %v212, %v384
      %v386 = vpop.f32.mrf.mxu0
      %v387 = vpop.f32.mrf.mxu0
      %v388 = vadd.f32 %v212, %v387
      %v389 = vpop.f32.mrf.mxu0
      %390 = vmatprep.mubr.bf16.mxu0 0
      %391 = vmatmul.mubr.bf16.gmra.mxu0 %v252
      %v392 = vpop.f32.mrf.mxu0
      %v393 = vadd.f32 %v212, %v392
      %v394 = vpop.f32.mrf.mxu0
      %v395 = vpop.f32.mrf.mxu0
      %v396 = vadd.f32 %v212, %v395
      %v397 = vpop.f32.mrf.mxu0
      %398 = vmatprep.mubr.bf16.mxu0 0
      %399 = vmatmul.mubr.bf16.gmra.mxu0 %v253
      %v400 = vpop.f32.mrf.mxu0
      %v401 = vadd.f32 %v212, %v400
      %v402 = vpop.f32.mrf.mxu0
      %v403 = vpop.f32.mrf.mxu0
      %v404 = vadd.f32 %v212, %v403
      %v405 = vpop.f32.mrf.mxu0
      %406 = vdwg.mxu0
      %v407 = vmax.f32 %v345, 0.0
      %v408 = vmax.f32 %v348, 0.0
      %v409 = vmax.f32 %v353, 0.0
      %v410 = vmax.f32 %v356, 0.0
      %v411 = vmax.f32 %v361, 0.0
      %v412 = vmax.f32 %v364, 0.0
      %v413 = vmax.f32 %v369, 0.0
      %v414 = vmax.f32 %v372, 0.0
      %v415 = vmax.f32 %v377, 0.0
      %v416 = vmax.f32 %v380, 0.0
      %v417 = vmax.f32 %v385, 0.0
      %v418 = vmax.f32 %v388, 0.0
      %v419 = vmax.f32 %v393, 0.0
      %v420 = vmax.f32 %v396, 0.0
      %v421 = vmax.f32 %v401, 0.0
      %v422 = vmax.f32 %v404, 0.0
      %v423 = vpack.c.bf16 %v408, %v407
      %v424 = vpack.c.bf16 %v410, %v409
      %v425 = vpack.c.bf16 %v412, %v411
      %v426 = vpack.c.bf16 %v414, %v413
      %v427 = vpack.c.bf16 %v416, %v415
      %v428 = vpack.c.bf16 %v418, %v417
      %v429 = vpack.c.bf16 %v420, %v419
      %v430 = vpack.c.bf16 %v422, %v421
      %v439 = vunpack.c.l.b16 %v423
      %v440 = vunpack.c.h.b16 %v423
      %v441 = vunpack.c.l.b16 %v424
      %v442 = vunpack.c.h.b16 %v424
      %v443 = vunpack.c.l.b16 %v425
      %v444 = vunpack.c.h.b16 %v425
      %v445 = vunpack.c.l.b16 %v426
      %v446 = vunpack.c.h.b16 %v426
      %v447 = vunpack.c.l.b16 %v427
      %v448 = vunpack.c.h.b16 %v427
      %v449 = vunpack.c.l.b16 %v428
      %v450 = vunpack.c.h.b16 %v428
      %v451 = vunpack.c.l.b16 %v429
      %v452 = vunpack.c.h.b16 %v429
      %v453 = vunpack.c.l.b16 %v430
      %v454 = vunpack.c.h.b16 %v430
      %v455 = vpack.c.b16 %v439, %v439
      %v456 = vpack.c.b16 %v440, %v440
      %v457 = vpack.c.b16 %v441, %v441
      %v458 = vpack.c.b16 %v442, %v442
      %v459 = vpack.c.b16 %v443, %v443
      %v460 = vpack.c.b16 %v444, %v444
      %v461 = vpack.c.b16 %v445, %v445
      %v462 = vpack.c.b16 %v446, %v446
      %v463 = vpack.c.b16 %v447, %v447
      %v464 = vpack.c.b16 %v448, %v448
      %v465 = vpack.c.b16 %v449, %v449
      %v466 = vpack.c.b16 %v450, %v450
      %v467 = vpack.c.b16 %v451, %v451
      %v468 = vpack.c.b16 %v452, %v452
      %v469 = vpack.c.b16 %v453, %v453
      %v470 = vpack.c.b16 %v454, %v454
      %487 = vst [vmem:[%s172] sm:$0xf] %v455
      %488 = vst [vmem:[%s172 + $0x4] sm:$0xf] %v456
      %489 = vst [vmem:[%s172 + $0x8] sm:$0xf] %v457
      %490 = vst [vmem:[%s172 + $0xc] sm:$0xf] %v458
      %491 = vst [vmem:[%s172 + $0x10] sm:$0xf] %v459
      %492 = vst [vmem:[%s172 + $0x14] sm:$0xf] %v460
      %493 = vst [vmem:[%s172 + $0x18] sm:$0xf] %v461
      %494 = vst [vmem:[%s172 + $0x1c] sm:$0xf] %v462
      %495 = vst [vmem:[%s172 + $0x20] sm:$0xf] %v463
      %496 = vst [vmem:[%s172 + $0x24] sm:$0xf] %v464
      %497 = vst [vmem:[%s172 + $0x28] sm:$0xf] %v465
      %498 = vst [vmem:[%s172 + $0x2c] sm:$0xf] %v466
      %499 = vst [vmem:[%s172 + $0x30] sm:$0xf] %v467
      %500 = vst [vmem:[%s172 + $0x34] sm:$0xf] %v468
      %501 = vst [vmem:[%s172 + $0x38] sm:$0xf] %v469
      %502 = vst [vmem:[%s172 + $0x3c] sm:$0xf] %v470
      %s503 = smul.u32 16, %s14
      %p504 = scmp.lt.s32.totalorder %s503, 31
      %s505 = scalar_select %p504, %s503, 31
      %s506 = smul.addr %s505, 4
      %s507 = scalar_lea.vmem %s3, %s506
      // Predicated region
      $region33: #{sgformer_forward.12} parent=31 // pred_check
        %p508 = pneg %p100
      $region34: #{sgformer_forward.12} parent=31 // pred_check_branch
        %510 = sbr.rel (%p508) target = $region36
      $region35: #{sgformer_forward.12} parent=31 // pred_region
        %s511 = smul.u32 16, %s14
      $region36: #{sgformer_forward.12} parent=31 // pred_fallthru
        _
    $region32: #{sgformer_forward.12} parent=5 // pred_fallthru
      _
    %p512 = scmp.le.s32.totalorder 2, %s9
    // Predicated region
    $region37: #{sgformer_forward.12} parent=5 // pred_check
      %p513 = pneg %p512
    $region38: #{sgformer_forward.12} parent=5 // pred_check_branch
      %515 = sbr.rel (%p513) target = $region40
    $region39: #{sgformer_forward.12} parent=5 // pred_region
      %s516 = ssub.s32 %s9, 2
      // Predicated region
      $region41: #{sgformer_forward.12} parent=39 // pred_check
        %p517 = pneg %p106
      $region42: #{sgformer_forward.12} parent=39 // pred_check_branch
        %519 = sbr.rel (%p517) target = $region44
      $region43: #{sgformer_forward.12} parent=39 // pred_region
        %s520 = smul.u32 16, %s15
        %p521 = scmp.lt.s32.totalorder %s520, 31
        %s522 = scalar_select %p521, %s520, 31
        %s523 = smul.addr %s522, 4
        %s524 = scalar_lea.vmem %s3, %s523
      $region44: #{sgformer_forward.12} parent=39 // pred_fallthru
        _
    $region40: #{sgformer_forward.12} parent=5 // pred_fallthru
      _
  $region6: #{sgformer_forward.12} parent=0 // loop_footer
    %s13 = sadd.s32 1, %s9
  $region7: #{sgformer_forward.12} parent=0 // loop_footer_branch
    %8 = sbr.rel target = $region3
  $region8: #{sgformer_forward.12} parent=0 // loop_exit
    _

// kernel: sgformer_forward.13
$region0: #{sgformer_forward.13}
  #allocation0 [shape = 'u32[]', space=smem, size = 0x4, offset = 0x4, fixed_abs, tag = 'smem constant byte address 0x4 - core index']
  #allocation1 [shape = 'u32[144,128]{1,0:T(1,128)}', space=vmem, size = 0x12000, scoped, tag = 'internal scratch']
  %s0 = inlined_call_operand.vmem [shape: bf16[256,128], index: 0, kind: input, shape index: {}]
  %s1 = inlined_call_operand.vmem [shape: bf16[128,256], index: 1, kind: input, shape index: {}]
  %s2 = inlined_call_operand.vmem [shape: bf16[2,256,128], index: 2, kind: output, shape index: {}]
  %s3 = sld [smem:[#allocation0]]
  $region78: #{sgformer_forward.13} parent=0
    _
  %s5 = ssub.s32 1, %s3
  %s6 = scalar_select 0, %s5, %s3
  $region1: #{sgformer_forward.13} parent=0
    #allocation2 [shape = 'u8[131072]{0}', space=vmem, size = 0x20000, scoped, tag = 'output window, operand 0']
    loop: start=0, step=1, limit=4
    $region2: #{sgformer_forward.13} parent=1 // loop_pre_header
      _
    $region3: #{sgformer_forward.13} parent=1 // loop_header
      %s8 = sphi 0, %s12
      %p9 = scmp.ge.s32.totalorder %s8, 4
      %s18 = sphi 0, %s20
      %s21 = sphi 0, %s18
      %s22 = sphi 0, %s21
      %s38 = sphi 0, %s22
      %s42 = sphi 0, %s42
      %s44 = sphi 0, %s42
      %s45 = sphi 0, %s44
      %s59 = sphi 0, %s45
      %s65 = sphi 0, %s67
      %s68 = sphi 0, %s65
      %s69 = sphi 0, %s68
      %s85 = sphi 0, %s69
    $region4: #{sgformer_forward.13} parent=1 // loop_header_branch
      %11 = sbr.rel (%p9) target = $region8
    $region5: #{sgformer_forward.13} parent=1 // loop_body
      %s13 = ssub.s32 %s8, 1
      %s14 = ssub.s32 %s8, 2
      %s15 = sadd.s32 %s8, 1
      %s16 = ssub.s32 %s8, %s15
      %p17 = scmp.eq.s32.totalorder %s16, 0
      %s19 = sadd.s32 %s18, 1
      %s20 = scalar_select %p17, %s18, %s19
      %p23 = pneg %p17
      %p24 = scmp.eq.s32.totalorder %s8, 1
      %p25 = por %p23, %p24
      %p26 = scmp.ne.s32.totalorder %s18, %s21
      %p27 = scmp.eq.s32.totalorder %s8, 0
      %p28 = por %p26, %p27
      %p29 = scmp.ne.s32.totalorder %s18, %s21
      %p30 = scmp.eq.s32.totalorder %s13, 1
      %p31 = por %p29, %p30
      %p32 = scmp.ne.s32.totalorder %s21, %s22
      %p33 = scmp.eq.s32.totalorder %s13, 0
      %p34 = por %p32, %p33
      %p35 = scmp.ne.s32.totalorder %s21, %s22
      %p36 = scmp.eq.s32.totalorder %s14, 1
      %p37 = por %p35, %p36
      %p39 = scmp.ne.s32.totalorder %s22, %s38
      %p40 = scmp.eq.s32.totalorder %s14, 0
      %p41 = por %p39, %p40
      %s43 = sadd.s32 %s42, 1
      %p46 = scmp.eq.s32.totalorder %s8, 1
      %p47 = scmp.ne.s32.totalorder %s42, %s44
      %p48 = scmp.eq.s32.totalorder %s8, 0
      %p49 = por %p47, %p48
      %p50 = scmp.ne.s32.totalorder %s42, %s44
      %p51 = scmp.eq.s32.totalorder %s13, 1
      %p52 = por %p50, %p51
      %p53 = scmp.ne.s32.totalorder %s44, %s45
      %p54 = scmp.eq.s32.totalorder %s13, 0
      %p55 = por %p53, %p54
      %p56 = scmp.ne.s32.totalorder %s44, %s45
      %p57 = scmp.eq.s32.totalorder %s14, 1
      %p58 = por %p56, %p57
      %p60 = scmp.ne.s32.totalorder %s45, %s59
      %p61 = scmp.eq.s32.totalorder %s14, 0
      %p62 = por %p60, %p61
      %s63 = ssub.s32 %s8, %s15
      %p64 = scmp.eq.s32.totalorder %s63, 0
      %s66 = sadd.s32 %s65, 1
      %s67 = scalar_select %p64, %s65, %s66
      %p70 = pneg %p64
      %p71 = scmp.eq.s32.totalorder %s8, 1
      %p72 = por %p70, %p71
      %p73 = scmp.ne.s32.totalorder %s65, %s68
      %p74 = scmp.eq.s32.totalorder %s8, 0
      %p75 = por %p73, %p74
      %p76 = scmp.ne.s32.totalorder %s65, %s68
      %p77 = scmp.eq.s32.totalorder %s13, 1
      %p78 = por %p76, %p77
      %p79 = scmp.ne.s32.totalorder %s68, %s69
      %p80 = scmp.eq.s32.totalorder %s13, 0
      %p81 = por %p79, %p80
      %p82 = scmp.ne.s32.totalorder %s68, %s69
      %p83 = scmp.eq.s32.totalorder %s14, 1
      %p84 = por %p82, %p83
      %p86 = scmp.ne.s32.totalorder %s69, %s85
      %p87 = scmp.eq.s32.totalorder %s14, 0
      %p88 = por %p86, %p87
      %p89 = scmp.le.s32.totalorder 1, %s8
      %p90 = scmp.lt.s32.totalorder %s8, 3
      %p91 = pnand %p89, %p90
      %p92 = pneg %p91
      // Predicated region
      $region9: #{sgformer_forward.13} parent=5 // pred_check
        _
      $region10: #{sgformer_forward.13} parent=5 // pred_check_branch
        %94 = sbr.rel (%p91) target = $region12
      $region11: #{sgformer_forward.13} parent=5 // pred_region
        %s95 = ssub.s32 %s8, 1
        // Predicated region
        $region13: #{sgformer_forward.13} parent=11 // pred_check
          %p96 = pneg %p55
        $region14: #{sgformer_forward.13} parent=11 // pred_check_branch
          %98 = sbr.rel (%p96) target = $region16
        $region15: #{sgformer_forward.13} parent=11 // pred_region
          _
        $region16: #{sgformer_forward.13} parent=11 // pred_fallthru
          _
      $region12: #{sgformer_forward.13} parent=5 // pred_fallthru
        _
      %p99 = scmp.lt.s32.totalorder %s8, 2
      // Predicated region
      $region17: #{sgformer_forward.13} parent=5 // pred_check
        %p100 = pneg %p99
      $region18: #{sgformer_forward.13} parent=5 // pred_check_branch
        %102 = sbr.rel (%p100) target = $region20
      $region19: #{sgformer_forward.13} parent=5 // pred_region
        // Predicated region
        $region21: #{sgformer_forward.13} parent=19 // pred_check
          %p103 = pneg %p28
        $region22: #{sgformer_forward.13} parent=19 // pred_check_branch
          %105 = sbr.rel (%p103) target = $region24
        $region23: #{sgformer_forward.13} parent=19 // pred_region
          %s106 = smul.u32 16, %s8
          %p107 = scmp.lt.s32.totalorder %s106, 31
          %s108 = scalar_select %p107, %s106, 31
          %s109 = smul.addr %s108, 4
          %s110 = scalar_lea.vmem %s0, %s109
          %s111 = smul.u32 16, %s8
        $region24: #{sgformer_forward.13} parent=19 // pred_fallthru
          _
      $region20: #{sgformer_forward.13} parent=5 // pred_fallthru
        _
      %p112 = scmp.le.s32.totalorder 1, %s8
      %p113 = scmp.lt.s32.totalorder %s8, 3
      %p114 = pnand %p112, %p113
      %p115 = pneg %p114
      // Predicated region
      $region25: #{sgformer_forward.13} parent=5 // pred_check
        _
      $region26: #{sgformer_forward.13} parent=5 // pred_check_branch
        %117 = sbr.rel (%p114) target = $region28
      $region27: #{sgformer_forward.13} parent=5 // pred_region
        %s118 = ssub.s32 %s8, 1
        %s119 = smul.u32 16, %s13
        %p120 = scmp.lt.s32.totalorder %s119, 31
        %s121 = scalar_select %p120, %s119, 31
        %s122 = smul.addr %s121, 4
        %s123 = scalar_lea.vmem %s0, %s122
        %p124 = pneg %p34
        %p125 = pneg %p31
        %p126 = pneg %p55
        %p127 = pneg %p52
        %p128 = pneg %p81
        %p129 = pneg %p78
        %s130 = sand.u32 %s68, 1
        %s131 = sand.u32 %s68, 1
        %s132 = smul.addr %s131, 128
        %s133 = scalar_lea.vmem [#allocation2], %s132
        %s134 = smul.u32 16, %s13
        %p135 = scmp.lt.s32.totalorder %s134, 31
        %s136 = scalar_select %p135, %s134, 31
        %s137 = smul.addr %s136, 4
        %s138 = scalar_lea.vmem %s0, %s137
        %s139 = smul.u32 16, %s13
        %s140 = smul.u32 16, %s13
        %v142 = vld [vmem:[%s138] sm:$0xf]
        %v143 = vld [vmem:[%s138 + $0x4] sm:$0xf]
        %v144 = vld [vmem:[%s138 + $0x8] sm:$0xf]
        %v145 = vld [vmem:[%s138 + $0xc] sm:$0xf]
        %v146 = vld [vmem:[%s138 + $0x10] sm:$0xf]
        %v147 = vld [vmem:[%s138 + $0x14] sm:$0xf]
        %v148 = vld [vmem:[%s138 + $0x18] sm:$0xf]
        %v149 = vld [vmem:[%s138 + $0x1c] sm:$0xf]
        %v150 = vld [vmem:[%s138 + $0x20] sm:$0xf]
        %v151 = vld [vmem:[%s138 + $0x24] sm:$0xf]
        %v152 = vld [vmem:[%s138 + $0x28] sm:$0xf]
        %v153 = vld [vmem:[%s138 + $0x2c] sm:$0xf]
        %v154 = vld [vmem:[%s138 + $0x30] sm:$0xf]
        %v155 = vld [vmem:[%s138 + $0x34] sm:$0xf]
        %v156 = vld [vmem:[%s138 + $0x38] sm:$0xf]
        %v157 = vld [vmem:[%s138 + $0x3c] sm:$0xf]
        %v158 = vld [vmem:[%s1] sm:$0xff]
        %v159 = vld [vmem:[%s1 + $0x8] sm:$0xff]
        %v160 = vld [vmem:[%s1 + $0x10] sm:$0xff]
        %v161 = vld [vmem:[%s1 + $0x18] sm:$0xff]
        %v162 = vld [vmem:[%s1 + $0x20] sm:$0xff]
        %v163 = vld [vmem:[%s1 + $0x28] sm:$0xff]
        %v164 = vld [vmem:[%s1 + $0x30] sm:$0xff]
        %v165 = vld [vmem:[%s1 + $0x38] sm:$0xff]
        %v166 = vld [vmem:[%s1 + $0x40] sm:$0xff]
        %v167 = vld [vmem:[%s1 + $0x48] sm:$0xff]
        %v168 = vld [vmem:[%s1 + $0x50] sm:$0xff]
        %v169 = vld [vmem:[%s1 + $0x58] sm:$0xff]
        %v170 = vld [vmem:[%s1 + $0x60] sm:$0xff]
        %v171 = vld [vmem:[%s1 + $0x68] sm:$0xff]
        %v172 = vld [vmem:[%s1 + $0x70] sm:$0xff]
        %v173 = vld [vmem:[%s1 + $0x78] sm:$0xff]
        %v190 = vunpack.c.l.b16 %v142
        %v191 = vunpack.c.l.b16 %v143
        %v192 = vunpack.c.l.b16 %v144
        %v193 = vunpack.c.l.b16 %v145
        %v194 = vunpack.c.l.b16 %v146
        %v195 = vunpack.c.l.b16 %v147
        %v196 = vunpack.c.l.b16 %v148
        %v197 = vunpack.c.l.b16 %v149
        %v198 = vunpack.c.l.b16 %v150
        %v199 = vunpack.c.l.b16 %v151
        %v200 = vunpack.c.l.b16 %v152
        %v201 = vunpack.c.l.b16 %v153
        %v202 = vunpack.c.l.b16 %v154
        %v203 = vunpack.c.l.b16 %v155
        %v204 = vunpack.c.l.b16 %v156
        %v205 = vunpack.c.l.b16 %v157
        %v206 = vpack.c.b16 %v191, %v190
        %v207 = vpack.c.b16 %v193, %v192
        %v208 = vpack.c.b16 %v195, %v194
        %v209 = vpack.c.b16 %v197, %v196
        %v210 = vpack.c.b16 %v199, %v198
        %v211 = vpack.c.b16 %v201, %v200
        %v212 = vpack.c.b16 %v203, %v202
        %v213 = vpack.c.b16 %v205, %v204
        %v238 = vunpack.c.l.b16 %v158
        %v239 = vunpack.c.h.b16 %v158
        %v240 = vunpack.c.l.b16 %v159
        %v241 = vunpack.c.h.b16 %v159
        %v242 = vunpack.c.l.b16 %v160
        %v243 = vunpack.c.h.b16 %v160
        %v244 = vunpack.c.l.b16 %v161
        %v245 = vunpack.c.h.b16 %v161
        %v246 = vunpack.c.l.b16 %v162
        %v247 = vunpack.c.h.b16 %v162
        %v248 = vunpack.c.l.b16 %v163
        %v249 = vunpack.c.h.b16 %v163
        %v250 = vunpack.c.l.b16 %v164
        %v251 = vunpack.c.h.b16 %v164
        %v252 = vunpack.c.l.b16 %v165
        %v253 = vunpack.c.h.b16 %v165
        %v254 = vunpack.c.l.b16 %v166
        %v255 = vunpack.c.h.b16 %v166
        %v256 = vunpack.c.l.b16 %v167
        %v257 = vunpack.c.h.b16 %v167
        %v258 = vunpack.c.l.b16 %v168
        %v259 = vunpack.c.h.b16 %v168
        %v260 = vunpack.c.l.b16 %v169
        %v261 = vunpack.c.h.b16 %v169
        %v262 = vunpack.c.l.b16 %v170
        %v263 = vunpack.c.h.b16 %v170
        %v264 = vunpack.c.l.b16 %v171
        %v265 = vunpack.c.h.b16 %v171
        %v266 = vunpack.c.l.b16 %v172
        %v267 = vunpack.c.h.b16 %v172
        %v268 = vunpack.c.l.b16 %v173
        %v269 = vunpack.c.h.b16 %v173
        %v270 = vpack.c.b16 %v240, %v238
        %v271 = vpack.c.b16 %v241, %v239
        %v272 = vpack.c.b16 %v244, %v242
        %v273 = vpack.c.b16 %v245, %v243
        %v274 = vpack.c.b16 %v248, %v246
        %v275 = vpack.c.b16 %v249, %v247
        %v276 = vpack.c.b16 %v252, %v250
        %v277 = vpack.c.b16 %v253, %v251
        %v278 = vpack.c.b16 %v256, %v254
        %v279 = vpack.c.b16 %v257, %v255
        %v280 = vpack.c.b16 %v260, %v258
        %v281 = vpack.c.b16 %v261, %v259
        %v282 = vpack.c.b16 %v264, %v262
        %v283 = vpack.c.b16 %v265, %v263
        %v284 = vpack.c.b16 %v268, %v266
        %v285 = vpack.c.b16 %v269, %v267
        %302 = vmatprep.subr.bf16.mxu0 %v285
        %303 = vmatpush1.bf16.msra.mxu0 %v284
        %304 = vmatprep.subr.bf16.mxu0 %v283
        %305 = vmatpush1.bf16.msra.mxu0 %v282
        %306 = vmatprep.subr.bf16.mxu0 %v281
        %307 = vmatpush1.bf16.msra.mxu0 %v280
        %308 = vmatprep.subr.bf16.mxu0 %v279
        %309 = vmatpush1.bf16.msra.mxu0 %v278
        %310 = vmatprep.subr.bf16.mxu0 %v277
        %311 = vmatpush1.bf16.msra.mxu0 %v276
        %312 = vmatprep.subr.bf16.mxu0 %v275
        %313 = vmatpush1.bf16.msra.mxu0 %v274
        %314 = vmatprep.subr.bf16.mxu0 %v273
        %315 = vmatpush1.bf16.msra.mxu0 %v272
        %316 = vmatprep.subr.bf16.mxu0 %v271
        %317 = vmatpush1.bf16.msra.mxu0 %v270
        %318 = vmatprep.subr.bf16.mxu0 0
        %319 = vmatpush2.bf16.msra.mxu0 0
        %320 = vmatprep.subr.bf16.mxu0 0
        %321 = vmatpush2.bf16.msra.mxu0 0
        %322 = vmatprep.subr.bf16.mxu0 0
        %323 = vmatpush2.bf16.msra.mxu0 0
        %324 = vmatprep.subr.bf16.mxu0 0
        %325 = vmatpush2.bf16.msra.mxu0 0
        %326 = vmatprep.subr.bf16.mxu0 0
        %327 = vmatpush2.bf16.msra.mxu0 0
        %328 = vmatprep.subr.bf16.mxu0 0
        %329 = vmatpush2.bf16.msra.mxu0 0
        %330 = vmatprep.subr.bf16.mxu0 0
        %331 = vmatpush2.bf16.msra.mxu0 0
        %332 = vmatprep.subr.bf16.mxu0 0
        %333 = vmatpush2.bf16.msra.mxu0 0
        %334 = vmatprep.mubr.bf16.mxu0 0
        %335 = vmatmul.mubr.bf16.gmra.mxu0 %v206
        %v336 = vpop.f32.mrf.mxu0
        %v337 = vadd.f32 0.0, %v336
        %v338 = vpop.f32.mrf.mxu0
        %v339 = vadd.f32 0.0, %v338
        %v340 = vpop.f32.mrf.mxu0
        %v341 = vadd.f32 0.0, %v340
        %v342 = vpop.f32.mrf.mxu0
        %v343 = vadd.f32 0.0, %v342
        %344 = vmatprep.mubr.bf16.mxu0 0
        %345 = vmatmul.mubr.bf16.gmra.mxu0 %v207
        %v346 = vpop.f32.mrf.mxu0
        %v347 = vadd.f32 0.0, %v346
        %v348 = vpop.f32.mrf.mxu0
        %v349 = vadd.f32 0.0, %v348
        %v350 = vpop.f32.mrf.mxu0
        %v351 = vadd.f32 0.0, %v350
        %v352 = vpop.f32.mrf.mxu0
        %v353 = vadd.f32 0.0, %v352
        %354 = vmatprep.mubr.bf16.mxu0 0
        %355 = vmatmul.mubr.bf16.gmra.mxu0 %v208
        %v356 = vpop.f32.mrf.mxu0
        %v357 = vadd.f32 0.0, %v356
        %v358 = vpop.f32.mrf.mxu0
        %v359 = vadd.f32 0.0, %v358
        %v360 = vpop.f32.mrf.mxu0
        %v361 = vadd.f32 0.0, %v360
        %v362 = vpop.f32.mrf.mxu0
        %v363 = vadd.f32 0.0, %v362
        %364 = vmatprep.mubr.bf16.mxu0 0
        %365 = vmatmul.mubr.bf16.gmra.mxu0 %v209
        %v366 = vpop.f32.mrf.mxu0
        %v367 = vadd.f32 0.0, %v366
        %v368 = vpop.f32.mrf.mxu0
        %v369 = vadd.f32 0.0, %v368
        %v370 = vpop.f32.mrf.mxu0
        %v371 = vadd.f32 0.0, %v370
        %v372 = vpop.f32.mrf.mxu0
        %v373 = vadd.f32 0.0, %v372
        %374 = vmatprep.mubr.bf16.mxu0 0
        %375 = vmatmul.mubr.bf16.gmra.mxu0 %v210
        %v376 = vpop.f32.mrf.mxu0
        %v377 = vadd.f32 0.0, %v376
        %v378 = vpop.f32.mrf.mxu0
        %v379 = vadd.f32 0.0, %v378
        %v380 = vpop.f32.mrf.mxu0
        %v381 = vadd.f32 0.0, %v380
        %v382 = vpop.f32.mrf.mxu0
        %v383 = vadd.f32 0.0, %v382
        %384 = vmatprep.mubr.bf16.mxu0 0
        %385 = vmatmul.mubr.bf16.gmra.mxu0 %v211
        %v386 = vpop.f32.mrf.mxu0
        %v387 = vadd.f32 0.0, %v386
        %v388 = vpop.f32.mrf.mxu0
        %v389 = vadd.f32 0.0, %v388
        %v390 = vpop.f32.mrf.mxu0
        %v391 = vadd.f32 0.0, %v390
        %v392 = vpop.f32.mrf.mxu0
        %v393 = vadd.f32 0.0, %v392
        %394 = vmatprep.mubr.bf16.mxu0 0
        %395 = vmatmul.mubr.bf16.gmra.mxu0 %v212
        %v396 = vpop.f32.mrf.mxu0
        %v397 = vadd.f32 0.0, %v396
        %v398 = vpop.f32.mrf.mxu0
        %v399 = vadd.f32 0.0, %v398
        %v400 = vpop.f32.mrf.mxu0
        %v401 = vadd.f32 0.0, %v400
        %v402 = vpop.f32.mrf.mxu0
        %v403 = vadd.f32 0.0, %v402
        %404 = vmatprep.mubr.bf16.mxu0 0
        %405 = vmatmul.mubr.bf16.gmra.mxu0 %v213
        %v406 = vpop.f32.mrf.mxu0
        %v407 = vadd.f32 0.0, %v406
        %v408 = vpop.f32.mrf.mxu0
        %v409 = vadd.f32 0.0, %v408
        %v410 = vpop.f32.mrf.mxu0
        %v411 = vadd.f32 0.0, %v410
        %v412 = vpop.f32.mrf.mxu0
        %v413 = vadd.f32 0.0, %v412
        %414 = vdwg.mxu0
        %v415 = vpack.c.bf16 %v341, %v337
        %v416 = vpack.c.bf16 %v351, %v347
        %v417 = vpack.c.bf16 %v361, %v357
        %v418 = vpack.c.bf16 %v371, %v367
        %v419 = vpack.c.bf16 %v381, %v377
        %v420 = vpack.c.bf16 %v391, %v387
        %v421 = vpack.c.bf16 %v401, %v397
        %v422 = vpack.c.bf16 %v411, %v407
        %v431 = vunpack.c.l.b16 %v415
        %v432 = vunpack.c.h.b16 %v415
        %v433 = vunpack.c.l.b16 %v416
        %v434 = vunpack.c.h.b16 %v416
        %v435 = vunpack.c.l.b16 %v417
        %v436 = vunpack.c.h.b16 %v417
        %v437 = vunpack.c.l.b16 %v418
        %v438 = vunpack.c.h.b16 %v418
        %v439 = vunpack.c.l.b16 %v419
        %v440 = vunpack.c.h.b16 %v419
        %v441 = vunpack.c.l.b16 %v420
        %v442 = vunpack.c.h.b16 %v420
        %v443 = vunpack.c.l.b16 %v421
        %v444 = vunpack.c.h.b16 %v421
        %v445 = vunpack.c.l.b16 %v422
        %v446 = vunpack.c.h.b16 %v422
        %v447 = vpack.c.b16 %v431, %v431
        %v448 = vpack.c.b16 %v432, %v432
        %v449 = vpack.c.b16 %v433, %v433
        %v450 = vpack.c.b16 %v434, %v434
        %v451 = vpack.c.b16 %v435, %v435
        %v452 = vpack.c.b16 %v436, %v436
        %v453 = vpack.c.b16 %v437, %v437
        %v454 = vpack.c.b16 %v438, %v438
        %v455 = vpack.c.b16 %v439, %v439
        %v456 = vpack.c.b16 %v440, %v440
        %v457 = vpack.c.b16 %v441, %v441
        %v458 = vpack.c.b16 %v442, %v442
        %v459 = vpack.c.b16 %v443, %v443
        %v460 = vpack.c.b16 %v444, %v444
        %v461 = vpack.c.b16 %v445, %v445
        %v462 = vpack.c.b16 %v446, %v446
        %479 = vst [vmem:[%s133] sm:$0xf] %v447
        %480 = vst [vmem:[%s133 + $0x4] sm:$0xf] %v448
        %481 = vst [vmem:[%s133 + $0x8] sm:$0xf] %v449
        %482 = vst [vmem:[%s133 + $0xc] sm:$0xf] %v450
        %483 = vst [vmem:[%s133 + $0x10] sm:$0xf] %v451
        %484 = vst [vmem:[%s133 + $0x14] sm:$0xf] %v452
        %485 = vst [vmem:[%s133 + $0x18] sm:$0xf] %v453
        %486 = vst [vmem:[%s133 + $0x1c] sm:$0xf] %v454
        %487 = vst [vmem:[%s133 + $0x20] sm:$0xf] %v455
        %488 = vst [vmem:[%s133 + $0x24] sm:$0xf] %v456
        %489 = vst [vmem:[%s133 + $0x28] sm:$0xf] %v457
        %490 = vst [vmem:[%s133 + $0x2c] sm:$0xf] %v458
        %491 = vst [vmem:[%s133 + $0x30] sm:$0xf] %v459
        %492 = vst [vmem:[%s133 + $0x34] sm:$0xf] %v460
        %493 = vst [vmem:[%s133 + $0x38] sm:$0xf] %v461
        %494 = vst [vmem:[%s133 + $0x3c] sm:$0xf] %v462
        %v495 = vpack.c.bf16 %v343, %v339
        %v496 = vpack.c.bf16 %v353, %v349
        %v497 = vpack.c.bf16 %v363, %v359
        %v498 = vpack.c.bf16 %v373, %v369
        %v499 = vpack.c.bf16 %v383, %v379
        %v500 = vpack.c.bf16 %v393, %v389
        %v501 = vpack.c.bf16 %v403, %v399
        %v502 = vpack.c.bf16 %v413, %v409
        %v511 = vunpack.c.l.b16 %v495
        %v512 = vunpack.c.h.b16 %v495
        %v513 = vunpack.c.l.b16 %v496
        %v514 = vunpack.c.h.b16 %v496
        %v515 = vunpack.c.l.b16 %v497
        %v516 = vunpack.c.h.b16 %v497
        %v517 = vunpack.c.l.b16 %v498
        %v518 = vunpack.c.h.b16 %v498
        %v519 = vunpack.c.l.b16 %v499
        %v520 = vunpack.c.h.b16 %v499
        %v521 = vunpack.c.l.b16 %v500
        %v522 = vunpack.c.h.b16 %v500
        %v523 = vunpack.c.l.b16 %v501
        %v524 = vunpack.c.h.b16 %v501
        %v525 = vunpack.c.l.b16 %v502
        %v526 = vunpack.c.h.b16 %v502
        %v527 = vpack.c.b16 %v511, %v511
        %v528 = vpack.c.b16 %v512, %v512
        %v529 = vpack.c.b16 %v513, %v513
        %v530 = vpack.c.b16 %v514, %v514
        %v531 = vpack.c.b16 %v515, %v515
        %v532 = vpack.c.b16 %v516, %v516
        %v533 = vpack.c.b16 %v517, %v517
        %v534 = vpack.c.b16 %v518, %v518
        %v535 = vpack.c.b16 %v519, %v519
        %v536 = vpack.c.b16 %v520, %v520
        %v537 = vpack.c.b16 %v521, %v521
        %v538 = vpack.c.b16 %v522, %v522
        %v539 = vpack.c.b16 %v523, %v523
        %v540 = vpack.c.b16 %v524, %v524
        %v541 = vpack.c.b16 %v525, %v525
        %v542 = vpack.c.b16 %v526, %v526
        %s559 = scalar_lea.vmem %s133, 64 [#allocation2]
        %560 = vst [vmem:[%s559] sm:$0xf] %v527
        %561 = vst [vmem:[%s559 + $0x4] sm:$0xf] %v528
        %562 = vst [vmem:[%s559 + $0x8] sm:$0xf] %v529
        %563 = vst [vmem:[%s559 + $0xc] sm:$0xf] %v530
        %564 = vst [vmem:[%s559 + $0x10] sm:$0xf] %v531
        %565 = vst [vmem:[%s559 + $0x14] sm:$0xf] %v532
        %566 = vst [vmem:[%s559 + $0x18] sm:$0xf] %v533
        %567 = vst [vmem:[%s559 + $0x1c] sm:$0xf] %v534
        %568 = vst [vmem:[%s559 + $0x20] sm:$0xf] %v535
        %569 = vst [vmem:[%s559 + $0x24] sm:$0xf] %v536
        %570 = vst [vmem:[%s559 + $0x28] sm:$0xf] %v537
        %571 = vst [vmem:[%s559 + $0x2c] sm:$0xf] %v538
        %572 = vst [vmem:[%s559 + $0x30] sm:$0xf] %v539
        %573 = vst [vmem:[%s559 + $0x34] sm:$0xf] %v540
        %574 = vst [vmem:[%s559 + $0x38] sm:$0xf] %v541
        %575 = vst [vmem:[%s559 + $0x3c] sm:$0xf] %v542
        %s576 = sand.u32 %s68, 1
        %s577 = sand.u32 %s68, 1
        %s578 = smul.addr %s577, 128
        %s579 = scalar_lea.vmem [#allocation2], %s578
        // Predicated region
        $region29: #{sgformer_forward.13} parent=27 // pred_check
          %p580 = pneg %p78
        $region30: #{sgformer_forward.13} parent=27 // pred_check_branch
          %582 = sbr.rel (%p580) target = $region32
        $region31: #{sgformer_forward.13} parent=27 // pred_region
          %s583 = smul.u32 16, %s13
          %s584 = smul.addr %s583, 4
          %s585 = scalar_lea.vmem %s2, %s584
          // Predicated region
          $region33: #{sgformer_forward.13} parent=31 // pred_check
            _
          $region34: #{sgformer_forward.13} parent=31 // pred_check_branch
            %587 = sbr.rel (0) target = $region36
          $region35: #{sgformer_forward.13} parent=31 // pred_region
            // Predicated region
            $region37: #{sgformer_forward.13} parent=35 // pred_check
              _
            $region38: #{sgformer_forward.13} parent=35 // pred_check_branch
              %589 = sbr.rel target = $region40
            $region39: #{sgformer_forward.13} parent=35 // pred_region
              // Predicated region
              $region52: #{sgformer_forward.13} parent=39 // pred_check
                _
              $region53: #{sgformer_forward.13} parent=39 // pred_check_branch
                %667 = sbr.rel (0) target = $region55
              $region54: #{sgformer_forward.13} parent=39 // pred_region
                loop: start=0, step=1, limit=1
                $region56: #{sgformer_forward.13} parent=54 // loop_pre_header
                  _
                $region57: #{sgformer_forward.13} parent=54 // loop_header
                  %s669 = sphi 0, %s673
                  %p670 = scmp.ge.s32.totalorder %s669, 1
                  %s674 = sphi %s579, %s579
                  %s675 = sphi %s585, %s585
                $region58: #{sgformer_forward.13} parent=54 // loop_header_branch
                  %672 = sbr.rel (%p670) target = $region62
                $region59: #{sgformer_forward.13} parent=54 // loop_body
                  _
                $region60: #{sgformer_forward.13} parent=54 // loop_footer
                  %s673 = sadd.s32 1, %s669
                $region61: #{sgformer_forward.13} parent=54 // loop_footer_branch
                  %668 = sbr.rel target = $region57
                $region62: #{sgformer_forward.13} parent=54 // loop_exit
                  _
                %s677 = ssub.s32 16, 1
                loop: start=0, step=1, limit=1
                $region63: #{sgformer_forward.13} parent=54 // loop_pre_header
                  _
                $region64: #{sgformer_forward.13} parent=54 // loop_header
                  %s679 = sphi 0, %s683
                  %p680 = scmp.ge.s32.totalorder %s679, 1
                  %s684 = sphi %s579, %s579
                  %s685 = sphi %s585, %s585
                $region65: #{sgformer_forward.13} parent=54 // loop_header_branch
                  %682 = sbr.rel (%p680) target = $region69
                $region66: #{sgformer_forward.13} parent=54 // loop_body
                  %v686 = vld [vmem:[%s684] sm:%s677]
                  %687 = vst [vmem:[%s685] sm:%s677] %v686
                  %v688 = vld [vmem:[%s684 + $0x4] sm:%s677]
                  %689 = vst [vmem:[%s685 + $0x4] sm:%s677] %v688
                  %v690 = vld [vmem:[%s684 + $0x8] sm:%s677]
                  %691 = vst [vmem:[%s685 + $0x8] sm:%s677] %v690
                  %v692 = vld [vmem:[%s684 + $0xc] sm:%s677]
                  %693 = vst [vmem:[%s685 + $0xc] sm:%s677] %v692
                  %v694 = vld [vmem:[%s684 + $0x10] sm:%s677]
                  %695 = vst [vmem:[%s685 + $0x10] sm:%s677] %v694
                  %v696 = vld [vmem:[%s684 + $0x14] sm:%s677]
                  %697 = vst [vmem:[%s685 + $0x14] sm:%s677] %v696
                  %v698 = vld [vmem:[%s684 + $0x18] sm:%s677]
                  %699 = vst [vmem:[%s685 + $0x18] sm:%s677] %v698
                  %v700 = vld [vmem:[%s684 + $0x1c] sm:%s677]
                  %701 = vst [vmem:[%s685 + $0x1c] sm:%s677] %v700
                  %v702 = vld [vmem:[%s684 + $0x20] sm:%s677]
                  %703 = vst [vmem:[%s685 + $0x20] sm:%s677] %v702
                  %v704 = vld [vmem:[%s684 + $0x24] sm:%s677]
                  %705 = vst [vmem:[%s685 + $0x24] sm:%s677] %v704
                  %v706 = vld [vmem:[%s684 + $0x28] sm:%s677]
                  %707 = vst [vmem:[%s685 + $0x28] sm:%s677] %v706
                  %v708 = vld [vmem:[%s684 + $0x2c] sm:%s677]
                  %709 = vst [vmem:[%s685 + $0x2c] sm:%s677] %v708
                  %v710 = vld [vmem:[%s684 + $0x30] sm:%s677]
                  %711 = vst [vmem:[%s685 + $0x30] sm:%s677] %v710
                  %v712 = vld [vmem:[%s684 + $0x34] sm:%s677]
                  %713 = vst [vmem:[%s685 + $0x34] sm:%s677] %v712
                  %v714 = vld [vmem:[%s684 + $0x38] sm:%s677]
                  %715 = vst [vmem:[%s685 + $0x38] sm:%s677] %v714
                  %v716 = vld [vmem:[%s684 + $0x3c] sm:%s677]
                  %717 = vst [vmem:[%s685 + $0x3c] sm:%s677] %v716
                  %v718 = vld [vmem:[%s684 + $0x40] sm:%s677]
                  %719 = vst [vmem:[%s685 + $0x80] sm:%s677] %v718
                  %v720 = vld [vmem:[%s684 + $0x44] sm:%s677]
                  %721 = vst [vmem:[%s685 + $0x84] sm:%s677] %v720
                  %v722 = vld [vmem:[%s684 + $0x48] sm:%s677]
                  %723 = vst [vmem:[%s685 + $0x88] sm:%s677] %v722
                  %v724 = vld [vmem:[%s684 + $0x4c] sm:%s677]
                  %725 = vst [vmem:[%s685 + $0x8c] sm:%s677] %v724
                  %v726 = vld [vmem:[%s684 + $0x50] sm:%s677]
                  %727 = vst [vmem:[%s685 + $0x90] sm:%s677] %v726
                  %v728 = vld [vmem:[%s684 + $0x54] sm:%s677]
                  %729 = vst [vmem:[%s685 + $0x94] sm:%s677] %v728
                  %v730 = vld [vmem:[%s684 + $0x58] sm:%s677]
                  %731 = vst [vmem:[%s685 + $0x98] sm:%s677] %v730
                  %v732 = vld [vmem:[%s684 + $0x5c] sm:%s677]
                  %733 = vst [vmem:[%s685 + $0x9c] sm:%s677] %v732
                  %v734 = vld [vmem:[%s684 + $0x60] sm:%s677]
                  %735 = vst [vmem:[%s685 + $0xa0] sm:%s677] %v734
                  %v736 = vld [vmem:[%s684 + $0x64] sm:%s677]
                  %737 = vst [vmem:[%s685 + $0xa4] sm:%s677] %v736
                  %v738 = vld [vmem:[%s684 + $0x68] sm:%s677]
                  %739 = vst [vmem:[%s685 + $0xa8] sm:%s677] %v738
                  %v740 = vld [vmem:[%s684 + $0x6c] sm:%s677]
                  %741 = vst [vmem:[%s685 + $0xac] sm:%s677] %v740
                  %v742 = vld [vmem:[%s684 + $0x70] sm:%s677]
                  %743 = vst [vmem:[%s685 + $0xb0] sm:%s677] %v742
                  %v744 = vld [vmem:[%s684 + $0x74] sm:%s677]
                  %745 = vst [vmem:[%s685 + $0xb4] sm:%s677] %v744
                  %v746 = vld [vmem:[%s684 + $0x78] sm:%s677]
                  %747 = vst [vmem:[%s685 + $0xb8] sm:%s677] %v746
                  %v748 = vld [vmem:[%s684 + $0x7c] sm:%s677]
                  %749 = vst [vmem:[%s685 + $0xbc] sm:%s677] %v748
                $region67: #{sgformer_forward.13} parent=54 // loop_footer
                  %s683 = sadd.s32 1, %s679
                $region68: #{sgformer_forward.13} parent=54 // loop_footer_branch
                  %678 = sbr.rel target = $region64
                $region69: #{sgformer_forward.13} parent=54 // loop_exit
                  _
              $region55: #{sgformer_forward.13} parent=39 // pred_fallthru
                _
            $region40: #{sgformer_forward.13} parent=35 // pred_fallthru
              _
            // Predicated region
            $region41: #{sgformer_forward.13} parent=35 // pred_check
              _
            $region42: #{sgformer_forward.13} parent=35 // pred_check_branch
              %591 = sbr.rel (0) target = $region44
            $region43: #{sgformer_forward.13} parent=35 // pred_region
              %s593 = ssub.s32 16, 1
              loop: start=0, step=1, limit=1
              $region45: #{sgformer_forward.13} parent=43 // loop_pre_header
                _
              $region46: #{sgformer_forward.13} parent=43 // loop_header
                %s595 = sphi 0, %s599
                %p596 = scmp.ge.s32.totalorder %s595, 1
                %s600 = sphi %s579, %s579
                %s601 = sphi %s585, %s585
              $region47: #{sgformer_forward.13} parent=43 // loop_header_branch
                %598 = sbr.rel (%p596) target = $region51
              $region48: #{sgformer_forward.13} parent=43 // loop_body
                %v602 = vld [vmem:[%s600] sm:%s593]
                %603 = vst [vmem:[%s601] sm:%s593] %v602
                %v604 = vld [vmem:[%s600 + $0x4] sm:%s593]
                %605 = vst [vmem:[%s601 + $0x4] sm:%s593] %v604
                %v606 = vld [vmem:[%s600 + $0x8] sm:%s593]
                %607 = vst [vmem:[%s601 + $0x8] sm:%s593] %v606
                %v608 = vld [vmem:[%s600 + $0xc] sm:%s593]
                %609 = vst [vmem:[%s601 + $0xc] sm:%s593] %v608
                %v610 = vld [vmem:[%s600 + $0x10] sm:%s593]
                %611 = vst [vmem:[%s601 + $0x10] sm:%s593] %v610
                %v612 = vld [vmem:[%s600 + $0x14] sm:%s593]
                %613 = vst [vmem:[%s601 + $0x14] sm:%s593] %v612
                %v614 = vld [vmem:[%s600 + $0x18] sm:%s593]
                %615 = vst [vmem:[%s601 + $0x18] sm:%s593] %v614
                %v616 = vld [vmem:[%s600 + $0x1c] sm:%s593]
                %617 = vst [vmem:[%s601 + $0x1c] sm:%s593] %v616
                %v618 = vld [vmem:[%s600 + $0x20] sm:%s593]
                %619 = vst [vmem:[%s601 + $0x20] sm:%s593] %v618
                %v620 = vld [vmem:[%s600 + $0x24] sm:%s593]
                %621 = vst [vmem:[%s601 + $0x24] sm:%s593] %v620
                %v622 = vld [vmem:[%s600 + $0x28] sm:%s593]
                %623 = vst [vmem:[%s601 + $0x28] sm:%s593] %v622
                %v624 = vld [vmem:[%s600 + $0x2c] sm:%s593]
                %625 = vst [vmem:[%s601 + $0x2c] sm:%s593] %v624
                %v626 = vld [vmem:[%s600 + $0x30] sm:%s593]
                %627 = vst [vmem:[%s601 + $0x30] sm:%s593] %v626
                %v628 = vld [vmem:[%s600 + $0x34] sm:%s593]
                %629 = vst [vmem:[%s601 + $0x34] sm:%s593] %v628
                %v630 = vld [vmem:[%s600 + $0x38] sm:%s593]
                %631 = vst [vmem:[%s601 + $0x38] sm:%s593] %v630
                %v632 = vld [vmem:[%s600 + $0x3c] sm:%s593]
                %633 = vst [vmem:[%s601 + $0x3c] sm:%s593] %v632
                %v634 = vld [vmem:[%s600 + $0x40] sm:%s593]
                %635 = vst [vmem:[%s601 + $0x80] sm:%s593] %v634
                %v636 = vld [vmem:[%s600 + $0x44] sm:%s593]
                %637 = vst [vmem:[%s601 + $0x84] sm:%s593] %v636
                %v638 = vld [vmem:[%s600 + $0x48] sm:%s593]
                %639 = vst [vmem:[%s601 + $0x88] sm:%s593] %v638
                %v640 = vld [vmem:[%s600 + $0x4c] sm:%s593]
                %641 = vst [vmem:[%s601 + $0x8c] sm:%s593] %v640
                %v642 = vld [vmem:[%s600 + $0x50] sm:%s593]
                %643 = vst [vmem:[%s601 + $0x90] sm:%s593] %v642
                %v644 = vld [vmem:[%s600 + $0x54] sm:%s593]
                %645 = vst [vmem:[%s601 + $0x94] sm:%s593] %v644
                %v646 = vld [vmem:[%s600 + $0x58] sm:%s593]
                %647 = vst [vmem:[%s601 + $0x98] sm:%s593] %v646
                %v648 = vld [vmem:[%s600 + $0x5c] sm:%s593]
                %649 = vst [vmem:[%s601 + $0x9c] sm:%s593] %v648
                %v650 = vld [vmem:[%s600 + $0x60] sm:%s593]
                %651 = vst [vmem:[%s601 + $0xa0] sm:%s593] %v650
                %v652 = vld [vmem:[%s600 + $0x64] sm:%s593]
                %653 = vst [vmem:[%s601 + $0xa4] sm:%s593] %v652
                %v654 = vld [vmem:[%s600 + $0x68] sm:%s593]
                %655 = vst [vmem:[%s601 + $0xa8] sm:%s593] %v654
                %v656 = vld [vmem:[%s600 + $0x6c] sm:%s593]
                %657 = vst [vmem:[%s601 + $0xac] sm:%s593] %v656
                %v658 = vld [vmem:[%s600 + $0x70] sm:%s593]
                %659 = vst [vmem:[%s601 + $0xb0] sm:%s593] %v658
                %v660 = vld [vmem:[%s600 + $0x74] sm:%s593]
                %661 = vst [vmem:[%s601 + $0xb4] sm:%s593] %v660
                %v662 = vld [vmem:[%s600 + $0x78] sm:%s593]
                %663 = vst [vmem:[%s601 + $0xb8] sm:%s593] %v662
                %v664 = vld [vmem:[%s600 + $0x7c] sm:%s593]
                %665 = vst [vmem:[%s601 + $0xbc] sm:%s593] %v664
              $region49: #{sgformer_forward.13} parent=43 // loop_footer
                %s599 = sadd.s32 1, %s595
              $region50: #{sgformer_forward.13} parent=43 // loop_footer_branch
                %594 = sbr.rel target = $region46
              $region51: #{sgformer_forward.13} parent=43 // loop_exit
                _
            $region44: #{sgformer_forward.13} parent=35 // pred_fallthru
              _
          $region36: #{sgformer_forward.13} parent=31 // pred_fallthru
            _
          %750 = vnop
        $region32: #{sgformer_forward.13} parent=27 // pred_fallthru
          _
      $region28: #{sgformer_forward.13} parent=5 // pred_fallthru
        _
      %p751 = scmp.le.s32.totalorder 2, %s8
      // Predicated region
      $region70: #{sgformer_forward.13} parent=5 // pred_check
        %p752 = pneg %p751
      $region71: #{sgformer_forward.13} parent=5 // pred_check_branch
        %754 = sbr.rel (%p752) target = $region73
      $region72: #{sgformer_forward.13} parent=5 // pred_region
        %s755 = ssub.s32 %s8, 2
        // Predicated region
        $region74: #{sgformer_forward.13} parent=72 // pred_check
          %p756 = pneg %p84
        $region75: #{sgformer_forward.13} parent=72 // pred_check_branch
          %758 = sbr.rel (%p756) target = $region77
        $region76: #{sgformer_forward.13} parent=72 // pred_region
          %s759 = sand.u32 %s69, 1
          %s760 = sand.u32 %s69, 1
          %s761 = smul.addr %s760, 128
          %s762 = scalar_lea.vmem [#allocation2], %s761
        $region77: #{sgformer_forward.13} parent=72 // pred_fallthru
          _
      $region73: #{sgformer_forward.13} parent=5 // pred_fallthru
        _
    $region6: #{sgformer_forward.13} parent=1 // loop_footer
      %s12 = sadd.s32 1, %s8
    $region7: #{sgformer_forward.13} parent=1 // loop_footer_branch
      %7 = sbr.rel target = $region3
    $region8: #{sgformer_forward.13} parent=1 // loop_exit
      _

// kernel: sgformer_forward.11
$region0: #{sgformer_forward.11}
  #allocation0 [shape = 'u32[]', space=smem, size = 0x4, offset = 0x4, fixed_abs, tag = 'smem constant byte address 0x4 - core index']
  #allocation1 [shape = 'u32[144,128]{1,0:T(1,128)}', space=vmem, size = 0x12000, scoped, tag = 'internal scratch']
  %s0 = inlined_call_operand.vmem [shape: bf16[256,256], index: 0, kind: input, shape index: {}]
  %s1 = inlined_call_operand.vmem [shape: bf16[256,128], index: 1, kind: input, shape index: {}]
  %s2 = inlined_call_operand.vmem [shape: f32[128,128], index: 2, kind: input, shape index: {}]
  %s3 = inlined_call_operand.vmem [shape: f32[8,128], index: 3, kind: input, shape index: {}]
  %s4 = inlined_call_operand.hbm [shape: f32[1,128], index: 4, kind: input, shape index: {}]
  %s5 = inlined_call_operand.hbm [shape: f32[1,128], index: 5, kind: input, shape index: {}]
  %s6 = inlined_call_operand.vmem [shape: bf16[256,128], index: 6, kind: output, shape index: {}]
  %s7 = sld [smem:[#allocation0]]
  $region65: #{sgformer_forward.11} parent=0
    _
  %s9 = ssub.s32 1, %s7
  %s10 = scalar_select 0, %s9, %s7
  $region1: #{sgformer_forward.11} parent=0
    #allocation2 [shape = 'u8[512]{0}', space=vmem, size = 0x400, scoped, tag = 'input window, operand 4, single buffered']
    #allocation3 [shape = 's32[2]{0}', space=sflag, size = 0x8, scoped, tag = 'scoped memory for sgformer_forward.11']
    #allocation4 [shape = 'u8[512]{0}', space=vmem, size = 0x400, scoped, tag = 'input window, operand 5, single buffered']
    #allocation5 [shape = 's32[1]{0}', space=sflag, size = 0x4, scoped, tag = 'scoped memory for sgformer_forward.11']
    %11 = vsyncpa [#allocation3], 0
    %12 = vsyncpa [#allocation5], 0
    loop: start=0, step=1, limit=4
    $region2: #{sgformer_forward.11} parent=1 // loop_pre_header
      _
    $region3: #{sgformer_forward.11} parent=1 // loop_header
      %s14 = sphi 0, %s18
      %p15 = scmp.ge.s32.totalorder %s14, 4
      %s24 = sphi 0, %s26
      %s27 = sphi 0, %s24
      %s28 = sphi 0, %s27
      %s44 = sphi 0, %s28
      %s50 = sphi 0, %s52
      %s53 = sphi 0, %s50
      %s54 = sphi 0, %s53
      %s70 = sphi 0, %s54
      %s74 = sphi 0, %s74
      %s76 = sphi 0, %s74
      %s77 = sphi 0, %s76
      %s91 = sphi 0, %s77
      %s95 = sphi 0, %s95
      %s97 = sphi 0, %s95
      %s98 = sphi 0, %s97
      %s112 = sphi 0, %s98
      %s116 = sphi 0, %s116
      %s118 = sphi 0, %s116
      %s119 = sphi 0, %s118
      %s133 = sphi 0, %s119
      %s137 = sphi 0, %s137
      %s139 = sphi 0, %s137
      %s140 = sphi 0, %s139
      %s154 = sphi 0, %s140
      %s160 = sphi 0, %s162
      %s163 = sphi 0, %s160
      %s164 = sphi 0, %s163
      %s180 = sphi 0, %s164
    $region4: #{sgformer_forward.11} parent=1 // loop_header_branch
      %17 = sbr.rel (%p15) target = $region8
    $region5: #{sgformer_forward.11} parent=1 // loop_body
      %s19 = ssub.s32 %s14, 1
      %s20 = ssub.s32 %s14, 2
      %s21 = sadd.s32 %s14, 1
      %s22 = ssub.s32 %s14, %s21
      %p23 = scmp.eq.s32.totalorder %s22, 0
      %s25 = sadd.s32 %s24, 1
      %s26 = scalar_select %p23, %s24, %s25
      %p29 = pneg %p23
      %p30 = scmp.eq.s32.totalorder %s14, 1
      %p31 = por %p29, %p30
      %p32 = scmp.ne.s32.totalorder %s24, %s27
      %p33 = scmp.eq.s32.totalorder %s14, 0
      %p34 = por %p32, %p33
      %p35 = scmp.ne.s32.totalorder %s24, %s27
      %p36 = scmp.eq.s32.totalorder %s19, 1
      %p37 = por %p35, %p36
      %p38 = scmp.ne.s32.totalorder %s27, %s28
      %p39 = scmp.eq.s32.totalorder %s19, 0
      %p40 = por %p38, %p39
      %p41 = scmp.ne.s32.totalorder %s27, %s28
      %p42 = scmp.eq.s32.totalorder %s20, 1
      %p43 = por %p41, %p42
      %p45 = scmp.ne.s32.totalorder %s28, %s44
      %p46 = scmp.eq.s32.totalorder %s20, 0
      %p47 = por %p45, %p46
      %s48 = ssub.s32 %s14, %s21
      %p49 = scmp.eq.s32.totalorder %s48, 0
      %s51 = sadd.s32 %s50, 1
      %s52 = scalar_select %p49, %s50, %s51
      %p55 = pneg %p49
      %p56 = scmp.eq.s32.totalorder %s14, 1
      %p57 = por %p55, %p56
      %p58 = scmp.ne.s32.totalorder %s50, %s53
      %p59 = scmp.eq.s32.totalorder %s14, 0
      %p60 = por %p58, %p59
      %p61 = scmp.ne.s32.totalorder %s50, %s53
      %p62 = scmp.eq.s32.totalorder %s19, 1
      %p63 = por %p61, %p62
      %p64 = scmp.ne.s32.totalorder %s53, %s54
      %p65 = scmp.eq.s32.totalorder %s19, 0
      %p66 = por %p64, %p65
      %p67 = scmp.ne.s32.totalorder %s53, %s54
      %p68 = scmp.eq.s32.totalorder %s20, 1
      %p69 = por %p67, %p68
      %p71 = scmp.ne.s32.totalorder %s54, %s70
      %p72 = scmp.eq.s32.totalorder %s20, 0
      %p73 = por %p71, %p72
      %s75 = sadd.s32 %s74, 1
      %p78 = scmp.eq.s32.totalorder %s14, 1
      %p79 = scmp.ne.s32.totalorder %s74, %s76
      %p80 = scmp.eq.s32.totalorder %s14, 0
      %p81 = por %p79, %p80
      %p82 = scmp.ne.s32.totalorder %s74, %s76
      %p83 = scmp.eq.s32.totalorder %s19, 1
      %p84 = por %p82, %p83
      %p85 = scmp.ne.s32.totalorder %s76, %s77
      %p86 = scmp.eq.s32.totalorder %s19, 0
      %p87 = por %p85, %p86
      %p88 = scmp.ne.s32.totalorder %s76, %s77
      %p89 = scmp.eq.s32.totalorder %s20, 1
      %p90 = por %p88, %p89
      %p92 = scmp.ne.s32.totalorder %s77, %s91
      %p93 = scmp.eq.s32.totalorder %s20, 0
      %p94 = por %p92, %p93
      %s96 = sadd.s32 %s95, 1
      %p99 = scmp.eq.s32.totalorder %s14, 1
      %p100 = scmp.ne.s32.totalorder %s95, %s97
      %p101 = scmp.eq.s32.totalorder %s14, 0
      %p102 = por %p100, %p101
      %p103 = scmp.ne.s32.totalorder %s95, %s97
      %p104 = scmp.eq.s32.totalorder %s19, 1
      %p105 = por %p103, %p104
      %p106 = scmp.ne.s32.totalorder %s97, %s98
      %p107 = scmp.eq.s32.totalorder %s19, 0
      %p108 = por %p106, %p107
      %p109 = scmp.ne.s32.totalorder %s97, %s98
      %p110 = scmp.eq.s32.totalorder %s20, 1
      %p111 = por %p109, %p110
      %p113 = scmp.ne.s32.totalorder %s98, %s112
      %p114 = scmp.eq.s32.totalorder %s20, 0
      %p115 = por %p113, %p114
      %s117 = sadd.s32 %s116, 1
      %p120 = scmp.eq.s32.totalorder %s14, 1
      %p121 = scmp.ne.s32.totalorder %s116, %s118
      %p122 = scmp.eq.s32.totalorder %s14, 0
      %p123 = por %p121, %p122
      %p124 = scmp.ne.s32.totalorder %s116, %s118
      %p125 = scmp.eq.s32.totalorder %s19, 1
      %p126 = por %p124, %p125
      %p127 = scmp.ne.s32.totalorder %s118, %s119
      %p128 = scmp.eq.s32.totalorder %s19, 0
      %p129 = por %p127, %p128
      %p130 = scmp.ne.s32.totalorder %s118, %s119
      %p131 = scmp.eq.s32.totalorder %s20, 1
      %p132 = por %p130, %p131
      %p134 = scmp.ne.s32.totalorder %s119, %s133
      %p135 = scmp.eq.s32.totalorder %s20, 0
      %p136 = por %p134, %p135
      %s138 = sadd.s32 %s137, 1
      %p141 = scmp.eq.s32.totalorder %s14, 1
      %p142 = scmp.ne.s32.totalorder %s137, %s139
      %p143 = scmp.eq.s32.totalorder %s14, 0
      %p144 = por %p142, %p143
      %p145 = scmp.ne.s32.totalorder %s137, %s139
      %p146 = scmp.eq.s32.totalorder %s19, 1
      %p147 = por %p145, %p146
      %p148 = scmp.ne.s32.totalorder %s139, %s140
      %p149 = scmp.eq.s32.totalorder %s19, 0
      %p150 = por %p148, %p149
      %p151 = scmp.ne.s32.totalorder %s139, %s140
      %p152 = scmp.eq.s32.totalorder %s20, 1
      %p153 = por %p151, %p152
      %p155 = scmp.ne.s32.totalorder %s140, %s154
      %p156 = scmp.eq.s32.totalorder %s20, 0
      %p157 = por %p155, %p156
      %s158 = ssub.s32 %s14, %s21
      %p159 = scmp.eq.s32.totalorder %s158, 0
      %s161 = sadd.s32 %s160, 1
      %s162 = scalar_select %p159, %s160, %s161
      %p165 = pneg %p159
      %p166 = scmp.eq.s32.totalorder %s14, 1
      %p167 = por %p165, %p166
      %p168 = scmp.ne.s32.totalorder %s160, %s163
      %p169 = scmp.eq.s32.totalorder %s14, 0
      %p170 = por %p168, %p169
      %p171 = scmp.ne.s32.totalorder %s160, %s163
      %p172 = scmp.eq.s32.totalorder %s19, 1
      %p173 = por %p171, %p172
      %p174 = scmp.ne.s32.totalorder %s163, %s164
      %p175 = scmp.eq.s32.totalorder %s19, 0
      %p176 = por %p174, %p175
      %p177 = scmp.ne.s32.totalorder %s163, %s164
      %p178 = scmp.eq.s32.totalorder %s20, 1
      %p179 = por %p177, %p178
      %p181 = scmp.ne.s32.totalorder %s164, %s180
      %p182 = scmp.eq.s32.totalorder %s20, 0
      %p183 = por %p181, %p182
      %p184 = scmp.le.s32.totalorder 1, %s14
      %p185 = scmp.lt.s32.totalorder %s14, 3
      %p186 = pnand %p184, %p185
      %p187 = pneg %p186
      // Predicated region
      $region9: #{sgformer_forward.11} parent=5 // pred_check
        _
      $region10: #{sgformer_forward.11} parent=5 // pred_check_branch
        %189 = sbr.rel (%p186) target = $region12
      $region11: #{sgformer_forward.11} parent=5 // pred_region
        %s190 = ssub.s32 %s14, 1
        // Predicated region
        $region13: #{sgformer_forward.11} parent=11 // pred_check
          %p191 = pneg %p87
        $region14: #{sgformer_forward.11} parent=11 // pred_check_branch
          %193 = sbr.rel (%p191) target = $region16
        $region15: #{sgformer_forward.11} parent=11 // pred_region
          _
        $region16: #{sgformer_forward.11} parent=11 // pred_fallthru
          _
        // Predicated region
        $region17: #{sgformer_forward.11} parent=11 // pred_check
          %p194 = pneg %p108
        $region18: #{sgformer_forward.11} parent=11 // pred_check_branch
          %196 = sbr.rel (%p194) target = $region20
        $region19: #{sgformer_forward.11} parent=11 // pred_region
          _
        $region20: #{sgformer_forward.11} parent=11 // pred_fallthru
          _
        // Predicated region
        $region21: #{sgformer_forward.11} parent=11 // pred_check
          %p197 = pneg %p129
        $region22: #{sgformer_forward.11} parent=11 // pred_check_branch
          %199 = sbr.rel (%p197) target = $region24
        $region23: #{sgformer_forward.11} parent=11 // pred_region
          %s201 = ssub.s32 16, 16
          %202 = vsyncadd [#allocation3], %s201
          %s204 = sshll.u32 [#allocation2], 4
          %s205 = int_to_ptr.vmem [resolvable:$true] %s204
          %207 = dma.hbm_to_vmem [thread:$0]  %s4, 16, %s205, [#allocation3]
        $region24: #{sgformer_forward.11} parent=11 // pred_fallthru
          _
        // Predicated region
        $region25: #{sgformer_forward.11} parent=11 // pred_check
          %p208 = pneg %p150
        $region26: #{sgformer_forward.11} parent=11 // pred_check_branch
          %210 = sbr.rel (%p208) target = $region28
        $region27: #{sgformer_forward.11} parent=11 // pred_region
          %s212 = ssub.s32 16, 16
          %213 = vsyncadd [#allocation5], %s212
          %s215 = sshll.u32 [#allocation4], 4
          %s216 = int_to_ptr.vmem [resolvable:$true] %s215
          %218 = dma.hbm_to_vmem [thread:$0]  %s5, 16, %s216, [#allocation5]
        $region28: #{sgformer_forward.11} parent=11 // pred_fallthru
          _
      $region12: #{sgformer_forward.11} parent=5 // pred_fallthru
        _
      %p219 = scmp.lt.s32.totalorder %s14, 2
      // Predicated region
      $region29: #{sgformer_forward.11} parent=5 // pred_check
        %p220 = pneg %p219
      $region30: #{sgformer_forward.11} parent=5 // pred_check_branch
        %222 = sbr.rel (%p220) target = $region32
      $region31: #{sgformer_forward.11} parent=5 // pred_region
        // Predicated region
        $region33: #{sgformer_forward.11} parent=31 // pred_check
          %p223 = pneg %p34
        $region34: #{sgformer_forward.11} parent=31 // pred_check_branch
          %225 = sbr.rel (%p223) target = $region36
        $region35: #{sgformer_forward.11} parent=31 // pred_region
          %s226 = smul.u32 16, %s14
          %p227 = scmp.lt.s32.totalorder %s226, 31
          %s228 = scalar_select %p227, %s226, 31
          %s229 = smul.addr %s228, 2
          %s230 = smul.addr %s229, 4
          %s231 = scalar_lea.vmem %s0, %s230
          %s232 = smul.u32 16, %s14
        $region36: #{sgformer_forward.11} parent=31 // pred_fallthru
          _
        // Predicated region
        $region37: #{sgformer_forward.11} parent=31 // pred_check
          %p233 = pneg %p60
        $region38: #{sgformer_forward.11} parent=31 // pred_check_branch
          %235 = sbr.rel (%p233) target = $region40
        $region39: #{sgformer_forward.11} parent=31 // pred_region
          %s236 = smul.u32 16, %s14
          %p237 = scmp.lt.s32.totalorder %s236, 31
          %s238 = scalar_select %p237, %s236, 31
          %s239 = smul.addr %s238, 4
          %s240 = scalar_lea.vmem %s1, %s239
          %s241 = smul.u32 16, %s14
        $region40: #{sgformer_forward.11} parent=31 // pred_fallthru
          _
      $region32: #{sgformer_forward.11} parent=5 // pred_fallthru
        _
      %p242 = scmp.le.s32.totalorder 1, %s14
      %p243 = scmp.lt.s32.totalorder %s14, 3
      %p244 = pnand %p242, %p243
      %p245 = pneg %p244
      // Predicated region
      $region41: #{sgformer_forward.11} parent=5 // pred_check
        _
      $region42: #{sgformer_forward.11} parent=5 // pred_check_branch
        %247 = sbr.rel (%p244) target = $region44
      $region43: #{sgformer_forward.11} parent=5 // pred_region
        %s248 = ssub.s32 %s14, 1
        // Predicated region
        $region45: #{sgformer_forward.11} parent=43 // pred_check
          %p249 = pneg %p129
        $region46: #{sgformer_forward.11} parent=43 // pred_check_branch
          %251 = sbr.rel (%p249) target = $region48
        $region47: #{sgformer_forward.11} parent=43 // pred_region
          %252 = dma.done [#allocation3], 16
        $region48: #{sgformer_forward.11} parent=43 // pred_fallthru
          _
        // Predicated region
        $region49: #{sgformer_forward.11} parent=43 // pred_check
          %p253 = pneg %p150
        $region50: #{sgformer_forward.11} parent=43 // pred_check_branch
          %255 = sbr.rel (%p253) target = $region52
        $region51: #{sgformer_forward.11} parent=43 // pred_region
          %256 = dma.done [#allocation5], 16
        $region52: #{sgformer_forward.11} parent=43 // pred_fallthru
          _
        %s257 = smul.u32 16, %s19
        %p258 = scmp.lt.s32.totalorder %s257, 31
        %s259 = scalar_select %p258, %s257, 31
        %s260 = smul.addr %s259, 2
        %s261 = smul.addr %s260, 4
        %s262 = scalar_lea.vmem %s0, %s261
        %p263 = pneg %p40
        %p264 = pneg %p37
        %s265 = smul.u32 16, %s19
        %p266 = scmp.lt.s32.totalorder %s265, 31
        %s267 = scalar_select %p266, %s265, 31
        %s268 = smul.addr %s267, 4
        %s269 = scalar_lea.vmem %s1, %s268
        %p270 = pneg %p66
        %p271 = pneg %p63
        %p272 = pneg %p87
        %p273 = pneg %p84
        %p274 = pneg %p108
        %p275 = pneg %p105
        %p276 = pneg %p129
        %p277 = pneg %p126
        %p278 = pneg %p150
        %p279 = pneg %p147
        %p280 = pneg %p176
        %p281 = pneg %p173
        %s282 = smul.u32 16, %s19
        %p283 = scmp.lt.s32.totalorder %s282, 31
        %s284 = scalar_select %p283, %s282, 31
        %s285 = smul.addr %s284, 4
        %s286 = scalar_lea.vmem %s6, %s285
        %s287 = smul.u32 16, %s19
        %p288 = scmp.lt.s32.totalorder %s287, 31
        %s289 = scalar_select %p288, %s287, 31
        %s290 = smul.addr %s289, 2
        %s291 = smul.addr %s290, 4
        %s292 = scalar_lea.vmem %s0, %s291
        %s293 = smul.u32 16, %s19
        %s294 = smul.u32 16, %s19
        %p295 = scmp.lt.s32.totalorder %s294, 31
        %s296 = scalar_select %p295, %s294, 31
        %s297 = smul.addr %s296, 4
        %s298 = scalar_lea.vmem %s1, %s297
        %s299 = smul.u32 16, %s19
        %s300 = smul.u32 16, %s19
        %p301 = scmp.lt.s32.totalorder %s300, 31
        %s302 = scalar_select %p301, %s300, 31
        %s303 = smul.addr %s302, 4
        %s304 = scalar_lea.vmem %s6, %s303
        %s305 = smul.u32 16, %s19
        %v307 = vld [vmem:[%s292] sm:$0xff]
        %v308 = vld [vmem:[%s292 + $0x8] sm:$0xff]
        %v309 = vld [vmem:[%s292 + $0x10] sm:$0xff]
        %v310 = vld [vmem:[%s292 + $0x18] sm:$0xff]
        %v311 = vld [vmem:[%s292 + $0x20] sm:$0xff]
        %v312 = vld [vmem:[%s292 + $0x28] sm:$0xff]
        %v313 = vld [vmem:[%s292 + $0x30] sm:$0xff]
        %v314 = vld [vmem:[%s292 + $0x38] sm:$0xff]
        %v315 = vld [vmem:[%s292 + $0x40] sm:$0xff]
        %v316 = vld [vmem:[%s292 + $0x48] sm:$0xff]
        %v317 = vld [vmem:[%s292 + $0x50] sm:$0xff]
        %v318 = vld [vmem:[%s292 + $0x58] sm:$0xff]
        %v319 = vld [vmem:[%s292 + $0x60] sm:$0xff]
        %v320 = vld [vmem:[%s292 + $0x68] sm:$0xff]
        %v321 = vld [vmem:[%s292 + $0x70] sm:$0xff]
        %v322 = vld [vmem:[%s292 + $0x78] sm:$0xff]
        %v323 = vunpack.c.l.bf16 %v307
        %v324 = vunpack.c.l.bf16 %v308
        %v325 = vunpack.c.l.bf16 %v309
        %v326 = vunpack.c.l.bf16 %v310
        %v327 = vunpack.c.l.bf16 %v311
        %v328 = vunpack.c.l.bf16 %v312
        %v329 = vunpack.c.l.bf16 %v313
        %v330 = vunpack.c.l.bf16 %v314
        %v331 = vunpack.c.l.bf16 %v315
        %v332 = vunpack.c.l.bf16 %v316
        %v333 = vunpack.c.l.bf16 %v317
        %v334 = vunpack.c.l.bf16 %v318
        %v335 = vunpack.c.l.bf16 %v319
        %v336 = vunpack.c.l.bf16 %v320
        %v337 = vunpack.c.l.bf16 %v321
        %v338 = vunpack.c.l.bf16 %v322
        %v339 = vld [vmem:[%s3 + $0x1] sm:$0x1]
        %vm340 = vcmask 1040384
        %v341 = vsel %vm340, %v339, 0.0
        %342 = vadd.xlane.f32.xlu0 %v341
        %v343 = vpop.xlane.xlu0 %342
        %v344 = vrot.slane %v343, 4
        %v345 = vadd.f32 %v343, %v344
        %v346 = vrot.slane %v345, 2
        %v347 = vadd.f32 %v345, %v346
        %v348 = vrot.slane %v347, 1
        %v349 = vadd.f32 %v347, %v348
        %s350 = vtos %v349
        %s351 = smax.f32 %s350, 1e-24
        %v352 = vstv %s351
        %v353 = vrsqrt.pop %v352
        %s354 = vtos %v353
        %v355 = vld [vmem:[%s3 + $0x2] sm:$0x1]
        %v356 = vsel %vm340, %v355, 0.0
        %357 = vadd.xlane.f32.xlu0 %v356
        %v358 = vpop.xlane.xlu0 %357
        %v359 = vrot.slane %v358, 4
        %v360 = vadd.f32 %v358, %v359
        %v361 = vrot.slane %v360, 2
        %v362 = vadd.f32 %v360, %v361
        %v363 = vrot.slane %v362, 1
        %v364 = vadd.f32 %v362, %v363
        %s365 = vtos %v364
        %s366 = smax.f32 %s365, 1e-24
        %v367 = vstv %s366
        %v368 = vrsqrt.pop %v367
        %s369 = vtos %v368
        %v370 = vstv %s354
        %v371 = vmul.f32 %v323, %v370
        %v372 = vmul.f32 %v324, %v370
        %v373 = vmul.f32 %v325, %v370
        %v374 = vmul.f32 %v326, %v370
        %v375 = vmul.f32 %v327, %v370
        %v376 = vmul.f32 %v328, %v370
        %v377 = vmul.f32 %v329, %v370
        %v378 = vmul.f32 %v330, %v370
        %v379 = vmul.f32 %v331, %v370
        %v380 = vmul.f32 %v332, %v370
        %v381 = vmul.f32 %v333, %v370
        %v382 = vmul.f32 %v334, %v370
        %v383 = vmul.f32 %v335, %v370
        %v384 = vmul.f32 %v336, %v370
        %v385 = vmul.f32 %v337, %v370
        %v386 = vmul.f32 %v338, %v370
        %v403 = vrot.slane %v307, 4
        %v404 = vrot.slane %v308, 4
        %v405 = vrot.slane %v309, 4
        %v406 = vrot.slane %v310, 4
        %v407 = vrot.slane %v311, 4
        %v408 = vrot.slane %v312, 4
        %v409 = vrot.slane %v313, 4
        %v410 = vrot.slane %v314, 4
        %v411 = vrot.slane %v315, 4
        %v412 = vrot.slane %v316, 4
        %v413 = vrot.slane %v317, 4
        %v414 = vrot.slane %v318, 4
        %v415 = vrot.slane %v319, 4
        %v416 = vrot.slane %v320, 4
        %v417 = vrot.slane %v321, 4
        %v418 = vrot.slane %v322, 4
        %v435 = vunpack.c.l.bf16 %v403
        %v436 = vunpack.c.l.bf16 %v404
        %v437 = vunpack.c.l.bf16 %v405
        %v438 = vunpack.c.l.bf16 %v406
        %v439 = vunpack.c.l.bf16 %v407
        %v440 = vunpack.c.l.bf16 %v408
        %v441 = vunpack.c.l.bf16 %v409
        %v442 = vunpack.c.l.bf16 %v410
        %v443 = vunpack.c.l.bf16 %v411
        %v444 = vunpack.c.l.bf16 %v412
        %v445 = vunpack.c.l.bf16 %v413
        %v446 = vunpack.c.l.bf16 %v414
        %v447 = vunpack.c.l.bf16 %v415
        %v448 = vunpack.c.l.bf16 %v416
        %v449 = vunpack.c.l.bf16 %v417
        %v450 = vunpack.c.l.bf16 %v418
        %v451 = vld [vmem:[%s2] sm:$0xff]
        %v452 = vld [vmem:[%s2 + $0x8] sm:$0xff]
        %v453 = vld [vmem:[%s2 + $0x10] sm:$0xff]
        %v454 = vld [vmem:[%s2 + $0x18] sm:$0xff]
        %v455 = vld [vmem:[%s2 + $0x20] sm:$0xff]
        %v456 = vld [vmem:[%s2 + $0x28] sm:$0xff]
        %v457 = vld [vmem:[%s2 + $0x30] sm:$0xff]
        %v458 = vld [vmem:[%s2 + $0x38] sm:$0xff]
        %v459 = vld [vmem:[%s2 + $0x40] sm:$0xff]
        %v460 = vld [vmem:[%s2 + $0x48] sm:$0xff]
        %v461 = vld [vmem:[%s2 + $0x50] sm:$0xff]
        %v462 = vld [vmem:[%s2 + $0x58] sm:$0xff]
        %v463 = vld [vmem:[%s2 + $0x60] sm:$0xff]
        %v464 = vld [vmem:[%s2 + $0x68] sm:$0xff]
        %v465 = vld [vmem:[%s2 + $0x70] sm:$0xff]
        %v466 = vld [vmem:[%s2 + $0x78] sm:$0xff]
        %v467 = vstv %s369
        %v468 = vmul.f32 %v451, %v467
        %v469 = vmul.f32 %v452, %v467
        %v470 = vmul.f32 %v453, %v467
        %v471 = vmul.f32 %v454, %v467
        %v472 = vmul.f32 %v455, %v467
        %v473 = vmul.f32 %v456, %v467
        %v474 = vmul.f32 %v457, %v467
        %v475 = vmul.f32 %v458, %v467
        %v476 = vmul.f32 %v459, %v467
        %v477 = vmul.f32 %v460, %v467
        %v478 = vmul.f32 %v461, %v467
        %v479 = vmul.f32 %v462, %v467
        %v480 = vmul.f32 %v463, %v467
        %v481 = vmul.f32 %v464, %v467
        %v482 = vmul.f32 %v465, %v467
        %v483 = vmul.f32 %v466, %v467
        %v484 = vpack.c.bf16 %v372, %v371
        %v485 = vpack.c.bf16 %v374, %v373
        %v486 = vpack.c.bf16 %v376, %v375
        %v487 = vpack.c.bf16 %v378, %v377
        %v488 = vpack.c.bf16 %v380, %v379
        %v489 = vpack.c.bf16 %v382, %v381
        %v490 = vpack.c.bf16 %v384, %v383
        %v491 = vpack.c.bf16 %v386, %v385
        %v492 = vpack.c.bf16 %v469, %v468
        %v493 = vpack.c.bf16 %v471, %v470
        %v494 = vpack.c.bf16 %v473, %v472
        %v495 = vpack.c.bf16 %v475, %v474
        %v496 = vpack.c.bf16 %v477, %v476
        %v497 = vpack.c.bf16 %v479, %v478
        %v498 = vpack.c.bf16 %v481, %v480
        %v499 = vpack.c.bf16 %v483, %v482
        %v500 = vmul.f32 %v435, 200.0
        %v501 = vmul.f32 %v436, 200.0
        %v502 = vmul.f32 %v437, 200.0
        %v503 = vmul.f32 %v438, 200.0
        %v504 = vmul.f32 %v439, 200.0
        %v505 = vmul.f32 %v440, 200.0
        %v506 = vmul.f32 %v441, 200.0
        %v507 = vmul.f32 %v442, 200.0
        %v508 = vmul.f32 %v443, 200.0
        %v509 = vmul.f32 %v444, 200.0
        %v510 = vmul.f32 %v445, 200.0
        %v511 = vmul.f32 %v446, 200.0
        %v512 = vmul.f32 %v447, 200.0
        %v513 = vmul.f32 %v448, 200.0
        %v514 = vmul.f32 %v449, 200.0
        %v515 = vmul.f32 %v450, 200.0
        %516 = vmatprep.subr.bf16.mxu0 0
        %517 = vmatpush1.bf16.msra.mxu0 %v499
        %518 = vmatprep.subr.bf16.mxu0 0
        %519 = vmatpush1.bf16.msra.mxu0 %v498
        %520 = vmatprep.subr.bf16.mxu0 0
        %521 = vmatpush1.bf16.msra.mxu0 %v497
        %522 = vmatprep.subr.bf16.mxu0 0
        %523 = vmatpush1.bf16.msra.mxu0 %v496
        %524 = vmatprep.subr.bf16.mxu0 0
        %525 = vmatpush1.bf16.msra.mxu0 %v495
        %526 = vmatprep.subr.bf16.mxu0 0
        %527 = vmatpush1.bf16.msra.mxu0 %v494
        %528 = vmatprep.subr.bf16.mxu0 0
        %529 = vmatpush1.bf16.msra.mxu0 %v493
        %530 = vmatprep.subr.bf16.mxu0 0
        %531 = vmatpush1.bf16.msra.mxu0 %v492
        %532 = vmatprep.subr.bf16.mxu0 0
        %533 = vmatpush2.bf16.msra.mxu0 0
        %534 = vmatprep.subr.bf16.mxu0 0
        %535 = vmatpush2.bf16.msra.mxu0 0
        %536 = vmatprep.subr.bf16.mxu0 0
        %537 = vmatpush2.bf16.msra.mxu0 0
        %538 = vmatprep.subr.bf16.mxu0 0
        %539 = vmatpush2.bf16.msra.mxu0 0
        %540 = vmatprep.subr.bf16.mxu0 0
        %541 = vmatpush2.bf16.msra.mxu0 0
        %542 = vmatprep.subr.bf16.mxu0 0
        %543 = vmatpush2.bf16.msra.mxu0 0
        %544 = vmatprep.subr.bf16.mxu0 0
        %545 = vmatpush2.bf16.msra.mxu0 0
        %546 = vmatprep.subr.bf16.mxu0 0
        %547 = vmatpush2.bf16.msra.mxu0 0
        %548 = vmatprep.mubr.bf16.mxu0 0
        %549 = vmatmul.mubr.bf16.gmra.mxu0 %v484
        %v550 = vpop.f32.mrf.mxu0
        %v551 = vadd.f32 %v500, %v550
        %v552 = vpop.f32.mrf.mxu0
        %v553 = vpop.f32.mrf.mxu0
        %v554 = vadd.f32 %v501, %v553
        %v555 = vpop.f32.mrf.mxu0
        %556 = vmatprep.mubr.bf16.mxu0 0
        %557 = vmatmul.mubr.bf16.gmra.mxu0 %v485
        %v558 = vpop.f32.mrf.mxu0
        %v559 = vadd.f32 %v502, %v558
        %v560 = vpop.f32.mrf.mxu0
        %v561 = vpop.f32.mrf.mxu0
        %v562 = vadd.f32 %v503, %v561
        %v563 = vpop.f32.mrf.mxu0
        %564 = vmatprep.mubr.bf16.mxu0 0
        %565 = vmatmul.mubr.bf16.gmra.mxu0 %v486
        %v566 = vpop.f32.mrf.mxu0
        %v567 = vadd.f32 %v504, %v566
        %v568 = vpop.f32.mrf.mxu0
        %v569 = vpop.f32.mrf.mxu0
        %v570 = vadd.f32 %v505, %v569
        %v571 = vpop.f32.mrf.mxu0
        %572 = vmatprep.mubr.bf16.mxu0 0
        %573 = vmatmul.mubr.bf16.gmra.mxu0 %v487
        %v574 = vpop.f32.mrf.mxu0
        %v575 = vadd.f32 %v506, %v574
        %v576 = vpop.f32.mrf.mxu0
        %v577 = vpop.f32.mrf.mxu0
        %v578 = vadd.f32 %v507, %v577
        %v579 = vpop.f32.mrf.mxu0
        %580 = vmatprep.mubr.bf16.mxu0 0
        %581 = vmatmul.mubr.bf16.gmra.mxu0 %v488
        %v582 = vpop.f32.mrf.mxu0
        %v583 = vadd.f32 %v508, %v582
        %v584 = vpop.f32.mrf.mxu0
        %v585 = vpop.f32.mrf.mxu0
        %v586 = vadd.f32 %v509, %v585
        %v587 = vpop.f32.mrf.mxu0
        %588 = vmatprep.mubr.bf16.mxu0 0
        %589 = vmatmul.mubr.bf16.gmra.mxu0 %v489
        %v590 = vpop.f32.mrf.mxu0
        %v591 = vadd.f32 %v510, %v590
        %v592 = vpop.f32.mrf.mxu0
        %v593 = vpop.f32.mrf.mxu0
        %v594 = vadd.f32 %v511, %v593
        %v595 = vpop.f32.mrf.mxu0
        %596 = vmatprep.mubr.bf16.mxu0 0
        %597 = vmatmul.mubr.bf16.gmra.mxu0 %v490
        %v598 = vpop.f32.mrf.mxu0
        %v599 = vadd.f32 %v512, %v598
        %v600 = vpop.f32.mrf.mxu0
        %v601 = vpop.f32.mrf.mxu0
        %v602 = vadd.f32 %v513, %v601
        %v603 = vpop.f32.mrf.mxu0
        %604 = vmatprep.mubr.bf16.mxu0 0
        %605 = vmatmul.mubr.bf16.gmra.mxu0 %v491
        %v606 = vpop.f32.mrf.mxu0
        %v607 = vadd.f32 %v514, %v606
        %v608 = vpop.f32.mrf.mxu0
        %v609 = vpop.f32.mrf.mxu0
        %v610 = vadd.f32 %v515, %v609
        %v611 = vpop.f32.mrf.mxu0
        %612 = vdwg.mxu0
        %v613 = vld [vmem:[%s3] sm:$0x1]
        %v614 = vmul.f32 %v613, %v467
        %v615 = vlaneseq
        %v616 = vshrl.u32 %v615, 7
        %v617 = vsub.s32 0, %v616
        %v618 = vrot.slane %v614, %v617
        %v619 = vmul.f32 %v371, %v618
        %v620 = vmul.f32 %v372, %v618
        %v621 = vmul.f32 %v373, %v618
        %v622 = vmul.f32 %v374, %v618
        %v623 = vmul.f32 %v375, %v618
        %v624 = vmul.f32 %v376, %v618
        %v625 = vmul.f32 %v377, %v618
        %v626 = vmul.f32 %v378, %v618
        %v627 = vmul.f32 %v379, %v618
        %v628 = vmul.f32 %v380, %v618
        %v629 = vmul.f32 %v381, %v618
        %v630 = vmul.f32 %v382, %v618
        %v631 = vmul.f32 %v383, %v618
        %v632 = vmul.f32 %v384, %v618
        %v633 = vmul.f32 %v385, %v618
        %v634 = vmul.f32 %v386, %v618
        %635 = vadd.xlane.f32.xlu0 %v619
        %v636 = vpop.xlane.xlu0 %635
        %637 = vadd.xlane.f32.xlu0 %v620
        %v638 = vpop.xlane.xlu0 %637
        %639 = vadd.xlane.f32.xlu0 %v621
        %v640 = vpop.xlane.xlu0 %639
        %641 = vadd.xlane.f32.xlu0 %v622
        %v642 = vpop.xlane.xlu0 %641
        %643 = vadd.xlane.f32.xlu0 %v623
        %v644 = vpop.xlane.xlu0 %643
        %645 = vadd.xlane.f32.xlu0 %v624
        %v646 = vpop.xlane.xlu0 %645
        %647 = vadd.xlane.f32.xlu0 %v625
        %v648 = vpop.xlane.xlu0 %647
        %649 = vadd.xlane.f32.xlu0 %v626
        %v650 = vpop.xlane.xlu0 %649
        %651 = vadd.xlane.f32.xlu0 %v627
        %v652 = vpop.xlane.xlu0 %651
        %653 = vadd.xlane.f32.xlu0 %v628
        %v654 = vpop.xlane.xlu0 %653
        %655 = vadd.xlane.f32.xlu0 %v629
        %v656 = vpop.xlane.xlu0 %655
        %657 = vadd.xlane.f32.xlu0 %v630
        %v658 = vpop.xlane.xlu0 %657
        %659 = vadd.xlane.f32.xlu0 %v631
        %v660 = vpop.xlane.xlu0 %659
        %661 = vadd.xlane.f32.xlu0 %v632
        %v662 = vpop.xlane.xlu0 %661
        %663 = vadd.xlane.f32.xlu0 %v633
        %v664 = vpop.xlane.xlu0 %663
        %665 = vadd.xlane.f32.xlu0 %v634
        %v666 = vpop.xlane.xlu0 %665
        %v667 = vadd.f32 %v636, 200.0
        %v668 = vadd.f32 %v638, 200.0
        %v669 = vadd.f32 %v640, 200.0
        %v670 = vadd.f32 %v642, 200.0
        %v671 = vadd.f32 %v644, 200.0
        %v672 = vadd.f32 %v646, 200.0
        %v673 = vadd.f32 %v648, 200.0
        %v674 = vadd.f32 %v650, 200.0
        %v675 = vadd.f32 %v652, 200.0
        %v676 = vadd.f32 %v654, 200.0
        %v677 = vadd.f32 %v656, 200.0
        %v678 = vadd.f32 %v658, 200.0
        %v679 = vadd.f32 %v660, 200.0
        %v680 = vadd.f32 %v662, 200.0
        %v681 = vadd.f32 %v664, 200.0
        %v682 = vadd.f32 %v666, 200.0
        %v683 = vrcp.pop %v667
        %v684 = vrcp.pop %v668
        %v685 = vrcp.pop %v669
        %v686 = vrcp.pop %v670
        %v687 = vrcp.pop %v671
        %v688 = vrcp.pop %v672
        %v689 = vrcp.pop %v673
        %v690 = vrcp.pop %v674
        %v691 = vrcp.pop %v675
        %v692 = vrcp.pop %v676
        %v693 = vrcp.pop %v677
        %v694 = vrcp.pop %v678
        %v695 = vrcp.pop %v679
        %v696 = vrcp.pop %v680
        %v697 = vrcp.pop %v681
        %v698 = vrcp.pop %v682
        %v699 = vmul.f32 %v551, %v683
        %v700 = vmul.f32 %v554, %v684
        %v701 = vmul.f32 %v559, %v685
        %v702 = vmul.f32 %v562, %v686
        %v703 = vmul.f32 %v567, %v687
        %v704 = vmul.f32 %v570, %v688
        %v705 = vmul.f32 %v575, %v689
        %v706 = vmul.f32 %v578, %v690
        %v707 = vmul.f32 %v583, %v691
        %v708 = vmul.f32 %v586, %v692
        %v709 = vmul.f32 %v591, %v693
        %v710 = vmul.f32 %v594, %v694
        %v711 = vmul.f32 %v599, %v695
        %v712 = vmul.f32 %v602, %v696
        %v713 = vmul.f32 %v607, %v697
        %v714 = vmul.f32 %v610, %v698
        %v715 = vadd.f32 %v699, 0.0
        %v716 = vadd.f32 %v700, 0.0
        %v717 = vadd.f32 %v701, 0.0
        %v718 = vadd.f32 %v702, 0.0
        %v719 = vadd.f32 %v703, 0.0
        %v720 = vadd.f32 %v704, 0.0
        %v721 = vadd.f32 %v705, 0.0
        %v722 = vadd.f32 %v706, 0.0
        %v723 = vadd.f32 %v707, 0.0
        %v724 = vadd.f32 %v708, 0.0
        %v725 = vadd.f32 %v709, 0.0
        %v726 = vadd.f32 %v710, 0.0
        %v727 = vadd.f32 %v711, 0.0
        %v728 = vadd.f32 %v712, 0.0
        %v729 = vadd.f32 %v713, 0.0
        %v730 = vadd.f32 %v714, 0.0
        %v731 = vmul.f32 %v715, 0.5
        %v732 = vmul.f32 %v716, 0.5
        %v733 = vmul.f32 %v717, 0.5
        %v734 = vmul.f32 %v718, 0.5
        %v735 = vmul.f32 %v719, 0.5
        %v736 = vmul.f32 %v720, 0.5
        %v737 = vmul.f32 %v721, 0.5
        %v738 = vmul.f32 %v722, 0.5
        %v739 = vmul.f32 %v723, 0.5
        %v740 = vmul.f32 %v724, 0.5
        %v741 = vmul.f32 %v725, 0.5
        %v742 = vmul.f32 %v726, 0.5
        %v743 = vmul.f32 %v727, 0.5
        %v744 = vmul.f32 %v728, 0.5
        %v745 = vmul.f32 %v729, 0.5
        %v746 = vmul.f32 %v730, 0.5
        %v747 = vld [vmem:[%s298] sm:$0xf]
        %v748 = vld [vmem:[%s298 + $0x4] sm:$0xf]
        %v749 = vld [vmem:[%s298 + $0x8] sm:$0xf]
        %v750 = vld [vmem:[%s298 + $0xc] sm:$0xf]
        %v751 = vld [vmem:[%s298 + $0x10] sm:$0xf]
        %v752 = vld [vmem:[%s298 + $0x14] sm:$0xf]
        %v753 = vld [vmem:[%s298 + $0x18] sm:$0xf]
        %v754 = vld [vmem:[%s298 + $0x1c] sm:$0xf]
        %v755 = vld [vmem:[%s298 + $0x20] sm:$0xf]
        %v756 = vld [vmem:[%s298 + $0x24] sm:$0xf]
        %v757 = vld [vmem:[%s298 + $0x28] sm:$0xf]
        %v758 = vld [vmem:[%s298 + $0x2c] sm:$0xf]
        %v759 = vld [vmem:[%s298 + $0x30] sm:$0xf]
        %v760 = vld [vmem:[%s298 + $0x34] sm:$0xf]
        %v761 = vld [vmem:[%s298 + $0x38] sm:$0xf]
        %v762 = vld [vmem:[%s298 + $0x3c] sm:$0xf]
        %v763 = vunpack.c.l.bf16 %v747
        %v764 = vunpack.c.l.bf16 %v748
        %v765 = vunpack.c.l.bf16 %v749
        %v766 = vunpack.c.l.bf16 %v750
        %v767 = vunpack.c.l.bf16 %v751
        %v768 = vunpack.c.l.bf16 %v752
        %v769 = vunpack.c.l.bf16 %v753
        %v770 = vunpack.c.l.bf16 %v754
        %v771 = vunpack.c.l.bf16 %v755
        %v772 = vunpack.c.l.bf16 %v756
        %v773 = vunpack.c.l.bf16 %v757
        %v774 = vunpack.c.l.bf16 %v758
        %v775 = vunpack.c.l.bf16 %v759
        %v776 = vunpack.c.l.bf16 %v760
        %v777 = vunpack.c.l.bf16 %v761
        %v778 = vunpack.c.l.bf16 %v762
        %v779 = vmul.f32 %v763, 0.5
        %v780 = vmul.f32 %v764, 0.5
        %v781 = vmul.f32 %v765, 0.5
        %v782 = vmul.f32 %v766, 0.5
        %v783 = vmul.f32 %v767, 0.5
        %v784 = vmul.f32 %v768, 0.5
        %v785 = vmul.f32 %v769, 0.5
        %v786 = vmul.f32 %v770, 0.5
        %v787 = vmul.f32 %v771, 0.5
        %v788 = vmul.f32 %v772, 0.5
        %v789 = vmul.f32 %v773, 0.5
        %v790 = vmul.f32 %v774, 0.5
        %v791 = vmul.f32 %v775, 0.5
        %v792 = vmul.f32 %v776, 0.5
        %v793 = vmul.f32 %v777, 0.5
        %v794 = vmul.f32 %v778, 0.5
        %v795 = vadd.f32 %v731, %v779
        %v796 = vadd.f32 %v732, %v780
        %v797 = vadd.f32 %v733, %v781
        %v798 = vadd.f32 %v734, %v782
        %v799 = vadd.f32 %v735, %v783
        %v800 = vadd.f32 %v736, %v784
        %v801 = vadd.f32 %v737, %v785
        %v802 = vadd.f32 %v738, %v786
        %v803 = vadd.f32 %v739, %v787
        %v804 = vadd.f32 %v740, %v788
        %v805 = vadd.f32 %v741, %v789
        %v806 = vadd.f32 %v742, %v790
        %v807 = vadd.f32 %v743, %v791
        %v808 = vadd.f32 %v744, %v792
        %v809 = vadd.f32 %v745, %v793
        %v810 = vadd.f32 %v746, %v794
        %811 = vadd.xlane.f32.xlu0 %v795
        %v812 = vpop.xlane.xlu0 %811
        %813 = vadd.xlane.f32.xlu0 %v796
        %v814 = vpop.xlane.xlu0 %813
        %815 = vadd.xlane.f32.xlu0 %v797
        %v816 = vpop.xlane.xlu0 %815
        %817 = vadd.xlane.f32.xlu0 %v798
        %v818 = vpop.xlane.xlu0 %817
        %819 = vadd.xlane.f32.xlu0 %v799
        %v820 = vpop.xlane.xlu0 %819
        %821 = vadd.xlane.f32.xlu0 %v800
        %v822 = vpop.xlane.xlu0 %821
        %823 = vadd.xlane.f32.xlu0 %v801
        %v824 = vpop.xlane.xlu0 %823
        %825 = vadd.xlane.f32.xlu0 %v802
        %v826 = vpop.xlane.xlu0 %825
        %827 = vadd.xlane.f32.xlu0 %v803
        %v828 = vpop.xlane.xlu0 %827
        %829 = vadd.xlane.f32.xlu0 %v804
        %v830 = vpop.xlane.xlu0 %829
        %831 = vadd.xlane.f32.xlu0 %v805
        %v832 = vpop.xlane.xlu0 %831
        %833 = vadd.xlane.f32.xlu0 %v806
        %v834 = vpop.xlane.xlu0 %833
        %835 = vadd.xlane.f32.xlu0 %v807
        %v836 = vpop.xlane.xlu0 %835
        %837 = vadd.xlane.f32.xlu0 %v808
        %v838 = vpop.xlane.xlu0 %837
        %839 = vadd.xlane.f32.xlu0 %v809
        %v840 = vpop.xlane.xlu0 %839
        %841 = vadd.xlane.f32.xlu0 %v810
        %v842 = vpop.xlane.xlu0 %841
        %v843 = vrcp.pop 128.0
        %v844 = vmul.f32 %v812, %v843
        %v845 = vmul.f32 %v814, %v843
        %v846 = vmul.f32 %v816, %v843
        %v847 = vmul.f32 %v818, %v843
        %v848 = vmul.f32 %v820, %v843
        %v849 = vmul.f32 %v822, %v843
        %v850 = vmul.f32 %v824, %v843
        %v851 = vmul.f32 %v826, %v843
        %v852 = vmul.f32 %v828, %v843
        %v853 = vmul.f32 %v830, %v843
        %v854 = vmul.f32 %v832, %v843
        %v855 = vmul.f32 %v834, %v843
        %v856 = vmul.f32 %v836, %v843
        %v857 = vmul.f32 %v838, %v843
        %v858 = vmul.f32 %v840, %v843
        %v859 = vmul.f32 %v842, %v843
        %v860 = vsub.f32 %v795, %v844
        %v861 = vsub.f32 %v796, %v845
        %v862 = vsub.f32 %v797, %v846
        %v863 = vsub.f32 %v798, %v847
        %v864 = vsub.f32 %v799, %v848
        %v865 = vsub.f32 %v800, %v849
        %v866 = vsub.f32 %v801, %v850
        %v867 = vsub.f32 %v802, %v851
        %v868 = vsub.f32 %v803, %v852
        %v869 = vsub.f32 %v804, %v853
        %v870 = vsub.f32 %v805, %v854
        %v871 = vsub.f32 %v806, %v855
        %v872 = vsub.f32 %v807, %v856
        %v873 = vsub.f32 %v808, %v857
        %v874 = vsub.f32 %v809, %v858
        %v875 = vsub.f32 %v810, %v859
        %v876 = vmul.f32 %v860, %v860
        %v877 = vmul.f32 %v861, %v861
        %v878 = vmul.f32 %v862, %v862
        %v879 = vmul.f32 %v863, %v863
        %v880 = vmul.f32 %v864, %v864
        %v881 = vmul.f32 %v865, %v865
        %v882 = vmul.f32 %v866, %v866
        %v883 = vmul.f32 %v867, %v867
        %v884 = vmul.f32 %v868, %v868
        %v885 = vmul.f32 %v869, %v869
        %v886 = vmul.f32 %v870, %v870
        %v887 = vmul.f32 %v871, %v871
        %v888 = vmul.f32 %v872, %v872
        %v889 = vmul.f32 %v873, %v873
        %v890 = vmul.f32 %v874, %v874
        %v891 = vmul.f32 %v875, %v875
        %892 = vadd.xlane.f32.xlu0 %v876
        %v893 = vpop.xlane.xlu0 %892
        %894 = vadd.xlane.f32.xlu0 %v877
        %v895 = vpop.xlane.xlu0 %894
        %896 = vadd.xlane.f32.xlu0 %v878
        %v897 = vpop.xlane.xlu0 %896
        %898 = vadd.xlane.f32.xlu0 %v879
        %v899 = vpop.xlane.xlu0 %898
        %900 = vadd.xlane.f32.xlu0 %v880
        %v901 = vpop.xlane.xlu0 %900
        %902 = vadd.xlane.f32.xlu0 %v881
        %v903 = vpop.xlane.xlu0 %902
        %904 = vadd.xlane.f32.xlu0 %v882
        %v905 = vpop.xlane.xlu0 %904
        %906 = vadd.xlane.f32.xlu0 %v883
        %v907 = vpop.xlane.xlu0 %906
        %908 = vadd.xlane.f32.xlu0 %v884
        %v909 = vpop.xlane.xlu0 %908
        %910 = vadd.xlane.f32.xlu0 %v885
        %v911 = vpop.xlane.xlu0 %910
        %912 = vadd.xlane.f32.xlu0 %v886
        %v913 = vpop.xlane.xlu0 %912
        %914 = vadd.xlane.f32.xlu0 %v887
        %v915 = vpop.xlane.xlu0 %914
        %916 = vadd.xlane.f32.xlu0 %v888
        %v917 = vpop.xlane.xlu0 %916
        %918 = vadd.xlane.f32.xlu0 %v889
        %v919 = vpop.xlane.xlu0 %918
        %920 = vadd.xlane.f32.xlu0 %v890
        %v921 = vpop.xlane.xlu0 %920
        %922 = vadd.xlane.f32.xlu0 %v891
        %v923 = vpop.xlane.xlu0 %922
        %v924 = vmul.f32 %v893, %v843
        %v925 = vmul.f32 %v895, %v843
        %v926 = vmul.f32 %v897, %v843
        %v927 = vmul.f32 %v899, %v843
        %v928 = vmul.f32 %v901, %v843
        %v929 = vmul.f32 %v903, %v843
        %v930 = vmul.f32 %v905, %v843
        %v931 = vmul.f32 %v907, %v843
        %v932 = vmul.f32 %v909, %v843
        %v933 = vmul.f32 %v911, %v843
        %v934 = vmul.f32 %v913, %v843
        %v935 = vmul.f32 %v915, %v843
        %v936 = vmul.f32 %v917, %v843
        %v937 = vmul.f32 %v919, %v843
        %v938 = vmul.f32 %v921, %v843
        %v939 = vmul.f32 %v923, %v843
        %v940 = vadd.f32 %v924, 1e-05
        %v941 = vadd.f32 %v925, 1e-05
        %v942 = vadd.f32 %v926, 1e-05
        %v943 = vadd.f32 %v927, 1e-05
        %v944 = vadd.f32 %v928, 1e-05
        %v945 = vadd.f32 %v929, 1e-05
        %v946 = vadd.f32 %v930, 1e-05
        %v947 = vadd.f32 %v931, 1e-05
        %v948 = vadd.f32 %v932, 1e-05
        %v949 = vadd.f32 %v933, 1e-05
        %v950 = vadd.f32 %v934, 1e-05
        %v951 = vadd.f32 %v935, 1e-05
        %v952 = vadd.f32 %v936, 1e-05
        %v953 = vadd.f32 %v937, 1e-05
        %v954 = vadd.f32 %v938, 1e-05
        %v955 = vadd.f32 %v939, 1e-05
        %v956 = vrsqrt.pop %v940
        %v957 = vrsqrt.pop %v941
        %v958 = vrsqrt.pop %v942
        %v959 = vrsqrt.pop %v943
        %v960 = vrsqrt.pop %v944
        %v961 = vrsqrt.pop %v945
        %v962 = vrsqrt.pop %v946
        %v963 = vrsqrt.pop %v947
        %v964 = vrsqrt.pop %v948
        %v965 = vrsqrt.pop %v949
        %v966 = vrsqrt.pop %v950
        %v967 = vrsqrt.pop %v951
        %v968 = vrsqrt.pop %v952
        %v969 = vrsqrt.pop %v953
        %v970 = vrsqrt.pop %v954
        %v971 = vrsqrt.pop %v955
        %v972 = vmul.f32 %v860, %v956
        %v973 = vmul.f32 %v861, %v957
        %v974 = vmul.f32 %v862, %v958
        %v975 = vmul.f32 %v863, %v959
        %v976 = vmul.f32 %v864, %v960
        %v977 = vmul.f32 %v865, %v961
        %v978 = vmul.f32 %v866, %v962
        %v979 = vmul.f32 %v867, %v963
        %v980 = vmul.f32 %v868, %v964
        %v981 = vmul.f32 %v869, %v965
        %v982 = vmul.f32 %v870, %v966
        %v983 = vmul.f32 %v871, %v967
        %v984 = vmul.f32 %v872, %v968
        %v985 = vmul.f32 %v873, %v969
        %v986 = vmul.f32 %v874, %v970
        %v987 = vmul.f32 %v875, %v971
        %v988 = vld [vmem:[#allocation2] sm:$0x1]
        %v990 = vlaneseq
        %v991 = vshrl.u32 %v990, 7
        %v992 = vsub.s32 0, %v991
        %v993 = vrot.slane %v988, %v992
        %v995 = vmul.f32 %v972, %v993
        %v996 = vmul.f32 %v973, %v993
        %v997 = vmul.f32 %v974, %v993
        %v998 = vmul.f32 %v975, %v993
        %v999 = vmul.f32 %v976, %v993
        %v1000 = vmul.f32 %v977, %v993
        %v1001 = vmul.f32 %v978, %v993
        %v1002 = vmul.f32 %v979, %v993
        %v1003 = vmul.f32 %v980, %v993
        %v1004 = vmul.f32 %v981, %v993
        %v1005 = vmul.f32 %v982, %v993
        %v1006 = vmul.f32 %v983, %v993
        %v1007 = vmul.f32 %v984, %v993
        %v1008 = vmul.f32 %v985, %v993
        %v1009 = vmul.f32 %v986, %v993
        %v1010 = vmul.f32 %v987, %v993
        %v1011 = vld [vmem:[#allocation4] sm:$0x1]
        %v1013 = vlaneseq
        %v1014 = vshrl.u32 %v1013, 7
        %v1015 = vsub.s32 0, %v1014
        %v1016 = vrot.slane %v1011, %v1015
        %v1018 = vadd.f32 %v995, %v1016
        %v1019 = vadd.f32 %v996, %v1016
        %v1020 = vadd.f32 %v997, %v1016
        %v1021 = vadd.f32 %v998, %v1016
        %v1022 = vadd.f32 %v999, %v1016
        %v1023 = vadd.f32 %v1000, %v1016
        %v1024 = vadd.f32 %v1001, %v1016
        %v1025 = vadd.f32 %v1002, %v1016
        %v1026 = vadd.f32 %v1003, %v1016
        %v1027 = vadd.f32 %v1004, %v1016
        %v1028 = vadd.f32 %v1005, %v1016
        %v1029 = vadd.f32 %v1006, %v1016
        %v1030 = vadd.f32 %v1007, %v1016
        %v1031 = vadd.f32 %v1008, %v1016
        %v1032 = vadd.f32 %v1009, %v1016
        %v1033 = vadd.f32 %v1010, %v1016
        %v1034 = vmax.f32 %v1018, 0.0
        %v1035 = vmax.f32 %v1019, 0.0
        %v1036 = vmax.f32 %v1020, 0.0
        %v1037 = vmax.f32 %v1021, 0.0
        %v1038 = vmax.f32 %v1022, 0.0
        %v1039 = vmax.f32 %v1023, 0.0
        %v1040 = vmax.f32 %v1024, 0.0
        %v1041 = vmax.f32 %v1025, 0.0
        %v1042 = vmax.f32 %v1026, 0.0
        %v1043 = vmax.f32 %v1027, 0.0
        %v1044 = vmax.f32 %v1028, 0.0
        %v1045 = vmax.f32 %v1029, 0.0
        %v1046 = vmax.f32 %v1030, 0.0
        %v1047 = vmax.f32 %v1031, 0.0
        %v1048 = vmax.f32 %v1032, 0.0
        %v1049 = vmax.f32 %v1033, 0.0
        %v1050 = vpack.c.bf16 %v1035, %v1034
        %v1051 = vpack.c.bf16 %v1037, %v1036
        %v1052 = vpack.c.bf16 %v1039, %v1038
        %v1053 = vpack.c.bf16 %v1041, %v1040
        %v1054 = vpack.c.bf16 %v1043, %v1042
        %v1055 = vpack.c.bf16 %v1045, %v1044
        %v1056 = vpack.c.bf16 %v1047, %v1046
        %v1057 = vpack.c.bf16 %v1049, %v1048
        %v1066 = vunpack.c.l.b16 %v1050
        %v1067 = vunpack.c.h.b16 %v1050
        %v1068 = vunpack.c.l.b16 %v1051
        %v1069 = vunpack.c.h.b16 %v1051
        %v1070 = vunpack.c.l.b16 %v1052
        %v1071 = vunpack.c.h.b16 %v1052
        %v1072 = vunpack.c.l.b16 %v1053
        %v1073 = vunpack.c.h.b16 %v1053
        %v1074 = vunpack.c.l.b16 %v1054
        %v1075 = vunpack.c.h.b16 %v1054
        %v1076 = vunpack.c.l.b16 %v1055
        %v1077 = vunpack.c.h.b16 %v1055
        %v1078 = vunpack.c.l.b16 %v1056
        %v1079 = vunpack.c.h.b16 %v1056
        %v1080 = vunpack.c.l.b16 %v1057
        %v1081 = vunpack.c.h.b16 %v1057
        %v1082 = vpack.c.b16 %v1066, %v1066
        %v1083 = vpack.c.b16 %v1067, %v1067
        %v1084 = vpack.c.b16 %v1068, %v1068
        %v1085 = vpack.c.b16 %v1069, %v1069
        %v1086 = vpack.c.b16 %v1070, %v1070
        %v1087 = vpack.c.b16 %v1071, %v1071
        %v1088 = vpack.c.b16 %v1072, %v1072
        %v1089 = vpack.c.b16 %v1073, %v1073
        %v1090 = vpack.c.b16 %v1074, %v1074
        %v1091 = vpack.c.b16 %v1075, %v1075
        %v1092 = vpack.c.b16 %v1076, %v1076
        %v1093 = vpack.c.b16 %v1077, %v1077
        %v1094 = vpack.c.b16 %v1078, %v1078
        %v1095 = vpack.c.b16 %v1079, %v1079
        %v1096 = vpack.c.b16 %v1080, %v1080
        %v1097 = vpack.c.b16 %v1081, %v1081
        %1114 = vst [vmem:[%s304] sm:$0xf] %v1082
        %1115 = vst [vmem:[%s304 + $0x4] sm:$0xf] %v1083
        %1116 = vst [vmem:[%s304 + $0x8] sm:$0xf] %v1084
        %1117 = vst [vmem:[%s304 + $0xc] sm:$0xf] %v1085
        %1118 = vst [vmem:[%s304 + $0x10] sm:$0xf] %v1086
        %1119 = vst [vmem:[%s304 + $0x14] sm:$0xf] %v1087
        %1120 = vst [vmem:[%s304 + $0x18] sm:$0xf] %v1088
        %1121 = vst [vmem:[%s304 + $0x1c] sm:$0xf] %v1089
        %1122 = vst [vmem:[%s304 + $0x20] sm:$0xf] %v1090
        %1123 = vst [vmem:[%s304 + $0x24] sm:$0xf] %v1091
        %1124 = vst [vmem:[%s304 + $0x28] sm:$0xf] %v1092
        %1125 = vst [vmem:[%s304 + $0x2c] sm:$0xf] %v1093
        %1126 = vst [vmem:[%s304 + $0x30] sm:$0xf] %v1094
        %1127 = vst [vmem:[%s304 + $0x34] sm:$0xf] %v1095
        %1128 = vst [vmem:[%s304 + $0x38] sm:$0xf] %v1096
        %1129 = vst [vmem:[%s304 + $0x3c] sm:$0xf] %v1097
        %s1130 = smul.u32 16, %s19
        %p1131 = scmp.lt.s32.totalorder %s1130, 31
        %s1132 = scalar_select %p1131, %s1130, 31
        %s1133 = smul.addr %s1132, 4
        %s1134 = scalar_lea.vmem %s6, %s1133
        // Predicated region
        $region53: #{sgformer_forward.11} parent=43 // pred_check
          %p1135 = pneg %p173
        $region54: #{sgformer_forward.11} parent=43 // pred_check_branch
          %1137 = sbr.rel (%p1135) target = $region56
        $region55: #{sgformer_forward.11} parent=43 // pred_region
          %s1138 = smul.u32 16, %s19
        $region56: #{sgformer_forward.11} parent=43 // pred_fallthru
          _
      $region44: #{sgformer_forward.11} parent=5 // pred_fallthru
        _
      %p1139 = scmp.le.s32.totalorder 2, %s14
      // Predicated region
      $region57: #{sgformer_forward.11} parent=5 // pred_check
        %p1140 = pneg %p1139
      $region58: #{sgformer_forward.11} parent=5 // pred_check_branch
        %1142 = sbr.rel (%p1140) target = $region60
      $region59: #{sgformer_forward.11} parent=5 // pred_region
        %s1143 = ssub.s32 %s14, 2
        // Predicated region
        $region61: #{sgformer_forward.11} parent=59 // pred_check
          %p1144 = pneg %p179
        $region62: #{sgformer_forward.11} parent=59 // pred_check_branch
          %1146 = sbr.rel (%p1144) target = $region64
        $region63: #{sgformer_forward.11} parent=59 // pred_region
          %s1147 = smul.u32 16, %s20
          %p1148 = scmp.lt.s32.totalorder %s1147, 31
          %s1149 = scalar_select %p1148, %s1147, 31
          %s1150 = smul.addr %s1149, 4
          %s1151 = scalar_lea.vmem %s6, %s1150
        $region64: #{sgformer_forward.11} parent=59 // pred_fallthru
          _
      $region60: #{sgformer_forward.11} parent=5 // pred_fallthru
        _
    $region6: #{sgformer_forward.11} parent=1 // loop_footer
      %s18 = sadd.s32 1, %s14
    $region7: #{sgformer_forward.11} parent=1 // loop_footer_branch
      %13 = sbr.rel target = $region3
    $region8: #{sgformer_forward.11} parent=1 // loop_exit
      _
    %1152 = vsyncpa [#allocation3], 1
    %s1153 = scalar_lea.sflag [#allocation3], 1
    %1154 = vsyncpa %s1153, 1
    %1155 = vsyncpa [#allocation5], 1

// kernel: sgformer_forward.14
$region0: #{sgformer_forward.14}
  #allocation0 [shape = 'u32[]', space=smem, size = 0x4, offset = 0x4, fixed_abs, tag = 'smem constant byte address 0x4 - core index']
  #allocation1 [shape = 'u32[144,128]{1,0:T(1,128)}', space=vmem, size = 0x12000, scoped, tag = 'internal scratch']
  #allocation2 [shape = 'f32[128,128]{1,0:T(8,128)}', space=vmem, size = 0x10000, scoped, tag = 'scratch operand']
  %s0 = inlined_call_operand.vmem [shape: bf16[2,256,256], index: 0, kind: input, shape index: {}]
  %s1 = inlined_call_operand.vmem [shape: bf16[2,256,128], index: 1, kind: input, shape index: {}]
  %s2 = inlined_call_operand.vmem [shape: bf16[256,128], index: 2, kind: input, shape index: {}]
  %s3 = inlined_call_operand.vmem [shape: f32[1,128], index: 3, kind: input, shape index: {}]
  %s4 = inlined_call_operand.vmem [shape: bf16[128,128], index: 4, kind: input, shape index: {}]
  %s5 = inlined_call_operand.vmem [shape: f32[1,128], index: 5, kind: input, shape index: {}]
  %s6 = inlined_call_operand.vmem [shape: bf16[256,128], index: 6, kind: output, shape index: {}]
  %s7 = sld [smem:[#allocation0]]
  $region65: #{sgformer_forward.14} parent=0
    _
  %s9 = ssub.s32 1, %s7
  %s10 = scalar_select 0, %s9, %s7
  loop: start=0, step=1, limit=6
  $region2: #{sgformer_forward.14} parent=0 // loop_pre_header
    _
  $region3: #{sgformer_forward.14} parent=0 // loop_header
    %s12 = sphi 0, %s16
    %p13 = scmp.ge.s32.totalorder %s12, 6
    %s19 = sphi 0, %s38
    %s20 = sphi 0, %s34
    %s21 = sphi 0, %s30
    %s22 = sphi 0, %s19
    %s23 = sphi 0, %s20
    %s24 = sphi 0, %s21
    %s25 = sphi 0, %s22
    %s26 = sphi 0, %s23
    %s27 = sphi 0, %s24
    %s45 = sphi 0, %s47
    %s48 = sphi 0, %s45
    %s49 = sphi 0, %s48
    %s65 = sphi 0, %s49
    %s73 = sphi 0, %s75
    %s76 = sphi 0, %s73
    %s77 = sphi 0, %s76
    %s93 = sphi 0, %s77
    %s99 = sphi 0, %s101
    %s102 = sphi 0, %s99
    %s103 = sphi 0, %s102
    %s119 = sphi 0, %s103
    %s123 = sphi 0, %s123
    %s125 = sphi 0, %s123
    %s126 = sphi 0, %s125
    %s140 = sphi 0, %s126
    %s144 = sphi 0, %s144
    %s146 = sphi 0, %s144
    %s147 = sphi 0, %s146
    %s161 = sphi 0, %s147
    %s165 = sphi 0, %s165
    %s167 = sphi 0, %s165
    %s168 = sphi 0, %s167
    %s182 = sphi 0, %s168
    %s188 = sphi 0, %s190
    %s191 = sphi 0, %s188
    %s192 = sphi 0, %s191
    %s208 = sphi 0, %s192
  $region4: #{sgformer_forward.14} parent=0 // loop_header_branch
    %15 = sbr.rel (%p13) target = $region8
  $region5: #{sgformer_forward.14} parent=0 // loop_body
    %s17 = ssub.s32 %s12, 1
    %s18 = ssub.s32 %s12, 2
    %s28 = sadd.s32 1, %s21
    %p29 = scmp.ge.s32.totalorder %s28, 1
    %s30 = scalar_select %p29, 0, %s28
    %s31 = sadd.s32 1, %s20
    %s32 = scalar_select %p29, %s31, %s20
    %p33 = scmp.ge.s32.totalorder %s32, 2
    %s34 = scalar_select %p33, 0, %s32
    %s35 = sadd.s32 1, %s19
    %s36 = scalar_select %p33, %s35, %s19
    %p37 = scmp.ge.s32.totalorder %s36, 2
    %s38 = scalar_select %p37, 0, %s36
    %s39 = ssub.s32 %s20, %s34
    %s40 = ssub.s32 %s19, %s38
    %s41 = sor.u32 %s39, %s40
    %s42 = ssub.s32 %s21, %s30
    %s43 = sor.u32 %s41, %s42
    %p44 = scmp.eq.s32.totalorder %s43, 0
    %s46 = sadd.s32 %s45, 1
    %s47 = scalar_select %p44, %s45, %s46
    %p50 = pneg %p44
    %p51 = scmp.eq.s32.totalorder %s12, 3
    %p52 = por %p50, %p51
    %p53 = scmp.ne.s32.totalorder %s45, %s48
    %p54 = scmp.eq.s32.totalorder %s12, 0
    %p55 = por %p53, %p54
    %p56 = scmp.ne.s32.totalorder %s45, %s48
    %p57 = scmp.eq.s32.totalorder %s17, 3
    %p58 = por %p56, %p57
    %p59 = scmp.ne.s32.totalorder %s48, %s49
    %p60 = scmp.eq.s32.totalorder %s17, 0
    %p61 = por %p59, %p60
    %p62 = scmp.ne.s32.totalorder %s48, %s49
    %p63 = scmp.eq.s32.totalorder %s18, 3
    %p64 = por %p62, %p63
    %p66 = scmp.ne.s32.totalorder %s49, %s65
    %p67 = scmp.eq.s32.totalorder %s18, 0
    %p68 = por %p66, %p67
    %s69 = ssub.s32 %s20, %s34
    %s70 = ssub.s32 %s21, %s30
    %s71 = sor.u32 %s69, %s70
    %p72 = scmp.eq.s32.totalorder %s71, 0
    %s74 = sadd.s32 %s73, 1
    %s75 = scalar_select %p72, %s73, %s74
    %p78 = pneg %p72
    %p79 = scmp.eq.s32.totalorder %s12, 3
    %p80 = por %p78, %p79
    %p81 = scmp.ne.s32.totalorder %s73, %s76
    %p82 = scmp.eq.s32.totalorder %s12, 0
    %p83 = por %p81, %p82
    %p84 = scmp.ne.s32.totalorder %s73, %s76
    %p85 = scmp.eq.s32.totalorder %s17, 3
    %p86 = por %p84, %p85
    %p87 = scmp.ne.s32.totalorder %s76, %s77
    %p88 = scmp.eq.s32.totalorder %s17, 0
    %p89 = por %p87, %p88
    %p90 = scmp.ne.s32.totalorder %s76, %s77
    %p91 = scmp.eq.s32.totalorder %s18, 3
    %p92 = por %p90, %p91
    %p94 = scmp.ne.s32.totalorder %s77, %s93
    %p95 = scmp.eq.s32.totalorder %s18, 0
    %p96 = por %p94, %p95
    %s97 = ssub.s32 %s19, %s38
    %p98 = scmp.eq.s32.totalorder %s97, 0
    %s100 = sadd.s32 %s99, 1
    %s101 = scalar_select %p98, %s99, %s100
    %p104 = pneg %p98
    %p105 = scmp.eq.s32.totalorder %s12, 3
    %p106 = por %p104, %p105
    %p107 = scmp.ne.s32.totalorder %s99, %s102
    %p108 = scmp.eq.s32.totalorder %s12, 0
    %p109 = por %p107, %p108
    %p110 = scmp.ne.s32.totalorder %s99, %s102
    %p111 = scmp.eq.s32.totalorder %s17, 3
    %p112 = por %p110, %p111
    %p113 = scmp.ne.s32.totalorder %s102, %s103
    %p114 = scmp.eq.s32.totalorder %s17, 0
    %p115 = por %p113, %p114
    %p116 = scmp.ne.s32.totalorder %s102, %s103
    %p117 = scmp.eq.s32.totalorder %s18, 3
    %p118 = por %p116, %p117
    %p120 = scmp.ne.s32.totalorder %s103, %s119
    %p121 = scmp.eq.s32.totalorder %s18, 0
    %p122 = por %p120, %p121
    %s124 = sadd.s32 %s123, 1
    %p127 = scmp.eq.s32.totalorder %s12, 3
    %p128 = scmp.ne.s32.totalorder %s123, %s125
    %p129 = scmp.eq.s32.totalorder %s12, 0
    %p130 = por %p128, %p129
    %p131 = scmp.ne.s32.totalorder %s123, %s125
    %p132 = scmp.eq.s32.totalorder %s17, 3
    %p133 = por %p131, %p132
    %p134 = scmp.ne.s32.totalorder %s125, %s126
    %p135 = scmp.eq.s32.totalorder %s17, 0
    %p136 = por %p134, %p135
    %p137 = scmp.ne.s32.totalorder %s125, %s126
    %p138 = scmp.eq.s32.totalorder %s18, 3
    %p139 = por %p137, %p138
    %p141 = scmp.ne.s32.totalorder %s126, %s140
    %p142 = scmp.eq.s32.totalorder %s18, 0
    %p143 = por %p141, %p142
    %s145 = sadd.s32 %s144, 1
    %p148 = scmp.eq.s32.totalorder %s12, 3
    %p149 = scmp.ne.s32.totalorder %s144, %s146
    %p150 = scmp.eq.s32.totalorder %s12, 0
    %p151 = por %p149, %p150
    %p152 = scmp.ne.s32.totalorder %s144, %s146
    %p153 = scmp.eq.s32.totalorder %s17, 3
    %p154 = por %p152, %p153
    %p155 = scmp.ne.s32.totalorder %s146, %s147
    %p156 = scmp.eq.s32.totalorder %s17, 0
    %p157 = por %p155, %p156
    %p158 = scmp.ne.s32.totalorder %s146, %s147
    %p159 = scmp.eq.s32.totalorder %s18, 3
    %p160 = por %p158, %p159
    %p162 = scmp.ne.s32.totalorder %s147, %s161
    %p163 = scmp.eq.s32.totalorder %s18, 0
    %p164 = por %p162, %p163
    %s166 = sadd.s32 %s165, 1
    %p169 = scmp.eq.s32.totalorder %s12, 3
    %p170 = scmp.ne.s32.totalorder %s165, %s167
    %p171 = scmp.eq.s32.totalorder %s12, 0
    %p172 = por %p170, %p171
    %p173 = scmp.ne.s32.totalorder %s165, %s167
    %p174 = scmp.eq.s32.totalorder %s17, 3
    %p175 = por %p173, %p174
    %p176 = scmp.ne.s32.totalorder %s167, %s168
    %p177 = scmp.eq.s32.totalorder %s17, 0
    %p178 = por %p176, %p177
    %p179 = scmp.ne.s32.totalorder %s167, %s168
    %p180 = scmp.eq.s32.totalorder %s18, 3
    %p181 = por %p179, %p180
    %p183 = scmp.ne.s32.totalorder %s168, %s182
    %p184 = scmp.eq.s32.totalorder %s18, 0
    %p185 = por %p183, %p184
    %s186 = ssub.s32 %s19, %s38
    %p187 = scmp.eq.s32.totalorder %s186, 0
    %s189 = sadd.s32 %s188, 1
    %s190 = scalar_select %p187, %s188, %s189
    %p193 = pneg %p187
    %p194 = scmp.eq.s32.totalorder %s12, 3
    %p195 = por %p193, %p194
    %p196 = scmp.ne.s32.totalorder %s188, %s191
    %p197 = scmp.eq.s32.totalorder %s12, 0
    %p198 = por %p196, %p197
    %p199 = scmp.ne.s32.totalorder %s188, %s191
    %p200 = scmp.eq.s32.totalorder %s17, 3
    %p201 = por %p199, %p200
    %p202 = scmp.ne.s32.totalorder %s191, %s192
    %p203 = scmp.eq.s32.totalorder %s17, 0
    %p204 = por %p202, %p203
    %p205 = scmp.ne.s32.totalorder %s191, %s192
    %p206 = scmp.eq.s32.totalorder %s18, 3
    %p207 = por %p205, %p206
    %p209 = scmp.ne.s32.totalorder %s192, %s208
    %p210 = scmp.eq.s32.totalorder %s18, 0
    %p211 = por %p209, %p210
    %p212 = scmp.le.s32.totalorder 1, %s12
    %p213 = scmp.lt.s32.totalorder %s12, 5
    %p214 = pnand %p212, %p213
    %p215 = pneg %p214
    // Predicated region
    $region9: #{sgformer_forward.14} parent=5 // pred_check
      _
    $region10: #{sgformer_forward.14} parent=5 // pred_check_branch
      %217 = sbr.rel (%p214) target = $region12
    $region11: #{sgformer_forward.14} parent=5 // pred_region
      %s218 = ssub.s32 %s12, 1
      // Predicated region
      $region13: #{sgformer_forward.14} parent=11 // pred_check
        %p219 = pneg %p136
      $region14: #{sgformer_forward.14} parent=11 // pred_check_branch
        %221 = sbr.rel (%p219) target = $region16
      $region15: #{sgformer_forward.14} parent=11 // pred_region
        _
      $region16: #{sgformer_forward.14} parent=11 // pred_fallthru
        _
      // Predicated region
      $region17: #{sgformer_forward.14} parent=11 // pred_check
        %p222 = pneg %p157
      $region18: #{sgformer_forward.14} parent=11 // pred_check_branch
        %224 = sbr.rel (%p222) target = $region20
      $region19: #{sgformer_forward.14} parent=11 // pred_region
        _
      $region20: #{sgformer_forward.14} parent=11 // pred_fallthru
        _
      // Predicated region
      $region21: #{sgformer_forward.14} parent=11 // pred_check
        %p225 = pneg %p178
      $region22: #{sgformer_forward.14} parent=11 // pred_check_branch
        %227 = sbr.rel (%p225) target = $region24
      $region23: #{sgformer_forward.14} parent=11 // pred_region
        _
      $region24: #{sgformer_forward.14} parent=11 // pred_fallthru
        _
    $region12: #{sgformer_forward.14} parent=5 // pred_fallthru
      _
    %p228 = scmp.lt.s32.totalorder %s12, 4
    // Predicated region
    $region25: #{sgformer_forward.14} parent=5 // pred_check
      %p229 = pneg %p228
    $region26: #{sgformer_forward.14} parent=5 // pred_check_branch
      %231 = sbr.rel (%p229) target = $region28
    $region27: #{sgformer_forward.14} parent=5 // pred_region
      // Predicated region
      $region29: #{sgformer_forward.14} parent=27 // pred_check
        %p232 = pneg %p55
      $region30: #{sgformer_forward.14} parent=27 // pred_check_branch
        %234 = sbr.rel (%p232) target = $region32
      $region31: #{sgformer_forward.14} parent=27 // pred_region
        %s235 = smul.u32 16, %s19
        %s236 = smul.u32 2, %s21
        %p237 = scmp.lt.s32.totalorder %s20, 1
        %s238 = scalar_select %p237, %s20, 1
        %p239 = scmp.lt.s32.totalorder %s235, 31
        %s240 = scalar_select %p239, %s235, 31
        %p241 = scmp.lt.s32.totalorder %s236, 1
        %s242 = scalar_select %p241, %s236, 1
        %s243 = smul.addr %s240, 2
        %s244 = sadd.s32 %s242, %s243
        %s245 = smul.addr %s238, 64
        %s246 = sadd.s32 %s244, %s245
        %s247 = smul.addr %s246, 4
        %s248 = scalar_lea.vmem %s0, %s247
        %s249 = smul.u32 16, %s19
        %s250 = smul.u32 2, %s21
      $region32: #{sgformer_forward.14} parent=27 // pred_fallthru
        _
      // Predicated region
      $region33: #{sgformer_forward.14} parent=27 // pred_check
        %p251 = pneg %p83
      $region34: #{sgformer_forward.14} parent=27 // pred_check_branch
        %253 = sbr.rel (%p251) target = $region36
      $region35: #{sgformer_forward.14} parent=27 // pred_region
        %s254 = smul.u32 32, %s21
        %p255 = scmp.lt.s32.totalorder %s20, 1
        %s256 = scalar_select %p255, %s20, 1
        %p257 = scmp.lt.s32.totalorder %s254, 31
        %s258 = scalar_select %p257, %s254, 31
        %s259 = smul.addr %s256, 32
        %s260 = sadd.s32 %s258, %s259
        %s261 = smul.addr %s260, 4
        %s262 = scalar_lea.vmem %s1, %s261
        %s263 = smul.u32 32, %s21
      $region36: #{sgformer_forward.14} parent=27 // pred_fallthru
        _
      // Predicated region
      $region37: #{sgformer_forward.14} parent=27 // pred_check
        %p264 = pneg %p109
      $region38: #{sgformer_forward.14} parent=27 // pred_check_branch
        %266 = sbr.rel (%p264) target = $region40
      $region39: #{sgformer_forward.14} parent=27 // pred_region
        %s267 = smul.u32 16, %s19
        %p268 = scmp.lt.s32.totalorder %s267, 31
        %s269 = scalar_select %p268, %s267, 31
        %s270 = smul.addr %s269, 4
        %s271 = scalar_lea.vmem %s2, %s270
        %s272 = smul.u32 16, %s19
      $region40: #{sgformer_forward.14} parent=27 // pred_fallthru
        _
    $region28: #{sgformer_forward.14} parent=5 // pred_fallthru
      _
    %p273 = scmp.le.s32.totalorder 1, %s12
    %p274 = scmp.lt.s32.totalorder %s12, 5
    %p275 = pnand %p273, %p274
    %p276 = pneg %p275
    // Predicated region
    $region41: #{sgformer_forward.14} parent=5 // pred_check
      _
    $region42: #{sgformer_forward.14} parent=5 // pred_check_branch
      %278 = sbr.rel (%p275) target = $region44
    $region43: #{sgformer_forward.14} parent=5 // pred_region
      %s279 = ssub.s32 %s12, 1
      %s280 = smul.u32 16, %s22
      %s281 = smul.u32 2, %s24
      %p282 = scmp.lt.s32.totalorder %s23, 1
      %s283 = scalar_select %p282, %s23, 1
      %p284 = scmp.lt.s32.totalorder %s280, 31
      %s285 = scalar_select %p284, %s280, 31
      %p286 = scmp.lt.s32.totalorder %s281, 1
      %s287 = scalar_select %p286, %s281, 1
      %s288 = smul.addr %s285, 2
      %s289 = sadd.s32 %s287, %s288
      %s290 = smul.addr %s283, 64
      %s291 = sadd.s32 %s289, %s290
      %s292 = smul.addr %s291, 4
      %s293 = scalar_lea.vmem %s0, %s292
      %p294 = pneg %p61
      %p295 = pneg %p58
      %s296 = smul.u32 32, %s24
      %p297 = scmp.lt.s32.totalorder %s23, 1
      %s298 = scalar_select %p297, %s23, 1
      %p299 = scmp.lt.s32.totalorder %s296, 31
      %s300 = scalar_select %p299, %s296, 31
      %s301 = smul.addr %s298, 32
      %s302 = sadd.s32 %s300, %s301
      %s303 = smul.addr %s302, 4
      %s304 = scalar_lea.vmem %s1, %s303
      %p305 = pneg %p89
      %p306 = pneg %p86
      %s307 = smul.u32 16, %s22
      %p308 = scmp.lt.s32.totalorder %s307, 31
      %s309 = scalar_select %p308, %s307, 31
      %s310 = smul.addr %s309, 4
      %s311 = scalar_lea.vmem %s2, %s310
      %p312 = pneg %p115
      %p313 = pneg %p112
      %p314 = pneg %p136
      %p315 = pneg %p133
      %p316 = pneg %p157
      %p317 = pneg %p154
      %p318 = pneg %p178
      %p319 = pneg %p175
      %p320 = pneg %p204
      %p321 = pneg %p201
      %s322 = smul.u32 16, %s22
      %p323 = scmp.lt.s32.totalorder %s322, 31
      %s324 = scalar_select %p323, %s322, 31
      %s325 = smul.addr %s324, 4
      %s326 = scalar_lea.vmem %s6, %s325
      %s327 = smul.u32 16, %s22
      %s328 = smul.u32 2, %s24
      %p329 = scmp.lt.s32.totalorder %s23, 1
      %s330 = scalar_select %p329, %s23, 1
      %p331 = scmp.lt.s32.totalorder %s327, 31
      %s332 = scalar_select %p331, %s327, 31
      %p333 = scmp.lt.s32.totalorder %s328, 1
      %s334 = scalar_select %p333, %s328, 1
      %s335 = smul.addr %s332, 2
      %s336 = sadd.s32 %s334, %s335
      %s337 = smul.addr %s330, 64
      %s338 = sadd.s32 %s336, %s337
      %s339 = smul.addr %s338, 4
      %s340 = scalar_lea.vmem %s0, %s339
      %s341 = smul.u32 16, %s22
      %s342 = smul.u32 2, %s24
      %s343 = smul.u32 32, %s24
      %p344 = scmp.lt.s32.totalorder %s23, 1
      %s345 = scalar_select %p344, %s23, 1
      %p346 = scmp.lt.s32.totalorder %s343, 31
      %s347 = scalar_select %p346, %s343, 31
      %s348 = smul.addr %s345, 32
      %s349 = sadd.s32 %s347, %s348
      %s350 = smul.addr %s349, 4
      %s351 = scalar_lea.vmem %s1, %s350
      %s352 = smul.u32 32, %s24
      %s353 = smul.u32 16, %s22
      %p354 = scmp.lt.s32.totalorder %s353, 31
      %s355 = scalar_select %p354, %s353, 31
      %s356 = smul.addr %s355, 4
      %s357 = scalar_lea.vmem %s2, %s356
      %s358 = smul.u32 16, %s22
      %s359 = smul.u32 16, %s22
      %p360 = scmp.lt.s32.totalorder %s359, 31
      %s361 = scalar_select %p360, %s359, 31
      %s362 = smul.addr %s361, 4
      %s363 = scalar_lea.vmem %s6, %s362
      %s364 = smul.u32 16, %s22
      %p366 = scmp.eq.s32.totalorder %s23, 0
      %p367 = scmp.eq.s32.totalorder %s24, 0
      %p368 = pnand %p366, %p367
      %p369 = pneg %p368
      // Predicated region
      $region45: #{sgformer_forward.14} parent=43 // pred_check
        _
      $region46: #{sgformer_forward.14} parent=43 // pred_check_branch
        %371 = sbr.rel (%p368) target = $region48
      $region47: #{sgformer_forward.14} parent=43 // pred_region
        %372 = vst [vmem:[#allocation2] sm:$0xff] 0.0
        %373 = vst [vmem:[#allocation2 + $0x8] sm:$0xff] 0.0
        %374 = vst [vmem:[#allocation2 + $0x10] sm:$0xff] 0.0
        %375 = vst [vmem:[#allocation2 + $0x18] sm:$0xff] 0.0
        %376 = vst [vmem:[#allocation2 + $0x20] sm:$0xff] 0.0
        %377 = vst [vmem:[#allocation2 + $0x28] sm:$0xff] 0.0
        %378 = vst [vmem:[#allocation2 + $0x30] sm:$0xff] 0.0
        %379 = vst [vmem:[#allocation2 + $0x38] sm:$0xff] 0.0
        %380 = vst [vmem:[#allocation2 + $0x40] sm:$0xff] 0.0
        %381 = vst [vmem:[#allocation2 + $0x48] sm:$0xff] 0.0
        %382 = vst [vmem:[#allocation2 + $0x50] sm:$0xff] 0.0
        %383 = vst [vmem:[#allocation2 + $0x58] sm:$0xff] 0.0
        %384 = vst [vmem:[#allocation2 + $0x60] sm:$0xff] 0.0
        %385 = vst [vmem:[#allocation2 + $0x68] sm:$0xff] 0.0
        %386 = vst [vmem:[#allocation2 + $0x70] sm:$0xff] 0.0
        %387 = vst [vmem:[#allocation2 + $0x78] sm:$0xff] 0.0
      $region48: #{sgformer_forward.14} parent=43 // pred_fallthru
        _
      %v388 = vld [vmem:[#allocation2] sm:$0xff]
      %v389 = vld [vmem:[#allocation2 + $0x8] sm:$0xff]
      %v390 = vld [vmem:[#allocation2 + $0x10] sm:$0xff]
      %v391 = vld [vmem:[#allocation2 + $0x18] sm:$0xff]
      %v392 = vld [vmem:[#allocation2 + $0x20] sm:$0xff]
      %v393 = vld [vmem:[#allocation2 + $0x28] sm:$0xff]
      %v394 = vld [vmem:[#allocation2 + $0x30] sm:$0xff]
      %v395 = vld [vmem:[#allocation2 + $0x38] sm:$0xff]
      %v396 = vld [vmem:[#allocation2 + $0x40] sm:$0xff]
      %v397 = vld [vmem:[#allocation2 + $0x48] sm:$0xff]
      %v398 = vld [vmem:[#allocation2 + $0x50] sm:$0xff]
      %v399 = vld [vmem:[#allocation2 + $0x58] sm:$0xff]
      %v400 = vld [vmem:[#allocation2 + $0x60] sm:$0xff]
      %v401 = vld [vmem:[#allocation2 + $0x68] sm:$0xff]
      %v402 = vld [vmem:[#allocation2 + $0x70] sm:$0xff]
      %v403 = vld [vmem:[#allocation2 + $0x78] sm:$0xff]
      %v404 = vld [vmem:[%s340] sm:$0xff]
      %v405 = vld [vmem:[%s340 + $0x8] sm:$0xff]
      %v406 = vld [vmem:[%s340 + $0x10] sm:$0xff]
      %v407 = vld [vmem:[%s340 + $0x18] sm:$0xff]
      %v408 = vld [vmem:[%s340 + $0x20] sm:$0xff]
      %v409 = vld [vmem:[%s340 + $0x28] sm:$0xff]
      %v410 = vld [vmem:[%s340 + $0x30] sm:$0xff]
      %v411 = vld [vmem:[%s340 + $0x38] sm:$0xff]
      %v412 = vld [vmem:[%s340 + $0x40] sm:$0xff]
      %v413 = vld [vmem:[%s340 + $0x48] sm:$0xff]
      %v414 = vld [vmem:[%s340 + $0x50] sm:$0xff]
      %v415 = vld [vmem:[%s340 + $0x58] sm:$0xff]
      %v416 = vld [vmem:[%s340 + $0x60] sm:$0xff]
      %v417 = vld [vmem:[%s340 + $0x68] sm:$0xff]
      %v418 = vld [vmem:[%s340 + $0x70] sm:$0xff]
      %v419 = vld [vmem:[%s340 + $0x78] sm:$0xff]
      %v420 = vld [vmem:[%s351] sm:$0xf]
      %v421 = vld [vmem:[%s351 + $0x4] sm:$0xf]
      %v422 = vld [vmem:[%s351 + $0x8] sm:$0xf]
      %v423 = vld [vmem:[%s351 + $0xc] sm:$0xf]
      %v424 = vld [vmem:[%s351 + $0x10] sm:$0xf]
      %v425 = vld [vmem:[%s351 + $0x14] sm:$0xf]
      %v426 = vld [vmem:[%s351 + $0x18] sm:$0xf]
      %v427 = vld [vmem:[%s351 + $0x1c] sm:$0xf]
      %v428 = vld [vmem:[%s351 + $0x20] sm:$0xf]
      %v429 = vld [vmem:[%s351 + $0x24] sm:$0xf]
      %v430 = vld [vmem:[%s351 + $0x28] sm:$0xf]
      %v431 = vld [vmem:[%s351 + $0x2c] sm:$0xf]
      %v432 = vld [vmem:[%s351 + $0x30] sm:$0xf]
      %v433 = vld [vmem:[%s351 + $0x34] sm:$0xf]
      %v434 = vld [vmem:[%s351 + $0x38] sm:$0xf]
      %v435 = vld [vmem:[%s351 + $0x3c] sm:$0xf]
      %v436 = vld [vmem:[%s351 + $0x40] sm:$0xf]
      %v437 = vld [vmem:[%s351 + $0x44] sm:$0xf]
      %v438 = vld [vmem:[%s351 + $0x48] sm:$0xf]
      %v439 = vld [vmem:[%s351 + $0x4c] sm:$0xf]
      %v440 = vld [vmem:[%s351 + $0x50] sm:$0xf]
      %v441 = vld [vmem:[%s351 + $0x54] sm:$0xf]
      %v442 = vld [vmem:[%s351 + $0x58] sm:$0xf]
      %v443 = vld [vmem:[%s351 + $0x5c] sm:$0xf]
      %v444 = vld [vmem:[%s351 + $0x60] sm:$0xf]
      %v445 = vld [vmem:[%s351 + $0x64] sm:$0xf]
      %v446 = vld [vmem:[%s351 + $0x68] sm:$0xf]
      %v447 = vld [vmem:[%s351 + $0x6c] sm:$0xf]
      %v448 = vld [vmem:[%s351 + $0x70] sm:$0xf]
      %v449 = vld [vmem:[%s351 + $0x74] sm:$0xf]
      %v450 = vld [vmem:[%s351 + $0x78] sm:$0xf]
      %v451 = vld [vmem:[%s351 + $0x7c] sm:$0xf]
      %v468 = vunpack.c.l.b16 %v404
      %v469 = vunpack.c.h.b16 %v404
      %v470 = vunpack.c.l.b16 %v405
      %v471 = vunpack.c.h.b16 %v405
      %v472 = vunpack.c.l.b16 %v406
      %v473 = vunpack.c.h.b16 %v406
      %v474 = vunpack.c.l.b16 %v407
      %v475 = vunpack.c.h.b16 %v407
      %v476 = vunpack.c.l.b16 %v408
      %v477 = vunpack.c.h.b16 %v408
      %v478 = vunpack.c.l.b16 %v409
      %v479 = vunpack.c.h.b16 %v409
      %v480 = vunpack.c.l.b16 %v410
      %v481 = vunpack.c.h.b16 %v410
      %v482 = vunpack.c.l.b16 %v411
      %v483 = vunpack.c.h.b16 %v411
      %v484 = vunpack.c.l.b16 %v412
      %v485 = vunpack.c.h.b16 %v412
      %v486 = vunpack.c.l.b16 %v413
      %v487 = vunpack.c.h.b16 %v413
      %v488 = vunpack.c.l.b16 %v414
      %v489 = vunpack.c.h.b16 %v414
      %v490 = vunpack.c.l.b16 %v415
      %v491 = vunpack.c.h.b16 %v415
      %v492 = vunpack.c.l.b16 %v416
      %v493 = vunpack.c.h.b16 %v416
      %v494 = vunpack.c.l.b16 %v417
      %v495 = vunpack.c.h.b16 %v417
      %v496 = vunpack.c.l.b16 %v418
      %v497 = vunpack.c.h.b16 %v418
      %v498 = vunpack.c.l.b16 %v419
      %v499 = vunpack.c.h.b16 %v419
      %v500 = vpack.c.b16 %v470, %v468
      %v501 = vpack.c.b16 %v471, %v469
      %v502 = vpack.c.b16 %v474, %v472
      %v503 = vpack.c.b16 %v475, %v473
      %v504 = vpack.c.b16 %v478, %v476
      %v505 = vpack.c.b16 %v479, %v477
      %v506 = vpack.c.b16 %v482, %v480
      %v507 = vpack.c.b16 %v483, %v481
      %v508 = vpack.c.b16 %v486, %v484
      %v509 = vpack.c.b16 %v487, %v485
      %v510 = vpack.c.b16 %v490, %v488
      %v511 = vpack.c.b16 %v491, %v489
      %v512 = vpack.c.b16 %v494, %v492
      %v513 = vpack.c.b16 %v495, %v493
      %v514 = vpack.c.b16 %v498, %v496
      %v515 = vpack.c.b16 %v499, %v497
      %v564 = vunpack.c.l.b16 %v420
      %v565 = vunpack.c.l.b16 %v421
      %v566 = vunpack.c.l.b16 %v422
      %v567 = vunpack.c.l.b16 %v423
      %v568 = vunpack.c.l.b16 %v424
      %v569 = vunpack.c.l.b16 %v425
      %v570 = vunpack.c.l.b16 %v426
      %v571 = vunpack.c.l.b16 %v427
      %v572 = vunpack.c.l.b16 %v428
      %v573 = vunpack.c.l.b16 %v429
      %v574 = vunpack.c.l.b16 %v430
      %v575 = vunpack.c.l.b16 %v431
      %v576 = vunpack.c.l.b16 %v432
      %v577 = vunpack.c.l.b16 %v433
      %v578 = vunpack.c.l.b16 %v434
      %v579 = vunpack.c.l.b16 %v435
      %v580 = vunpack.c.l.b16 %v436
      %v581 = vunpack.c.l.b16 %v437
      %v582 = vunpack.c.l.b16 %v438
      %v583 = vunpack.c.l.b16 %v439
      %v584 = vunpack.c.l.b16 %v440
      %v585 = vunpack.c.l.b16 %v441
      %v586 = vunpack.c.l.b16 %v442
      %v587 = vunpack.c.l.b16 %v443
      %v588 = vunpack.c.l.b16 %v444
      %v589 = vunpack.c.l.b16 %v445
      %v590 = vunpack.c.l.b16 %v446
      %v591 = vunpack.c.l.b16 %v447
      %v592 = vunpack.c.l.b16 %v448
      %v593 = vunpack.c.l.b16 %v449
      %v594 = vunpack.c.l.b16 %v450
      %v595 = vunpack.c.l.b16 %v451
      %v596 = vpack.c.b16 %v565, %v564
      %v597 = vpack.c.b16 %v567, %v566
      %v598 = vpack.c.b16 %v569, %v568
      %v599 = vpack.c.b16 %v571, %v570
      %v600 = vpack.c.b16 %v573, %v572
      %v601 = vpack.c.b16 %v575, %v574
      %v602 = vpack.c.b16 %v577, %v576
      %v603 = vpack.c.b16 %v579, %v578
      %v604 = vpack.c.b16 %v581, %v580
      %v605 = vpack.c.b16 %v583, %v582
      %v606 = vpack.c.b16 %v585, %v584
      %v607 = vpack.c.b16 %v587, %v586
      %v608 = vpack.c.b16 %v589, %v588
      %v609 = vpack.c.b16 %v591, %v590
      %v610 = vpack.c.b16 %v593, %v592
      %v611 = vpack.c.b16 %v595, %v594
      %628 = vmatprep.subr.bf16.mxu0 0
      %629 = vmatpush1.bf16.msra.mxu0 %v603
      %630 = vmatprep.subr.bf16.mxu0 0
      %631 = vmatpush1.bf16.msra.mxu0 %v602
      %632 = vmatprep.subr.bf16.mxu0 0
      %633 = vmatpush1.bf16.msra.mxu0 %v601
      %634 = vmatprep.subr.bf16.mxu0 0
      %635 = vmatpush1.bf16.msra.mxu0 %v600
      %636 = vmatprep.subr.bf16.mxu0 0
      %637 = vmatpush1.bf16.msra.mxu0 %v599
      %638 = vmatprep.subr.bf16.mxu0 0
      %639 = vmatpush1.bf16.msra.mxu0 %v598
      %640 = vmatprep.subr.bf16.mxu0 0
      %641 = vmatpush1.bf16.msra.mxu0 %v597
      %642 = vmatprep.subr.bf16.mxu0 0
      %643 = vmatpush1.bf16.msra.mxu0 %v596
      %644 = vmatprep.subr.bf16.mxu0 0
      %645 = vmatpush2.bf16.msra.mxu0 %v611
      %646 = vmatprep.subr.bf16.mxu0 0
      %647 = vmatpush2.bf16.msra.mxu0 %v610
      %648 = vmatprep.subr.bf16.mxu0 0
      %649 = vmatpush2.bf16.msra.mxu0 %v609
      %650 = vmatprep.subr.bf16.mxu0 0
      %651 = vmatpush2.bf16.msra.mxu0 %v608
      %652 = vmatprep.subr.bf16.mxu0 0
      %653 = vmatpush2.bf16.msra.mxu0 %v607
      %654 = vmatprep.subr.bf16.mxu0 0
      %655 = vmatpush2.bf16.msra.mxu0 %v606
      %656 = vmatprep.subr.bf16.mxu0 0
      %657 = vmatpush2.bf16.msra.mxu0 %v605
      %658 = vmatprep.subr.bf16.mxu0 0
      %659 = vmatpush2.bf16.msra.mxu0 %v604
      %660 = vmatprep.mubr.bf16.mxu0 %v501
      %661 = vmatmul.mubr.bf16.gmra.mxu0 %v500
      %v662 = vpop.f32.mrf.mxu0
      %v663 = vadd.f32 0.0, %v662
      %v664 = vpop.f32.mrf.mxu0
      %v665 = vpop.f32.mrf.mxu0
      %v666 = vadd.f32 0.0, %v665
      %v667 = vpop.f32.mrf.mxu0
      %668 = vmatprep.mubr.bf16.mxu0 %v503
      %669 = vmatmul.mubr.bf16.gmra.mxu0 %v502
      %v670 = vpop.f32.mrf.mxu0
      %v671 = vadd.f32 0.0, %v670
      %v672 = vpop.f32.mrf.mxu0
      %v673 = vpop.f32.mrf.mxu0
      %v674 = vadd.f32 0.0, %v673
      %v675 = vpop.f32.mrf.mxu0
      %676 = vmatprep.mubr.bf16.mxu0 %v505
      %677 = vmatmul.mubr.bf16.gmra.mxu0 %v504
      %v678 = vpop.f32.mrf.mxu0
      %v679 = vadd.f32 0.0, %v678
      %v680 = vpop.f32.mrf.mxu0
      %v681 = vpop.f32.mrf.mxu0
      %v682 = vadd.f32 0.0, %v681
      %v683 = vpop.f32.mrf.mxu0
      %684 = vmatprep.mubr.bf16.mxu0 %v507
      %685 = vmatmul.mubr.bf16.gmra.mxu0 %v506
      %v686 = vpop.f32.mrf.mxu0
      %v687 = vadd.f32 0.0, %v686
      %v688 = vpop.f32.mrf.mxu0
      %v689 = vpop.f32.mrf.mxu0
      %v690 = vadd.f32 0.0, %v689
      %v691 = vpop.f32.mrf.mxu0
      %692 = vmatprep.mubr.bf16.mxu0 %v509
      %693 = vmatmul.mubr.bf16.gmra.mxu0 %v508
      %v694 = vpop.f32.mrf.mxu0
      %v695 = vadd.f32 0.0, %v694
      %v696 = vpop.f32.mrf.mxu0
      %v697 = vpop.f32.mrf.mxu0
      %v698 = vadd.f32 0.0, %v697
      %v699 = vpop.f32.mrf.mxu0
      %700 = vmatprep.mubr.bf16.mxu0 %v511
      %701 = vmatmul.mubr.bf16.gmra.mxu0 %v510
      %v702 = vpop.f32.mrf.mxu0
      %v703 = vadd.f32 0.0, %v702
      %v704 = vpop.f32.mrf.mxu0
      %v705 = vpop.f32.mrf.mxu0
      %v706 = vadd.f32 0.0, %v705
      %v707 = vpop.f32.mrf.mxu0
      %708 = vmatprep.mubr.bf16.mxu0 %v513
      %709 = vmatmul.mubr.bf16.gmra.mxu0 %v512
      %v710 = vpop.f32.mrf.mxu0
      %v711 = vadd.f32 0.0, %v710
      %v712 = vpop.f32.mrf.mxu0
      %v713 = vpop.f32.mrf.mxu0
      %v714 = vadd.f32 0.0, %v713
      %v715 = vpop.f32.mrf.mxu0
      %716 = vmatprep.mubr.bf16.mxu0 %v515
      %717 = vmatmul.mubr.bf16.gmra.mxu0 %v514
      %v718 = vpop.f32.mrf.mxu0
      %v719 = vadd.f32 0.0, %v718
      %v720 = vpop.f32.mrf.mxu0
      %v721 = vpop.f32.mrf.mxu0
      %v722 = vadd.f32 0.0, %v721
      %v723 = vpop.f32.mrf.mxu0
      %724 = vdwg.mxu0
      %v725 = vadd.f32 %v388, %v663
      %v726 = vadd.f32 %v389, %v666
      %v727 = vadd.f32 %v390, %v671
      %v728 = vadd.f32 %v391, %v674
      %v729 = vadd.f32 %v392, %v679
      %v730 = vadd.f32 %v393, %v682
      %v731 = vadd.f32 %v394, %v687
      %v732 = vadd.f32 %v395, %v690
      %v733 = vadd.f32 %v396, %v695
      %v734 = vadd.f32 %v397, %v698
      %v735 = vadd.f32 %v398, %v703
      %v736 = vadd.f32 %v399, %v706
      %v737 = vadd.f32 %v400, %v711
      %v738 = vadd.f32 %v401, %v714
      %v739 = vadd.f32 %v402, %v719
      %v740 = vadd.f32 %v403, %v722
      %741 = vst [vmem:[#allocation2] sm:$0xff] %v725
      %742 = vst [vmem:[#allocation2 + $0x8] sm:$0xff] %v726
      %743 = vst [vmem:[#allocation2 + $0x10] sm:$0xff] %v727
      %744 = vst [vmem:[#allocation2 + $0x18] sm:$0xff] %v728
      %745 = vst [vmem:[#allocation2 + $0x20] sm:$0xff] %v729
      %746 = vst [vmem:[#allocation2 + $0x28] sm:$0xff] %v730
      %747 = vst [vmem:[#allocation2 + $0x30] sm:$0xff] %v731
      %748 = vst [vmem:[#allocation2 + $0x38] sm:$0xff] %v732
      %749 = vst [vmem:[#allocation2 + $0x40] sm:$0xff] %v733
      %750 = vst [vmem:[#allocation2 + $0x48] sm:$0xff] %v734
      %751 = vst [vmem:[#allocation2 + $0x50] sm:$0xff] %v735
      %752 = vst [vmem:[#allocation2 + $0x58] sm:$0xff] %v736
      %753 = vst [vmem:[#allocation2 + $0x60] sm:$0xff] %v737
      %754 = vst [vmem:[#allocation2 + $0x68] sm:$0xff] %v738
      %755 = vst [vmem:[#allocation2 + $0x70] sm:$0xff] %v739
      %756 = vst [vmem:[#allocation2 + $0x78] sm:$0xff] %v740
      %p757 = scmp.eq.s32.totalorder %s23, 1
      %p758 = pnand %p757, %p367
      %p759 = pneg %p758
      // Predicated region
      $region49: #{sgformer_forward.14} parent=43 // pred_check
        _
      $region50: #{sgformer_forward.14} parent=43 // pred_check_branch
        %761 = sbr.rel (%p758) target = $region52
      $region51: #{sgformer_forward.14} parent=43 // pred_region
        %v762 = vld [vmem:[#allocation2] sm:$0xff]
        %v763 = vld [vmem:[#allocation2 + $0x8] sm:$0xff]
        %v764 = vld [vmem:[#allocation2 + $0x10] sm:$0xff]
        %v765 = vld [vmem:[#allocation2 + $0x18] sm:$0xff]
        %v766 = vld [vmem:[#allocation2 + $0x20] sm:$0xff]
        %v767 = vld [vmem:[#allocation2 + $0x28] sm:$0xff]
        %v768 = vld [vmem:[#allocation2 + $0x30] sm:$0xff]
        %v769 = vld [vmem:[#allocation2 + $0x38] sm:$0xff]
        %v770 = vld [vmem:[#allocation2 + $0x40] sm:$0xff]
        %v771 = vld [vmem:[#allocation2 + $0x48] sm:$0xff]
        %v772 = vld [vmem:[#allocation2 + $0x50] sm:$0xff]
        %v773 = vld [vmem:[#allocation2 + $0x58] sm:$0xff]
        %v774 = vld [vmem:[#allocation2 + $0x60] sm:$0xff]
        %v775 = vld [vmem:[#allocation2 + $0x68] sm:$0xff]
        %v776 = vld [vmem:[#allocation2 + $0x70] sm:$0xff]
        %v777 = vld [vmem:[#allocation2 + $0x78] sm:$0xff]
        %v778 = vld [vmem:[%s3] sm:$0x1]
        %v780 = vlaneseq
        %v781 = vshrl.u32 %v780, 7
        %v782 = vsub.s32 0, %v781
        %v783 = vrot.slane %v778, %v782
        %v785 = vadd.f32 %v762, %v783
        %v786 = vadd.f32 %v763, %v783
        %v787 = vadd.f32 %v764, %v783
        %v788 = vadd.f32 %v765, %v783
        %v789 = vadd.f32 %v766, %v783
        %v790 = vadd.f32 %v767, %v783
        %v791 = vadd.f32 %v768, %v783
        %v792 = vadd.f32 %v769, %v783
        %v793 = vadd.f32 %v770, %v783
        %v794 = vadd.f32 %v771, %v783
        %v795 = vadd.f32 %v772, %v783
        %v796 = vadd.f32 %v773, %v783
        %v797 = vadd.f32 %v774, %v783
        %v798 = vadd.f32 %v775, %v783
        %v799 = vadd.f32 %v776, %v783
        %v800 = vadd.f32 %v777, %v783
        %v801 = vld [vmem:[%s357] sm:$0xf]
        %v802 = vld [vmem:[%s357 + $0x4] sm:$0xf]
        %v803 = vld [vmem:[%s357 + $0x8] sm:$0xf]
        %v804 = vld [vmem:[%s357 + $0xc] sm:$0xf]
        %v805 = vld [vmem:[%s357 + $0x10] sm:$0xf]
        %v806 = vld [vmem:[%s357 + $0x14] sm:$0xf]
        %v807 = vld [vmem:[%s357 + $0x18] sm:$0xf]
        %v808 = vld [vmem:[%s357 + $0x1c] sm:$0xf]
        %v809 = vld [vmem:[%s357 + $0x20] sm:$0xf]
        %v810 = vld [vmem:[%s357 + $0x24] sm:$0xf]
        %v811 = vld [vmem:[%s357 + $0x28] sm:$0xf]
        %v812 = vld [vmem:[%s357 + $0x2c] sm:$0xf]
        %v813 = vld [vmem:[%s357 + $0x30] sm:$0xf]
        %v814 = vld [vmem:[%s357 + $0x34] sm:$0xf]
        %v815 = vld [vmem:[%s357 + $0x38] sm:$0xf]
        %v816 = vld [vmem:[%s357 + $0x3c] sm:$0xf]
        %v817 = vunpack.c.l.bf16 %v801
        %v818 = vunpack.c.l.bf16 %v802
        %v819 = vunpack.c.l.bf16 %v803
        %v820 = vunpack.c.l.bf16 %v804
        %v821 = vunpack.c.l.bf16 %v805
        %v822 = vunpack.c.l.bf16 %v806
        %v823 = vunpack.c.l.bf16 %v807
        %v824 = vunpack.c.l.bf16 %v808
        %v825 = vunpack.c.l.bf16 %v809
        %v826 = vunpack.c.l.bf16 %v810
        %v827 = vunpack.c.l.bf16 %v811
        %v828 = vunpack.c.l.bf16 %v812
        %v829 = vunpack.c.l.bf16 %v813
        %v830 = vunpack.c.l.bf16 %v814
        %v831 = vunpack.c.l.bf16 %v815
        %v832 = vunpack.c.l.bf16 %v816
        %v833 = vadd.f32 %v785, %v817
        %v834 = vadd.f32 %v786, %v818
        %v835 = vadd.f32 %v787, %v819
        %v836 = vadd.f32 %v788, %v820
        %v837 = vadd.f32 %v789, %v821
        %v838 = vadd.f32 %v790, %v822
        %v839 = vadd.f32 %v791, %v823
        %v840 = vadd.f32 %v792, %v824
        %v841 = vadd.f32 %v793, %v825
        %v842 = vadd.f32 %v794, %v826
        %v843 = vadd.f32 %v795, %v827
        %v844 = vadd.f32 %v796, %v828
        %v845 = vadd.f32 %v797, %v829
        %v846 = vadd.f32 %v798, %v830
        %v847 = vadd.f32 %v799, %v831
        %v848 = vadd.f32 %v800, %v832
        %v849 = vpack.c.bf16 %v834, %v833
        %v850 = vpack.c.bf16 %v836, %v835
        %v851 = vpack.c.bf16 %v838, %v837
        %v852 = vpack.c.bf16 %v840, %v839
        %v853 = vpack.c.bf16 %v842, %v841
        %v854 = vpack.c.bf16 %v844, %v843
        %v855 = vpack.c.bf16 %v846, %v845
        %v856 = vpack.c.bf16 %v848, %v847
        %v857 = vld [vmem:[%s4] sm:$0xf]
        %v858 = vld [vmem:[%s4 + $0x4] sm:$0xf]
        %v859 = vld [vmem:[%s4 + $0x8] sm:$0xf]
        %v860 = vld [vmem:[%s4 + $0xc] sm:$0xf]
        %v861 = vld [vmem:[%s4 + $0x10] sm:$0xf]
        %v862 = vld [vmem:[%s4 + $0x14] sm:$0xf]
        %v863 = vld [vmem:[%s4 + $0x18] sm:$0xf]
        %v864 = vld [vmem:[%s4 + $0x1c] sm:$0xf]
        %v865 = vld [vmem:[%s4 + $0x20] sm:$0xf]
        %v866 = vld [vmem:[%s4 + $0x24] sm:$0xf]
        %v867 = vld [vmem:[%s4 + $0x28] sm:$0xf]
        %v868 = vld [vmem:[%s4 + $0x2c] sm:$0xf]
        %v869 = vld [vmem:[%s4 + $0x30] sm:$0xf]
        %v870 = vld [vmem:[%s4 + $0x34] sm:$0xf]
        %v871 = vld [vmem:[%s4 + $0x38] sm:$0xf]
        %v872 = vld [vmem:[%s4 + $0x3c] sm:$0xf]
        %v873 = vld [vmem:[%s5] sm:$0x1]
        %v875 = vlaneseq
        %v876 = vshrl.u32 %v875, 7
        %v877 = vsub.s32 0, %v876
        %v878 = vrot.slane %v873, %v877
        %v896 = vunpack.c.l.b16 %v857
        %v897 = vunpack.c.l.b16 %v858
        %v898 = vunpack.c.l.b16 %v859
        %v899 = vunpack.c.l.b16 %v860
        %v900 = vunpack.c.l.b16 %v861
        %v901 = vunpack.c.l.b16 %v862
        %v902 = vunpack.c.l.b16 %v863
        %v903 = vunpack.c.l.b16 %v864
        %v904 = vunpack.c.l.b16 %v865
        %v905 = vunpack.c.l.b16 %v866
        %v906 = vunpack.c.l.b16 %v867
        %v907 = vunpack.c.l.b16 %v868
        %v908 = vunpack.c.l.b16 %v869
        %v909 = vunpack.c.l.b16 %v870
        %v910 = vunpack.c.l.b16 %v871
        %v911 = vunpack.c.l.b16 %v872
        %v912 = vpack.c.b16 %v897, %v896
        %v913 = vpack.c.b16 %v899, %v898
        %v914 = vpack.c.b16 %v901, %v900
        %v915 = vpack.c.b16 %v903, %v902
        %v916 = vpack.c.b16 %v905, %v904
        %v917 = vpack.c.b16 %v907, %v906
        %v918 = vpack.c.b16 %v909, %v908
        %v919 = vpack.c.b16 %v911, %v910
        %928 = vmatprep.subr.bf16.mxu0 0
        %929 = vmatpush1.bf16.msra.mxu0 %v919
        %930 = vmatprep.subr.bf16.mxu0 0
        %931 = vmatpush1.bf16.msra.mxu0 %v918
        %932 = vmatprep.subr.bf16.mxu0 0
        %933 = vmatpush1.bf16.msra.mxu0 %v917
        %934 = vmatprep.subr.bf16.mxu0 0
        %935 = vmatpush1.bf16.msra.mxu0 %v916
        %936 = vmatprep.subr.bf16.mxu0 0
        %937 = vmatpush1.bf16.msra.mxu0 %v915
        %938 = vmatprep.subr.bf16.mxu0 0
        %939 = vmatpush1.bf16.msra.mxu0 %v914
        %940 = vmatprep.subr.bf16.mxu0 0
        %941 = vmatpush1.bf16.msra.mxu0 %v913
        %942 = vmatprep.subr.bf16.mxu0 0
        %943 = vmatpush1.bf16.msra.mxu0 %v912
        %944 = vmatprep.subr.bf16.mxu0 0
        %945 = vmatpush2.bf16.msra.mxu0 0
        %946 = vmatprep.subr.bf16.mxu0 0
        %947 = vmatpush2.bf16.msra.mxu0 0
        %948 = vmatprep.subr.bf16.mxu0 0
        %949 = vmatpush2.bf16.msra.mxu0 0
        %950 = vmatprep.subr.bf16.mxu0 0
        %951 = vmatpush2.bf16.msra.mxu0 0
        %952 = vmatprep.subr.bf16.mxu0 0
        %953 = vmatpush2.bf16.msra.mxu0 0
        %954 = vmatprep.subr.bf16.mxu0 0
        %955 = vmatpush2.bf16.msra.mxu0 0
        %956 = vmatprep.subr.bf16.mxu0 0
        %957 = vmatpush2.bf16.msra.mxu0 0
        %958 = vmatprep.subr.bf16.mxu0 0
        %959 = vmatpush2.bf16.msra.mxu0 0
        %960 = vmatprep.mubr.bf16.mxu0 0
        %961 = vmatmul.mubr.bf16.gmra.mxu0 %v849
        %v962 = vpop.f32.mrf.mxu0
        %v963 = vadd.f32 %v878, %v962
        %v964 = vpop.f32.mrf.mxu0
        %v965 = vpop.f32.mrf.mxu0
        %v966 = vadd.f32 %v878, %v965
        %v967 = vpop.f32.mrf.mxu0
        %968 = vmatprep.mubr.bf16.mxu0 0
        %969 = vmatmul.mubr.bf16.gmra.mxu0 %v850
        %v970 = vpop.f32.mrf.mxu0
        %v971 = vadd.f32 %v878, %v970
        %v972 = vpop.f32.mrf.mxu0
        %v973 = vpop.f32.mrf.mxu0
        %v974 = vadd.f32 %v878, %v973
        %v975 = vpop.f32.mrf.mxu0
        %976 = vmatprep.mubr.bf16.mxu0 0
        %977 = vmatmul.mubr.bf16.gmra.mxu0 %v851
        %v978 = vpop.f32.mrf.mxu0
        %v979 = vadd.f32 %v878, %v978
        %v980 = vpop.f32.mrf.mxu0
        %v981 = vpop.f32.mrf.mxu0
        %v982 = vadd.f32 %v878, %v981
        %v983 = vpop.f32.mrf.mxu0
        %984 = vmatprep.mubr.bf16.mxu0 0
        %985 = vmatmul.mubr.bf16.gmra.mxu0 %v852
        %v986 = vpop.f32.mrf.mxu0
        %v987 = vadd.f32 %v878, %v986
        %v988 = vpop.f32.mrf.mxu0
        %v989 = vpop.f32.mrf.mxu0
        %v990 = vadd.f32 %v878, %v989
        %v991 = vpop.f32.mrf.mxu0
        %992 = vmatprep.mubr.bf16.mxu0 0
        %993 = vmatmul.mubr.bf16.gmra.mxu0 %v853
        %v994 = vpop.f32.mrf.mxu0
        %v995 = vadd.f32 %v878, %v994
        %v996 = vpop.f32.mrf.mxu0
        %v997 = vpop.f32.mrf.mxu0
        %v998 = vadd.f32 %v878, %v997
        %v999 = vpop.f32.mrf.mxu0
        %1000 = vmatprep.mubr.bf16.mxu0 0
        %1001 = vmatmul.mubr.bf16.gmra.mxu0 %v854
        %v1002 = vpop.f32.mrf.mxu0
        %v1003 = vadd.f32 %v878, %v1002
        %v1004 = vpop.f32.mrf.mxu0
        %v1005 = vpop.f32.mrf.mxu0
        %v1006 = vadd.f32 %v878, %v1005
        %v1007 = vpop.f32.mrf.mxu0
        %1008 = vmatprep.mubr.bf16.mxu0 0
        %1009 = vmatmul.mubr.bf16.gmra.mxu0 %v855
        %v1010 = vpop.f32.mrf.mxu0
        %v1011 = vadd.f32 %v878, %v1010
        %v1012 = vpop.f32.mrf.mxu0
        %v1013 = vpop.f32.mrf.mxu0
        %v1014 = vadd.f32 %v878, %v1013
        %v1015 = vpop.f32.mrf.mxu0
        %1016 = vmatprep.mubr.bf16.mxu0 0
        %1017 = vmatmul.mubr.bf16.gmra.mxu0 %v856
        %v1018 = vpop.f32.mrf.mxu0
        %v1019 = vadd.f32 %v878, %v1018
        %v1020 = vpop.f32.mrf.mxu0
        %v1021 = vpop.f32.mrf.mxu0
        %v1022 = vadd.f32 %v878, %v1021
        %v1023 = vpop.f32.mrf.mxu0
        %1024 = vdwg.mxu0
        %v1025 = vmax.f32 %v963, 0.0
        %v1026 = vmax.f32 %v966, 0.0
        %v1027 = vmax.f32 %v971, 0.0
        %v1028 = vmax.f32 %v974, 0.0
        %v1029 = vmax.f32 %v979, 0.0
        %v1030 = vmax.f32 %v982, 0.0
        %v1031 = vmax.f32 %v987, 0.0
        %v1032 = vmax.f32 %v990, 0.0
        %v1033 = vmax.f32 %v995, 0.0
        %v1034 = vmax.f32 %v998, 0.0
        %v1035 = vmax.f32 %v1003, 0.0
        %v1036 = vmax.f32 %v1006, 0.0
        %v1037 = vmax.f32 %v1011, 0.0
        %v1038 = vmax.f32 %v1014, 0.0
        %v1039 = vmax.f32 %v1019, 0.0
        %v1040 = vmax.f32 %v1022, 0.0
        %v1041 = vpack.c.bf16 %v1026, %v1025
        %v1042 = vpack.c.bf16 %v1028, %v1027
        %v1043 = vpack.c.bf16 %v1030, %v1029
        %v1044 = vpack.c.bf16 %v1032, %v1031
        %v1045 = vpack.c.bf16 %v1034, %v1033
        %v1046 = vpack.c.bf16 %v1036, %v1035
        %v1047 = vpack.c.bf16 %v1038, %v1037
        %v1048 = vpack.c.bf16 %v1040, %v1039
        %v1057 = vunpack.c.l.b16 %v1041
        %v1058 = vunpack.c.h.b16 %v1041
        %v1059 = vunpack.c.l.b16 %v1042
        %v1060 = vunpack.c.h.b16 %v1042
        %v1061 = vunpack.c.l.b16 %v1043
        %v1062 = vunpack.c.h.b16 %v1043
        %v1063 = vunpack.c.l.b16 %v1044
        %v1064 = vunpack.c.h.b16 %v1044
        %v1065 = vunpack.c.l.b16 %v1045
        %v1066 = vunpack.c.h.b16 %v1045
        %v1067 = vunpack.c.l.b16 %v1046
        %v1068 = vunpack.c.h.b16 %v1046
        %v1069 = vunpack.c.l.b16 %v1047
        %v1070 = vunpack.c.h.b16 %v1047
        %v1071 = vunpack.c.l.b16 %v1048
        %v1072 = vunpack.c.h.b16 %v1048
        %v1073 = vpack.c.b16 %v1057, %v1057
        %v1074 = vpack.c.b16 %v1058, %v1058
        %v1075 = vpack.c.b16 %v1059, %v1059
        %v1076 = vpack.c.b16 %v1060, %v1060
        %v1077 = vpack.c.b16 %v1061, %v1061
        %v1078 = vpack.c.b16 %v1062, %v1062
        %v1079 = vpack.c.b16 %v1063, %v1063
        %v1080 = vpack.c.b16 %v1064, %v1064
        %v1081 = vpack.c.b16 %v1065, %v1065
        %v1082 = vpack.c.b16 %v1066, %v1066
        %v1083 = vpack.c.b16 %v1067, %v1067
        %v1084 = vpack.c.b16 %v1068, %v1068
        %v1085 = vpack.c.b16 %v1069, %v1069
        %v1086 = vpack.c.b16 %v1070, %v1070
        %v1087 = vpack.c.b16 %v1071, %v1071
        %v1088 = vpack.c.b16 %v1072, %v1072
        %1105 = vst [vmem:[%s363] sm:$0xf] %v1073
        %1106 = vst [vmem:[%s363 + $0x4] sm:$0xf] %v1074
        %1107 = vst [vmem:[%s363 + $0x8] sm:$0xf] %v1075
        %1108 = vst [vmem:[%s363 + $0xc] sm:$0xf] %v1076
        %1109 = vst [vmem:[%s363 + $0x10] sm:$0xf] %v1077
        %1110 = vst [vmem:[%s363 + $0x14] sm:$0xf] %v1078
        %1111 = vst [vmem:[%s363 + $0x18] sm:$0xf] %v1079
        %1112 = vst [vmem:[%s363 + $0x1c] sm:$0xf] %v1080
        %1113 = vst [vmem:[%s363 + $0x20] sm:$0xf] %v1081
        %1114 = vst [vmem:[%s363 + $0x24] sm:$0xf] %v1082
        %1115 = vst [vmem:[%s363 + $0x28] sm:$0xf] %v1083
        %1116 = vst [vmem:[%s363 + $0x2c] sm:$0xf] %v1084
        %1117 = vst [vmem:[%s363 + $0x30] sm:$0xf] %v1085
        %1118 = vst [vmem:[%s363 + $0x34] sm:$0xf] %v1086
        %1119 = vst [vmem:[%s363 + $0x38] sm:$0xf] %v1087
        %1120 = vst [vmem:[%s363 + $0x3c] sm:$0xf] %v1088
      $region52: #{sgformer_forward.14} parent=43 // pred_fallthru
        _
      %s1121 = smul.u32 16, %s22
      %p1122 = scmp.lt.s32.totalorder %s1121, 31
      %s1123 = scalar_select %p1122, %s1121, 31
      %s1124 = smul.addr %s1123, 4
      %s1125 = scalar_lea.vmem %s6, %s1124
      // Predicated region
      $region53: #{sgformer_forward.14} parent=43 // pred_check
        %p1126 = pneg %p201
      $region54: #{sgformer_forward.14} parent=43 // pred_check_branch
        %1128 = sbr.rel (%p1126) target = $region56
      $region55: #{sgformer_forward.14} parent=43 // pred_region
        %s1129 = smul.u32 16, %s22
      $region56: #{sgformer_forward.14} parent=43 // pred_fallthru
        _
    $region44: #{sgformer_forward.14} parent=5 // pred_fallthru
      _
    %p1130 = scmp.le.s32.totalorder 2, %s12
    // Predicated region
    $region57: #{sgformer_forward.14} parent=5 // pred_check
      %p1131 = pneg %p1130
    $region58: #{sgformer_forward.14} parent=5 // pred_check_branch
      %1133 = sbr.rel (%p1131) target = $region60
    $region59: #{sgformer_forward.14} parent=5 // pred_region
      %s1134 = ssub.s32 %s12, 2
      // Predicated region
      $region61: #{sgformer_forward.14} parent=59 // pred_check
        %p1135 = pneg %p207
      $region62: #{sgformer_forward.14} parent=59 // pred_check_branch
        %1137 = sbr.rel (%p1135) target = $region64
      $region63: #{sgformer_forward.14} parent=59 // pred_region
        %s1138 = smul.u32 16, %s25
        %p1139 = scmp.lt.s32.totalorder %s1138, 31
        %s1140 = scalar_select %p1139, %s1138, 31
        %s1141 = smul.addr %s1140, 4
        %s1142 = scalar_lea.vmem %s6, %s1141
      $region64: #{sgformer_forward.14} parent=59 // pred_fallthru
        _
    $region60: #{sgformer_forward.14} parent=5 // pred_fallthru
      _
  $region6: #{sgformer_forward.14} parent=0 // loop_footer
    %s16 = sadd.s32 1, %s12
  $region7: #{sgformer_forward.14} parent=0 // loop_footer_branch
    %11 = sbr.rel target = $region3
  $region8: #{sgformer_forward.14} parent=0 // loop_exit
    _

// kernel: sgformer_forward.15
$region0: #{sgformer_forward.15}
  #allocation0 [shape = 'u32[]', space=smem, size = 0x4, offset = 0x4, fixed_abs, tag = 'smem constant byte address 0x4 - core index']
  #allocation1 [shape = 'u32[144,128]{1,0:T(1,128)}', space=vmem, size = 0x12000, scoped, tag = 'internal scratch']
  %s0 = inlined_call_operand.vmem [shape: bf16[256,128], index: 0, kind: input, shape index: {}]
  %s1 = inlined_call_operand.vmem [shape: bf16[256,128], index: 1, kind: input, shape index: {}]
  %s2 = inlined_call_operand.vmem [shape: bf16[256,128], index: 2, kind: input, shape index: {}]
  %s3 = inlined_call_operand.vmem [shape: f32[1,128], index: 3, kind: input, shape index: {}]
  %s4 = inlined_call_operand.vmem [shape: bf16[128,128], index: 4, kind: input, shape index: {}]
  %s5 = inlined_call_operand.vmem [shape: f32[1,128], index: 5, kind: input, shape index: {}]
  %s6 = inlined_call_operand.vmem [shape: bf16[128,128], index: 6, kind: input, shape index: {}]
  %s7 = inlined_call_operand.vmem [shape: f32[1,128], index: 7, kind: input, shape index: {}]
  %s8 = inlined_call_operand.vmem [shape: f32[256,128], index: 8, kind: output, shape index: {}]
  %s9 = sld [smem:[#allocation0]]
  $region65: #{sgformer_forward.15} parent=0
    _
  %s11 = ssub.s32 1, %s9
  %s12 = scalar_select 0, %s11, %s9
  loop: start=0, step=1, limit=4
  $region2: #{sgformer_forward.15} parent=0 // loop_pre_header
    _
  $region3: #{sgformer_forward.15} parent=0 // loop_header
    %s14 = sphi 0, %s18
    %p15 = scmp.ge.s32.totalorder %s14, 4
    %s24 = sphi 0, %s26
    %s27 = sphi 0, %s24
    %s28 = sphi 0, %s27
    %s44 = sphi 0, %s28
    %s50 = sphi 0, %s52
    %s53 = sphi 0, %s50
    %s54 = sphi 0, %s53
    %s70 = sphi 0, %s54
    %s74 = sphi 0, %s74
    %s76 = sphi 0, %s74
    %s77 = sphi 0, %s76
    %s91 = sphi 0, %s77
    %s95 = sphi 0, %s95
    %s97 = sphi 0, %s95
    %s98 = sphi 0, %s97
    %s112 = sphi 0, %s98
    %s116 = sphi 0, %s116
    %s118 = sphi 0, %s116
    %s119 = sphi 0, %s118
    %s133 = sphi 0, %s119
    %s137 = sphi 0, %s137
    %s139 = sphi 0, %s137
    %s140 = sphi 0, %s139
    %s154 = sphi 0, %s140
    %s158 = sphi 0, %s158
    %s160 = sphi 0, %s158
    %s161 = sphi 0, %s160
    %s175 = sphi 0, %s161
    %s179 = sphi 0, %s179
    %s181 = sphi 0, %s179
    %s182 = sphi 0, %s181
    %s196 = sphi 0, %s182
    %s202 = sphi 0, %s204
    %s205 = sphi 0, %s202
    %s206 = sphi 0, %s205
    %s222 = sphi 0, %s206
  $region4: #{sgformer_forward.15} parent=0 // loop_header_branch
    %17 = sbr.rel (%p15) target = $region8
  $region5: #{sgformer_forward.15} parent=0 // loop_body
    %s19 = ssub.s32 %s14, 1
    %s20 = ssub.s32 %s14, 2
    %s21 = sadd.s32 %s14, 1
    %s22 = ssub.s32 %s14, %s21
    %p23 = scmp.eq.s32.totalorder %s22, 0
    %s25 = sadd.s32 %s24, 1
    %s26 = scalar_select %p23, %s24, %s25
    %p29 = pneg %p23
    %p30 = scmp.eq.s32.totalorder %s14, 1
    %p31 = por %p29, %p30
    %p32 = scmp.ne.s32.totalorder %s24, %s27
    %p33 = scmp.eq.s32.totalorder %s14, 0
    %p34 = por %p32, %p33
    %p35 = scmp.ne.s32.totalorder %s24, %s27
    %p36 = scmp.eq.s32.totalorder %s19, 1
    %p37 = por %p35, %p36
    %p38 = scmp.ne.s32.totalorder %s27, %s28
    %p39 = scmp.eq.s32.totalorder %s19, 0
    %p40 = por %p38, %p39
    %p41 = scmp.ne.s32.totalorder %s27, %s28
    %p42 = scmp.eq.s32.totalorder %s20, 1
    %p43 = por %p41, %p42
    %p45 = scmp.ne.s32.totalorder %s28, %s44
    %p46 = scmp.eq.s32.totalorder %s20, 0
    %p47 = por %p45, %p46
    %s48 = ssub.s32 %s14, %s21
    %p49 = scmp.eq.s32.totalorder %s48, 0
    %s51 = sadd.s32 %s50, 1
    %s52 = scalar_select %p49, %s50, %s51
    %p55 = pneg %p49
    %p56 = scmp.eq.s32.totalorder %s14, 1
    %p57 = por %p55, %p56
    %p58 = scmp.ne.s32.totalorder %s50, %s53
    %p59 = scmp.eq.s32.totalorder %s14, 0
    %p60 = por %p58, %p59
    %p61 = scmp.ne.s32.totalorder %s50, %s53
    %p62 = scmp.eq.s32.totalorder %s19, 1
    %p63 = por %p61, %p62
    %p64 = scmp.ne.s32.totalorder %s53, %s54
    %p65 = scmp.eq.s32.totalorder %s19, 0
    %p66 = por %p64, %p65
    %p67 = scmp.ne.s32.totalorder %s53, %s54
    %p68 = scmp.eq.s32.totalorder %s20, 1
    %p69 = por %p67, %p68
    %p71 = scmp.ne.s32.totalorder %s54, %s70
    %p72 = scmp.eq.s32.totalorder %s20, 0
    %p73 = por %p71, %p72
    %s75 = sadd.s32 %s74, 1
    %p78 = scmp.eq.s32.totalorder %s14, 1
    %p79 = scmp.ne.s32.totalorder %s74, %s76
    %p80 = scmp.eq.s32.totalorder %s14, 0
    %p81 = por %p79, %p80
    %p82 = scmp.ne.s32.totalorder %s74, %s76
    %p83 = scmp.eq.s32.totalorder %s19, 1
    %p84 = por %p82, %p83
    %p85 = scmp.ne.s32.totalorder %s76, %s77
    %p86 = scmp.eq.s32.totalorder %s19, 0
    %p87 = por %p85, %p86
    %p88 = scmp.ne.s32.totalorder %s76, %s77
    %p89 = scmp.eq.s32.totalorder %s20, 1
    %p90 = por %p88, %p89
    %p92 = scmp.ne.s32.totalorder %s77, %s91
    %p93 = scmp.eq.s32.totalorder %s20, 0
    %p94 = por %p92, %p93
    %s96 = sadd.s32 %s95, 1
    %p99 = scmp.eq.s32.totalorder %s14, 1
    %p100 = scmp.ne.s32.totalorder %s95, %s97
    %p101 = scmp.eq.s32.totalorder %s14, 0
    %p102 = por %p100, %p101
    %p103 = scmp.ne.s32.totalorder %s95, %s97
    %p104 = scmp.eq.s32.totalorder %s19, 1
    %p105 = por %p103, %p104
    %p106 = scmp.ne.s32.totalorder %s97, %s98
    %p107 = scmp.eq.s32.totalorder %s19, 0
    %p108 = por %p106, %p107
    %p109 = scmp.ne.s32.totalorder %s97, %s98
    %p110 = scmp.eq.s32.totalorder %s20, 1
    %p111 = por %p109, %p110
    %p113 = scmp.ne.s32.totalorder %s98, %s112
    %p114 = scmp.eq.s32.totalorder %s20, 0
    %p115 = por %p113, %p114
    %s117 = sadd.s32 %s116, 1
    %p120 = scmp.eq.s32.totalorder %s14, 1
    %p121 = scmp.ne.s32.totalorder %s116, %s118
    %p122 = scmp.eq.s32.totalorder %s14, 0
    %p123 = por %p121, %p122
    %p124 = scmp.ne.s32.totalorder %s116, %s118
    %p125 = scmp.eq.s32.totalorder %s19, 1
    %p126 = por %p124, %p125
    %p127 = scmp.ne.s32.totalorder %s118, %s119
    %p128 = scmp.eq.s32.totalorder %s19, 0
    %p129 = por %p127, %p128
    %p130 = scmp.ne.s32.totalorder %s118, %s119
    %p131 = scmp.eq.s32.totalorder %s20, 1
    %p132 = por %p130, %p131
    %p134 = scmp.ne.s32.totalorder %s119, %s133
    %p135 = scmp.eq.s32.totalorder %s20, 0
    %p136 = por %p134, %p135
    %s138 = sadd.s32 %s137, 1
    %p141 = scmp.eq.s32.totalorder %s14, 1
    %p142 = scmp.ne.s32.totalorder %s137, %s139
    %p143 = scmp.eq.s32.totalorder %s14, 0
    %p144 = por %p142, %p143
    %p145 = scmp.ne.s32.totalorder %s137, %s139
    %p146 = scmp.eq.s32.totalorder %s19, 1
    %p147 = por %p145, %p146
    %p148 = scmp.ne.s32.totalorder %s139, %s140
    %p149 = scmp.eq.s32.totalorder %s19, 0
    %p150 = por %p148, %p149
    %p151 = scmp.ne.s32.totalorder %s139, %s140
    %p152 = scmp.eq.s32.totalorder %s20, 1
    %p153 = por %p151, %p152
    %p155 = scmp.ne.s32.totalorder %s140, %s154
    %p156 = scmp.eq.s32.totalorder %s20, 0
    %p157 = por %p155, %p156
    %s159 = sadd.s32 %s158, 1
    %p162 = scmp.eq.s32.totalorder %s14, 1
    %p163 = scmp.ne.s32.totalorder %s158, %s160
    %p164 = scmp.eq.s32.totalorder %s14, 0
    %p165 = por %p163, %p164
    %p166 = scmp.ne.s32.totalorder %s158, %s160
    %p167 = scmp.eq.s32.totalorder %s19, 1
    %p168 = por %p166, %p167
    %p169 = scmp.ne.s32.totalorder %s160, %s161
    %p170 = scmp.eq.s32.totalorder %s19, 0
    %p171 = por %p169, %p170
    %p172 = scmp.ne.s32.totalorder %s160, %s161
    %p173 = scmp.eq.s32.totalorder %s20, 1
    %p174 = por %p172, %p173
    %p176 = scmp.ne.s32.totalorder %s161, %s175
    %p177 = scmp.eq.s32.totalorder %s20, 0
    %p178 = por %p176, %p177
    %s180 = sadd.s32 %s179, 1
    %p183 = scmp.eq.s32.totalorder %s14, 1
    %p184 = scmp.ne.s32.totalorder %s179, %s181
    %p185 = scmp.eq.s32.totalorder %s14, 0
    %p186 = por %p184, %p185
    %p187 = scmp.ne.s32.totalorder %s179, %s181
    %p188 = scmp.eq.s32.totalorder %s19, 1
    %p189 = por %p187, %p188
    %p190 = scmp.ne.s32.totalorder %s181, %s182
    %p191 = scmp.eq.s32.totalorder %s19, 0
    %p192 = por %p190, %p191
    %p193 = scmp.ne.s32.totalorder %s181, %s182
    %p194 = scmp.eq.s32.totalorder %s20, 1
    %p195 = por %p193, %p194
    %p197 = scmp.ne.s32.totalorder %s182, %s196
    %p198 = scmp.eq.s32.totalorder %s20, 0
    %p199 = por %p197, %p198
    %s200 = ssub.s32 %s14, %s21
    %p201 = scmp.eq.s32.totalorder %s200, 0
    %s203 = sadd.s32 %s202, 1
    %s204 = scalar_select %p201, %s202, %s203
    %p207 = pneg %p201
    %p208 = scmp.eq.s32.totalorder %s14, 1
    %p209 = por %p207, %p208
    %p210 = scmp.ne.s32.totalorder %s202, %s205
    %p211 = scmp.eq.s32.totalorder %s14, 0
    %p212 = por %p210, %p211
    %p213 = scmp.ne.s32.totalorder %s202, %s205
    %p214 = scmp.eq.s32.totalorder %s19, 1
    %p215 = por %p213, %p214
    %p216 = scmp.ne.s32.totalorder %s205, %s206
    %p217 = scmp.eq.s32.totalorder %s19, 0
    %p218 = por %p216, %p217
    %p219 = scmp.ne.s32.totalorder %s205, %s206
    %p220 = scmp.eq.s32.totalorder %s20, 1
    %p221 = por %p219, %p220
    %p223 = scmp.ne.s32.totalorder %s206, %s222
    %p224 = scmp.eq.s32.totalorder %s20, 0
    %p225 = por %p223, %p224
    %p226 = scmp.le.s32.totalorder 1, %s14
    %p227 = scmp.lt.s32.totalorder %s14, 3
    %p228 = pnand %p226, %p227
    %p229 = pneg %p228
    // Predicated region
    $region9: #{sgformer_forward.15} parent=5 // pred_check
      _
    $region10: #{sgformer_forward.15} parent=5 // pred_check_branch
      %231 = sbr.rel (%p228) target = $region12
    $region11: #{sgformer_forward.15} parent=5 // pred_region
      %s232 = ssub.s32 %s14, 1
      // Predicated region
      $region13: #{sgformer_forward.15} parent=11 // pred_check
        %p233 = pneg %p87
      $region14: #{sgformer_forward.15} parent=11 // pred_check_branch
        %235 = sbr.rel (%p233) target = $region16
      $region15: #{sgformer_forward.15} parent=11 // pred_region
        _
      $region16: #{sgformer_forward.15} parent=11 // pred_fallthru
        _
      // Predicated region
      $region17: #{sgformer_forward.15} parent=11 // pred_check
        %p236 = pneg %p108
      $region18: #{sgformer_forward.15} parent=11 // pred_check_branch
        %238 = sbr.rel (%p236) target = $region20
      $region19: #{sgformer_forward.15} parent=11 // pred_region
        _
      $region20: #{sgformer_forward.15} parent=11 // pred_fallthru
        _
      // Predicated region
      $region21: #{sgformer_forward.15} parent=11 // pred_check
        %p239 = pneg %p129
      $region22: #{sgformer_forward.15} parent=11 // pred_check_branch
        %241 = sbr.rel (%p239) target = $region24
      $region23: #{sgformer_forward.15} parent=11 // pred_region
        _
      $region24: #{sgformer_forward.15} parent=11 // pred_fallthru
        _
      // Predicated region
      $region25: #{sgformer_forward.15} parent=11 // pred_check
        %p242 = pneg %p150
      $region26: #{sgformer_forward.15} parent=11 // pred_check_branch
        %244 = sbr.rel (%p242) target = $region28
      $region27: #{sgformer_forward.15} parent=11 // pred_region
        _
      $region28: #{sgformer_forward.15} parent=11 // pred_fallthru
        _
      // Predicated region
      $region29: #{sgformer_forward.15} parent=11 // pred_check
        %p245 = pneg %p171
      $region30: #{sgformer_forward.15} parent=11 // pred_check_branch
        %247 = sbr.rel (%p245) target = $region32
      $region31: #{sgformer_forward.15} parent=11 // pred_region
        _
      $region32: #{sgformer_forward.15} parent=11 // pred_fallthru
        _
      // Predicated region
      $region33: #{sgformer_forward.15} parent=11 // pred_check
        %p248 = pneg %p192
      $region34: #{sgformer_forward.15} parent=11 // pred_check_branch
        %250 = sbr.rel (%p248) target = $region36
      $region35: #{sgformer_forward.15} parent=11 // pred_region
        _
      $region36: #{sgformer_forward.15} parent=11 // pred_fallthru
        _
    $region12: #{sgformer_forward.15} parent=5 // pred_fallthru
      _
    %p251 = scmp.lt.s32.totalorder %s14, 2
    // Predicated region
    $region37: #{sgformer_forward.15} parent=5 // pred_check
      %p252 = pneg %p251
    $region38: #{sgformer_forward.15} parent=5 // pred_check_branch
      %254 = sbr.rel (%p252) target = $region40
    $region39: #{sgformer_forward.15} parent=5 // pred_region
      // Predicated region
      $region41: #{sgformer_forward.15} parent=39 // pred_check
        %p255 = pneg %p34
      $region42: #{sgformer_forward.15} parent=39 // pred_check_branch
        %257 = sbr.rel (%p255) target = $region44
      $region43: #{sgformer_forward.15} parent=39 // pred_region
        %s258 = smul.u32 16, %s14
        %p259 = scmp.lt.s32.totalorder %s258, 31
        %s260 = scalar_select %p259, %s258, 31
        %s261 = smul.addr %s260, 4
        %s262 = scalar_lea.vmem %s0, %s261
        %s263 = smul.u32 16, %s14
      $region44: #{sgformer_forward.15} parent=39 // pred_fallthru
        _
      // Predicated region
      $region45: #{sgformer_forward.15} parent=39 // pred_check
        %p264 = pneg %p60
      $region46: #{sgformer_forward.15} parent=39 // pred_check_branch
        %266 = sbr.rel (%p264) target = $region48
      $region47: #{sgformer_forward.15} parent=39 // pred_region
        %s267 = smul.u32 16, %s14
        %p268 = scmp.lt.s32.totalorder %s267, 31
        %s269 = scalar_select %p268, %s267, 31
        %s270 = smul.addr %s269, 4
        %s271 = scalar_lea.vmem %s1, %s270
        %s272 = smul.u32 16, %s14
      $region48: #{sgformer_forward.15} parent=39 // pred_fallthru
        _
    $region40: #{sgformer_forward.15} parent=5 // pred_fallthru
      _
    %p273 = scmp.le.s32.totalorder 1, %s14
    %p274 = scmp.lt.s32.totalorder %s14, 3
    %p275 = pnand %p273, %p274
    %p276 = pneg %p275
    // Predicated region
    $region49: #{sgformer_forward.15} parent=5 // pred_check
      _
    $region50: #{sgformer_forward.15} parent=5 // pred_check_branch
      %278 = sbr.rel (%p275) target = $region52
    $region51: #{sgformer_forward.15} parent=5 // pred_region
      %s279 = ssub.s32 %s14, 1
      %s280 = smul.u32 16, %s19
      %p281 = scmp.lt.s32.totalorder %s280, 31
      %s282 = scalar_select %p281, %s280, 31
      %s283 = smul.addr %s282, 4
      %s284 = scalar_lea.vmem %s0, %s283
      %p285 = pneg %p40
      %p286 = pneg %p37
      %s287 = smul.u32 16, %s19
      %p288 = scmp.lt.s32.totalorder %s287, 31
      %s289 = scalar_select %p288, %s287, 31
      %s290 = smul.addr %s289, 4
      %s291 = scalar_lea.vmem %s1, %s290
      %p292 = pneg %p66
      %p293 = pneg %p63
      %p294 = pneg %p87
      %p295 = pneg %p84
      %p296 = pneg %p108
      %p297 = pneg %p105
      %p298 = pneg %p129
      %p299 = pneg %p126
      %p300 = pneg %p150
      %p301 = pneg %p147
      %p302 = pneg %p171
      %p303 = pneg %p168
      %p304 = pneg %p192
      %p305 = pneg %p189
      %p306 = pneg %p218
      %p307 = pneg %p215
      %s308 = smul.u32 16, %s19
      %p309 = scmp.lt.s32.totalorder %s308, 31
      %s310 = scalar_select %p309, %s308, 31
      %s311 = smul.addr %s310, 8
      %s312 = scalar_lea.vmem %s8, %s311
      %s313 = smul.u32 16, %s19
      %p314 = scmp.lt.s32.totalorder %s313, 31
      %s315 = scalar_select %p314, %s313, 31
      %s316 = smul.addr %s315, 4
      %s317 = scalar_lea.vmem %s0, %s316
      %s318 = smul.u32 16, %s19
      %s319 = smul.u32 16, %s19
      %p320 = scmp.lt.s32.totalorder %s319, 31
      %s321 = scalar_select %p320, %s319, 31
      %s322 = smul.addr %s321, 4
      %s323 = scalar_lea.vmem %s1, %s322
      %s324 = smul.u32 16, %s19
      %s325 = smul.u32 16, %s19
      %p326 = scmp.lt.s32.totalorder %s325, 31
      %s327 = scalar_select %p326, %s325, 31
      %s328 = smul.addr %s327, 8
      %s329 = scalar_lea.vmem %s8, %s328
      %s330 = smul.u32 16, %s19
      %v332 = vld [vmem:[%s317] sm:$0xf]
      %v333 = vld [vmem:[%s317 + $0x4] sm:$0xf]
      %v334 = vld [vmem:[%s317 + $0x8] sm:$0xf]
      %v335 = vld [vmem:[%s317 + $0xc] sm:$0xf]
      %v336 = vld [vmem:[%s317 + $0x10] sm:$0xf]
      %v337 = vld [vmem:[%s317 + $0x14] sm:$0xf]
      %v338 = vld [vmem:[%s317 + $0x18] sm:$0xf]
      %v339 = vld [vmem:[%s317 + $0x1c] sm:$0xf]
      %v340 = vld [vmem:[%s317 + $0x20] sm:$0xf]
      %v341 = vld [vmem:[%s317 + $0x24] sm:$0xf]
      %v342 = vld [vmem:[%s317 + $0x28] sm:$0xf]
      %v343 = vld [vmem:[%s317 + $0x2c] sm:$0xf]
      %v344 = vld [vmem:[%s317 + $0x30] sm:$0xf]
      %v345 = vld [vmem:[%s317 + $0x34] sm:$0xf]
      %v346 = vld [vmem:[%s317 + $0x38] sm:$0xf]
      %v347 = vld [vmem:[%s317 + $0x3c] sm:$0xf]
      %v348 = vld [vmem:[%s323] sm:$0xf]
      %v349 = vld [vmem:[%s323 + $0x4] sm:$0xf]
      %v350 = vld [vmem:[%s323 + $0x8] sm:$0xf]
      %v351 = vld [vmem:[%s323 + $0xc] sm:$0xf]
      %v352 = vld [vmem:[%s323 + $0x10] sm:$0xf]
      %v353 = vld [vmem:[%s323 + $0x14] sm:$0xf]
      %v354 = vld [vmem:[%s323 + $0x18] sm:$0xf]
      %v355 = vld [vmem:[%s323 + $0x1c] sm:$0xf]
      %v356 = vld [vmem:[%s323 + $0x20] sm:$0xf]
      %v357 = vld [vmem:[%s323 + $0x24] sm:$0xf]
      %v358 = vld [vmem:[%s323 + $0x28] sm:$0xf]
      %v359 = vld [vmem:[%s323 + $0x2c] sm:$0xf]
      %v360 = vld [vmem:[%s323 + $0x30] sm:$0xf]
      %v361 = vld [vmem:[%s323 + $0x34] sm:$0xf]
      %v362 = vld [vmem:[%s323 + $0x38] sm:$0xf]
      %v363 = vld [vmem:[%s323 + $0x3c] sm:$0xf]
      %v380 = vunpack.c.l.b16 %v332
      %v381 = vunpack.c.l.b16 %v333
      %v382 = vunpack.c.l.b16 %v334
      %v383 = vunpack.c.l.b16 %v335
      %v384 = vunpack.c.l.b16 %v336
      %v385 = vunpack.c.l.b16 %v337
      %v386 = vunpack.c.l.b16 %v338
      %v387 = vunpack.c.l.b16 %v339
      %v388 = vunpack.c.l.b16 %v340
      %v389 = vunpack.c.l.b16 %v341
      %v390 = vunpack.c.l.b16 %v342
      %v391 = vunpack.c.l.b16 %v343
      %v392 = vunpack.c.l.b16 %v344
      %v393 = vunpack.c.l.b16 %v345
      %v394 = vunpack.c.l.b16 %v346
      %v395 = vunpack.c.l.b16 %v347
      %v396 = vpack.c.b16 %v381, %v380
      %v397 = vpack.c.b16 %v383, %v382
      %v398 = vpack.c.b16 %v385, %v384
      %v399 = vpack.c.b16 %v387, %v386
      %v400 = vpack.c.b16 %v389, %v388
      %v401 = vpack.c.b16 %v391, %v390
      %v402 = vpack.c.b16 %v393, %v392
      %v403 = vpack.c.b16 %v395, %v394
      %v428 = vunpack.c.l.b16 %v348
      %v429 = vunpack.c.l.b16 %v349
      %v430 = vunpack.c.l.b16 %v350
      %v431 = vunpack.c.l.b16 %v351
      %v432 = vunpack.c.l.b16 %v352
      %v433 = vunpack.c.l.b16 %v353
      %v434 = vunpack.c.l.b16 %v354
      %v435 = vunpack.c.l.b16 %v355
      %v436 = vunpack.c.l.b16 %v356
      %v437 = vunpack.c.l.b16 %v357
      %v438 = vunpack.c.l.b16 %v358
      %v439 = vunpack.c.l.b16 %v359
      %v440 = vunpack.c.l.b16 %v360
      %v441 = vunpack.c.l.b16 %v361
      %v442 = vunpack.c.l.b16 %v362
      %v443 = vunpack.c.l.b16 %v363
      %v444 = vpack.c.b16 %v429, %v428
      %v445 = vpack.c.b16 %v431, %v430
      %v446 = vpack.c.b16 %v433, %v432
      %v447 = vpack.c.b16 %v435, %v434
      %v448 = vpack.c.b16 %v437, %v436
      %v449 = vpack.c.b16 %v439, %v438
      %v450 = vpack.c.b16 %v441, %v440
      %v451 = vpack.c.b16 %v443, %v442
      %v460 = vld [vmem:[%s2] sm:$0xf]
      %v461 = vld [vmem:[%s2 + $0x4] sm:$0xf]
      %v462 = vld [vmem:[%s2 + $0x8] sm:$0xf]
      %v463 = vld [vmem:[%s2 + $0xc] sm:$0xf]
      %v464 = vld [vmem:[%s2 + $0x10] sm:$0xf]
      %v465 = vld [vmem:[%s2 + $0x14] sm:$0xf]
      %v466 = vld [vmem:[%s2 + $0x18] sm:$0xf]
      %v467 = vld [vmem:[%s2 + $0x1c] sm:$0xf]
      %v468 = vld [vmem:[%s2 + $0x20] sm:$0xf]
      %v469 = vld [vmem:[%s2 + $0x24] sm:$0xf]
      %v470 = vld [vmem:[%s2 + $0x28] sm:$0xf]
      %v471 = vld [vmem:[%s2 + $0x2c] sm:$0xf]
      %v472 = vld [vmem:[%s2 + $0x30] sm:$0xf]
      %v473 = vld [vmem:[%s2 + $0x34] sm:$0xf]
      %v474 = vld [vmem:[%s2 + $0x38] sm:$0xf]
      %v475 = vld [vmem:[%s2 + $0x3c] sm:$0xf]
      %v476 = vld [vmem:[%s2 + $0x40] sm:$0xf]
      %v477 = vld [vmem:[%s2 + $0x44] sm:$0xf]
      %v478 = vld [vmem:[%s2 + $0x48] sm:$0xf]
      %v479 = vld [vmem:[%s2 + $0x4c] sm:$0xf]
      %v480 = vld [vmem:[%s2 + $0x50] sm:$0xf]
      %v481 = vld [vmem:[%s2 + $0x54] sm:$0xf]
      %v482 = vld [vmem:[%s2 + $0x58] sm:$0xf]
      %v483 = vld [vmem:[%s2 + $0x5c] sm:$0xf]
      %v484 = vld [vmem:[%s2 + $0x60] sm:$0xf]
      %v485 = vld [vmem:[%s2 + $0x64] sm:$0xf]
      %v486 = vld [vmem:[%s2 + $0x68] sm:$0xf]
      %v487 = vld [vmem:[%s2 + $0x6c] sm:$0xf]
      %v488 = vld [vmem:[%s2 + $0x70] sm:$0xf]
      %v489 = vld [vmem:[%s2 + $0x74] sm:$0xf]
      %v490 = vld [vmem:[%s2 + $0x78] sm:$0xf]
      %v491 = vld [vmem:[%s2 + $0x7c] sm:$0xf]
      %v492 = vld [vmem:[%s3] sm:$0x1]
      %v494 = vlaneseq
      %v495 = vshrl.u32 %v494, 7
      %v496 = vsub.s32 0, %v495
      %v497 = vrot.slane %v492, %v496
      %v531 = vunpack.c.l.b16 %v460
      %v532 = vunpack.c.l.b16 %v461
      %v533 = vunpack.c.l.b16 %v462
      %v534 = vunpack.c.l.b16 %v463
      %v535 = vunpack.c.l.b16 %v464
      %v536 = vunpack.c.l.b16 %v465
      %v537 = vunpack.c.l.b16 %v466
      %v538 = vunpack.c.l.b16 %v467
      %v539 = vunpack.c.l.b16 %v468
      %v540 = vunpack.c.l.b16 %v469
      %v541 = vunpack.c.l.b16 %v470
      %v542 = vunpack.c.l.b16 %v471
      %v543 = vunpack.c.l.b16 %v472
      %v544 = vunpack.c.l.b16 %v473
      %v545 = vunpack.c.l.b16 %v474
      %v546 = vunpack.c.l.b16 %v475
      %v547 = vunpack.c.l.b16 %v476
      %v548 = vunpack.c.l.b16 %v477
      %v549 = vunpack.c.l.b16 %v478
      %v550 = vunpack.c.l.b16 %v479
      %v551 = vunpack.c.l.b16 %v480
      %v552 = vunpack.c.l.b16 %v481
      %v553 = vunpack.c.l.b16 %v482
      %v554 = vunpack.c.l.b16 %v483
      %v555 = vunpack.c.l.b16 %v484
      %v556 = vunpack.c.l.b16 %v485
      %v557 = vunpack.c.l.b16 %v486
      %v558 = vunpack.c.l.b16 %v487
      %v559 = vunpack.c.l.b16 %v488
      %v560 = vunpack.c.l.b16 %v489
      %v561 = vunpack.c.l.b16 %v490
      %v562 = vunpack.c.l.b16 %v491
      %v563 = vpack.c.b16 %v532, %v531
      %v564 = vpack.c.b16 %v534, %v533
      %v565 = vpack.c.b16 %v536, %v535
      %v566 = vpack.c.b16 %v538, %v537
      %v567 = vpack.c.b16 %v540, %v539
      %v568 = vpack.c.b16 %v542, %v541
      %v569 = vpack.c.b16 %v544, %v543
      %v570 = vpack.c.b16 %v546, %v545
      %v571 = vpack.c.b16 %v548, %v547
      %v572 = vpack.c.b16 %v550, %v549
      %v573 = vpack.c.b16 %v552, %v551
      %v574 = vpack.c.b16 %v554, %v553
      %v575 = vpack.c.b16 %v556, %v555
      %v576 = vpack.c.b16 %v558, %v557
      %v577 = vpack.c.b16 %v560, %v559
      %v578 = vpack.c.b16 %v562, %v561
      %595 = vmatprep.subr.bf16.mxu0 0
      %596 = vmatpush1.bf16.msra.mxu0 %v570
      %597 = vmatprep.subr.bf16.mxu0 0
      %598 = vmatpush1.bf16.msra.mxu0 %v569
      %599 = vmatprep.subr.bf16.mxu0 0
      %600 = vmatpush1.bf16.msra.mxu0 %v568
      %601 = vmatprep.subr.bf16.mxu0 0
      %602 = vmatpush1.bf16.msra.mxu0 %v567
      %603 = vmatprep.subr.bf16.mxu0 0
      %604 = vmatpush1.bf16.msra.mxu0 %v566
      %605 = vmatprep.subr.bf16.mxu0 0
      %606 = vmatpush1.bf16.msra.mxu0 %v565
      %607 = vmatprep.subr.bf16.mxu0 0
      %608 = vmatpush1.bf16.msra.mxu0 %v564
      %609 = vmatprep.subr.bf16.mxu0 0
      %610 = vmatpush1.bf16.msra.mxu0 %v563
      %611 = vmatprep.subr.bf16.mxu0 0
      %612 = vmatpush2.bf16.msra.mxu0 %v578
      %613 = vmatprep.subr.bf16.mxu0 0
      %614 = vmatpush2.bf16.msra.mxu0 %v577
      %615 = vmatprep.subr.bf16.mxu0 0
      %616 = vmatpush2.bf16.msra.mxu0 %v576
      %617 = vmatprep.subr.bf16.mxu0 0
      %618 = vmatpush2.bf16.msra.mxu0 %v575
      %619 = vmatprep.subr.bf16.mxu0 0
      %620 = vmatpush2.bf16.msra.mxu0 %v574
      %621 = vmatprep.subr.bf16.mxu0 0
      %622 = vmatpush2.bf16.msra.mxu0 %v573
      %623 = vmatprep.subr.bf16.mxu0 0
      %624 = vmatpush2.bf16.msra.mxu0 %v572
      %625 = vmatprep.subr.bf16.mxu0 0
      %626 = vmatpush2.bf16.msra.mxu0 %v571
      %627 = vmatprep.mubr.bf16.mxu0 %v444
      %628 = vmatmul.mubr.bf16.gmra.mxu0 %v396
      %v629 = vpop.f32.mrf.mxu0
      %v630 = vadd.f32 %v497, %v629
      %v631 = vpop.f32.mrf.mxu0
      %v632 = vpop.f32.mrf.mxu0
      %v633 = vadd.f32 %v497, %v632
      %v634 = vpop.f32.mrf.mxu0
      %635 = vmatprep.mubr.bf16.mxu0 %v445
      %636 = vmatmul.mubr.bf16.gmra.mxu0 %v397
      %v637 = vpop.f32.mrf.mxu0
      %v638 = vadd.f32 %v497, %v637
      %v639 = vpop.f32.mrf.mxu0
      %v640 = vpop.f32.mrf.mxu0
      %v641 = vadd.f32 %v497, %v640
      %v642 = vpop.f32.mrf.mxu0
      %643 = vmatprep.mubr.bf16.mxu0 %v446
      %644 = vmatmul.mubr.bf16.gmra.mxu0 %v398
      %v645 = vpop.f32.mrf.mxu0
      %v646 = vadd.f32 %v497, %v645
      %v647 = vpop.f32.mrf.mxu0
      %v648 = vpop.f32.mrf.mxu0
      %v649 = vadd.f32 %v497, %v648
      %v650 = vpop.f32.mrf.mxu0
      %651 = vmatprep.mubr.bf16.mxu0 %v447
      %652 = vmatmul.mubr.bf16.gmra.mxu0 %v399
      %v653 = vpop.f32.mrf.mxu0
      %v654 = vadd.f32 %v497, %v653
      %v655 = vpop.f32.mrf.mxu0
      %v656 = vpop.f32.mrf.mxu0
      %v657 = vadd.f32 %v497, %v656
      %v658 = vpop.f32.mrf.mxu0
      %659 = vmatprep.mubr.bf16.mxu0 %v448
      %660 = vmatmul.mubr.bf16.gmra.mxu0 %v400
      %v661 = vpop.f32.mrf.mxu0
      %v662 = vadd.f32 %v497, %v661
      %v663 = vpop.f32.mrf.mxu0
      %v664 = vpop.f32.mrf.mxu0
      %v665 = vadd.f32 %v497, %v664
      %v666 = vpop.f32.mrf.mxu0
      %667 = vmatprep.mubr.bf16.mxu0 %v449
      %668 = vmatmul.mubr.bf16.gmra.mxu0 %v401
      %v669 = vpop.f32.mrf.mxu0
      %v670 = vadd.f32 %v497, %v669
      %v671 = vpop.f32.mrf.mxu0
      %v672 = vpop.f32.mrf.mxu0
      %v673 = vadd.f32 %v497, %v672
      %v674 = vpop.f32.mrf.mxu0
      %675 = vmatprep.mubr.bf16.mxu0 %v450
      %676 = vmatmul.mubr.bf16.gmra.mxu0 %v402
      %v677 = vpop.f32.mrf.mxu0
      %v678 = vadd.f32 %v497, %v677
      %v679 = vpop.f32.mrf.mxu0
      %v680 = vpop.f32.mrf.mxu0
      %v681 = vadd.f32 %v497, %v680
      %v682 = vpop.f32.mrf.mxu0
      %683 = vmatprep.mubr.bf16.mxu0 %v451
      %684 = vmatmul.mubr.bf16.gmra.mxu0 %v403
      %v685 = vpop.f32.mrf.mxu0
      %v686 = vadd.f32 %v497, %v685
      %v687 = vpop.f32.mrf.mxu0
      %v688 = vpop.f32.mrf.mxu0
      %v689 = vadd.f32 %v497, %v688
      %v690 = vpop.f32.mrf.mxu0
      %691 = vdwg.mxu0
      %v692 = vtanh.pop %v630
      %v693 = vtanh.pop %v633
      %v694 = vtanh.pop %v638
      %v695 = vtanh.pop %v641
      %v696 = vtanh.pop %v646
      %v697 = vtanh.pop %v649
      %v698 = vtanh.pop %v654
      %v699 = vtanh.pop %v657
      %v700 = vtanh.pop %v662
      %v701 = vtanh.pop %v665
      %v702 = vtanh.pop %v670
      %v703 = vtanh.pop %v673
      %v704 = vtanh.pop %v678
      %v705 = vtanh.pop %v681
      %v706 = vtanh.pop %v686
      %v707 = vtanh.pop %v689
      %v708 = vmul.f32 %v692, %v692
      %v709 = vmul.f32 %v693, %v693
      %v710 = vmul.f32 %v694, %v694
      %v711 = vmul.f32 %v695, %v695
      %v712 = vmul.f32 %v696, %v696
      %v713 = vmul.f32 %v697, %v697
      %v714 = vmul.f32 %v698, %v698
      %v715 = vmul.f32 %v699, %v699
      %v716 = vmul.f32 %v700, %v700
      %v717 = vmul.f32 %v701, %v701
      %v718 = vmul.f32 %v702, %v702
      %v719 = vmul.f32 %v703, %v703
      %v720 = vmul.f32 %v704, %v704
      %v721 = vmul.f32 %v705, %v705
      %v722 = vmul.f32 %v706, %v706
      %v723 = vmul.f32 %v707, %v707
      %724 = vadd.xlane.f32.xlu0 %v708
      %v725 = vpop.xlane.xlu0 %724
      %726 = vadd.xlane.f32.xlu0 %v709
      %v727 = vpop.xlane.xlu0 %726
      %728 = vadd.xlane.f32.xlu0 %v710
      %v729 = vpop.xlane.xlu0 %728
      %730 = vadd.xlane.f32.xlu0 %v711
      %v731 = vpop.xlane.xlu0 %730
      %732 = vadd.xlane.f32.xlu0 %v712
      %v733 = vpop.xlane.xlu0 %732
      %734 = vadd.xlane.f32.xlu0 %v713
      %v735 = vpop.xlane.xlu0 %734
      %736 = vadd.xlane.f32.xlu0 %v714
      %v737 = vpop.xlane.xlu0 %736
      %738 = vadd.xlane.f32.xlu0 %v715
      %v739 = vpop.xlane.xlu0 %738
      %740 = vadd.xlane.f32.xlu0 %v716
      %v741 = vpop.xlane.xlu0 %740
      %742 = vadd.xlane.f32.xlu0 %v717
      %v743 = vpop.xlane.xlu0 %742
      %744 = vadd.xlane.f32.xlu0 %v718
      %v745 = vpop.xlane.xlu0 %744
      %746 = vadd.xlane.f32.xlu0 %v719
      %v747 = vpop.xlane.xlu0 %746
      %748 = vadd.xlane.f32.xlu0 %v720
      %v749 = vpop.xlane.xlu0 %748
      %750 = vadd.xlane.f32.xlu0 %v721
      %v751 = vpop.xlane.xlu0 %750
      %752 = vadd.xlane.f32.xlu0 %v722
      %v753 = vpop.xlane.xlu0 %752
      %754 = vadd.xlane.f32.xlu0 %v723
      %v755 = vpop.xlane.xlu0 %754
      %v756 = vadd.f32 %v725, 1e-24
      %v757 = vadd.f32 %v727, 1e-24
      %v758 = vadd.f32 %v729, 1e-24
      %v759 = vadd.f32 %v731, 1e-24
      %v760 = vadd.f32 %v733, 1e-24
      %v761 = vadd.f32 %v735, 1e-24
      %v762 = vadd.f32 %v737, 1e-24
      %v763 = vadd.f32 %v739, 1e-24
      %v764 = vadd.f32 %v741, 1e-24
      %v765 = vadd.f32 %v743, 1e-24
      %v766 = vadd.f32 %v745, 1e-24
      %v767 = vadd.f32 %v747, 1e-24
      %v768 = vadd.f32 %v749, 1e-24
      %v769 = vadd.f32 %v751, 1e-24
      %v770 = vadd.f32 %v753, 1e-24
      %v771 = vadd.f32 %v755, 1e-24
      %v772 = vrsqrt.pop %v756
      %v773 = vrsqrt.pop %v757
      %v774 = vrsqrt.pop %v758
      %v775 = vrsqrt.pop %v759
      %v776 = vrsqrt.pop %v760
      %v777 = vrsqrt.pop %v761
      %v778 = vrsqrt.pop %v762
      %v779 = vrsqrt.pop %v763
      %v780 = vrsqrt.pop %v764
      %v781 = vrsqrt.pop %v765
      %v782 = vrsqrt.pop %v766
      %v783 = vrsqrt.pop %v767
      %v784 = vrsqrt.pop %v768
      %v785 = vrsqrt.pop %v769
      %v786 = vrsqrt.pop %v770
      %v787 = vrsqrt.pop %v771
      %v788 = vmul.f32 %v692, %v772
      %v789 = vmul.f32 %v693, %v773
      %v790 = vmul.f32 %v694, %v774
      %v791 = vmul.f32 %v695, %v775
      %v792 = vmul.f32 %v696, %v776
      %v793 = vmul.f32 %v697, %v777
      %v794 = vmul.f32 %v698, %v778
      %v795 = vmul.f32 %v699, %v779
      %v796 = vmul.f32 %v700, %v780
      %v797 = vmul.f32 %v701, %v781
      %v798 = vmul.f32 %v702, %v782
      %v799 = vmul.f32 %v703, %v783
      %v800 = vmul.f32 %v704, %v784
      %v801 = vmul.f32 %v705, %v785
      %v802 = vmul.f32 %v706, %v786
      %v803 = vmul.f32 %v707, %v787
      %v804 = vpack.c.bf16 %v789, %v788
      %v805 = vpack.c.bf16 %v791, %v790
      %v806 = vpack.c.bf16 %v793, %v792
      %v807 = vpack.c.bf16 %v795, %v794
      %v808 = vpack.c.bf16 %v797, %v796
      %v809 = vpack.c.bf16 %v799, %v798
      %v810 = vpack.c.bf16 %v801, %v800
      %v811 = vpack.c.bf16 %v803, %v802
      %v812 = vld [vmem:[%s4] sm:$0xf]
      %v813 = vld [vmem:[%s4 + $0x4] sm:$0xf]
      %v814 = vld [vmem:[%s4 + $0x8] sm:$0xf]
      %v815 = vld [vmem:[%s4 + $0xc] sm:$0xf]
      %v816 = vld [vmem:[%s4 + $0x10] sm:$0xf]
      %v817 = vld [vmem:[%s4 + $0x14] sm:$0xf]
      %v818 = vld [vmem:[%s4 + $0x18] sm:$0xf]
      %v819 = vld [vmem:[%s4 + $0x1c] sm:$0xf]
      %v820 = vld [vmem:[%s4 + $0x20] sm:$0xf]
      %v821 = vld [vmem:[%s4 + $0x24] sm:$0xf]
      %v822 = vld [vmem:[%s4 + $0x28] sm:$0xf]
      %v823 = vld [vmem:[%s4 + $0x2c] sm:$0xf]
      %v824 = vld [vmem:[%s4 + $0x30] sm:$0xf]
      %v825 = vld [vmem:[%s4 + $0x34] sm:$0xf]
      %v826 = vld [vmem:[%s4 + $0x38] sm:$0xf]
      %v827 = vld [vmem:[%s4 + $0x3c] sm:$0xf]
      %v828 = vld [vmem:[%s5] sm:$0x1]
      %v830 = vlaneseq
      %v831 = vshrl.u32 %v830, 7
      %v832 = vsub.s32 0, %v831
      %v833 = vrot.slane %v828, %v832
      %v851 = vunpack.c.l.b16 %v812
      %v852 = vunpack.c.l.b16 %v813
      %v853 = vunpack.c.l.b16 %v814
      %v854 = vunpack.c.l.b16 %v815
      %v855 = vunpack.c.l.b16 %v816
      %v856 = vunpack.c.l.b16 %v817
      %v857 = vunpack.c.l.b16 %v818
      %v858 = vunpack.c.l.b16 %v819
      %v859 = vunpack.c.l.b16 %v820
      %v860 = vunpack.c.l.b16 %v821
      %v861 = vunpack.c.l.b16 %v822
      %v862 = vunpack.c.l.b16 %v823
      %v863 = vunpack.c.l.b16 %v824
      %v864 = vunpack.c.l.b16 %v825
      %v865 = vunpack.c.l.b16 %v826
      %v866 = vunpack.c.l.b16 %v827
      %v867 = vpack.c.b16 %v852, %v851
      %v868 = vpack.c.b16 %v854, %v853
      %v869 = vpack.c.b16 %v856, %v855
      %v870 = vpack.c.b16 %v858, %v857
      %v871 = vpack.c.b16 %v860, %v859
      %v872 = vpack.c.b16 %v862, %v861
      %v873 = vpack.c.b16 %v864, %v863
      %v874 = vpack.c.b16 %v866, %v865
      %883 = vmatprep.subr.bf16.mxu0 0
      %884 = vmatpush1.bf16.msra.mxu0 %v874
      %885 = vmatprep.subr.bf16.mxu0 0
      %886 = vmatpush1.bf16.msra.mxu0 %v873
      %887 = vmatprep.subr.bf16.mxu0 0
      %888 = vmatpush1.bf16.msra.mxu0 %v872
      %889 = vmatprep.subr.bf16.mxu0 0
      %890 = vmatpush1.bf16.msra.mxu0 %v871
      %891 = vmatprep.subr.bf16.mxu0 0
      %892 = vmatpush1.bf16.msra.mxu0 %v870
      %893 = vmatprep.subr.bf16.mxu0 0
      %894 = vmatpush1.bf16.msra.mxu0 %v869
      %895 = vmatprep.subr.bf16.mxu0 0
      %896 = vmatpush1.bf16.msra.mxu0 %v868
      %897 = vmatprep.subr.bf16.mxu0 0
      %898 = vmatpush1.bf16.msra.mxu0 %v867
      %899 = vmatprep.subr.bf16.mxu0 0
      %900 = vmatpush2.bf16.msra.mxu0 0
      %901 = vmatprep.subr.bf16.mxu0 0
      %902 = vmatpush2.bf16.msra.mxu0 0
      %903 = vmatprep.subr.bf16.mxu0 0
      %904 = vmatpush2.bf16.msra.mxu0 0
      %905 = vmatprep.subr.bf16.mxu0 0
      %906 = vmatpush2.bf16.msra.mxu0 0
      %907 = vmatprep.subr.bf16.mxu0 0
      %908 = vmatpush2.bf16.msra.mxu0 0
      %909 = vmatprep.subr.bf16.mxu0 0
      %910 = vmatpush2.bf16.msra.mxu0 0
      %911 = vmatprep.subr.bf16.mxu0 0
      %912 = vmatpush2.bf16.msra.mxu0 0
      %913 = vmatprep.subr.bf16.mxu0 0
      %914 = vmatpush2.bf16.msra.mxu0 0
      %915 = vmatprep.mubr.bf16.mxu0 0
      %916 = vmatmul.mubr.bf16.gmra.mxu0 %v804
      %v917 = vpop.f32.mrf.mxu0
      %v918 = vadd.f32 %v833, %v917
      %v919 = vpop.f32.mrf.mxu0
      %v920 = vpop.f32.mrf.mxu0
      %v921 = vadd.f32 %v833, %v920
      %v922 = vpop.f32.mrf.mxu0
      %923 = vmatprep.mubr.bf16.mxu0 0
      %924 = vmatmul.mubr.bf16.gmra.mxu0 %v805
      %v925 = vpop.f32.mrf.mxu0
      %v926 = vadd.f32 %v833, %v925
      %v927 = vpop.f32.mrf.mxu0
      %v928 = vpop.f32.mrf.mxu0
      %v929 = vadd.f32 %v833, %v928
      %v930 = vpop.f32.mrf.mxu0
      %931 = vmatprep.mubr.bf16.mxu0 0
      %932 = vmatmul.mubr.bf16.gmra.mxu0 %v806
      %v933 = vpop.f32.mrf.mxu0
      %v934 = vadd.f32 %v833, %v933
      %v935 = vpop.f32.mrf.mxu0
      %v936 = vpop.f32.mrf.mxu0
      %v937 = vadd.f32 %v833, %v936
      %v938 = vpop.f32.mrf.mxu0
      %939 = vmatprep.mubr.bf16.mxu0 0
      %940 = vmatmul.mubr.bf16.gmra.mxu0 %v807
      %v941 = vpop.f32.mrf.mxu0
      %v942 = vadd.f32 %v833, %v941
      %v943 = vpop.f32.mrf.mxu0
      %v944 = vpop.f32.mrf.mxu0
      %v945 = vadd.f32 %v833, %v944
      %v946 = vpop.f32.mrf.mxu0
      %947 = vmatprep.mubr.bf16.mxu0 0
      %948 = vmatmul.mubr.bf16.gmra.mxu0 %v808
      %v949 = vpop.f32.mrf.mxu0
      %v950 = vadd.f32 %v833, %v949
      %v951 = vpop.f32.mrf.mxu0
      %v952 = vpop.f32.mrf.mxu0
      %v953 = vadd.f32 %v833, %v952
      %v954 = vpop.f32.mrf.mxu0
      %955 = vmatprep.mubr.bf16.mxu0 0
      %956 = vmatmul.mubr.bf16.gmra.mxu0 %v809
      %v957 = vpop.f32.mrf.mxu0
      %v958 = vadd.f32 %v833, %v957
      %v959 = vpop.f32.mrf.mxu0
      %v960 = vpop.f32.mrf.mxu0
      %v961 = vadd.f32 %v833, %v960
      %v962 = vpop.f32.mrf.mxu0
      %963 = vmatprep.mubr.bf16.mxu0 0
      %964 = vmatmul.mubr.bf16.gmra.mxu0 %v810
      %v965 = vpop.f32.mrf.mxu0
      %v966 = vadd.f32 %v833, %v965
      %v967 = vpop.f32.mrf.mxu0
      %v968 = vpop.f32.mrf.mxu0
      %v969 = vadd.f32 %v833, %v968
      %v970 = vpop.f32.mrf.mxu0
      %971 = vmatprep.mubr.bf16.mxu0 0
      %972 = vmatmul.mubr.bf16.gmra.mxu0 %v811
      %v973 = vpop.f32.mrf.mxu0
      %v974 = vadd.f32 %v833, %v973
      %v975 = vpop.f32.mrf.mxu0
      %v976 = vpop.f32.mrf.mxu0
      %v977 = vadd.f32 %v833, %v976
      %v978 = vpop.f32.mrf.mxu0
      %979 = vdwg.mxu0
      %v980 = vmax.f32 %v918, 0.0
      %v981 = vmax.f32 %v921, 0.0
      %v982 = vmax.f32 %v926, 0.0
      %v983 = vmax.f32 %v929, 0.0
      %v984 = vmax.f32 %v934, 0.0
      %v985 = vmax.f32 %v937, 0.0
      %v986 = vmax.f32 %v942, 0.0
      %v987 = vmax.f32 %v945, 0.0
      %v988 = vmax.f32 %v950, 0.0
      %v989 = vmax.f32 %v953, 0.0
      %v990 = vmax.f32 %v958, 0.0
      %v991 = vmax.f32 %v961, 0.0
      %v992 = vmax.f32 %v966, 0.0
      %v993 = vmax.f32 %v969, 0.0
      %v994 = vmax.f32 %v974, 0.0
      %v995 = vmax.f32 %v977, 0.0
      %v996 = vpack.c.bf16 %v981, %v980
      %v997 = vpack.c.bf16 %v983, %v982
      %v998 = vpack.c.bf16 %v985, %v984
      %v999 = vpack.c.bf16 %v987, %v986
      %v1000 = vpack.c.bf16 %v989, %v988
      %v1001 = vpack.c.bf16 %v991, %v990
      %v1002 = vpack.c.bf16 %v993, %v992
      %v1003 = vpack.c.bf16 %v995, %v994
      %v1004 = vld [vmem:[%s6] sm:$0xf]
      %v1005 = vld [vmem:[%s6 + $0x4] sm:$0xf]
      %v1006 = vld [vmem:[%s6 + $0x8] sm:$0xf]
      %v1007 = vld [vmem:[%s6 + $0xc] sm:$0xf]
      %v1008 = vld [vmem:[%s6 + $0x10] sm:$0xf]
      %v1009 = vld [vmem:[%s6 + $0x14] sm:$0xf]
      %v1010 = vld [vmem:[%s6 + $0x18] sm:$0xf]
      %v1011 = vld [vmem:[%s6 + $0x1c] sm:$0xf]
      %v1012 = vld [vmem:[%s6 + $0x20] sm:$0xf]
      %v1013 = vld [vmem:[%s6 + $0x24] sm:$0xf]
      %v1014 = vld [vmem:[%s6 + $0x28] sm:$0xf]
      %v1015 = vld [vmem:[%s6 + $0x2c] sm:$0xf]
      %v1016 = vld [vmem:[%s6 + $0x30] sm:$0xf]
      %v1017 = vld [vmem:[%s6 + $0x34] sm:$0xf]
      %v1018 = vld [vmem:[%s6 + $0x38] sm:$0xf]
      %v1019 = vld [vmem:[%s6 + $0x3c] sm:$0xf]
      %v1020 = vld [vmem:[%s7] sm:$0x1]
      %v1022 = vlaneseq
      %v1023 = vshrl.u32 %v1022, 7
      %v1024 = vsub.s32 0, %v1023
      %v1025 = vrot.slane %v1020, %v1024
      %v1043 = vunpack.c.l.b16 %v1004
      %v1044 = vunpack.c.l.b16 %v1005
      %v1045 = vunpack.c.l.b16 %v1006
      %v1046 = vunpack.c.l.b16 %v1007
      %v1047 = vunpack.c.l.b16 %v1008
      %v1048 = vunpack.c.l.b16 %v1009
      %v1049 = vunpack.c.l.b16 %v1010
      %v1050 = vunpack.c.l.b16 %v1011
      %v1051 = vunpack.c.l.b16 %v1012
      %v1052 = vunpack.c.l.b16 %v1013
      %v1053 = vunpack.c.l.b16 %v1014
      %v1054 = vunpack.c.l.b16 %v1015
      %v1055 = vunpack.c.l.b16 %v1016
      %v1056 = vunpack.c.l.b16 %v1017
      %v1057 = vunpack.c.l.b16 %v1018
      %v1058 = vunpack.c.l.b16 %v1019
      %v1059 = vpack.c.b16 %v1044, %v1043
      %v1060 = vpack.c.b16 %v1046, %v1045
      %v1061 = vpack.c.b16 %v1048, %v1047
      %v1062 = vpack.c.b16 %v1050, %v1049
      %v1063 = vpack.c.b16 %v1052, %v1051
      %v1064 = vpack.c.b16 %v1054, %v1053
      %v1065 = vpack.c.b16 %v1056, %v1055
      %v1066 = vpack.c.b16 %v1058, %v1057
      %1075 = vmatprep.subr.bf16.mxu0 0
      %1076 = vmatpush1.bf16.msra.mxu0 %v1066
      %1077 = vmatprep.subr.bf16.mxu0 0
      %1078 = vmatpush1.bf16.msra.mxu0 %v1065
      %1079 = vmatprep.subr.bf16.mxu0 0
      %1080 = vmatpush1.bf16.msra.mxu0 %v1064
      %1081 = vmatprep.subr.bf16.mxu0 0
      %1082 = vmatpush1.bf16.msra.mxu0 %v1063
      %1083 = vmatprep.subr.bf16.mxu0 0
      %1084 = vmatpush1.bf16.msra.mxu0 %v1062
      %1085 = vmatprep.subr.bf16.mxu0 0
      %1086 = vmatpush1.bf16.msra.mxu0 %v1061
      %1087 = vmatprep.subr.bf16.mxu0 0
      %1088 = vmatpush1.bf16.msra.mxu0 %v1060
      %1089 = vmatprep.subr.bf16.mxu0 0
      %1090 = vmatpush1.bf16.msra.mxu0 %v1059
      %1091 = vmatprep.subr.bf16.mxu0 0
      %1092 = vmatpush2.bf16.msra.mxu0 0
      %1093 = vmatprep.subr.bf16.mxu0 0
      %1094 = vmatpush2.bf16.msra.mxu0 0
      %1095 = vmatprep.subr.bf16.mxu0 0
      %1096 = vmatpush2.bf16.msra.mxu0 0
      %1097 = vmatprep.subr.bf16.mxu0 0
      %1098 = vmatpush2.bf16.msra.mxu0 0
      %1099 = vmatprep.subr.bf16.mxu0 0
      %1100 = vmatpush2.bf16.msra.mxu0 0
      %1101 = vmatprep.subr.bf16.mxu0 0
      %1102 = vmatpush2.bf16.msra.mxu0 0
      %1103 = vmatprep.subr.bf16.mxu0 0
      %1104 = vmatpush2.bf16.msra.mxu0 0
      %1105 = vmatprep.subr.bf16.mxu0 0
      %1106 = vmatpush2.bf16.msra.mxu0 0
      %1107 = vmatprep.mubr.bf16.mxu0 0
      %1108 = vmatmul.mubr.bf16.gmra.mxu0 %v996
      %v1109 = vpop.f32.mrf.mxu0
      %v1110 = vadd.f32 %v1025, %v1109
      %v1111 = vpop.f32.mrf.mxu0
      %v1112 = vpop.f32.mrf.mxu0
      %v1113 = vadd.f32 %v1025, %v1112
      %v1114 = vpop.f32.mrf.mxu0
      %1115 = vmatprep.mubr.bf16.mxu0 0
      %1116 = vmatmul.mubr.bf16.gmra.mxu0 %v997
      %v1117 = vpop.f32.mrf.mxu0
      %v1118 = vadd.f32 %v1025, %v1117
      %v1119 = vpop.f32.mrf.mxu0
      %v1120 = vpop.f32.mrf.mxu0
      %v1121 = vadd.f32 %v1025, %v1120
      %v1122 = vpop.f32.mrf.mxu0
      %1123 = vmatprep.mubr.bf16.mxu0 0
      %1124 = vmatmul.mubr.bf16.gmra.mxu0 %v998
      %v1125 = vpop.f32.mrf.mxu0
      %v1126 = vadd.f32 %v1025, %v1125
      %v1127 = vpop.f32.mrf.mxu0
      %v1128 = vpop.f32.mrf.mxu0
      %v1129 = vadd.f32 %v1025, %v1128
      %v1130 = vpop.f32.mrf.mxu0
      %1131 = vmatprep.mubr.bf16.mxu0 0
      %1132 = vmatmul.mubr.bf16.gmra.mxu0 %v999
      %v1133 = vpop.f32.mrf.mxu0
      %v1134 = vadd.f32 %v1025, %v1133
      %v1135 = vpop.f32.mrf.mxu0
      %v1136 = vpop.f32.mrf.mxu0
      %v1137 = vadd.f32 %v1025, %v1136
      %v1138 = vpop.f32.mrf.mxu0
      %1139 = vmatprep.mubr.bf16.mxu0 0
      %1140 = vmatmul.mubr.bf16.gmra.mxu0 %v1000
      %v1141 = vpop.f32.mrf.mxu0
      %v1142 = vadd.f32 %v1025, %v1141
      %v1143 = vpop.f32.mrf.mxu0
      %v1144 = vpop.f32.mrf.mxu0
      %v1145 = vadd.f32 %v1025, %v1144
      %v1146 = vpop.f32.mrf.mxu0
      %1147 = vmatprep.mubr.bf16.mxu0 0
      %1148 = vmatmul.mubr.bf16.gmra.mxu0 %v1001
      %v1149 = vpop.f32.mrf.mxu0
      %v1150 = vadd.f32 %v1025, %v1149
      %v1151 = vpop.f32.mrf.mxu0
      %v1152 = vpop.f32.mrf.mxu0
      %v1153 = vadd.f32 %v1025, %v1152
      %v1154 = vpop.f32.mrf.mxu0
      %1155 = vmatprep.mubr.bf16.mxu0 0
      %1156 = vmatmul.mubr.bf16.gmra.mxu0 %v1002
      %v1157 = vpop.f32.mrf.mxu0
      %v1158 = vadd.f32 %v1025, %v1157
      %v1159 = vpop.f32.mrf.mxu0
      %v1160 = vpop.f32.mrf.mxu0
      %v1161 = vadd.f32 %v1025, %v1160
      %v1162 = vpop.f32.mrf.mxu0
      %1163 = vmatprep.mubr.bf16.mxu0 0
      %1164 = vmatmul.mubr.bf16.gmra.mxu0 %v1003
      %v1165 = vpop.f32.mrf.mxu0
      %v1166 = vadd.f32 %v1025, %v1165
      %v1167 = vpop.f32.mrf.mxu0
      %v1168 = vpop.f32.mrf.mxu0
      %v1169 = vadd.f32 %v1025, %v1168
      %v1170 = vpop.f32.mrf.mxu0
      %1171 = vdwg.mxu0
      %v1172 = vmul.f32 %v1110, %v1110
      %v1173 = vmul.f32 %v1113, %v1113
      %v1174 = vmul.f32 %v1118, %v1118
      %v1175 = vmul.f32 %v1121, %v1121
      %v1176 = vmul.f32 %v1126, %v1126
      %v1177 = vmul.f32 %v1129, %v1129
      %v1178 = vmul.f32 %v1134, %v1134
      %v1179 = vmul.f32 %v1137, %v1137
      %v1180 = vmul.f32 %v1142, %v1142
      %v1181 = vmul.f32 %v1145, %v1145
      %v1182 = vmul.f32 %v1150, %v1150
      %v1183 = vmul.f32 %v1153, %v1153
      %v1184 = vmul.f32 %v1158, %v1158
      %v1185 = vmul.f32 %v1161, %v1161
      %v1186 = vmul.f32 %v1166, %v1166
      %v1187 = vmul.f32 %v1169, %v1169
      %1188 = vadd.xlane.f32.xlu0 %v1172
      %v1189 = vpop.xlane.xlu0 %1188
      %1190 = vadd.xlane.f32.xlu0 %v1173
      %v1191 = vpop.xlane.xlu0 %1190
      %1192 = vadd.xlane.f32.xlu0 %v1174
      %v1193 = vpop.xlane.xlu0 %1192
      %1194 = vadd.xlane.f32.xlu0 %v1175
      %v1195 = vpop.xlane.xlu0 %1194
      %1196 = vadd.xlane.f32.xlu0 %v1176
      %v1197 = vpop.xlane.xlu0 %1196
      %1198 = vadd.xlane.f32.xlu0 %v1177
      %v1199 = vpop.xlane.xlu0 %1198
      %1200 = vadd.xlane.f32.xlu0 %v1178
      %v1201 = vpop.xlane.xlu0 %1200
      %1202 = vadd.xlane.f32.xlu0 %v1179
      %v1203 = vpop.xlane.xlu0 %1202
      %1204 = vadd.xlane.f32.xlu0 %v1180
      %v1205 = vpop.xlane.xlu0 %1204
      %1206 = vadd.xlane.f32.xlu0 %v1181
      %v1207 = vpop.xlane.xlu0 %1206
      %1208 = vadd.xlane.f32.xlu0 %v1182
      %v1209 = vpop.xlane.xlu0 %1208
      %1210 = vadd.xlane.f32.xlu0 %v1183
      %v1211 = vpop.xlane.xlu0 %1210
      %1212 = vadd.xlane.f32.xlu0 %v1184
      %v1213 = vpop.xlane.xlu0 %1212
      %1214 = vadd.xlane.f32.xlu0 %v1185
      %v1215 = vpop.xlane.xlu0 %1214
      %1216 = vadd.xlane.f32.xlu0 %v1186
      %v1217 = vpop.xlane.xlu0 %1216
      %1218 = vadd.xlane.f32.xlu0 %v1187
      %v1219 = vpop.xlane.xlu0 %1218
      %v1220 = vadd.f32 %v1189, 1e-24
      %v1221 = vadd.f32 %v1191, 1e-24
      %v1222 = vadd.f32 %v1193, 1e-24
      %v1223 = vadd.f32 %v1195, 1e-24
      %v1224 = vadd.f32 %v1197, 1e-24
      %v1225 = vadd.f32 %v1199, 1e-24
      %v1226 = vadd.f32 %v1201, 1e-24
      %v1227 = vadd.f32 %v1203, 1e-24
      %v1228 = vadd.f32 %v1205, 1e-24
      %v1229 = vadd.f32 %v1207, 1e-24
      %v1230 = vadd.f32 %v1209, 1e-24
      %v1231 = vadd.f32 %v1211, 1e-24
      %v1232 = vadd.f32 %v1213, 1e-24
      %v1233 = vadd.f32 %v1215, 1e-24
      %v1234 = vadd.f32 %v1217, 1e-24
      %v1235 = vadd.f32 %v1219, 1e-24
      %v1236 = vrsqrt.pop %v1220
      %v1237 = vrsqrt.pop %v1221
      %v1238 = vrsqrt.pop %v1222
      %v1239 = vrsqrt.pop %v1223
      %v1240 = vrsqrt.pop %v1224
      %v1241 = vrsqrt.pop %v1225
      %v1242 = vrsqrt.pop %v1226
      %v1243 = vrsqrt.pop %v1227
      %v1244 = vrsqrt.pop %v1228
      %v1245 = vrsqrt.pop %v1229
      %v1246 = vrsqrt.pop %v1230
      %v1247 = vrsqrt.pop %v1231
      %v1248 = vrsqrt.pop %v1232
      %v1249 = vrsqrt.pop %v1233
      %v1250 = vrsqrt.pop %v1234
      %v1251 = vrsqrt.pop %v1235
      %v1252 = vmul.f32 %v1110, %v1236
      %v1253 = vmul.f32 %v1113, %v1237
      %v1254 = vmul.f32 %v1118, %v1238
      %v1255 = vmul.f32 %v1121, %v1239
      %v1256 = vmul.f32 %v1126, %v1240
      %v1257 = vmul.f32 %v1129, %v1241
      %v1258 = vmul.f32 %v1134, %v1242
      %v1259 = vmul.f32 %v1137, %v1243
      %v1260 = vmul.f32 %v1142, %v1244
      %v1261 = vmul.f32 %v1145, %v1245
      %v1262 = vmul.f32 %v1150, %v1246
      %v1263 = vmul.f32 %v1153, %v1247
      %v1264 = vmul.f32 %v1158, %v1248
      %v1265 = vmul.f32 %v1161, %v1249
      %v1266 = vmul.f32 %v1166, %v1250
      %v1267 = vmul.f32 %v1169, %v1251
      %1268 = vst [vmem:[%s329] sm:$0xff] %v1252
      %1269 = vst [vmem:[%s329 + $0x8] sm:$0xff] %v1253
      %1270 = vst [vmem:[%s329 + $0x10] sm:$0xff] %v1254
      %1271 = vst [vmem:[%s329 + $0x18] sm:$0xff] %v1255
      %1272 = vst [vmem:[%s329 + $0x20] sm:$0xff] %v1256
      %1273 = vst [vmem:[%s329 + $0x28] sm:$0xff] %v1257
      %1274 = vst [vmem:[%s329 + $0x30] sm:$0xff] %v1258
      %1275 = vst [vmem:[%s329 + $0x38] sm:$0xff] %v1259
      %1276 = vst [vmem:[%s329 + $0x40] sm:$0xff] %v1260
      %1277 = vst [vmem:[%s329 + $0x48] sm:$0xff] %v1261
      %1278 = vst [vmem:[%s329 + $0x50] sm:$0xff] %v1262
      %1279 = vst [vmem:[%s329 + $0x58] sm:$0xff] %v1263
      %1280 = vst [vmem:[%s329 + $0x60] sm:$0xff] %v1264
      %1281 = vst [vmem:[%s329 + $0x68] sm:$0xff] %v1265
      %1282 = vst [vmem:[%s329 + $0x70] sm:$0xff] %v1266
      %1283 = vst [vmem:[%s329 + $0x78] sm:$0xff] %v1267
      %s1284 = smul.u32 16, %s19
      %p1285 = scmp.lt.s32.totalorder %s1284, 31
      %s1286 = scalar_select %p1285, %s1284, 31
      %s1287 = smul.addr %s1286, 8
      %s1288 = scalar_lea.vmem %s8, %s1287
      // Predicated region
      $region53: #{sgformer_forward.15} parent=51 // pred_check
        %p1289 = pneg %p215
      $region54: #{sgformer_forward.15} parent=51 // pred_check_branch
        %1291 = sbr.rel (%p1289) target = $region56
      $region55: #{sgformer_forward.15} parent=51 // pred_region
        %s1292 = smul.u32 16, %s19
      $region56: #{sgformer_forward.15} parent=51 // pred_fallthru
        _
    $region52: #{sgformer_forward.15} parent=5 // pred_fallthru
      _
    %p1293 = scmp.le.s32.totalorder 2, %s14
    // Predicated region
    $region57: #{sgformer_forward.15} parent=5 // pred_check
      %p1294 = pneg %p1293
    $region58: #{sgformer_forward.15} parent=5 // pred_check_branch
      %1296 = sbr.rel (%p1294) target = $region60
    $region59: #{sgformer_forward.15} parent=5 // pred_region
      %s1297 = ssub.s32 %s14, 2
      // Predicated region
      $region61: #{sgformer_forward.15} parent=59 // pred_check
        %p1298 = pneg %p221
      $region62: #{sgformer_forward.15} parent=59 // pred_check_branch
        %1300 = sbr.rel (%p1298) target = $region64
      $region63: #{sgformer_forward.15} parent=59 // pred_region
        %s1301 = smul.u32 16, %s20
        %p1302 = scmp.lt.s32.totalorder %s1301, 31
        %s1303 = scalar_select %p1302, %s1301, 31
        %s1304 = smul.addr %s1303, 8
        %s1305 = scalar_lea.vmem %s8, %s1304
      $region64: #{sgformer_forward.15} parent=59 // pred_fallthru
        _
    $region60: #{sgformer_forward.15} parent=5 // pred_fallthru
      _
  $region6: #{sgformer_forward.15} parent=0 // loop_footer
    %s18 = sadd.s32 1, %s14
  $region7: #{sgformer_forward.15} parent=0 // loop_footer_branch
    %13 = sbr.rel target = $region3
  $region8: #{sgformer_forward.15} parent=0 // loop_exit
    _

</llo_original>
